<compile_context>
chip_gen: v7x
topology: tpu7x:2x2x1
jax: 0.10.0
libtpu: 0.0.40
codegen_flags: <defaults>
</compile_context>

<pallas_src>
import numpy as np
import jax
import jax.numpy as jnp
from jax.experimental import pallas as pl
from jax.experimental.pallas import tpu as pltpu


class Config:
    batch_size = 2
    features = 8            # sequence length
    d_model = 32
    heads = 4
    mlp_size = 64
    layers = 2
    num_classes = 10
    dropout_rate = 0.0      # TODO(synk): RNG-based dropout not reproduced; p=0 -> identity


B = Config.batch_size
F = Config.features
D = Config.d_model
H = Config.heads
M = Config.mlp_size
L = Config.layers
C = Config.num_classes
BF = B * F
D_K = D // H
C_PAD = 128                 # lane-dense classifier width; first C columns are real
LN_EPS = 1e-5               # nn.LayerNorm default
NEG_INF = -1e30
INV_SQRT_DK = 1.0 / float(np.sqrt(D_K))

# Matmul operand dtype. Keep f32 for exact parity with the PyTorch reference at this
# tiny size; switch to jnp.bfloat16 on v6e/v7x if the config is scaled up (native MXU).
MM_DTYPE = jnp.float32


# ---------------------------------------------------------------- in-kernel math
def _mm(a, b):
    return jnp.dot(a.astype(MM_DTYPE), b.astype(MM_DTYPE),
                   preferred_element_type=jnp.float32)


def _layernorm(x, gamma, beta):
    # x: (BF, D); gamma/beta: (1, D)
    mu = jnp.mean(x, axis=-1, keepdims=True)
    var = jnp.mean(jnp.square(x - mu), axis=-1, keepdims=True)
    return (x - mu) * jax.lax.rsqrt(var + LN_EPS) * gamma + beta


def _softmax_rows(s):
    s = s - jnp.max(s, axis=-1, keepdims=True)
    p = jnp.exp(s)
    return p / jnp.sum(p, axis=-1, keepdims=True)


def _mha(q, k, v, bias):
    # q, k, v: (BF, D) with rows grouped per batch element.
    # bias: (BF, BF) block-diagonal 0 / -1e30 mask -> attention restricted to the same
    # batch element, so each head needs only two 2-D matmuls over the merged B*F axis.
    q = q * INV_SQRT_DK
    outs = []
    for h in range(H):                       # static unroll over 4 heads
        lo = h * D_K
        qs = q[:, lo:lo + D_K]
        ks = k[:, lo:lo + D_K]
        vs = v[:, lo:lo + D_K]
        s = jnp.einsum('qd,kd->qk', qs.astype(MM_DTYPE), ks.astype(MM_DTYPE),
                       preferred_element_type=jnp.float32) + bias
        p = _softmax_rows(s)
        outs.append(jnp.einsum('qk,kd->qd', p.astype(MM_DTYPE), vs.astype(MM_DTYPE),
                               preferred_element_type=jnp.float32))
    return jnp.concatenate(outs, axis=-1)    # (BF, D)


def _ffn(x, w1, b1, w2, b2):
    # x: (BF, D); w1: (D, M); b1: (1, M); w2: (M, D); b2: (1, D)
    h = jnp.maximum(_mm(x, w1) + b1, 0.0)
    return _mm(h, w2) + b2


# ---------------------------------------------------------------- fused kernel
def fused_model_kernel(
        x_ref, bias_ref, pe_ref,
        enc_ew_ref, enc_eb_ref, dec_ew_ref, dec_eb_ref,
        eg1_ref, ebt1_ref, eg2_ref, ebt2_ref,
        ew1_ref, efb1_ref, ew2_ref, efb2_ref,
        eng_ref, enb_ref,
        dg1_ref, dbt1_ref, dg2_ref, dbt2_ref, dg3_ref, dbt3_ref,
        dw1_ref, dfb1_ref, dw2_ref, dfb2_ref,
        dng_ref, dnb_ref,
        ow_ref, ob_ref,
        o_ref):
    x = x_ref[...]            # (BF, 1)  raw scalar feature per token
    bias = bias_ref[...]      # (BF, BF) block-diagonal attention bias
    pe = pe_ref[...]          # (BF, D)

    # ---------------- encoder ----------------
    # sqrt(d_model) is already folded into the embedding params at init time.
    h = x * enc_ew_ref[...] + enc_eb_ref[...] + pe
    for l in range(L):        # static unroll over layers
        x1 = _layernorm(h, eg1_ref[l], ebt1_ref[l])
        h = h + _mha(x1, x1, x1, bias)
        h = _layernorm(h, eg2_ref[l], ebt2_ref[l])          # FFN residual base is post-norm2 (as in ref)
        h = h + _ffn(h, ew1_ref[l], efb1_ref[l], ew2_ref[l], efb2_ref[l])
    enc_out = _layernorm(h, eng_ref[...], enb_ref[...])

    # ---------------- decoder ----------------
    hd = x * dec_ew_ref[...] + dec_eb_ref[...] + pe
    for l in range(L):
        x1 = _layernorm(hd, dg1_ref[l], dbt1_ref[l])
        hd = hd + _mha(x1, x1, x1, bias)                    # "masked" self-attn; ref passes mask=None
        x1 = _layernorm(hd, dg2_ref[l], dbt2_ref[l])
        hd = hd + _mha(x1, enc_out, enc_out, bias)          # cross attention
        x1 = _layernorm(hd, dg3_ref[l], dbt3_ref[l])
        hd = hd + _ffn(x1, dw1_ref[l], dfb1_ref[l], dw2_ref[l], dfb2_ref[l])
    dec_out = _layernorm(hd, dng_ref[...], dnb_ref[...])    # (BF, D)

    # ---------------- classifier head (Linear(F*D -> C) + softmax) ----------------
    # logits[b, c] = sum_f dec_out[b*F + f, :] @ out_w[f] + out_b  (lane-dense, C padded to 128)
    ob_v = ob_ref[...]                                      # (1, C_PAD); padded cols are -1e30
    accs = [ob_v for _ in range(B)]
    for f in range(F):
        wf = ow_ref[f]                                      # (D, C_PAD)
        for b in range(B):
            r = b * F + f
            accs[b] = accs[b] + _mm(dec_out[r:r + 1, :], wf)
    logits = jnp.concatenate(accs, axis=0)                  # (B, C_PAD)
    o_ref[...] = _softmax_rows(logits)                      # padded cols -> exactly 0


# ---------------------------------------------------------------- pallas_call glue
_VMEM = pl.BlockSpec(memory_space=pltpu.MemorySpace.VMEM)

_PARAM_ORDER = (
    'attn_bias', 'pe',
    'enc_ew', 'enc_eb', 'dec_ew', 'dec_eb',
    'enc_g1', 'enc_b1', 'enc_g2', 'enc_b2',
    'enc_w1', 'enc_fb1', 'enc_w2', 'enc_fb2',
    'enc_ng', 'enc_nb',
    'dec_g1', 'dec_b1', 'dec_g2', 'dec_b2', 'dec_g3', 'dec_b3',
    'dec_w1', 'dec_fb1', 'dec_w2', 'dec_fb2',
    'dec_ng', 'dec_nb',
    'out_w', 'out_b',
)


def model_forward(x, params):
    x2 = x.reshape(BF, 1).astype(jnp.float32)   # Embedding's unsqueeze/view, host-side
    operands = [x2] + [params[k] for k in _PARAM_ORDER]
    out = pl.pallas_call(
        fused_model_kernel,
        out_shape=jax.ShapeDtypeStruct((B, C_PAD), jnp.float32),
        in_specs=[_VMEM] * len(operands),
        out_specs=_VMEM,
    )(*operands)
    return out[:, :C]                           # drop the zero-probability lane padding


# ---------------------------------------------------------------- parameters
def make_positional_encoding():
    pos = np.arange(1000, dtype=np.float32)[:, None]
    div = np.exp(np.arange(0, D, 2, dtype=np.float32) * (-np.log(10000.0) / D))
    pe = np.zeros((1000, D), np.float32)
    pe[:, 0::2] = np.sin(pos * div)
    pe[:, 1::2] = np.cos(pos * div)
    # Reference quirk (kept on purpose): pe is (1000,1,D) after unsqueeze/transpose and
    # is indexed pe[:batch_size], then broadcast over the sequence axis -> every token
    # of batch element b receives the positional vector of position b.
    pe_b = pe[:B]                                    # (B, D)
    return jnp.asarray(np.repeat(pe_b, F, axis=0))   # (B*F, D)


def init_params(key):
    keys = iter(jax.random.split(key, 64))
    nrm = lambda shape, s=1.0: jax.random.normal(next(keys), shape, jnp.float32) * s
    sqrt_d = float(np.sqrt(D))

    def emb_pair():
        w = nrm((B, F, D))
        b = nrm((B, F, D))
        # fold PositionalEncoding's * sqrt(d_model) into the embedding params (init-time)
        return (w * sqrt_d).reshape(BF, D), (b * sqrt_d).reshape(BF, D)

    def ln(n_layers=None):
        if n_layers is None:
            return jnp.ones((1, D), jnp.float32), jnp.zeros((1, D), jnp.float32)
        return (jnp.ones((n_layers, 1, D), jnp.float32),
                jnp.zeros((n_layers, 1, D), jnp.float32))

    def ffn_stack():
        return (nrm((L, D, M), 0.05), nrm((L, 1, M), 0.05),
                nrm((L, M, D), 0.05), nrm((L, 1, D), 0.05))

    # block-diagonal attention bias (0 within a batch element, -1e30 across elements)
    ab = np.full((BF, BF), NEG_INF, np.float32)
    for b in range(B):
        ab[b * F:(b + 1) * F, b * F:(b + 1) * F] = 0.0

    # lane-dense classifier: zero-pad weights to 128 cols, bias padding -> -1e30
    out_w = np.zeros((F, D, C_PAD), np.float32)
    out_w[:, :, :C] = np.asarray(nrm((F, D, C), 0.05))
    out_b = np.full((1, C_PAD), NEG_INF, np.float32)
    out_b[0, :C] = np.asarray(nrm((C,), 0.05))

    p = {'attn_bias': jnp.asarray(ab), 'pe': make_positional_encoding()}
    p['enc_ew'], p['enc_eb'] = emb_pair()
    p['dec_ew'], p['dec_eb'] = emb_pair()
    p['enc_g1'], p['enc_b1'] = ln(L)
    p['enc_g2'], p['enc_b2'] = ln(L)
    p['enc_w1'], p['enc_fb1'], p['enc_w2'], p['enc_fb2'] = ffn_stack()
    p['enc_ng'], p['enc_nb'] = ln()
    p['dec_g1'], p['dec_b1'] = ln(L)
    p['dec_g2'], p['dec_b2'] = ln(L)
    p['dec_g3'], p['dec_b3'] = ln(L)
    p['dec_w1'], p['dec_fb1'], p['dec_w2'], p['dec_fb2'] = ffn_stack()
    p['dec_ng'], p['dec_nb'] = ln()
    p['out_w'] = jnp.asarray(out_w)
    p['out_b'] = jnp.asarray(out_b)
    return p


if __name__ == "__main__":
    key = jax.random.PRNGKey(0)
    pkey, xkey = jax.random.split(key)
    params = init_params(pkey)
    x = jax.random.normal(xkey, (B, F), jnp.float32)

    out = jax.jit(model_forward)(x, params)
    out = jax.block_until_ready(out)

    assert out.shape == (B, C), out.shape
    o = np.asarray(out)
    assert np.all(np.isfinite(o))
    assert np.allclose(o.sum(axis=1), 1.0, atol=1e-4), o.sum(axis=1)
    print("KERNEL_OK")
</pallas_src>

<mosaic_0001>
module attributes {stable_mosaic.version = 11 : i64} {
  func.func @fused_model_kernel(%arg0: memref<16x1xf32, #tpu.memory_space<vmem>>, %arg1: memref<16x16xf32, #tpu.memory_space<vmem>>, %arg2: memref<16x32xf32, #tpu.memory_space<vmem>>, %arg3: memref<16x32xf32, #tpu.memory_space<vmem>>, %arg4: memref<16x32xf32, #tpu.memory_space<vmem>>, %arg5: memref<16x32xf32, #tpu.memory_space<vmem>>, %arg6: memref<16x32xf32, #tpu.memory_space<vmem>>, %arg7: memref<2x1x32xf32, #tpu.memory_space<vmem>>, %arg8: memref<2x1x32xf32, #tpu.memory_space<vmem>>, %arg9: memref<2x1x32xf32, #tpu.memory_space<vmem>>, %arg10: memref<2x1x32xf32, #tpu.memory_space<vmem>>, %arg11: memref<2x32x64xf32, #tpu.memory_space<vmem>>, %arg12: memref<2x1x64xf32, #tpu.memory_space<vmem>>, %arg13: memref<2x64x32xf32, #tpu.memory_space<vmem>>, %arg14: memref<2x1x32xf32, #tpu.memory_space<vmem>>, %arg15: memref<1x32xf32, #tpu.memory_space<vmem>>, %arg16: memref<1x32xf32, #tpu.memory_space<vmem>>, %arg17: memref<2x1x32xf32, #tpu.memory_space<vmem>>, %arg18: memref<2x1x32xf32, #tpu.memory_space<vmem>>, %arg19: memref<2x1x32xf32, #tpu.memory_space<vmem>>, %arg20: memref<2x1x32xf32, #tpu.memory_space<vmem>>, %arg21: memref<2x1x32xf32, #tpu.memory_space<vmem>>, %arg22: memref<2x1x32xf32, #tpu.memory_space<vmem>>, %arg23: memref<2x32x64xf32, #tpu.memory_space<vmem>>, %arg24: memref<2x1x64xf32, #tpu.memory_space<vmem>>, %arg25: memref<2x64x32xf32, #tpu.memory_space<vmem>>, %arg26: memref<2x1x32xf32, #tpu.memory_space<vmem>>, %arg27: memref<1x32xf32, #tpu.memory_space<vmem>>, %arg28: memref<1x32xf32, #tpu.memory_space<vmem>>, %arg29: memref<8x32x128xf32, #tpu.memory_space<vmem>>, %arg30: memref<1x128xf32, #tpu.memory_space<vmem>>, %arg31: memref<2x128xf32, #tpu.memory_space<vmem>>) attributes {dimension_semantics = [], scalar_prefetch = 0 : i64, scratch_operands = 0 : i64, tpu.core_type = #tpu.core_type<tc>} {
    %c0 = arith.constant 0 : index
    %c0_0 = arith.constant 0 : index
    %0 = vector.load %arg0[%c0, %c0_0] : memref<16x1xf32, #tpu.memory_space<vmem>>, vector<16x1xf32>
    %c0_1 = arith.constant 0 : index
    %c0_2 = arith.constant 0 : index
    %1 = vector.load %arg1[%c0_1, %c0_2] : memref<16x16xf32, #tpu.memory_space<vmem>>, vector<16x16xf32>
    %c0_3 = arith.constant 0 : index
    %c0_4 = arith.constant 0 : index
    %2 = vector.load %arg2[%c0_3, %c0_4] : memref<16x32xf32, #tpu.memory_space<vmem>>, vector<16x32xf32>
    %c0_5 = arith.constant 0 : index
    %c0_6 = arith.constant 0 : index
    %3 = vector.load %arg3[%c0_5, %c0_6] : memref<16x32xf32, #tpu.memory_space<vmem>>, vector<16x32xf32>
    %4 = vector.broadcast %0 : vector<16x1xf32> to vector<16x32xf32>
    %5 = arith.mulf %4, %3 : vector<16x32xf32>
    %c0_7 = arith.constant 0 : index
    %c0_8 = arith.constant 0 : index
    %6 = vector.load %arg4[%c0_7, %c0_8] : memref<16x32xf32, #tpu.memory_space<vmem>>, vector<16x32xf32>
    %7 = arith.addf %5, %6 : vector<16x32xf32>
    %8 = arith.addf %7, %2 : vector<16x32xf32>
    %c0_9 = arith.constant 0 : index
    %c0_10 = arith.constant 0 : index
    %c0_11 = arith.constant 0 : index
    %9 = vector.load %arg7[%c0_9, %c0_10, %c0_11] : memref<2x1x32xf32, #tpu.memory_space<vmem>>, vector<1x1x32xf32>
    %10 = vector.shape_cast %9 : vector<1x1x32xf32> to vector<1x32xf32>
    %c0_12 = arith.constant 0 : index
    %c0_13 = arith.constant 0 : index
    %c0_14 = arith.constant 0 : index
    %11 = vector.load %arg8[%c0_12, %c0_13, %c0_14] : memref<2x1x32xf32, #tpu.memory_space<vmem>>, vector<1x1x32xf32>
    %12 = vector.shape_cast %11 : vector<1x1x32xf32> to vector<1x32xf32>
    %cst = arith.constant dense<0.000000e+00> : vector<16xf32>
    %13 = vector.multi_reduction <add>, %8, %cst [1] : vector<16x32xf32> to vector<16xf32>
    %14 = vector.shape_cast %13 : vector<16xf32> to vector<16x1xf32>
    %cst_15 = arith.constant 3.200000e+01 : f32
    %15 = vector.broadcast %cst_15 : f32 to vector<16x1xf32>
    %16 = arith.divf %14, %15 : vector<16x1xf32>
    %17 = vector.broadcast %16 : vector<16x1xf32> to vector<16x32xf32>
    %18 = arith.subf %8, %17 : vector<16x32xf32>
    %19 = arith.mulf %18, %18 : vector<16x32xf32>
    %cst_16 = arith.constant dense<0.000000e+00> : vector<16xf32>
    %20 = vector.multi_reduction <add>, %19, %cst_16 [1] : vector<16x32xf32> to vector<16xf32>
    %21 = vector.shape_cast %20 : vector<16xf32> to vector<16x1xf32>
    %cst_17 = arith.constant 3.200000e+01 : f32
    %22 = vector.broadcast %cst_17 : f32 to vector<16x1xf32>
    %23 = arith.divf %21, %22 : vector<16x1xf32>
    %24 = vector.broadcast %16 : vector<16x1xf32> to vector<16x32xf32>
    %25 = arith.subf %8, %24 : vector<16x32xf32>
    %cst_18 = arith.constant 9.99999974E-6 : f32
    %26 = vector.broadcast %cst_18 : f32 to vector<16x1xf32>
    %27 = arith.addf %23, %26 : vector<16x1xf32>
    %28 = math.rsqrt %27 : vector<16x1xf32>
    %29 = vector.broadcast %28 : vector<16x1xf32> to vector<16x32xf32>
    %30 = arith.mulf %25, %29 : vector<16x32xf32>
    %31 = vector.broadcast %10 : vector<1x32xf32> to vector<16x32xf32>
    %32 = arith.mulf %30, %31 : vector<16x32xf32>
    %33 = vector.broadcast %12 : vector<1x32xf32> to vector<16x32xf32>
    %34 = arith.addf %32, %33 : vector<16x32xf32>
    %cst_19 = arith.constant 0.353553385 : f32
    %35 = vector.broadcast %cst_19 : f32 to vector<16x32xf32>
    %36 = arith.mulf %34, %35 : vector<16x32xf32>
    %37 = vector.extract_strided_slice %36 {offsets = [0, 0], sizes = [16, 8], strides = [1, 1]} : vector<16x32xf32> to vector<16x8xf32>
    %38 = vector.extract_strided_slice %34 {offsets = [0, 0], sizes = [16, 8], strides = [1, 1]} : vector<16x32xf32> to vector<16x8xf32>
    %39 = vector.extract_strided_slice %34 {offsets = [0, 0], sizes = [16, 8], strides = [1, 1]} : vector<16x32xf32> to vector<16x8xf32>
    "tpu.trace_start"() <{level = 10 : i32, message = "qd,kd->qk"}> : () -> ()
    %cst_20 = arith.constant dense<0.000000e+00> : vector<16x16xf32>
    %40 = tpu.matmul %37, %38, %cst_20 {dimension_numbers = #tpu.dot_dimension_numbers<[1], [1], [0], [0], [0, 0, 1, 0], [], []>} : vector<16x8xf32>, vector<16x8xf32>, vector<16x16xf32> -> vector<16x16xf32>
    "tpu.trace_stop"() : () -> ()
    %41 = arith.addf %40, %1 : vector<16x16xf32>
    %cst_21 = arith.constant dense<0xFF800000> : vector<16xf32>
    %42 = vector.multi_reduction <maximumf>, %41, %cst_21 [1] : vector<16x16xf32> to vector<16xf32>
    %43 = vector.shape_cast %42 : vector<16xf32> to vector<16x1xf32>
    %44 = vector.broadcast %43 : vector<16x1xf32> to vector<16x16xf32>
    %45 = arith.subf %41, %44 : vector<16x16xf32>
    %46 = math.exp %45 : vector<16x16xf32>
    %cst_22 = arith.constant dense<0.000000e+00> : vector<16xf32>
    %47 = vector.multi_reduction <add>, %46, %cst_22 [1] : vector<16x16xf32> to vector<16xf32>
    %48 = vector.shape_cast %47 : vector<16xf32> to vector<16x1xf32>
    %49 = vector.broadcast %48 : vector<16x1xf32> to vector<16x16xf32>
    %50 = arith.divf %46, %49 : vector<16x16xf32>
    "tpu.trace_start"() <{level = 10 : i32, message = "qk,kd->qd"}> : () -> ()
    %cst_23 = arith.constant dense<0.000000e+00> : vector<16x8xf32>
    %51 = tpu.matmul %50, %39, %cst_23 {dimension_numbers = #tpu.dot_dimension_numbers<[1], [0], [0], [1], [0, 0, 1, 1], [], []>} : vector<16x16xf32>, vector<16x8xf32>, vector<16x8xf32> -> vector<16x8xf32>
    "tpu.trace_stop"() : () -> ()
    %52 = vector.extract_strided_slice %36 {offsets = [0, 8], sizes = [16, 8], strides = [1, 1]} : vector<16x32xf32> to vector<16x8xf32>
    %53 = vector.extract_strided_slice %34 {offsets = [0, 8], sizes = [16, 8], strides = [1, 1]} : vector<16x32xf32> to vector<16x8xf32>
    %54 = vector.extract_strided_slice %34 {offsets = [0, 8], sizes = [16, 8], strides = [1, 1]} : vector<16x32xf32> to vector<16x8xf32>
    "tpu.trace_start"() <{level = 10 : i32, message = "qd,kd->qk"}> : () -> ()
    %cst_24 = arith.constant dense<0.000000e+00> : vector<16x16xf32>
    %55 = tpu.matmul %52, %53, %cst_24 {dimension_numbers = #tpu.dot_dimension_numbers<[1], [1], [0], [0], [0, 0, 1, 0], [], []>} : vector<16x8xf32>, vector<16x8xf32>, vector<16x16xf32> -> vector<16x16xf32>
    "tpu.trace_stop"() : () -> ()
    %56 = arith.addf %55, %1 : vector<16x16xf32>
    %cst_25 = arith.constant dense<0xFF800000> : vector<16xf32>
    %57 = vector.multi_reduction <maximumf>, %56, %cst_25 [1] : vector<16x16xf32> to vector<16xf32>
    %58 = vector.shape_cast %57 : vector<16xf32> to vector<16x1xf32>
    %59 = vector.broadcast %58 : vector<16x1xf32> to vector<16x16xf32>
    %60 = arith.subf %56, %59 : vector<16x16xf32>
    %61 = math.exp %60 : vector<16x16xf32>
    %cst_26 = arith.constant dense<0.000000e+00> : vector<16xf32>
    %62 = vector.multi_reduction <add>, %61, %cst_26 [1] : vector<16x16xf32> to vector<16xf32>
    %63 = vector.shape_cast %62 : vector<16xf32> to vector<16x1xf32>
    %64 = vector.broadcast %63 : vector<16x1xf32> to vector<16x16xf32>
    %65 = arith.divf %61, %64 : vector<16x16xf32>
    "tpu.trace_start"() <{level = 10 : i32, message = "qk,kd->qd"}> : () -> ()
    %cst_27 = arith.constant dense<0.000000e+00> : vector<16x8xf32>
    %66 = tpu.matmul %65, %54, %cst_27 {dimension_numbers = #tpu.dot_dimension_numbers<[1], [0], [0], [1], [0, 0, 1, 1], [], []>} : vector<16x16xf32>, vector<16x8xf32>, vector<16x8xf32> -> vector<16x8xf32>
    "tpu.trace_stop"() : () -> ()
    %67 = vector.extract_strided_slice %36 {offsets = [0, 16], sizes = [16, 8], strides = [1, 1]} : vector<16x32xf32> to vector<16x8xf32>
    %68 = vector.extract_strided_slice %34 {offsets = [0, 16], sizes = [16, 8], strides = [1, 1]} : vector<16x32xf32> to vector<16x8xf32>
    %69 = vector.extract_strided_slice %34 {offsets = [0, 16], sizes = [16, 8], strides = [1, 1]} : vector<16x32xf32> to vector<16x8xf32>
    "tpu.trace_start"() <{level = 10 : i32, message = "qd,kd->qk"}> : () -> ()
    %cst_28 = arith.constant dense<0.000000e+00> : vector<16x16xf32>
    %70 = tpu.matmul %67, %68, %cst_28 {dimension_numbers = #tpu.dot_dimension_numbers<[1], [1], [0], [0], [0, 0, 1, 0], [], []>} : vector<16x8xf32>, vector<16x8xf32>, vector<16x16xf32> -> vector<16x16xf32>
    "tpu.trace_stop"() : () -> ()
    %71 = arith.addf %70, %1 : vector<16x16xf32>
    %cst_29 = arith.constant dense<0xFF800000> : vector<16xf32>
    %72 = vector.multi_reduction <maximumf>, %71, %cst_29 [1] : vector<16x16xf32> to vector<16xf32>
    %73 = vector.shape_cast %72 : vector<16xf32> to vector<16x1xf32>
    %74 = vector.broadcast %73 : vector<16x1xf32> to vector<16x16xf32>
    %75 = arith.subf %71, %74 : vector<16x16xf32>
    %76 = math.exp %75 : vector<16x16xf32>
    %cst_30 = arith.constant dense<0.000000e+00> : vector<16xf32>
    %77 = vector.multi_reduction <add>, %76, %cst_30 [1] : vector<16x16xf32> to vector<16xf32>
    %78 = vector.shape_cast %77 : vector<16xf32> to vector<16x1xf32>
    %79 = vector.broadcast %78 : vector<16x1xf32> to vector<16x16xf32>
    %80 = arith.divf %76, %79 : vector<16x16xf32>
    "tpu.trace_start"() <{level = 10 : i32, message = "qk,kd->qd"}> : () -> ()
    %cst_31 = arith.constant dense<0.000000e+00> : vector<16x8xf32>
    %81 = tpu.matmul %80, %69, %cst_31 {dimension_numbers = #tpu.dot_dimension_numbers<[1], [0], [0], [1], [0, 0, 1, 1], [], []>} : vector<16x16xf32>, vector<16x8xf32>, vector<16x8xf32> -> vector<16x8xf32>
    "tpu.trace_stop"() : () -> ()
    %82 = vector.extract_strided_slice %36 {offsets = [0, 24], sizes = [16, 8], strides = [1, 1]} : vector<16x32xf32> to vector<16x8xf32>
    %83 = vector.extract_strided_slice %34 {offsets = [0, 24], sizes = [16, 8], strides = [1, 1]} : vector<16x32xf32> to vector<16x8xf32>
    %84 = vector.extract_strided_slice %34 {offsets = [0, 24], sizes = [16, 8], strides = [1, 1]} : vector<16x32xf32> to vector<16x8xf32>
    "tpu.trace_start"() <{level = 10 : i32, message = "qd,kd->qk"}> : () -> ()
    %cst_32 = arith.constant dense<0.000000e+00> : vector<16x16xf32>
    %85 = tpu.matmul %82, %83, %cst_32 {dimension_numbers = #tpu.dot_dimension_numbers<[1], [1], [0], [0], [0, 0, 1, 0], [], []>} : vector<16x8xf32>, vector<16x8xf32>, vector<16x16xf32> -> vector<16x16xf32>
    "tpu.trace_stop"() : () -> ()
    %86 = arith.addf %85, %1 : vector<16x16xf32>
    %cst_33 = arith.constant dense<0xFF800000> : vector<16xf32>
    %87 = vector.multi_reduction <maximumf>, %86, %cst_33 [1] : vector<16x16xf32> to vector<16xf32>
    %88 = vector.shape_cast %87 : vector<16xf32> to vector<16x1xf32>
    %89 = vector.broadcast %88 : vector<16x1xf32> to vector<16x16xf32>
    %90 = arith.subf %86, %89 : vector<16x16xf32>
    %91 = math.exp %90 : vector<16x16xf32>
    %cst_34 = arith.constant dense<0.000000e+00> : vector<16xf32>
    %92 = vector.multi_reduction <add>, %91, %cst_34 [1] : vector<16x16xf32> to vector<16xf32>
    %93 = vector.shape_cast %92 : vector<16xf32> to vector<16x1xf32>
    %94 = vector.broadcast %93 : vector<16x1xf32> to vector<16x16xf32>
    %95 = arith.divf %91, %94 : vector<16x16xf32>
    "tpu.trace_start"() <{level = 10 : i32, message = "qk,kd->qd"}> : () -> ()
    %cst_35 = arith.constant dense<0.000000e+00> : vector<16x8xf32>
    %96 = tpu.matmul %95, %84, %cst_35 {dimension_numbers = #tpu.dot_dimension_numbers<[1], [0], [0], [1], [0, 0, 1, 1], [], []>} : vector<16x16xf32>, vector<16x8xf32>, vector<16x8xf32> -> vector<16x8xf32>
    "tpu.trace_stop"() : () -> ()
    %97 = tpu.concatenate %51, %66, %81, %96 in 1 : vector<16x8xf32>, vector<16x8xf32>, vector<16x8xf32>, vector<16x8xf32> -> vector<16x32xf32>
    %98 = arith.addf %8, %97 : vector<16x32xf32>
    %c0_36 = arith.constant 0 : index
    %c0_37 = arith.constant 0 : index
    %c0_38 = arith.constant 0 : index
    %99 = vector.load %arg9[%c0_36, %c0_37, %c0_38] : memref<2x1x32xf32, #tpu.memory_space<vmem>>, vector<1x1x32xf32>
    %100 = vector.shape_cast %99 : vector<1x1x32xf32> to vector<1x32xf32>
    %c0_39 = arith.constant 0 : index
    %c0_40 = arith.constant 0 : index
    %c0_41 = arith.constant 0 : index
    %101 = vector.load %arg10[%c0_39, %c0_40, %c0_41] : memref<2x1x32xf32, #tpu.memory_space<vmem>>, vector<1x1x32xf32>
    %102 = vector.shape_cast %101 : vector<1x1x32xf32> to vector<1x32xf32>
    %cst_42 = arith.constant dense<0.000000e+00> : vector<16xf32>
    %103 = vector.multi_reduction <add>, %98, %cst_42 [1] : vector<16x32xf32> to vector<16xf32>
    %104 = vector.shape_cast %103 : vector<16xf32> to vector<16x1xf32>
    %cst_43 = arith.constant 3.200000e+01 : f32
    %105 = vector.broadcast %cst_43 : f32 to vector<16x1xf32>
    %106 = arith.divf %104, %105 : vector<16x1xf32>
    %107 = vector.broadcast %106 : vector<16x1xf32> to vector<16x32xf32>
    %108 = arith.subf %98, %107 : vector<16x32xf32>
    %109 = arith.mulf %108, %108 : vector<16x32xf32>
    %cst_44 = arith.constant dense<0.000000e+00> : vector<16xf32>
    %110 = vector.multi_reduction <add>, %109, %cst_44 [1] : vector<16x32xf32> to vector<16xf32>
    %111 = vector.shape_cast %110 : vector<16xf32> to vector<16x1xf32>
    %cst_45 = arith.constant 3.200000e+01 : f32
    %112 = vector.broadcast %cst_45 : f32 to vector<16x1xf32>
    %113 = arith.divf %111, %112 : vector<16x1xf32>
    %114 = vector.broadcast %106 : vector<16x1xf32> to vector<16x32xf32>
    %115 = arith.subf %98, %114 : vector<16x32xf32>
    %cst_46 = arith.constant 9.99999974E-6 : f32
    %116 = vector.broadcast %cst_46 : f32 to vector<16x1xf32>
    %117 = arith.addf %113, %116 : vector<16x1xf32>
    %118 = math.rsqrt %117 : vector<16x1xf32>
    %119 = vector.broadcast %118 : vector<16x1xf32> to vector<16x32xf32>
    %120 = arith.mulf %115, %119 : vector<16x32xf32>
    %121 = vector.broadcast %100 : vector<1x32xf32> to vector<16x32xf32>
    %122 = arith.mulf %120, %121 : vector<16x32xf32>
    %123 = vector.broadcast %102 : vector<1x32xf32> to vector<16x32xf32>
    %124 = arith.addf %122, %123 : vector<16x32xf32>
    %c0_47 = arith.constant 0 : index
    %c0_48 = arith.constant 0 : index
    %c0_49 = arith.constant 0 : index
    %125 = vector.load %arg11[%c0_47, %c0_48, %c0_49] : memref<2x32x64xf32, #tpu.memory_space<vmem>>, vector<1x32x64xf32>
    %126 = vector.shape_cast %125 : vector<1x32x64xf32> to vector<32x64xf32>
    %c0_50 = arith.constant 0 : index
    %c0_51 = arith.constant 0 : index
    %c0_52 = arith.constant 0 : index
    %127 = vector.load %arg12[%c0_50, %c0_51, %c0_52] : memref<2x1x64xf32, #tpu.memory_space<vmem>>, vector<1x1x64xf32>
    %128 = vector.shape_cast %127 : vector<1x1x64xf32> to vector<1x64xf32>
    %c0_53 = arith.constant 0 : index
    %c0_54 = arith.constant 0 : index
    %c0_55 = arith.constant 0 : index
    %129 = vector.load %arg13[%c0_53, %c0_54, %c0_55] : memref<2x64x32xf32, #tpu.memory_space<vmem>>, vector<1x64x32xf32>
    %130 = vector.shape_cast %129 : vector<1x64x32xf32> to vector<64x32xf32>
    %c0_56 = arith.constant 0 : index
    %c0_57 = arith.constant 0 : index
    %c0_58 = arith.constant 0 : index
    %131 = vector.load %arg14[%c0_56, %c0_57, %c0_58] : memref<2x1x32xf32, #tpu.memory_space<vmem>>, vector<1x1x32xf32>
    %132 = vector.shape_cast %131 : vector<1x1x32xf32> to vector<1x32xf32>
    %cst_59 = arith.constant dense<0.000000e+00> : vector<16x64xf32>
    %133 = tpu.matmul %124, %126, %cst_59 {dimension_numbers = #tpu.dot_dimension_numbers<[1], [0], [0], [1], [0, 0, 1, 1], [], []>} : vector<16x32xf32>, vector<32x64xf32>, vector<16x64xf32> -> vector<16x64xf32>
    %134 = vector.broadcast %128 : vector<1x64xf32> to vector<16x64xf32>
    %135 = arith.addf %133, %134 : vector<16x64xf32>
    %cst_60 = arith.constant 0.000000e+00 : f32
    %136 = vector.broadcast %cst_60 : f32 to vector<16x64xf32>
    %137 = arith.maximumf %135, %136 : vector<16x64xf32>
    %cst_61 = arith.constant dense<0.000000e+00> : vector<16x32xf32>
    %138 = tpu.matmul %137, %130, %cst_61 {dimension_numbers = #tpu.dot_dimension_numbers<[1], [0], [0], [1], [0, 0, 1, 1], [], []>} : vector<16x64xf32>, vector<64x32xf32>, vector<16x32xf32> -> vector<16x32xf32>
    %139 = vector.broadcast %132 : vector<1x32xf32> to vector<16x32xf32>
    %140 = arith.addf %138, %139 : vector<16x32xf32>
    %141 = arith.addf %124, %140 : vector<16x32xf32>
    %c1 = arith.constant 1 : index
    %c0_62 = arith.constant 0 : index
    %c0_63 = arith.constant 0 : index
    %142 = vector.load %arg7[%c1, %c0_62, %c0_63] : memref<2x1x32xf32, #tpu.memory_space<vmem>>, vector<1x1x32xf32>
    %143 = vector.shape_cast %142 : vector<1x1x32xf32> to vector<1x32xf32>
    %c1_64 = arith.constant 1 : index
    %c0_65 = arith.constant 0 : index
    %c0_66 = arith.constant 0 : index
    %144 = vector.load %arg8[%c1_64, %c0_65, %c0_66] : memref<2x1x32xf32, #tpu.memory_space<vmem>>, vector<1x1x32xf32>
    %145 = vector.shape_cast %144 : vector<1x1x32xf32> to vector<1x32xf32>
    %cst_67 = arith.constant dense<0.000000e+00> : vector<16xf32>
    %146 = vector.multi_reduction <add>, %141, %cst_67 [1] : vector<16x32xf32> to vector<16xf32>
    %147 = vector.shape_cast %146 : vector<16xf32> to vector<16x1xf32>
    %cst_68 = arith.constant 3.200000e+01 : f32
    %148 = vector.broadcast %cst_68 : f32 to vector<16x1xf32>
    %149 = arith.divf %147, %148 : vector<16x1xf32>
    %150 = vector.broadcast %149 : vector<16x1xf32> to vector<16x32xf32>
    %151 = arith.subf %141, %150 : vector<16x32xf32>
    %152 = arith.mulf %151, %151 : vector<16x32xf32>
    %cst_69 = arith.constant dense<0.000000e+00> : vector<16xf32>
    %153 = vector.multi_reduction <add>, %152, %cst_69 [1] : vector<16x32xf32> to vector<16xf32>
    %154 = vector.shape_cast %153 : vector<16xf32> to vector<16x1xf32>
    %cst_70 = arith.constant 3.200000e+01 : f32
    %155 = vector.broadcast %cst_70 : f32 to vector<16x1xf32>
    %156 = arith.divf %154, %155 : vector<16x1xf32>
    %157 = vector.broadcast %149 : vector<16x1xf32> to vector<16x32xf32>
    %158 = arith.subf %141, %157 : vector<16x32xf32>
    %cst_71 = arith.constant 9.99999974E-6 : f32
    %159 = vector.broadcast %cst_71 : f32 to vector<16x1xf32>
    %160 = arith.addf %156, %159 : vector<16x1xf32>
    %161 = math.rsqrt %160 : vector<16x1xf32>
    %162 = vector.broadcast %161 : vector<16x1xf32> to vector<16x32xf32>
    %163 = arith.mulf %158, %162 : vector<16x32xf32>
    %164 = vector.broadcast %143 : vector<1x32xf32> to vector<16x32xf32>
    %165 = arith.mulf %163, %164 : vector<16x32xf32>
    %166 = vector.broadcast %145 : vector<1x32xf32> to vector<16x32xf32>
    %167 = arith.addf %165, %166 : vector<16x32xf32>
    %cst_72 = arith.constant 0.353553385 : f32
    %168 = vector.broadcast %cst_72 : f32 to vector<16x32xf32>
    %169 = arith.mulf %167, %168 : vector<16x32xf32>
    %170 = vector.extract_strided_slice %169 {offsets = [0, 0], sizes = [16, 8], strides = [1, 1]} : vector<16x32xf32> to vector<16x8xf32>
    %171 = vector.extract_strided_slice %167 {offsets = [0, 0], sizes = [16, 8], strides = [1, 1]} : vector<16x32xf32> to vector<16x8xf32>
    %172 = vector.extract_strided_slice %167 {offsets = [0, 0], sizes = [16, 8], strides = [1, 1]} : vector<16x32xf32> to vector<16x8xf32>
    "tpu.trace_start"() <{level = 10 : i32, message = "qd,kd->qk"}> : () -> ()
    %cst_73 = arith.constant dense<0.000000e+00> : vector<16x16xf32>
    %173 = tpu.matmul %170, %171, %cst_73 {dimension_numbers = #tpu.dot_dimension_numbers<[1], [1], [0], [0], [0, 0, 1, 0], [], []>} : vector<16x8xf32>, vector<16x8xf32>, vector<16x16xf32> -> vector<16x16xf32>
    "tpu.trace_stop"() : () -> ()
    %174 = arith.addf %173, %1 : vector<16x16xf32>
    %cst_74 = arith.constant dense<0xFF800000> : vector<16xf32>
    %175 = vector.multi_reduction <maximumf>, %174, %cst_74 [1] : vector<16x16xf32> to vector<16xf32>
    %176 = vector.shape_cast %175 : vector<16xf32> to vector<16x1xf32>
    %177 = vector.broadcast %176 : vector<16x1xf32> to vector<16x16xf32>
    %178 = arith.subf %174, %177 : vector<16x16xf32>
    %179 = math.exp %178 : vector<16x16xf32>
    %cst_75 = arith.constant dense<0.000000e+00> : vector<16xf32>
    %180 = vector.multi_reduction <add>, %179, %cst_75 [1] : vector<16x16xf32> to vector<16xf32>
    %181 = vector.shape_cast %180 : vector<16xf32> to vector<16x1xf32>
    %182 = vector.broadcast %181 : vector<16x1xf32> to vector<16x16xf32>
    %183 = arith.divf %179, %182 : vector<16x16xf32>
    "tpu.trace_start"() <{level = 10 : i32, message = "qk,kd->qd"}> : () -> ()
    %cst_76 = arith.constant dense<0.000000e+00> : vector<16x8xf32>
    %184 = tpu.matmul %183, %172, %cst_76 {dimension_numbers = #tpu.dot_dimension_numbers<[1], [0], [0], [1], [0, 0, 1, 1], [], []>} : vector<16x16xf32>, vector<16x8xf32>, vector<16x8xf32> -> vector<16x8xf32>
    "tpu.trace_stop"() : () -> ()
    %185 = vector.extract_strided_slice %169 {offsets = [0, 8], sizes = [16, 8], strides = [1, 1]} : vector<16x32xf32> to vector<16x8xf32>
    %186 = vector.extract_strided_slice %167 {offsets = [0, 8], sizes = [16, 8], strides = [1, 1]} : vector<16x32xf32> to vector<16x8xf32>
    %187 = vector.extract_strided_slice %167 {offsets = [0, 8], sizes = [16, 8], strides = [1, 1]} : vector<16x32xf32> to vector<16x8xf32>
    "tpu.trace_start"() <{level = 10 : i32, message = "qd,kd->qk"}> : () -> ()
    %cst_77 = arith.constant dense<0.000000e+00> : vector<16x16xf32>
    %188 = tpu.matmul %185, %186, %cst_77 {dimension_numbers = #tpu.dot_dimension_numbers<[1], [1], [0], [0], [0, 0, 1, 0], [], []>} : vector<16x8xf32>, vector<16x8xf32>, vector<16x16xf32> -> vector<16x16xf32>
    "tpu.trace_stop"() : () -> ()
    %189 = arith.addf %188, %1 : vector<16x16xf32>
    %cst_78 = arith.constant dense<0xFF800000> : vector<16xf32>
    %190 = vector.multi_reduction <maximumf>, %189, %cst_78 [1] : vector<16x16xf32> to vector<16xf32>
    %191 = vector.shape_cast %190 : vector<16xf32> to vector<16x1xf32>
    %192 = vector.broadcast %191 : vector<16x1xf32> to vector<16x16xf32>
    %193 = arith.subf %189, %192 : vector<16x16xf32>
    %194 = math.exp %193 : vector<16x16xf32>
    %cst_79 = arith.constant dense<0.000000e+00> : vector<16xf32>
    %195 = vector.multi_reduction <add>, %194, %cst_79 [1] : vector<16x16xf32> to vector<16xf32>
    %196 = vector.shape_cast %195 : vector<16xf32> to vector<16x1xf32>
    %197 = vector.broadcast %196 : vector<16x1xf32> to vector<16x16xf32>
    %198 = arith.divf %194, %197 : vector<16x16xf32>
    "tpu.trace_start"() <{level = 10 : i32, message = "qk,kd->qd"}> : () -> ()
    %cst_80 = arith.constant dense<0.000000e+00> : vector<16x8xf32>
    %199 = tpu.matmul %198, %187, %cst_80 {dimension_numbers = #tpu.dot_dimension_numbers<[1], [0], [0], [1], [0, 0, 1, 1], [], []>} : vector<16x16xf32>, vector<16x8xf32>, vector<16x8xf32> -> vector<16x8xf32>
    "tpu.trace_stop"() : () -> ()
    %200 = vector.extract_strided_slice %169 {offsets = [0, 16], sizes = [16, 8], strides = [1, 1]} : vector<16x32xf32> to vector<16x8xf32>
    %201 = vector.extract_strided_slice %167 {offsets = [0, 16], sizes = [16, 8], strides = [1, 1]} : vector<16x32xf32> to vector<16x8xf32>
    %202 = vector.extract_strided_slice %167 {offsets = [0, 16], sizes = [16, 8], strides = [1, 1]} : vector<16x32xf32> to vector<16x8xf32>
    "tpu.trace_start"() <{level = 10 : i32, message = "qd,kd->qk"}> : () -> ()
    %cst_81 = arith.constant dense<0.000000e+00> : vector<16x16xf32>
    %203 = tpu.matmul %200, %201, %cst_81 {dimension_numbers = #tpu.dot_dimension_numbers<[1], [1], [0], [0], [0, 0, 1, 0], [], []>} : vector<16x8xf32>, vector<16x8xf32>, vector<16x16xf32> -> vector<16x16xf32>
    "tpu.trace_stop"() : () -> ()
    %204 = arith.addf %203, %1 : vector<16x16xf32>
    %cst_82 = arith.constant dense<0xFF800000> : vector<16xf32>
    %205 = vector.multi_reduction <maximumf>, %204, %cst_82 [1] : vector<16x16xf32> to vector<16xf32>
    %206 = vector.shape_cast %205 : vector<16xf32> to vector<16x1xf32>
    %207 = vector.broadcast %206 : vector<16x1xf32> to vector<16x16xf32>
    %208 = arith.subf %204, %207 : vector<16x16xf32>
    %209 = math.exp %208 : vector<16x16xf32>
    %cst_83 = arith.constant dense<0.000000e+00> : vector<16xf32>
    %210 = vector.multi_reduction <add>, %209, %cst_83 [1] : vector<16x16xf32> to vector<16xf32>
    %211 = vector.shape_cast %210 : vector<16xf32> to vector<16x1xf32>
    %212 = vector.broadcast %211 : vector<16x1xf32> to vector<16x16xf32>
    %213 = arith.divf %209, %212 : vector<16x16xf32>
    "tpu.trace_start"() <{level = 10 : i32, message = "qk,kd->qd"}> : () -> ()
    %cst_84 = arith.constant dense<0.000000e+00> : vector<16x8xf32>
    %214 = tpu.matmul %213, %202, %cst_84 {dimension_numbers = #tpu.dot_dimension_numbers<[1], [0], [0], [1], [0, 0, 1, 1], [], []>} : vector<16x16xf32>, vector<16x8xf32>, vector<16x8xf32> -> vector<16x8xf32>
    "tpu.trace_stop"() : () -> ()
    %215 = vector.extract_strided_slice %169 {offsets = [0, 24], sizes = [16, 8], strides = [1, 1]} : vector<16x32xf32> to vector<16x8xf32>
    %216 = vector.extract_strided_slice %167 {offsets = [0, 24], sizes = [16, 8], strides = [1, 1]} : vector<16x32xf32> to vector<16x8xf32>
    %217 = vector.extract_strided_slice %167 {offsets = [0, 24], sizes = [16, 8], strides = [1, 1]} : vector<16x32xf32> to vector<16x8xf32>
    "tpu.trace_start"() <{level = 10 : i32, message = "qd,kd->qk"}> : () -> ()
    %cst_85 = arith.constant dense<0.000000e+00> : vector<16x16xf32>
    %218 = tpu.matmul %215, %216, %cst_85 {dimension_numbers = #tpu.dot_dimension_numbers<[1], [1], [0], [0], [0, 0, 1, 0], [], []>} : vector<16x8xf32>, vector<16x8xf32>, vector<16x16xf32> -> vector<16x16xf32>
    "tpu.trace_stop"() : () -> ()
    %219 = arith.addf %218, %1 : vector<16x16xf32>
    %cst_86 = arith.constant dense<0xFF800000> : vector<16xf32>
    %220 = vector.multi_reduction <maximumf>, %219, %cst_86 [1] : vector<16x16xf32> to vector<16xf32>
    %221 = vector.shape_cast %220 : vector<16xf32> to vector<16x1xf32>
    %222 = vector.broadcast %221 : vector<16x1xf32> to vector<16x16xf32>
    %223 = arith.subf %219, %222 : vector<16x16xf32>
    %224 = math.exp %223 : vector<16x16xf32>
    %cst_87 = arith.constant dense<0.000000e+00> : vector<16xf32>
    %225 = vector.multi_reduction <add>, %224, %cst_87 [1] : vector<16x16xf32> to vector<16xf32>
    %226 = vector.shape_cast %225 : vector<16xf32> to vector<16x1xf32>
    %227 = vector.broadcast %226 : vector<16x1xf32> to vector<16x16xf32>
    %228 = arith.divf %224, %227 : vector<16x16xf32>
    "tpu.trace_start"() <{level = 10 : i32, message = "qk,kd->qd"}> : () -> ()
    %cst_88 = arith.constant dense<0.000000e+00> : vector<16x8xf32>
    %229 = tpu.matmul %228, %217, %cst_88 {dimension_numbers = #tpu.dot_dimension_numbers<[1], [0], [0], [1], [0, 0, 1, 1], [], []>} : vector<16x16xf32>, vector<16x8xf32>, vector<16x8xf32> -> vector<16x8xf32>
    "tpu.trace_stop"() : () -> ()
    %230 = tpu.concatenate %184, %199, %214, %229 in 1 : vector<16x8xf32>, vector<16x8xf32>, vector<16x8xf32>, vector<16x8xf32> -> vector<16x32xf32>
    %231 = arith.addf %141, %230 : vector<16x32xf32>
    %c1_89 = arith.constant 1 : index
    %c0_90 = arith.constant 0 : index
    %c0_91 = arith.constant 0 : index
    %232 = vector.load %arg9[%c1_89, %c0_90, %c0_91] : memref<2x1x32xf32, #tpu.memory_space<vmem>>, vector<1x1x32xf32>
    %233 = vector.shape_cast %232 : vector<1x1x32xf32> to vector<1x32xf32>
    %c1_92 = arith.constant 1 : index
    %c0_93 = arith.constant 0 : index
    %c0_94 = arith.constant 0 : index
    %234 = vector.load %arg10[%c1_92, %c0_93, %c0_94] : memref<2x1x32xf32, #tpu.memory_space<vmem>>, vector<1x1x32xf32>
    %235 = vector.shape_cast %234 : vector<1x1x32xf32> to vector<1x32xf32>
    %cst_95 = arith.constant dense<0.000000e+00> : vector<16xf32>
    %236 = vector.multi_reduction <add>, %231, %cst_95 [1] : vector<16x32xf32> to vector<16xf32>
    %237 = vector.shape_cast %236 : vector<16xf32> to vector<16x1xf32>
    %cst_96 = arith.constant 3.200000e+01 : f32
    %238 = vector.broadcast %cst_96 : f32 to vector<16x1xf32>
    %239 = arith.divf %237, %238 : vector<16x1xf32>
    %240 = vector.broadcast %239 : vector<16x1xf32> to vector<16x32xf32>
    %241 = arith.subf %231, %240 : vector<16x32xf32>
    %242 = arith.mulf %241, %241 : vector<16x32xf32>
    %cst_97 = arith.constant dense<0.000000e+00> : vector<16xf32>
    %243 = vector.multi_reduction <add>, %242, %cst_97 [1] : vector<16x32xf32> to vector<16xf32>
    %244 = vector.shape_cast %243 : vector<16xf32> to vector<16x1xf32>
    %cst_98 = arith.constant 3.200000e+01 : f32
    %245 = vector.broadcast %cst_98 : f32 to vector<16x1xf32>
    %246 = arith.divf %244, %245 : vector<16x1xf32>
    %247 = vector.broadcast %239 : vector<16x1xf32> to vector<16x32xf32>
    %248 = arith.subf %231, %247 : vector<16x32xf32>
    %cst_99 = arith.constant 9.99999974E-6 : f32
    %249 = vector.broadcast %cst_99 : f32 to vector<16x1xf32>
    %250 = arith.addf %246, %249 : vector<16x1xf32>
    %251 = math.rsqrt %250 : vector<16x1xf32>
    %252 = vector.broadcast %251 : vector<16x1xf32> to vector<16x32xf32>
    %253 = arith.mulf %248, %252 : vector<16x32xf32>
    %254 = vector.broadcast %233 : vector<1x32xf32> to vector<16x32xf32>
    %255 = arith.mulf %253, %254 : vector<16x32xf32>
    %256 = vector.broadcast %235 : vector<1x32xf32> to vector<16x32xf32>
    %257 = arith.addf %255, %256 : vector<16x32xf32>
    %c1_100 = arith.constant 1 : index
    %c0_101 = arith.constant 0 : index
    %c0_102 = arith.constant 0 : index
    %258 = vector.load %arg11[%c1_100, %c0_101, %c0_102] : memref<2x32x64xf32, #tpu.memory_space<vmem>>, vector<1x32x64xf32>
    %259 = vector.shape_cast %258 : vector<1x32x64xf32> to vector<32x64xf32>
    %c1_103 = arith.constant 1 : index
    %c0_104 = arith.constant 0 : index
    %c0_105 = arith.constant 0 : index
    %260 = vector.load %arg12[%c1_103, %c0_104, %c0_105] : memref<2x1x64xf32, #tpu.memory_space<vmem>>, vector<1x1x64xf32>
    %261 = vector.shape_cast %260 : vector<1x1x64xf32> to vector<1x64xf32>
    %c1_106 = arith.constant 1 : index
    %c0_107 = arith.constant 0 : index
    %c0_108 = arith.constant 0 : index
    %262 = vector.load %arg13[%c1_106, %c0_107, %c0_108] : memref<2x64x32xf32, #tpu.memory_space<vmem>>, vector<1x64x32xf32>
    %263 = vector.shape_cast %262 : vector<1x64x32xf32> to vector<64x32xf32>
    %c1_109 = arith.constant 1 : index
    %c0_110 = arith.constant 0 : index
    %c0_111 = arith.constant 0 : index
    %264 = vector.load %arg14[%c1_109, %c0_110, %c0_111] : memref<2x1x32xf32, #tpu.memory_space<vmem>>, vector<1x1x32xf32>
    %265 = vector.shape_cast %264 : vector<1x1x32xf32> to vector<1x32xf32>
    %cst_112 = arith.constant dense<0.000000e+00> : vector<16x64xf32>
    %266 = tpu.matmul %257, %259, %cst_112 {dimension_numbers = #tpu.dot_dimension_numbers<[1], [0], [0], [1], [0, 0, 1, 1], [], []>} : vector<16x32xf32>, vector<32x64xf32>, vector<16x64xf32> -> vector<16x64xf32>
    %267 = vector.broadcast %261 : vector<1x64xf32> to vector<16x64xf32>
    %268 = arith.addf %266, %267 : vector<16x64xf32>
    %cst_113 = arith.constant 0.000000e+00 : f32
    %269 = vector.broadcast %cst_113 : f32 to vector<16x64xf32>
    %270 = arith.maximumf %268, %269 : vector<16x64xf32>
    %cst_114 = arith.constant dense<0.000000e+00> : vector<16x32xf32>
    %271 = tpu.matmul %270, %263, %cst_114 {dimension_numbers = #tpu.dot_dimension_numbers<[1], [0], [0], [1], [0, 0, 1, 1], [], []>} : vector<16x64xf32>, vector<64x32xf32>, vector<16x32xf32> -> vector<16x32xf32>
    %272 = vector.broadcast %265 : vector<1x32xf32> to vector<16x32xf32>
    %273 = arith.addf %271, %272 : vector<16x32xf32>
    %274 = arith.addf %257, %273 : vector<16x32xf32>
    %c0_115 = arith.constant 0 : index
    %c0_116 = arith.constant 0 : index
    %275 = vector.load %arg15[%c0_115, %c0_116] : memref<1x32xf32, #tpu.memory_space<vmem>>, vector<1x32xf32>
    %c0_117 = arith.constant 0 : index
    %c0_118 = arith.constant 0 : index
    %276 = vector.load %arg16[%c0_117, %c0_118] : memref<1x32xf32, #tpu.memory_space<vmem>>, vector<1x32xf32>
    %cst_119 = arith.constant dense<0.000000e+00> : vector<16xf32>
    %277 = vector.multi_reduction <add>, %274, %cst_119 [1] : vector<16x32xf32> to vector<16xf32>
    %278 = vector.shape_cast %277 : vector<16xf32> to vector<16x1xf32>
    %cst_120 = arith.constant 3.200000e+01 : f32
    %279 = vector.broadcast %cst_120 : f32 to vector<16x1xf32>
    %280 = arith.divf %278, %279 : vector<16x1xf32>
    %281 = vector.broadcast %280 : vector<16x1xf32> to vector<16x32xf32>
    %282 = arith.subf %274, %281 : vector<16x32xf32>
    %283 = arith.mulf %282, %282 : vector<16x32xf32>
    %cst_121 = arith.constant dense<0.000000e+00> : vector<16xf32>
    %284 = vector.multi_reduction <add>, %283, %cst_121 [1] : vector<16x32xf32> to vector<16xf32>
    %285 = vector.shape_cast %284 : vector<16xf32> to vector<16x1xf32>
    %cst_122 = arith.constant 3.200000e+01 : f32
    %286 = vector.broadcast %cst_122 : f32 to vector<16x1xf32>
    %287 = arith.divf %285, %286 : vector<16x1xf32>
    %288 = vector.broadcast %280 : vector<16x1xf32> to vector<16x32xf32>
    %289 = arith.subf %274, %288 : vector<16x32xf32>
    %cst_123 = arith.constant 9.99999974E-6 : f32
    %290 = vector.broadcast %cst_123 : f32 to vector<16x1xf32>
    %291 = arith.addf %287, %290 : vector<16x1xf32>
    %292 = math.rsqrt %291 : vector<16x1xf32>
    %293 = vector.broadcast %292 : vector<16x1xf32> to vector<16x32xf32>
    %294 = arith.mulf %289, %293 : vector<16x32xf32>
    %295 = vector.broadcast %275 : vector<1x32xf32> to vector<16x32xf32>
    %296 = arith.mulf %294, %295 : vector<16x32xf32>
    %297 = vector.broadcast %276 : vector<1x32xf32> to vector<16x32xf32>
    %298 = arith.addf %296, %297 : vector<16x32xf32>
    %c0_124 = arith.constant 0 : index
    %c0_125 = arith.constant 0 : index
    %299 = vector.load %arg5[%c0_124, %c0_125] : memref<16x32xf32, #tpu.memory_space<vmem>>, vector<16x32xf32>
    %300 = vector.broadcast %0 : vector<16x1xf32> to vector<16x32xf32>
    %301 = arith.mulf %300, %299 : vector<16x32xf32>
    %c0_126 = arith.constant 0 : index
    %c0_127 = arith.constant 0 : index
    %302 = vector.load %arg6[%c0_126, %c0_127] : memref<16x32xf32, #tpu.memory_space<vmem>>, vector<16x32xf32>
    %303 = arith.addf %301, %302 : vector<16x32xf32>
    %304 = arith.addf %303, %2 : vector<16x32xf32>
    %c0_128 = arith.constant 0 : index
    %c0_129 = arith.constant 0 : index
    %c0_130 = arith.constant 0 : index
    %305 = vector.load %arg17[%c0_128, %c0_129, %c0_130] : memref<2x1x32xf32, #tpu.memory_space<vmem>>, vector<1x1x32xf32>
    %306 = vector.shape_cast %305 : vector<1x1x32xf32> to vector<1x32xf32>
    %c0_131 = arith.constant 0 : index
    %c0_132 = arith.constant 0 : index
    %c0_133 = arith.constant 0 : index
    %307 = vector.load %arg18[%c0_131, %c0_132, %c0_133] : memref<2x1x32xf32, #tpu.memory_space<vmem>>, vector<1x1x32xf32>
    %308 = vector.shape_cast %307 : vector<1x1x32xf32> to vector<1x32xf32>
    %cst_134 = arith.constant dense<0.000000e+00> : vector<16xf32>
    %309 = vector.multi_reduction <add>, %304, %cst_134 [1] : vector<16x32xf32> to vector<16xf32>
    %310 = vector.shape_cast %309 : vector<16xf32> to vector<16x1xf32>
    %cst_135 = arith.constant 3.200000e+01 : f32
    %311 = vector.broadcast %cst_135 : f32 to vector<16x1xf32>
    %312 = arith.divf %310, %311 : vector<16x1xf32>
    %313 = vector.broadcast %312 : vector<16x1xf32> to vector<16x32xf32>
    %314 = arith.subf %304, %313 : vector<16x32xf32>
    %315 = arith.mulf %314, %314 : vector<16x32xf32>
    %cst_136 = arith.constant dense<0.000000e+00> : vector<16xf32>
    %316 = vector.multi_reduction <add>, %315, %cst_136 [1] : vector<16x32xf32> to vector<16xf32>
    %317 = vector.shape_cast %316 : vector<16xf32> to vector<16x1xf32>
    %cst_137 = arith.constant 3.200000e+01 : f32
    %318 = vector.broadcast %cst_137 : f32 to vector<16x1xf32>
    %319 = arith.divf %317, %318 : vector<16x1xf32>
    %320 = vector.broadcast %312 : vector<16x1xf32> to vector<16x32xf32>
    %321 = arith.subf %304, %320 : vector<16x32xf32>
    %cst_138 = arith.constant 9.99999974E-6 : f32
    %322 = vector.broadcast %cst_138 : f32 to vector<16x1xf32>
    %323 = arith.addf %319, %322 : vector<16x1xf32>
    %324 = math.rsqrt %323 : vector<16x1xf32>
    %325 = vector.broadcast %324 : vector<16x1xf32> to vector<16x32xf32>
    %326 = arith.mulf %321, %325 : vector<16x32xf32>
    %327 = vector.broadcast %306 : vector<1x32xf32> to vector<16x32xf32>
    %328 = arith.mulf %326, %327 : vector<16x32xf32>
    %329 = vector.broadcast %308 : vector<1x32xf32> to vector<16x32xf32>
    %330 = arith.addf %328, %329 : vector<16x32xf32>
    %cst_139 = arith.constant 0.353553385 : f32
    %331 = vector.broadcast %cst_139 : f32 to vector<16x32xf32>
    %332 = arith.mulf %330, %331 : vector<16x32xf32>
    %333 = vector.extract_strided_slice %332 {offsets = [0, 0], sizes = [16, 8], strides = [1, 1]} : vector<16x32xf32> to vector<16x8xf32>
    %334 = vector.extract_strided_slice %330 {offsets = [0, 0], sizes = [16, 8], strides = [1, 1]} : vector<16x32xf32> to vector<16x8xf32>
    %335 = vector.extract_strided_slice %330 {offsets = [0, 0], sizes = [16, 8], strides = [1, 1]} : vector<16x32xf32> to vector<16x8xf32>
    "tpu.trace_start"() <{level = 10 : i32, message = "qd,kd->qk"}> : () -> ()
    %cst_140 = arith.constant dense<0.000000e+00> : vector<16x16xf32>
    %336 = tpu.matmul %333, %334, %cst_140 {dimension_numbers = #tpu.dot_dimension_numbers<[1], [1], [0], [0], [0, 0, 1, 0], [], []>} : vector<16x8xf32>, vector<16x8xf32>, vector<16x16xf32> -> vector<16x16xf32>
    "tpu.trace_stop"() : () -> ()
    %337 = arith.addf %336, %1 : vector<16x16xf32>
    %cst_141 = arith.constant dense<0xFF800000> : vector<16xf32>
    %338 = vector.multi_reduction <maximumf>, %337, %cst_141 [1] : vector<16x16xf32> to vector<16xf32>
    %339 = vector.shape_cast %338 : vector<16xf32> to vector<16x1xf32>
    %340 = vector.broadcast %339 : vector<16x1xf32> to vector<16x16xf32>
    %341 = arith.subf %337, %340 : vector<16x16xf32>
    %342 = math.exp %341 : vector<16x16xf32>
    %cst_142 = arith.constant dense<0.000000e+00> : vector<16xf32>
    %343 = vector.multi_reduction <add>, %342, %cst_142 [1] : vector<16x16xf32> to vector<16xf32>
    %344 = vector.shape_cast %343 : vector<16xf32> to vector<16x1xf32>
    %345 = vector.broadcast %344 : vector<16x1xf32> to vector<16x16xf32>
    %346 = arith.divf %342, %345 : vector<16x16xf32>
    "tpu.trace_start"() <{level = 10 : i32, message = "qk,kd->qd"}> : () -> ()
    %cst_143 = arith.constant dense<0.000000e+00> : vector<16x8xf32>
    %347 = tpu.matmul %346, %335, %cst_143 {dimension_numbers = #tpu.dot_dimension_numbers<[1], [0], [0], [1], [0, 0, 1, 1], [], []>} : vector<16x16xf32>, vector<16x8xf32>, vector<16x8xf32> -> vector<16x8xf32>
    "tpu.trace_stop"() : () -> ()
    %348 = vector.extract_strided_slice %332 {offsets = [0, 8], sizes = [16, 8], strides = [1, 1]} : vector<16x32xf32> to vector<16x8xf32>
    %349 = vector.extract_strided_slice %330 {offsets = [0, 8], sizes = [16, 8], strides = [1, 1]} : vector<16x32xf32> to vector<16x8xf32>
    %350 = vector.extract_strided_slice %330 {offsets = [0, 8], sizes = [16, 8], strides = [1, 1]} : vector<16x32xf32> to vector<16x8xf32>
    "tpu.trace_start"() <{level = 10 : i32, message = "qd,kd->qk"}> : () -> ()
    %cst_144 = arith.constant dense<0.000000e+00> : vector<16x16xf32>
    %351 = tpu.matmul %348, %349, %cst_144 {dimension_numbers = #tpu.dot_dimension_numbers<[1], [1], [0], [0], [0, 0, 1, 0], [], []>} : vector<16x8xf32>, vector<16x8xf32>, vector<16x16xf32> -> vector<16x16xf32>
    "tpu.trace_stop"() : () -> ()
    %352 = arith.addf %351, %1 : vector<16x16xf32>
    %cst_145 = arith.constant dense<0xFF800000> : vector<16xf32>
    %353 = vector.multi_reduction <maximumf>, %352, %cst_145 [1] : vector<16x16xf32> to vector<16xf32>
    %354 = vector.shape_cast %353 : vector<16xf32> to vector<16x1xf32>
    %355 = vector.broadcast %354 : vector<16x1xf32> to vector<16x16xf32>
    %356 = arith.subf %352, %355 : vector<16x16xf32>
    %357 = math.exp %356 : vector<16x16xf32>
    %cst_146 = arith.constant dense<0.000000e+00> : vector<16xf32>
    %358 = vector.multi_reduction <add>, %357, %cst_146 [1] : vector<16x16xf32> to vector<16xf32>
    %359 = vector.shape_cast %358 : vector<16xf32> to vector<16x1xf32>
    %360 = vector.broadcast %359 : vector<16x1xf32> to vector<16x16xf32>
    %361 = arith.divf %357, %360 : vector<16x16xf32>
    "tpu.trace_start"() <{level = 10 : i32, message = "qk,kd->qd"}> : () -> ()
    %cst_147 = arith.constant dense<0.000000e+00> : vector<16x8xf32>
    %362 = tpu.matmul %361, %350, %cst_147 {dimension_numbers = #tpu.dot_dimension_numbers<[1], [0], [0], [1], [0, 0, 1, 1], [], []>} : vector<16x16xf32>, vector<16x8xf32>, vector<16x8xf32> -> vector<16x8xf32>
    "tpu.trace_stop"() : () -> ()
    %363 = vector.extract_strided_slice %332 {offsets = [0, 16], sizes = [16, 8], strides = [1, 1]} : vector<16x32xf32> to vector<16x8xf32>
    %364 = vector.extract_strided_slice %330 {offsets = [0, 16], sizes = [16, 8], strides = [1, 1]} : vector<16x32xf32> to vector<16x8xf32>
    %365 = vector.extract_strided_slice %330 {offsets = [0, 16], sizes = [16, 8], strides = [1, 1]} : vector<16x32xf32> to vector<16x8xf32>
    "tpu.trace_start"() <{level = 10 : i32, message = "qd,kd->qk"}> : () -> ()
    %cst_148 = arith.constant dense<0.000000e+00> : vector<16x16xf32>
    %366 = tpu.matmul %363, %364, %cst_148 {dimension_numbers = #tpu.dot_dimension_numbers<[1], [1], [0], [0], [0, 0, 1, 0], [], []>} : vector<16x8xf32>, vector<16x8xf32>, vector<16x16xf32> -> vector<16x16xf32>
    "tpu.trace_stop"() : () -> ()
    %367 = arith.addf %366, %1 : vector<16x16xf32>
    %cst_149 = arith.constant dense<0xFF800000> : vector<16xf32>
    %368 = vector.multi_reduction <maximumf>, %367, %cst_149 [1] : vector<16x16xf32> to vector<16xf32>
    %369 = vector.shape_cast %368 : vector<16xf32> to vector<16x1xf32>
    %370 = vector.broadcast %369 : vector<16x1xf32> to vector<16x16xf32>
    %371 = arith.subf %367, %370 : vector<16x16xf32>
    %372 = math.exp %371 : vector<16x16xf32>
    %cst_150 = arith.constant dense<0.000000e+00> : vector<16xf32>
    %373 = vector.multi_reduction <add>, %372, %cst_150 [1] : vector<16x16xf32> to vector<16xf32>
    %374 = vector.shape_cast %373 : vector<16xf32> to vector<16x1xf32>
    %375 = vector.broadcast %374 : vector<16x1xf32> to vector<16x16xf32>
    %376 = arith.divf %372, %375 : vector<16x16xf32>
    "tpu.trace_start"() <{level = 10 : i32, message = "qk,kd->qd"}> : () -> ()
    %cst_151 = arith.constant dense<0.000000e+00> : vector<16x8xf32>
    %377 = tpu.matmul %376, %365, %cst_151 {dimension_numbers = #tpu.dot_dimension_numbers<[1], [0], [0], [1], [0, 0, 1, 1], [], []>} : vector<16x16xf32>, vector<16x8xf32>, vector<16x8xf32> -> vector<16x8xf32>
    "tpu.trace_stop"() : () -> ()
    %378 = vector.extract_strided_slice %332 {offsets = [0, 24], sizes = [16, 8], strides = [1, 1]} : vector<16x32xf32> to vector<16x8xf32>
    %379 = vector.extract_strided_slice %330 {offsets = [0, 24], sizes = [16, 8], strides = [1, 1]} : vector<16x32xf32> to vector<16x8xf32>
    %380 = vector.extract_strided_slice %330 {offsets = [0, 24], sizes = [16, 8], strides = [1, 1]} : vector<16x32xf32> to vector<16x8xf32>
    "tpu.trace_start"() <{level = 10 : i32, message = "qd,kd->qk"}> : () -> ()
    %cst_152 = arith.constant dense<0.000000e+00> : vector<16x16xf32>
    %381 = tpu.matmul %378, %379, %cst_152 {dimension_numbers = #tpu.dot_dimension_numbers<[1], [1], [0], [0], [0, 0, 1, 0], [], []>} : vector<16x8xf32>, vector<16x8xf32>, vector<16x16xf32> -> vector<16x16xf32>
    "tpu.trace_stop"() : () -> ()
    %382 = arith.addf %381, %1 : vector<16x16xf32>
    %cst_153 = arith.constant dense<0xFF800000> : vector<16xf32>
    %383 = vector.multi_reduction <maximumf>, %382, %cst_153 [1] : vector<16x16xf32> to vector<16xf32>
    %384 = vector.shape_cast %383 : vector<16xf32> to vector<16x1xf32>
    %385 = vector.broadcast %384 : vector<16x1xf32> to vector<16x16xf32>
    %386 = arith.subf %382, %385 : vector<16x16xf32>
    %387 = math.exp %386 : vector<16x16xf32>
    %cst_154 = arith.constant dense<0.000000e+00> : vector<16xf32>
    %388 = vector.multi_reduction <add>, %387, %cst_154 [1] : vector<16x16xf32> to vector<16xf32>
    %389 = vector.shape_cast %388 : vector<16xf32> to vector<16x1xf32>
    %390 = vector.broadcast %389 : vector<16x1xf32> to vector<16x16xf32>
    %391 = arith.divf %387, %390 : vector<16x16xf32>
    "tpu.trace_start"() <{level = 10 : i32, message = "qk,kd->qd"}> : () -> ()
    %cst_155 = arith.constant dense<0.000000e+00> : vector<16x8xf32>
    %392 = tpu.matmul %391, %380, %cst_155 {dimension_numbers = #tpu.dot_dimension_numbers<[1], [0], [0], [1], [0, 0, 1, 1], [], []>} : vector<16x16xf32>, vector<16x8xf32>, vector<16x8xf32> -> vector<16x8xf32>
    "tpu.trace_stop"() : () -> ()
    %393 = tpu.concatenate %347, %362, %377, %392 in 1 : vector<16x8xf32>, vector<16x8xf32>, vector<16x8xf32>, vector<16x8xf32> -> vector<16x32xf32>
    %394 = arith.addf %304, %393 : vector<16x32xf32>
    %c0_156 = arith.constant 0 : index
    %c0_157 = arith.constant 0 : index
    %c0_158 = arith.constant 0 : index
    %395 = vector.load %arg19[%c0_156, %c0_157, %c0_158] : memref<2x1x32xf32, #tpu.memory_space<vmem>>, vector<1x1x32xf32>
    %396 = vector.shape_cast %395 : vector<1x1x32xf32> to vector<1x32xf32>
    %c0_159 = arith.constant 0 : index
    %c0_160 = arith.constant 0 : index
    %c0_161 = arith.constant 0 : index
    %397 = vector.load %arg20[%c0_159, %c0_160, %c0_161] : memref<2x1x32xf32, #tpu.memory_space<vmem>>, vector<1x1x32xf32>
    %398 = vector.shape_cast %397 : vector<1x1x32xf32> to vector<1x32xf32>
    %cst_162 = arith.constant dense<0.000000e+00> : vector<16xf32>
    %399 = vector.multi_reduction <add>, %394, %cst_162 [1] : vector<16x32xf32> to vector<16xf32>
    %400 = vector.shape_cast %399 : vector<16xf32> to vector<16x1xf32>
    %cst_163 = arith.constant 3.200000e+01 : f32
    %401 = vector.broadcast %cst_163 : f32 to vector<16x1xf32>
    %402 = arith.divf %400, %401 : vector<16x1xf32>
    %403 = vector.broadcast %402 : vector<16x1xf32> to vector<16x32xf32>
    %404 = arith.subf %394, %403 : vector<16x32xf32>
    %405 = arith.mulf %404, %404 : vector<16x32xf32>
    %cst_164 = arith.constant dense<0.000000e+00> : vector<16xf32>
    %406 = vector.multi_reduction <add>, %405, %cst_164 [1] : vector<16x32xf32> to vector<16xf32>
    %407 = vector.shape_cast %406 : vector<16xf32> to vector<16x1xf32>
    %cst_165 = arith.constant 3.200000e+01 : f32
    %408 = vector.broadcast %cst_165 : f32 to vector<16x1xf32>
    %409 = arith.divf %407, %408 : vector<16x1xf32>
    %410 = vector.broadcast %402 : vector<16x1xf32> to vector<16x32xf32>
    %411 = arith.subf %394, %410 : vector<16x32xf32>
    %cst_166 = arith.constant 9.99999974E-6 : f32
    %412 = vector.broadcast %cst_166 : f32 to vector<16x1xf32>
    %413 = arith.addf %409, %412 : vector<16x1xf32>
    %414 = math.rsqrt %413 : vector<16x1xf32>
    %415 = vector.broadcast %414 : vector<16x1xf32> to vector<16x32xf32>
    %416 = arith.mulf %411, %415 : vector<16x32xf32>
    %417 = vector.broadcast %396 : vector<1x32xf32> to vector<16x32xf32>
    %418 = arith.mulf %416, %417 : vector<16x32xf32>
    %419 = vector.broadcast %398 : vector<1x32xf32> to vector<16x32xf32>
    %420 = arith.addf %418, %419 : vector<16x32xf32>
    %cst_167 = arith.constant 0.353553385 : f32
    %421 = vector.broadcast %cst_167 : f32 to vector<16x32xf32>
    %422 = arith.mulf %420, %421 : vector<16x32xf32>
    %423 = vector.extract_strided_slice %422 {offsets = [0, 0], sizes = [16, 8], strides = [1, 1]} : vector<16x32xf32> to vector<16x8xf32>
    %424 = vector.extract_strided_slice %298 {offsets = [0, 0], sizes = [16, 8], strides = [1, 1]} : vector<16x32xf32> to vector<16x8xf32>
    %425 = vector.extract_strided_slice %298 {offsets = [0, 0], sizes = [16, 8], strides = [1, 1]} : vector<16x32xf32> to vector<16x8xf32>
    "tpu.trace_start"() <{level = 10 : i32, message = "qd,kd->qk"}> : () -> ()
    %cst_168 = arith.constant dense<0.000000e+00> : vector<16x16xf32>
    %426 = tpu.matmul %423, %424, %cst_168 {dimension_numbers = #tpu.dot_dimension_numbers<[1], [1], [0], [0], [0, 0, 1, 0], [], []>} : vector<16x8xf32>, vector<16x8xf32>, vector<16x16xf32> -> vector<16x16xf32>
    "tpu.trace_stop"() : () -> ()
    %427 = arith.addf %426, %1 : vector<16x16xf32>
    %cst_169 = arith.constant dense<0xFF800000> : vector<16xf32>
    %428 = vector.multi_reduction <maximumf>, %427, %cst_169 [1] : vector<16x16xf32> to vector<16xf32>
    %429 = vector.shape_cast %428 : vector<16xf32> to vector<16x1xf32>
    %430 = vector.broadcast %429 : vector<16x1xf32> to vector<16x16xf32>
    %431 = arith.subf %427, %430 : vector<16x16xf32>
    %432 = math.exp %431 : vector<16x16xf32>
    %cst_170 = arith.constant dense<0.000000e+00> : vector<16xf32>
    %433 = vector.multi_reduction <add>, %432, %cst_170 [1] : vector<16x16xf32> to vector<16xf32>
    %434 = vector.shape_cast %433 : vector<16xf32> to vector<16x1xf32>
    %435 = vector.broadcast %434 : vector<16x1xf32> to vector<16x16xf32>
    %436 = arith.divf %432, %435 : vector<16x16xf32>
    "tpu.trace_start"() <{level = 10 : i32, message = "qk,kd->qd"}> : () -> ()
    %cst_171 = arith.constant dense<0.000000e+00> : vector<16x8xf32>
    %437 = tpu.matmul %436, %425, %cst_171 {dimension_numbers = #tpu.dot_dimension_numbers<[1], [0], [0], [1], [0, 0, 1, 1], [], []>} : vector<16x16xf32>, vector<16x8xf32>, vector<16x8xf32> -> vector<16x8xf32>
    "tpu.trace_stop"() : () -> ()
    %438 = vector.extract_strided_slice %422 {offsets = [0, 8], sizes = [16, 8], strides = [1, 1]} : vector<16x32xf32> to vector<16x8xf32>
    %439 = vector.extract_strided_slice %298 {offsets = [0, 8], sizes = [16, 8], strides = [1, 1]} : vector<16x32xf32> to vector<16x8xf32>
    %440 = vector.extract_strided_slice %298 {offsets = [0, 8], sizes = [16, 8], strides = [1, 1]} : vector<16x32xf32> to vector<16x8xf32>
    "tpu.trace_start"() <{level = 10 : i32, message = "qd,kd->qk"}> : () -> ()
    %cst_172 = arith.constant dense<0.000000e+00> : vector<16x16xf32>
    %441 = tpu.matmul %438, %439, %cst_172 {dimension_numbers = #tpu.dot_dimension_numbers<[1], [1], [0], [0], [0, 0, 1, 0], [], []>} : vector<16x8xf32>, vector<16x8xf32>, vector<16x16xf32> -> vector<16x16xf32>
    "tpu.trace_stop"() : () -> ()
    %442 = arith.addf %441, %1 : vector<16x16xf32>
    %cst_173 = arith.constant dense<0xFF800000> : vector<16xf32>
    %443 = vector.multi_reduction <maximumf>, %442, %cst_173 [1] : vector<16x16xf32> to vector<16xf32>
    %444 = vector.shape_cast %443 : vector<16xf32> to vector<16x1xf32>
    %445 = vector.broadcast %444 : vector<16x1xf32> to vector<16x16xf32>
    %446 = arith.subf %442, %445 : vector<16x16xf32>
    %447 = math.exp %446 : vector<16x16xf32>
    %cst_174 = arith.constant dense<0.000000e+00> : vector<16xf32>
    %448 = vector.multi_reduction <add>, %447, %cst_174 [1] : vector<16x16xf32> to vector<16xf32>
    %449 = vector.shape_cast %448 : vector<16xf32> to vector<16x1xf32>
    %450 = vector.broadcast %449 : vector<16x1xf32> to vector<16x16xf32>
    %451 = arith.divf %447, %450 : vector<16x16xf32>
    "tpu.trace_start"() <{level = 10 : i32, message = "qk,kd->qd"}> : () -> ()
    %cst_175 = arith.constant dense<0.000000e+00> : vector<16x8xf32>
    %452 = tpu.matmul %451, %440, %cst_175 {dimension_numbers = #tpu.dot_dimension_numbers<[1], [0], [0], [1], [0, 0, 1, 1], [], []>} : vector<16x16xf32>, vector<16x8xf32>, vector<16x8xf32> -> vector<16x8xf32>
    "tpu.trace_stop"() : () -> ()
    %453 = vector.extract_strided_slice %422 {offsets = [0, 16], sizes = [16, 8], strides = [1, 1]} : vector<16x32xf32> to vector<16x8xf32>
    %454 = vector.extract_strided_slice %298 {offsets = [0, 16], sizes = [16, 8], strides = [1, 1]} : vector<16x32xf32> to vector<16x8xf32>
    %455 = vector.extract_strided_slice %298 {offsets = [0, 16], sizes = [16, 8], strides = [1, 1]} : vector<16x32xf32> to vector<16x8xf32>
    "tpu.trace_start"() <{level = 10 : i32, message = "qd,kd->qk"}> : () -> ()
    %cst_176 = arith.constant dense<0.000000e+00> : vector<16x16xf32>
    %456 = tpu.matmul %453, %454, %cst_176 {dimension_numbers = #tpu.dot_dimension_numbers<[1], [1], [0], [0], [0, 0, 1, 0], [], []>} : vector<16x8xf32>, vector<16x8xf32>, vector<16x16xf32> -> vector<16x16xf32>
    "tpu.trace_stop"() : () -> ()
    %457 = arith.addf %456, %1 : vector<16x16xf32>
    %cst_177 = arith.constant dense<0xFF800000> : vector<16xf32>
    %458 = vector.multi_reduction <maximumf>, %457, %cst_177 [1] : vector<16x16xf32> to vector<16xf32>
    %459 = vector.shape_cast %458 : vector<16xf32> to vector<16x1xf32>
    %460 = vector.broadcast %459 : vector<16x1xf32> to vector<16x16xf32>
    %461 = arith.subf %457, %460 : vector<16x16xf32>
    %462 = math.exp %461 : vector<16x16xf32>
    %cst_178 = arith.constant dense<0.000000e+00> : vector<16xf32>
    %463 = vector.multi_reduction <add>, %462, %cst_178 [1] : vector<16x16xf32> to vector<16xf32>
    %464 = vector.shape_cast %463 : vector<16xf32> to vector<16x1xf32>
    %465 = vector.broadcast %464 : vector<16x1xf32> to vector<16x16xf32>
    %466 = arith.divf %462, %465 : vector<16x16xf32>
    "tpu.trace_start"() <{level = 10 : i32, message = "qk,kd->qd"}> : () -> ()
    %cst_179 = arith.constant dense<0.000000e+00> : vector<16x8xf32>
    %467 = tpu.matmul %466, %455, %cst_179 {dimension_numbers = #tpu.dot_dimension_numbers<[1], [0], [0], [1], [0, 0, 1, 1], [], []>} : vector<16x16xf32>, vector<16x8xf32>, vector<16x8xf32> -> vector<16x8xf32>
    "tpu.trace_stop"() : () -> ()
    %468 = vector.extract_strided_slice %422 {offsets = [0, 24], sizes = [16, 8], strides = [1, 1]} : vector<16x32xf32> to vector<16x8xf32>
    %469 = vector.extract_strided_slice %298 {offsets = [0, 24], sizes = [16, 8], strides = [1, 1]} : vector<16x32xf32> to vector<16x8xf32>
    %470 = vector.extract_strided_slice %298 {offsets = [0, 24], sizes = [16, 8], strides = [1, 1]} : vector<16x32xf32> to vector<16x8xf32>
    "tpu.trace_start"() <{level = 10 : i32, message = "qd,kd->qk"}> : () -> ()
    %cst_180 = arith.constant dense<0.000000e+00> : vector<16x16xf32>
    %471 = tpu.matmul %468, %469, %cst_180 {dimension_numbers = #tpu.dot_dimension_numbers<[1], [1], [0], [0], [0, 0, 1, 0], [], []>} : vector<16x8xf32>, vector<16x8xf32>, vector<16x16xf32> -> vector<16x16xf32>
    "tpu.trace_stop"() : () -> ()
    %472 = arith.addf %471, %1 : vector<16x16xf32>
    %cst_181 = arith.constant dense<0xFF800000> : vector<16xf32>
    %473 = vector.multi_reduction <maximumf>, %472, %cst_181 [1] : vector<16x16xf32> to vector<16xf32>
    %474 = vector.shape_cast %473 : vector<16xf32> to vector<16x1xf32>
    %475 = vector.broadcast %474 : vector<16x1xf32> to vector<16x16xf32>
    %476 = arith.subf %472, %475 : vector<16x16xf32>
    %477 = math.exp %476 : vector<16x16xf32>
    %cst_182 = arith.constant dense<0.000000e+00> : vector<16xf32>
    %478 = vector.multi_reduction <add>, %477, %cst_182 [1] : vector<16x16xf32> to vector<16xf32>
    %479 = vector.shape_cast %478 : vector<16xf32> to vector<16x1xf32>
    %480 = vector.broadcast %479 : vector<16x1xf32> to vector<16x16xf32>
    %481 = arith.divf %477, %480 : vector<16x16xf32>
    "tpu.trace_start"() <{level = 10 : i32, message = "qk,kd->qd"}> : () -> ()
    %cst_183 = arith.constant dense<0.000000e+00> : vector<16x8xf32>
    %482 = tpu.matmul %481, %470, %cst_183 {dimension_numbers = #tpu.dot_dimension_numbers<[1], [0], [0], [1], [0, 0, 1, 1], [], []>} : vector<16x16xf32>, vector<16x8xf32>, vector<16x8xf32> -> vector<16x8xf32>
    "tpu.trace_stop"() : () -> ()
    %483 = tpu.concatenate %437, %452, %467, %482 in 1 : vector<16x8xf32>, vector<16x8xf32>, vector<16x8xf32>, vector<16x8xf32> -> vector<16x32xf32>
    %484 = arith.addf %394, %483 : vector<16x32xf32>
    %c0_184 = arith.constant 0 : index
    %c0_185 = arith.constant 0 : index
    %c0_186 = arith.constant 0 : index
    %485 = vector.load %arg21[%c0_184, %c0_185, %c0_186] : memref<2x1x32xf32, #tpu.memory_space<vmem>>, vector<1x1x32xf32>
    %486 = vector.shape_cast %485 : vector<1x1x32xf32> to vector<1x32xf32>
    %c0_187 = arith.constant 0 : index
    %c0_188 = arith.constant 0 : index
    %c0_189 = arith.constant 0 : index
    %487 = vector.load %arg22[%c0_187, %c0_188, %c0_189] : memref<2x1x32xf32, #tpu.memory_space<vmem>>, vector<1x1x32xf32>
    %488 = vector.shape_cast %487 : vector<1x1x32xf32> to vector<1x32xf32>
    %cst_190 = arith.constant dense<0.000000e+00> : vector<16xf32>
    %489 = vector.multi_reduction <add>, %484, %cst_190 [1] : vector<16x32xf32> to vector<16xf32>
    %490 = vector.shape_cast %489 : vector<16xf32> to vector<16x1xf32>
    %cst_191 = arith.constant 3.200000e+01 : f32
    %491 = vector.broadcast %cst_191 : f32 to vector<16x1xf32>
    %492 = arith.divf %490, %491 : vector<16x1xf32>
    %493 = vector.broadcast %492 : vector<16x1xf32> to vector<16x32xf32>
    %494 = arith.subf %484, %493 : vector<16x32xf32>
    %495 = arith.mulf %494, %494 : vector<16x32xf32>
    %cst_192 = arith.constant dense<0.000000e+00> : vector<16xf32>
    %496 = vector.multi_reduction <add>, %495, %cst_192 [1] : vector<16x32xf32> to vector<16xf32>
    %497 = vector.shape_cast %496 : vector<16xf32> to vector<16x1xf32>
    %cst_193 = arith.constant 3.200000e+01 : f32
    %498 = vector.broadcast %cst_193 : f32 to vector<16x1xf32>
    %499 = arith.divf %497, %498 : vector<16x1xf32>
    %500 = vector.broadcast %492 : vector<16x1xf32> to vector<16x32xf32>
    %501 = arith.subf %484, %500 : vector<16x32xf32>
    %cst_194 = arith.constant 9.99999974E-6 : f32
    %502 = vector.broadcast %cst_194 : f32 to vector<16x1xf32>
    %503 = arith.addf %499, %502 : vector<16x1xf32>
    %504 = math.rsqrt %503 : vector<16x1xf32>
    %505 = vector.broadcast %504 : vector<16x1xf32> to vector<16x32xf32>
    %506 = arith.mulf %501, %505 : vector<16x32xf32>
    %507 = vector.broadcast %486 : vector<1x32xf32> to vector<16x32xf32>
    %508 = arith.mulf %506, %507 : vector<16x32xf32>
    %509 = vector.broadcast %488 : vector<1x32xf32> to vector<16x32xf32>
    %510 = arith.addf %508, %509 : vector<16x32xf32>
    %c0_195 = arith.constant 0 : index
    %c0_196 = arith.constant 0 : index
    %c0_197 = arith.constant 0 : index
    %511 = vector.load %arg23[%c0_195, %c0_196, %c0_197] : memref<2x32x64xf32, #tpu.memory_space<vmem>>, vector<1x32x64xf32>
    %512 = vector.shape_cast %511 : vector<1x32x64xf32> to vector<32x64xf32>
    %c0_198 = arith.constant 0 : index
    %c0_199 = arith.constant 0 : index
    %c0_200 = arith.constant 0 : index
    %513 = vector.load %arg24[%c0_198, %c0_199, %c0_200] : memref<2x1x64xf32, #tpu.memory_space<vmem>>, vector<1x1x64xf32>
    %514 = vector.shape_cast %513 : vector<1x1x64xf32> to vector<1x64xf32>
    %c0_201 = arith.constant 0 : index
    %c0_202 = arith.constant 0 : index
    %c0_203 = arith.constant 0 : index
    %515 = vector.load %arg25[%c0_201, %c0_202, %c0_203] : memref<2x64x32xf32, #tpu.memory_space<vmem>>, vector<1x64x32xf32>
    %516 = vector.shape_cast %515 : vector<1x64x32xf32> to vector<64x32xf32>
    %c0_204 = arith.constant 0 : index
    %c0_205 = arith.constant 0 : index
    %c0_206 = arith.constant 0 : index
    %517 = vector.load %arg26[%c0_204, %c0_205, %c0_206] : memref<2x1x32xf32, #tpu.memory_space<vmem>>, vector<1x1x32xf32>
    %518 = vector.shape_cast %517 : vector<1x1x32xf32> to vector<1x32xf32>
    %cst_207 = arith.constant dense<0.000000e+00> : vector<16x64xf32>
    %519 = tpu.matmul %510, %512, %cst_207 {dimension_numbers = #tpu.dot_dimension_numbers<[1], [0], [0], [1], [0, 0, 1, 1], [], []>} : vector<16x32xf32>, vector<32x64xf32>, vector<16x64xf32> -> vector<16x64xf32>
    %520 = vector.broadcast %514 : vector<1x64xf32> to vector<16x64xf32>
    %521 = arith.addf %519, %520 : vector<16x64xf32>
    %cst_208 = arith.constant 0.000000e+00 : f32
    %522 = vector.broadcast %cst_208 : f32 to vector<16x64xf32>
    %523 = arith.maximumf %521, %522 : vector<16x64xf32>
    %cst_209 = arith.constant dense<0.000000e+00> : vector<16x32xf32>
    %524 = tpu.matmul %523, %516, %cst_209 {dimension_numbers = #tpu.dot_dimension_numbers<[1], [0], [0], [1], [0, 0, 1, 1], [], []>} : vector<16x64xf32>, vector<64x32xf32>, vector<16x32xf32> -> vector<16x32xf32>
    %525 = vector.broadcast %518 : vector<1x32xf32> to vector<16x32xf32>
    %526 = arith.addf %524, %525 : vector<16x32xf32>
    %527 = arith.addf %484, %526 : vector<16x32xf32>
    %c1_210 = arith.constant 1 : index
    %c0_211 = arith.constant 0 : index
    %c0_212 = arith.constant 0 : index
    %528 = vector.load %arg17[%c1_210, %c0_211, %c0_212] : memref<2x1x32xf32, #tpu.memory_space<vmem>>, vector<1x1x32xf32>
    %529 = vector.shape_cast %528 : vector<1x1x32xf32> to vector<1x32xf32>
    %c1_213 = arith.constant 1 : index
    %c0_214 = arith.constant 0 : index
    %c0_215 = arith.constant 0 : index
    %530 = vector.load %arg18[%c1_213, %c0_214, %c0_215] : memref<2x1x32xf32, #tpu.memory_space<vmem>>, vector<1x1x32xf32>
    %531 = vector.shape_cast %530 : vector<1x1x32xf32> to vector<1x32xf32>
    %cst_216 = arith.constant dense<0.000000e+00> : vector<16xf32>
    %532 = vector.multi_reduction <add>, %527, %cst_216 [1] : vector<16x32xf32> to vector<16xf32>
    %533 = vector.shape_cast %532 : vector<16xf32> to vector<16x1xf32>
    %cst_217 = arith.constant 3.200000e+01 : f32
    %534 = vector.broadcast %cst_217 : f32 to vector<16x1xf32>
    %535 = arith.divf %533, %534 : vector<16x1xf32>
    %536 = vector.broadcast %535 : vector<16x1xf32> to vector<16x32xf32>
    %537 = arith.subf %527, %536 : vector<16x32xf32>
    %538 = arith.mulf %537, %537 : vector<16x32xf32>
    %cst_218 = arith.constant dense<0.000000e+00> : vector<16xf32>
    %539 = vector.multi_reduction <add>, %538, %cst_218 [1] : vector<16x32xf32> to vector<16xf32>
    %540 = vector.shape_cast %539 : vector<16xf32> to vector<16x1xf32>
    %cst_219 = arith.constant 3.200000e+01 : f32
    %541 = vector.broadcast %cst_219 : f32 to vector<16x1xf32>
    %542 = arith.divf %540, %541 : vector<16x1xf32>
    %543 = vector.broadcast %535 : vector<16x1xf32> to vector<16x32xf32>
    %544 = arith.subf %527, %543 : vector<16x32xf32>
    %cst_220 = arith.constant 9.99999974E-6 : f32
    %545 = vector.broadcast %cst_220 : f32 to vector<16x1xf32>
    %546 = arith.addf %542, %545 : vector<16x1xf32>
    %547 = math.rsqrt %546 : vector<16x1xf32>
    %548 = vector.broadcast %547 : vector<16x1xf32> to vector<16x32xf32>
    %549 = arith.mulf %544, %548 : vector<16x32xf32>
    %550 = vector.broadcast %529 : vector<1x32xf32> to vector<16x32xf32>
    %551 = arith.mulf %549, %550 : vector<16x32xf32>
    %552 = vector.broadcast %531 : vector<1x32xf32> to vector<16x32xf32>
    %553 = arith.addf %551, %552 : vector<16x32xf32>
    %cst_221 = arith.constant 0.353553385 : f32
    %554 = vector.broadcast %cst_221 : f32 to vector<16x32xf32>
    %555 = arith.mulf %553, %554 : vector<16x32xf32>
    %556 = vector.extract_strided_slice %555 {offsets = [0, 0], sizes = [16, 8], strides = [1, 1]} : vector<16x32xf32> to vector<16x8xf32>
    %557 = vector.extract_strided_slice %553 {offsets = [0, 0], sizes = [16, 8], strides = [1, 1]} : vector<16x32xf32> to vector<16x8xf32>
    %558 = vector.extract_strided_slice %553 {offsets = [0, 0], sizes = [16, 8], strides = [1, 1]} : vector<16x32xf32> to vector<16x8xf32>
    "tpu.trace_start"() <{level = 10 : i32, message = "qd,kd->qk"}> : () -> ()
    %cst_222 = arith.constant dense<0.000000e+00> : vector<16x16xf32>
    %559 = tpu.matmul %556, %557, %cst_222 {dimension_numbers = #tpu.dot_dimension_numbers<[1], [1], [0], [0], [0, 0, 1, 0], [], []>} : vector<16x8xf32>, vector<16x8xf32>, vector<16x16xf32> -> vector<16x16xf32>
    "tpu.trace_stop"() : () -> ()
    %560 = arith.addf %559, %1 : vector<16x16xf32>
    %cst_223 = arith.constant dense<0xFF800000> : vector<16xf32>
    %561 = vector.multi_reduction <maximumf>, %560, %cst_223 [1] : vector<16x16xf32> to vector<16xf32>
    %562 = vector.shape_cast %561 : vector<16xf32> to vector<16x1xf32>
    %563 = vector.broadcast %562 : vector<16x1xf32> to vector<16x16xf32>
    %564 = arith.subf %560, %563 : vector<16x16xf32>
    %565 = math.exp %564 : vector<16x16xf32>
    %cst_224 = arith.constant dense<0.000000e+00> : vector<16xf32>
    %566 = vector.multi_reduction <add>, %565, %cst_224 [1] : vector<16x16xf32> to vector<16xf32>
    %567 = vector.shape_cast %566 : vector<16xf32> to vector<16x1xf32>
    %568 = vector.broadcast %567 : vector<16x1xf32> to vector<16x16xf32>
    %569 = arith.divf %565, %568 : vector<16x16xf32>
    "tpu.trace_start"() <{level = 10 : i32, message = "qk,kd->qd"}> : () -> ()
    %cst_225 = arith.constant dense<0.000000e+00> : vector<16x8xf32>
    %570 = tpu.matmul %569, %558, %cst_225 {dimension_numbers = #tpu.dot_dimension_numbers<[1], [0], [0], [1], [0, 0, 1, 1], [], []>} : vector<16x16xf32>, vector<16x8xf32>, vector<16x8xf32> -> vector<16x8xf32>
    "tpu.trace_stop"() : () -> ()
    %571 = vector.extract_strided_slice %555 {offsets = [0, 8], sizes = [16, 8], strides = [1, 1]} : vector<16x32xf32> to vector<16x8xf32>
    %572 = vector.extract_strided_slice %553 {offsets = [0, 8], sizes = [16, 8], strides = [1, 1]} : vector<16x32xf32> to vector<16x8xf32>
    %573 = vector.extract_strided_slice %553 {offsets = [0, 8], sizes = [16, 8], strides = [1, 1]} : vector<16x32xf32> to vector<16x8xf32>
    "tpu.trace_start"() <{level = 10 : i32, message = "qd,kd->qk"}> : () -> ()
    %cst_226 = arith.constant dense<0.000000e+00> : vector<16x16xf32>
    %574 = tpu.matmul %571, %572, %cst_226 {dimension_numbers = #tpu.dot_dimension_numbers<[1], [1], [0], [0], [0, 0, 1, 0], [], []>} : vector<16x8xf32>, vector<16x8xf32>, vector<16x16xf32> -> vector<16x16xf32>
    "tpu.trace_stop"() : () -> ()
    %575 = arith.addf %574, %1 : vector<16x16xf32>
    %cst_227 = arith.constant dense<0xFF800000> : vector<16xf32>
    %576 = vector.multi_reduction <maximumf>, %575, %cst_227 [1] : vector<16x16xf32> to vector<16xf32>
    %577 = vector.shape_cast %576 : vector<16xf32> to vector<16x1xf32>
    %578 = vector.broadcast %577 : vector<16x1xf32> to vector<16x16xf32>
    %579 = arith.subf %575, %578 : vector<16x16xf32>
    %580 = math.exp %579 : vector<16x16xf32>
    %cst_228 = arith.constant dense<0.000000e+00> : vector<16xf32>
    %581 = vector.multi_reduction <add>, %580, %cst_228 [1] : vector<16x16xf32> to vector<16xf32>
    %582 = vector.shape_cast %581 : vector<16xf32> to vector<16x1xf32>
    %583 = vector.broadcast %582 : vector<16x1xf32> to vector<16x16xf32>
    %584 = arith.divf %580, %583 : vector<16x16xf32>
    "tpu.trace_start"() <{level = 10 : i32, message = "qk,kd->qd"}> : () -> ()
    %cst_229 = arith.constant dense<0.000000e+00> : vector<16x8xf32>
    %585 = tpu.matmul %584, %573, %cst_229 {dimension_numbers = #tpu.dot_dimension_numbers<[1], [0], [0], [1], [0, 0, 1, 1], [], []>} : vector<16x16xf32>, vector<16x8xf32>, vector<16x8xf32> -> vector<16x8xf32>
    "tpu.trace_stop"() : () -> ()
    %586 = vector.extract_strided_slice %555 {offsets = [0, 16], sizes = [16, 8], strides = [1, 1]} : vector<16x32xf32> to vector<16x8xf32>
    %587 = vector.extract_strided_slice %553 {offsets = [0, 16], sizes = [16, 8], strides = [1, 1]} : vector<16x32xf32> to vector<16x8xf32>
    %588 = vector.extract_strided_slice %553 {offsets = [0, 16], sizes = [16, 8], strides = [1, 1]} : vector<16x32xf32> to vector<16x8xf32>
    "tpu.trace_start"() <{level = 10 : i32, message = "qd,kd->qk"}> : () -> ()
    %cst_230 = arith.constant dense<0.000000e+00> : vector<16x16xf32>
    %589 = tpu.matmul %586, %587, %cst_230 {dimension_numbers = #tpu.dot_dimension_numbers<[1], [1], [0], [0], [0, 0, 1, 0], [], []>} : vector<16x8xf32>, vector<16x8xf32>, vector<16x16xf32> -> vector<16x16xf32>
    "tpu.trace_stop"() : () -> ()
    %590 = arith.addf %589, %1 : vector<16x16xf32>
    %cst_231 = arith.constant dense<0xFF800000> : vector<16xf32>
    %591 = vector.multi_reduction <maximumf>, %590, %cst_231 [1] : vector<16x16xf32> to vector<16xf32>
    %592 = vector.shape_cast %591 : vector<16xf32> to vector<16x1xf32>
    %593 = vector.broadcast %592 : vector<16x1xf32> to vector<16x16xf32>
    %594 = arith.subf %590, %593 : vector<16x16xf32>
    %595 = math.exp %594 : vector<16x16xf32>
    %cst_232 = arith.constant dense<0.000000e+00> : vector<16xf32>
    %596 = vector.multi_reduction <add>, %595, %cst_232 [1] : vector<16x16xf32> to vector<16xf32>
    %597 = vector.shape_cast %596 : vector<16xf32> to vector<16x1xf32>
    %598 = vector.broadcast %597 : vector<16x1xf32> to vector<16x16xf32>
    %599 = arith.divf %595, %598 : vector<16x16xf32>
    "tpu.trace_start"() <{level = 10 : i32, message = "qk,kd->qd"}> : () -> ()
    %cst_233 = arith.constant dense<0.000000e+00> : vector<16x8xf32>
    %600 = tpu.matmul %599, %588, %cst_233 {dimension_numbers = #tpu.dot_dimension_numbers<[1], [0], [0], [1], [0, 0, 1, 1], [], []>} : vector<16x16xf32>, vector<16x8xf32>, vector<16x8xf32> -> vector<16x8xf32>
    "tpu.trace_stop"() : () -> ()
    %601 = vector.extract_strided_slice %555 {offsets = [0, 24], sizes = [16, 8], strides = [1, 1]} : vector<16x32xf32> to vector<16x8xf32>
    %602 = vector.extract_strided_slice %553 {offsets = [0, 24], sizes = [16, 8], strides = [1, 1]} : vector<16x32xf32> to vector<16x8xf32>
    %603 = vector.extract_strided_slice %553 {offsets = [0, 24], sizes = [16, 8], strides = [1, 1]} : vector<16x32xf32> to vector<16x8xf32>
    "tpu.trace_start"() <{level = 10 : i32, message = "qd,kd->qk"}> : () -> ()
    %cst_234 = arith.constant dense<0.000000e+00> : vector<16x16xf32>
    %604 = tpu.matmul %601, %602, %cst_234 {dimension_numbers = #tpu.dot_dimension_numbers<[1], [1], [0], [0], [0, 0, 1, 0], [], []>} : vector<16x8xf32>, vector<16x8xf32>, vector<16x16xf32> -> vector<16x16xf32>
    "tpu.trace_stop"() : () -> ()
    %605 = arith.addf %604, %1 : vector<16x16xf32>
    %cst_235 = arith.constant dense<0xFF800000> : vector<16xf32>
    %606 = vector.multi_reduction <maximumf>, %605, %cst_235 [1] : vector<16x16xf32> to vector<16xf32>
    %607 = vector.shape_cast %606 : vector<16xf32> to vector<16x1xf32>
    %608 = vector.broadcast %607 : vector<16x1xf32> to vector<16x16xf32>
    %609 = arith.subf %605, %608 : vector<16x16xf32>
    %610 = math.exp %609 : vector<16x16xf32>
    %cst_236 = arith.constant dense<0.000000e+00> : vector<16xf32>
    %611 = vector.multi_reduction <add>, %610, %cst_236 [1] : vector<16x16xf32> to vector<16xf32>
    %612 = vector.shape_cast %611 : vector<16xf32> to vector<16x1xf32>
    %613 = vector.broadcast %612 : vector<16x1xf32> to vector<16x16xf32>
    %614 = arith.divf %610, %613 : vector<16x16xf32>
    "tpu.trace_start"() <{level = 10 : i32, message = "qk,kd->qd"}> : () -> ()
    %cst_237 = arith.constant dense<0.000000e+00> : vector<16x8xf32>
    %615 = tpu.matmul %614, %603, %cst_237 {dimension_numbers = #tpu.dot_dimension_numbers<[1], [0], [0], [1], [0, 0, 1, 1], [], []>} : vector<16x16xf32>, vector<16x8xf32>, vector<16x8xf32> -> vector<16x8xf32>
    "tpu.trace_stop"() : () -> ()
    %616 = tpu.concatenate %570, %585, %600, %615 in 1 : vector<16x8xf32>, vector<16x8xf32>, vector<16x8xf32>, vector<16x8xf32> -> vector<16x32xf32>
    %617 = arith.addf %527, %616 : vector<16x32xf32>
    %c1_238 = arith.constant 1 : index
    %c0_239 = arith.constant 0 : index
    %c0_240 = arith.constant 0 : index
    %618 = vector.load %arg19[%c1_238, %c0_239, %c0_240] : memref<2x1x32xf32, #tpu.memory_space<vmem>>, vector<1x1x32xf32>
    %619 = vector.shape_cast %618 : vector<1x1x32xf32> to vector<1x32xf32>
    %c1_241 = arith.constant 1 : index
    %c0_242 = arith.constant 0 : index
    %c0_243 = arith.constant 0 : index
    %620 = vector.load %arg20[%c1_241, %c0_242, %c0_243] : memref<2x1x32xf32, #tpu.memory_space<vmem>>, vector<1x1x32xf32>
    %621 = vector.shape_cast %620 : vector<1x1x32xf32> to vector<1x32xf32>
    %cst_244 = arith.constant dense<0.000000e+00> : vector<16xf32>
    %622 = vector.multi_reduction <add>, %617, %cst_244 [1] : vector<16x32xf32> to vector<16xf32>
    %623 = vector.shape_cast %622 : vector<16xf32> to vector<16x1xf32>
    %cst_245 = arith.constant 3.200000e+01 : f32
    %624 = vector.broadcast %cst_245 : f32 to vector<16x1xf32>
    %625 = arith.divf %623, %624 : vector<16x1xf32>
    %626 = vector.broadcast %625 : vector<16x1xf32> to vector<16x32xf32>
    %627 = arith.subf %617, %626 : vector<16x32xf32>
    %628 = arith.mulf %627, %627 : vector<16x32xf32>
    %cst_246 = arith.constant dense<0.000000e+00> : vector<16xf32>
    %629 = vector.multi_reduction <add>, %628, %cst_246 [1] : vector<16x32xf32> to vector<16xf32>
    %630 = vector.shape_cast %629 : vector<16xf32> to vector<16x1xf32>
    %cst_247 = arith.constant 3.200000e+01 : f32
    %631 = vector.broadcast %cst_247 : f32 to vector<16x1xf32>
    %632 = arith.divf %630, %631 : vector<16x1xf32>
    %633 = vector.broadcast %625 : vector<16x1xf32> to vector<16x32xf32>
    %634 = arith.subf %617, %633 : vector<16x32xf32>
    %cst_248 = arith.constant 9.99999974E-6 : f32
    %635 = vector.broadcast %cst_248 : f32 to vector<16x1xf32>
    %636 = arith.addf %632, %635 : vector<16x1xf32>
    %637 = math.rsqrt %636 : vector<16x1xf32>
    %638 = vector.broadcast %637 : vector<16x1xf32> to vector<16x32xf32>
    %639 = arith.mulf %634, %638 : vector<16x32xf32>
    %640 = vector.broadcast %619 : vector<1x32xf32> to vector<16x32xf32>
    %641 = arith.mulf %639, %640 : vector<16x32xf32>
    %642 = vector.broadcast %621 : vector<1x32xf32> to vector<16x32xf32>
    %643 = arith.addf %641, %642 : vector<16x32xf32>
    %cst_249 = arith.constant 0.353553385 : f32
    %644 = vector.broadcast %cst_249 : f32 to vector<16x32xf32>
    %645 = arith.mulf %643, %644 : vector<16x32xf32>
    %646 = vector.extract_strided_slice %645 {offsets = [0, 0], sizes = [16, 8], strides = [1, 1]} : vector<16x32xf32> to vector<16x8xf32>
    %647 = vector.extract_strided_slice %298 {offsets = [0, 0], sizes = [16, 8], strides = [1, 1]} : vector<16x32xf32> to vector<16x8xf32>
    %648 = vector.extract_strided_slice %298 {offsets = [0, 0], sizes = [16, 8], strides = [1, 1]} : vector<16x32xf32> to vector<16x8xf32>
    "tpu.trace_start"() <{level = 10 : i32, message = "qd,kd->qk"}> : () -> ()
    %cst_250 = arith.constant dense<0.000000e+00> : vector<16x16xf32>
    %649 = tpu.matmul %646, %647, %cst_250 {dimension_numbers = #tpu.dot_dimension_numbers<[1], [1], [0], [0], [0, 0, 1, 0], [], []>} : vector<16x8xf32>, vector<16x8xf32>, vector<16x16xf32> -> vector<16x16xf32>
    "tpu.trace_stop"() : () -> ()
    %650 = arith.addf %649, %1 : vector<16x16xf32>
    %cst_251 = arith.constant dense<0xFF800000> : vector<16xf32>
    %651 = vector.multi_reduction <maximumf>, %650, %cst_251 [1] : vector<16x16xf32> to vector<16xf32>
    %652 = vector.shape_cast %651 : vector<16xf32> to vector<16x1xf32>
    %653 = vector.broadcast %652 : vector<16x1xf32> to vector<16x16xf32>
    %654 = arith.subf %650, %653 : vector<16x16xf32>
    %655 = math.exp %654 : vector<16x16xf32>
    %cst_252 = arith.constant dense<0.000000e+00> : vector<16xf32>
    %656 = vector.multi_reduction <add>, %655, %cst_252 [1] : vector<16x16xf32> to vector<16xf32>
    %657 = vector.shape_cast %656 : vector<16xf32> to vector<16x1xf32>
    %658 = vector.broadcast %657 : vector<16x1xf32> to vector<16x16xf32>
    %659 = arith.divf %655, %658 : vector<16x16xf32>
    "tpu.trace_start"() <{level = 10 : i32, message = "qk,kd->qd"}> : () -> ()
    %cst_253 = arith.constant dense<0.000000e+00> : vector<16x8xf32>
    %660 = tpu.matmul %659, %648, %cst_253 {dimension_numbers = #tpu.dot_dimension_numbers<[1], [0], [0], [1], [0, 0, 1, 1], [], []>} : vector<16x16xf32>, vector<16x8xf32>, vector<16x8xf32> -> vector<16x8xf32>
    "tpu.trace_stop"() : () -> ()
    %661 = vector.extract_strided_slice %645 {offsets = [0, 8], sizes = [16, 8], strides = [1, 1]} : vector<16x32xf32> to vector<16x8xf32>
    %662 = vector.extract_strided_slice %298 {offsets = [0, 8], sizes = [16, 8], strides = [1, 1]} : vector<16x32xf32> to vector<16x8xf32>
    %663 = vector.extract_strided_slice %298 {offsets = [0, 8], sizes = [16, 8], strides = [1, 1]} : vector<16x32xf32> to vector<16x8xf32>
    "tpu.trace_start"() <{level = 10 : i32, message = "qd,kd->qk"}> : () -> ()
    %cst_254 = arith.constant dense<0.000000e+00> : vector<16x16xf32>
    %664 = tpu.matmul %661, %662, %cst_254 {dimension_numbers = #tpu.dot_dimension_numbers<[1], [1], [0], [0], [0, 0, 1, 0], [], []>} : vector<16x8xf32>, vector<16x8xf32>, vector<16x16xf32> -> vector<16x16xf32>
    "tpu.trace_stop"() : () -> ()
    %665 = arith.addf %664, %1 : vector<16x16xf32>
    %cst_255 = arith.constant dense<0xFF800000> : vector<16xf32>
    %666 = vector.multi_reduction <maximumf>, %665, %cst_255 [1] : vector<16x16xf32> to vector<16xf32>
    %667 = vector.shape_cast %666 : vector<16xf32> to vector<16x1xf32>
    %668 = vector.broadcast %667 : vector<16x1xf32> to vector<16x16xf32>
    %669 = arith.subf %665, %668 : vector<16x16xf32>
    %670 = math.exp %669 : vector<16x16xf32>
    %cst_256 = arith.constant dense<0.000000e+00> : vector<16xf32>
    %671 = vector.multi_reduction <add>, %670, %cst_256 [1] : vector<16x16xf32> to vector<16xf32>
    %672 = vector.shape_cast %671 : vector<16xf32> to vector<16x1xf32>
    %673 = vector.broadcast %672 : vector<16x1xf32> to vector<16x16xf32>
    %674 = arith.divf %670, %673 : vector<16x16xf32>
    "tpu.trace_start"() <{level = 10 : i32, message = "qk,kd->qd"}> : () -> ()
    %cst_257 = arith.constant dense<0.000000e+00> : vector<16x8xf32>
    %675 = tpu.matmul %674, %663, %cst_257 {dimension_numbers = #tpu.dot_dimension_numbers<[1], [0], [0], [1], [0, 0, 1, 1], [], []>} : vector<16x16xf32>, vector<16x8xf32>, vector<16x8xf32> -> vector<16x8xf32>
    "tpu.trace_stop"() : () -> ()
    %676 = vector.extract_strided_slice %645 {offsets = [0, 16], sizes = [16, 8], strides = [1, 1]} : vector<16x32xf32> to vector<16x8xf32>
    %677 = vector.extract_strided_slice %298 {offsets = [0, 16], sizes = [16, 8], strides = [1, 1]} : vector<16x32xf32> to vector<16x8xf32>
    %678 = vector.extract_strided_slice %298 {offsets = [0, 16], sizes = [16, 8], strides = [1, 1]} : vector<16x32xf32> to vector<16x8xf32>
    "tpu.trace_start"() <{level = 10 : i32, message = "qd,kd->qk"}> : () -> ()
    %cst_258 = arith.constant dense<0.000000e+00> : vector<16x16xf32>
    %679 = tpu.matmul %676, %677, %cst_258 {dimension_numbers = #tpu.dot_dimension_numbers<[1], [1], [0], [0], [0, 0, 1, 0], [], []>} : vector<16x8xf32>, vector<16x8xf32>, vector<16x16xf32> -> vector<16x16xf32>
    "tpu.trace_stop"() : () -> ()
    %680 = arith.addf %679, %1 : vector<16x16xf32>
    %cst_259 = arith.constant dense<0xFF800000> : vector<16xf32>
    %681 = vector.multi_reduction <maximumf>, %680, %cst_259 [1] : vector<16x16xf32> to vector<16xf32>
    %682 = vector.shape_cast %681 : vector<16xf32> to vector<16x1xf32>
    %683 = vector.broadcast %682 : vector<16x1xf32> to vector<16x16xf32>
    %684 = arith.subf %680, %683 : vector<16x16xf32>
    %685 = math.exp %684 : vector<16x16xf32>
    %cst_260 = arith.constant dense<0.000000e+00> : vector<16xf32>
    %686 = vector.multi_reduction <add>, %685, %cst_260 [1] : vector<16x16xf32> to vector<16xf32>
    %687 = vector.shape_cast %686 : vector<16xf32> to vector<16x1xf32>
    %688 = vector.broadcast %687 : vector<16x1xf32> to vector<16x16xf32>
    %689 = arith.divf %685, %688 : vector<16x16xf32>
    "tpu.trace_start"() <{level = 10 : i32, message = "qk,kd->qd"}> : () -> ()
    %cst_261 = arith.constant dense<0.000000e+00> : vector<16x8xf32>
    %690 = tpu.matmul %689, %678, %cst_261 {dimension_numbers = #tpu.dot_dimension_numbers<[1], [0], [0], [1], [0, 0, 1, 1], [], []>} : vector<16x16xf32>, vector<16x8xf32>, vector<16x8xf32> -> vector<16x8xf32>
    "tpu.trace_stop"() : () -> ()
    %691 = vector.extract_strided_slice %645 {offsets = [0, 24], sizes = [16, 8], strides = [1, 1]} : vector<16x32xf32> to vector<16x8xf32>
    %692 = vector.extract_strided_slice %298 {offsets = [0, 24], sizes = [16, 8], strides = [1, 1]} : vector<16x32xf32> to vector<16x8xf32>
    %693 = vector.extract_strided_slice %298 {offsets = [0, 24], sizes = [16, 8], strides = [1, 1]} : vector<16x32xf32> to vector<16x8xf32>
    "tpu.trace_start"() <{level = 10 : i32, message = "qd,kd->qk"}> : () -> ()
    %cst_262 = arith.constant dense<0.000000e+00> : vector<16x16xf32>
    %694 = tpu.matmul %691, %692, %cst_262 {dimension_numbers = #tpu.dot_dimension_numbers<[1], [1], [0], [0], [0, 0, 1, 0], [], []>} : vector<16x8xf32>, vector<16x8xf32>, vector<16x16xf32> -> vector<16x16xf32>
    "tpu.trace_stop"() : () -> ()
    %695 = arith.addf %694, %1 : vector<16x16xf32>
    %cst_263 = arith.constant dense<0xFF800000> : vector<16xf32>
    %696 = vector.multi_reduction <maximumf>, %695, %cst_263 [1] : vector<16x16xf32> to vector<16xf32>
    %697 = vector.shape_cast %696 : vector<16xf32> to vector<16x1xf32>
    %698 = vector.broadcast %697 : vector<16x1xf32> to vector<16x16xf32>
    %699 = arith.subf %695, %698 : vector<16x16xf32>
    %700 = math.exp %699 : vector<16x16xf32>
    %cst_264 = arith.constant dense<0.000000e+00> : vector<16xf32>
    %701 = vector.multi_reduction <add>, %700, %cst_264 [1] : vector<16x16xf32> to vector<16xf32>
    %702 = vector.shape_cast %701 : vector<16xf32> to vector<16x1xf32>
    %703 = vector.broadcast %702 : vector<16x1xf32> to vector<16x16xf32>
    %704 = arith.divf %700, %703 : vector<16x16xf32>
    "tpu.trace_start"() <{level = 10 : i32, message = "qk,kd->qd"}> : () -> ()
    %cst_265 = arith.constant dense<0.000000e+00> : vector<16x8xf32>
    %705 = tpu.matmul %704, %693, %cst_265 {dimension_numbers = #tpu.dot_dimension_numbers<[1], [0], [0], [1], [0, 0, 1, 1], [], []>} : vector<16x16xf32>, vector<16x8xf32>, vector<16x8xf32> -> vector<16x8xf32>
    "tpu.trace_stop"() : () -> ()
    %706 = tpu.concatenate %660, %675, %690, %705 in 1 : vector<16x8xf32>, vector<16x8xf32>, vector<16x8xf32>, vector<16x8xf32> -> vector<16x32xf32>
    %707 = arith.addf %617, %706 : vector<16x32xf32>
    %c1_266 = arith.constant 1 : index
    %c0_267 = arith.constant 0 : index
    %c0_268 = arith.constant 0 : index
    %708 = vector.load %arg21[%c1_266, %c0_267, %c0_268] : memref<2x1x32xf32, #tpu.memory_space<vmem>>, vector<1x1x32xf32>
    %709 = vector.shape_cast %708 : vector<1x1x32xf32> to vector<1x32xf32>
    %c1_269 = arith.constant 1 : index
    %c0_270 = arith.constant 0 : index
    %c0_271 = arith.constant 0 : index
    %710 = vector.load %arg22[%c1_269, %c0_270, %c0_271] : memref<2x1x32xf32, #tpu.memory_space<vmem>>, vector<1x1x32xf32>
    %711 = vector.shape_cast %710 : vector<1x1x32xf32> to vector<1x32xf32>
    %cst_272 = arith.constant dense<0.000000e+00> : vector<16xf32>
    %712 = vector.multi_reduction <add>, %707, %cst_272 [1] : vector<16x32xf32> to vector<16xf32>
    %713 = vector.shape_cast %712 : vector<16xf32> to vector<16x1xf32>
    %cst_273 = arith.constant 3.200000e+01 : f32
    %714 = vector.broadcast %cst_273 : f32 to vector<16x1xf32>
    %715 = arith.divf %713, %714 : vector<16x1xf32>
    %716 = vector.broadcast %715 : vector<16x1xf32> to vector<16x32xf32>
    %717 = arith.subf %707, %716 : vector<16x32xf32>
    %718 = arith.mulf %717, %717 : vector<16x32xf32>
    %cst_274 = arith.constant dense<0.000000e+00> : vector<16xf32>
    %719 = vector.multi_reduction <add>, %718, %cst_274 [1] : vector<16x32xf32> to vector<16xf32>
    %720 = vector.shape_cast %719 : vector<16xf32> to vector<16x1xf32>
    %cst_275 = arith.constant 3.200000e+01 : f32
    %721 = vector.broadcast %cst_275 : f32 to vector<16x1xf32>
    %722 = arith.divf %720, %721 : vector<16x1xf32>
    %723 = vector.broadcast %715 : vector<16x1xf32> to vector<16x32xf32>
    %724 = arith.subf %707, %723 : vector<16x32xf32>
    %cst_276 = arith.constant 9.99999974E-6 : f32
    %725 = vector.broadcast %cst_276 : f32 to vector<16x1xf32>
    %726 = arith.addf %722, %725 : vector<16x1xf32>
    %727 = math.rsqrt %726 : vector<16x1xf32>
    %728 = vector.broadcast %727 : vector<16x1xf32> to vector<16x32xf32>
    %729 = arith.mulf %724, %728 : vector<16x32xf32>
    %730 = vector.broadcast %709 : vector<1x32xf32> to vector<16x32xf32>
    %731 = arith.mulf %729, %730 : vector<16x32xf32>
    %732 = vector.broadcast %711 : vector<1x32xf32> to vector<16x32xf32>
    %733 = arith.addf %731, %732 : vector<16x32xf32>
    %c1_277 = arith.constant 1 : index
    %c0_278 = arith.constant 0 : index
    %c0_279 = arith.constant 0 : index
    %734 = vector.load %arg23[%c1_277, %c0_278, %c0_279] : memref<2x32x64xf32, #tpu.memory_space<vmem>>, vector<1x32x64xf32>
    %735 = vector.shape_cast %734 : vector<1x32x64xf32> to vector<32x64xf32>
    %c1_280 = arith.constant 1 : index
    %c0_281 = arith.constant 0 : index
    %c0_282 = arith.constant 0 : index
    %736 = vector.load %arg24[%c1_280, %c0_281, %c0_282] : memref<2x1x64xf32, #tpu.memory_space<vmem>>, vector<1x1x64xf32>
    %737 = vector.shape_cast %736 : vector<1x1x64xf32> to vector<1x64xf32>
    %c1_283 = arith.constant 1 : index
    %c0_284 = arith.constant 0 : index
    %c0_285 = arith.constant 0 : index
    %738 = vector.load %arg25[%c1_283, %c0_284, %c0_285] : memref<2x64x32xf32, #tpu.memory_space<vmem>>, vector<1x64x32xf32>
    %739 = vector.shape_cast %738 : vector<1x64x32xf32> to vector<64x32xf32>
    %c1_286 = arith.constant 1 : index
    %c0_287 = arith.constant 0 : index
    %c0_288 = arith.constant 0 : index
    %740 = vector.load %arg26[%c1_286, %c0_287, %c0_288] : memref<2x1x32xf32, #tpu.memory_space<vmem>>, vector<1x1x32xf32>
    %741 = vector.shape_cast %740 : vector<1x1x32xf32> to vector<1x32xf32>
    %cst_289 = arith.constant dense<0.000000e+00> : vector<16x64xf32>
    %742 = tpu.matmul %733, %735, %cst_289 {dimension_numbers = #tpu.dot_dimension_numbers<[1], [0], [0], [1], [0, 0, 1, 1], [], []>} : vector<16x32xf32>, vector<32x64xf32>, vector<16x64xf32> -> vector<16x64xf32>
    %743 = vector.broadcast %737 : vector<1x64xf32> to vector<16x64xf32>
    %744 = arith.addf %742, %743 : vector<16x64xf32>
    %cst_290 = arith.constant 0.000000e+00 : f32
    %745 = vector.broadcast %cst_290 : f32 to vector<16x64xf32>
    %746 = arith.maximumf %744, %745 : vector<16x64xf32>
    %cst_291 = arith.constant dense<0.000000e+00> : vector<16x32xf32>
    %747 = tpu.matmul %746, %739, %cst_291 {dimension_numbers = #tpu.dot_dimension_numbers<[1], [0], [0], [1], [0, 0, 1, 1], [], []>} : vector<16x64xf32>, vector<64x32xf32>, vector<16x32xf32> -> vector<16x32xf32>
    %748 = vector.broadcast %741 : vector<1x32xf32> to vector<16x32xf32>
    %749 = arith.addf %747, %748 : vector<16x32xf32>
    %750 = arith.addf %707, %749 : vector<16x32xf32>
    %c0_292 = arith.constant 0 : index
    %c0_293 = arith.constant 0 : index
    %751 = vector.load %arg27[%c0_292, %c0_293] : memref<1x32xf32, #tpu.memory_space<vmem>>, vector<1x32xf32>
    %c0_294 = arith.constant 0 : index
    %c0_295 = arith.constant 0 : index
    %752 = vector.load %arg28[%c0_294, %c0_295] : memref<1x32xf32, #tpu.memory_space<vmem>>, vector<1x32xf32>
    %cst_296 = arith.constant dense<0.000000e+00> : vector<16xf32>
    %753 = vector.multi_reduction <add>, %750, %cst_296 [1] : vector<16x32xf32> to vector<16xf32>
    %754 = vector.shape_cast %753 : vector<16xf32> to vector<16x1xf32>
    %cst_297 = arith.constant 3.200000e+01 : f32
    %755 = vector.broadcast %cst_297 : f32 to vector<16x1xf32>
    %756 = arith.divf %754, %755 : vector<16x1xf32>
    %757 = vector.broadcast %756 : vector<16x1xf32> to vector<16x32xf32>
    %758 = arith.subf %750, %757 : vector<16x32xf32>
    %759 = arith.mulf %758, %758 : vector<16x32xf32>
    %cst_298 = arith.constant dense<0.000000e+00> : vector<16xf32>
    %760 = vector.multi_reduction <add>, %759, %cst_298 [1] : vector<16x32xf32> to vector<16xf32>
    %761 = vector.shape_cast %760 : vector<16xf32> to vector<16x1xf32>
    %cst_299 = arith.constant 3.200000e+01 : f32
    %762 = vector.broadcast %cst_299 : f32 to vector<16x1xf32>
    %763 = arith.divf %761, %762 : vector<16x1xf32>
    %764 = vector.broadcast %756 : vector<16x1xf32> to vector<16x32xf32>
    %765 = arith.subf %750, %764 : vector<16x32xf32>
    %cst_300 = arith.constant 9.99999974E-6 : f32
    %766 = vector.broadcast %cst_300 : f32 to vector<16x1xf32>
    %767 = arith.addf %763, %766 : vector<16x1xf32>
    %768 = math.rsqrt %767 : vector<16x1xf32>
    %769 = vector.broadcast %768 : vector<16x1xf32> to vector<16x32xf32>
    %770 = arith.mulf %765, %769 : vector<16x32xf32>
    %771 = vector.broadcast %751 : vector<1x32xf32> to vector<16x32xf32>
    %772 = arith.mulf %770, %771 : vector<16x32xf32>
    %773 = vector.broadcast %752 : vector<1x32xf32> to vector<16x32xf32>
    %774 = arith.addf %772, %773 : vector<16x32xf32>
    %c0_301 = arith.constant 0 : index
    %c0_302 = arith.constant 0 : index
    %775 = vector.load %arg30[%c0_301, %c0_302] : memref<1x128xf32, #tpu.memory_space<vmem>>, vector<1x128xf32>
    %c0_303 = arith.constant 0 : index
    %c0_304 = arith.constant 0 : index
    %c0_305 = arith.constant 0 : index
    %776 = vector.load %arg29[%c0_303, %c0_304, %c0_305] : memref<8x32x128xf32, #tpu.memory_space<vmem>>, vector<1x32x128xf32>
    %777 = vector.shape_cast %776 : vector<1x32x128xf32> to vector<32x128xf32>
    %778 = vector.extract_strided_slice %774 {offsets = [0, 0], sizes = [1, 32], strides = [1, 1]} : vector<16x32xf32> to vector<1x32xf32>
    %cst_306 = arith.constant dense<0.000000e+00> : vector<1x128xf32>
    %779 = tpu.matmul %778, %777, %cst_306 {dimension_numbers = #tpu.dot_dimension_numbers<[1], [0], [0], [1], [0, 0, 1, 1], [], []>} : vector<1x32xf32>, vector<32x128xf32>, vector<1x128xf32> -> vector<1x128xf32>
    %780 = arith.addf %775, %779 : vector<1x128xf32>
    %781 = vector.extract_strided_slice %774 {offsets = [8, 0], sizes = [1, 32], strides = [1, 1]} : vector<16x32xf32> to vector<1x32xf32>
    %cst_307 = arith.constant dense<0.000000e+00> : vector<1x128xf32>
    %782 = tpu.matmul %781, %777, %cst_307 {dimension_numbers = #tpu.dot_dimension_numbers<[1], [0], [0], [1], [0, 0, 1, 1], [], []>} : vector<1x32xf32>, vector<32x128xf32>, vector<1x128xf32> -> vector<1x128xf32>
    %783 = arith.addf %775, %782 : vector<1x128xf32>
    %c1_308 = arith.constant 1 : index
    %c0_309 = arith.constant 0 : index
    %c0_310 = arith.constant 0 : index
    %784 = vector.load %arg29[%c1_308, %c0_309, %c0_310] : memref<8x32x128xf32, #tpu.memory_space<vmem>>, vector<1x32x128xf32>
    %785 = vector.shape_cast %784 : vector<1x32x128xf32> to vector<32x128xf32>
    %786 = vector.extract_strided_slice %774 {offsets = [1, 0], sizes = [1, 32], strides = [1, 1]} : vector<16x32xf32> to vector<1x32xf32>
    %cst_311 = arith.constant dense<0.000000e+00> : vector<1x128xf32>
    %787 = tpu.matmul %786, %785, %cst_311 {dimension_numbers = #tpu.dot_dimension_numbers<[1], [0], [0], [1], [0, 0, 1, 1], [], []>} : vector<1x32xf32>, vector<32x128xf32>, vector<1x128xf32> -> vector<1x128xf32>
    %788 = arith.addf %780, %787 : vector<1x128xf32>
    %789 = vector.extract_strided_slice %774 {offsets = [9, 0], sizes = [1, 32], strides = [1, 1]} : vector<16x32xf32> to vector<1x32xf32>
    %cst_312 = arith.constant dense<0.000000e+00> : vector<1x128xf32>
    %790 = tpu.matmul %789, %785, %cst_312 {dimension_numbers = #tpu.dot_dimension_numbers<[1], [0], [0], [1], [0, 0, 1, 1], [], []>} : vector<1x32xf32>, vector<32x128xf32>, vector<1x128xf32> -> vector<1x128xf32>
    %791 = arith.addf %783, %790 : vector<1x128xf32>
    %c2 = arith.constant 2 : index
    %c0_313 = arith.constant 0 : index
    %c0_314 = arith.constant 0 : index
    %792 = vector.load %arg29[%c2, %c0_313, %c0_314] : memref<8x32x128xf32, #tpu.memory_space<vmem>>, vector<1x32x128xf32>
    %793 = vector.shape_cast %792 : vector<1x32x128xf32> to vector<32x128xf32>
    %794 = vector.extract_strided_slice %774 {offsets = [2, 0], sizes = [1, 32], strides = [1, 1]} : vector<16x32xf32> to vector<1x32xf32>
    %cst_315 = arith.constant dense<0.000000e+00> : vector<1x128xf32>
    %795 = tpu.matmul %794, %793, %cst_315 {dimension_numbers = #tpu.dot_dimension_numbers<[1], [0], [0], [1], [0, 0, 1, 1], [], []>} : vector<1x32xf32>, vector<32x128xf32>, vector<1x128xf32> -> vector<1x128xf32>
    %796 = arith.addf %788, %795 : vector<1x128xf32>
    %797 = vector.extract_strided_slice %774 {offsets = [10, 0], sizes = [1, 32], strides = [1, 1]} : vector<16x32xf32> to vector<1x32xf32>
    %cst_316 = arith.constant dense<0.000000e+00> : vector<1x128xf32>
    %798 = tpu.matmul %797, %793, %cst_316 {dimension_numbers = #tpu.dot_dimension_numbers<[1], [0], [0], [1], [0, 0, 1, 1], [], []>} : vector<1x32xf32>, vector<32x128xf32>, vector<1x128xf32> -> vector<1x128xf32>
    %799 = arith.addf %791, %798 : vector<1x128xf32>
    %c3 = arith.constant 3 : index
    %c0_317 = arith.constant 0 : index
    %c0_318 = arith.constant 0 : index
    %800 = vector.load %arg29[%c3, %c0_317, %c0_318] : memref<8x32x128xf32, #tpu.memory_space<vmem>>, vector<1x32x128xf32>
    %801 = vector.shape_cast %800 : vector<1x32x128xf32> to vector<32x128xf32>
    %802 = vector.extract_strided_slice %774 {offsets = [3, 0], sizes = [1, 32], strides = [1, 1]} : vector<16x32xf32> to vector<1x32xf32>
    %cst_319 = arith.constant dense<0.000000e+00> : vector<1x128xf32>
    %803 = tpu.matmul %802, %801, %cst_319 {dimension_numbers = #tpu.dot_dimension_numbers<[1], [0], [0], [1], [0, 0, 1, 1], [], []>} : vector<1x32xf32>, vector<32x128xf32>, vector<1x128xf32> -> vector<1x128xf32>
    %804 = arith.addf %796, %803 : vector<1x128xf32>
    %805 = vector.extract_strided_slice %774 {offsets = [11, 0], sizes = [1, 32], strides = [1, 1]} : vector<16x32xf32> to vector<1x32xf32>
    %cst_320 = arith.constant dense<0.000000e+00> : vector<1x128xf32>
    %806 = tpu.matmul %805, %801, %cst_320 {dimension_numbers = #tpu.dot_dimension_numbers<[1], [0], [0], [1], [0, 0, 1, 1], [], []>} : vector<1x32xf32>, vector<32x128xf32>, vector<1x128xf32> -> vector<1x128xf32>
    %807 = arith.addf %799, %806 : vector<1x128xf32>
    %c4 = arith.constant 4 : index
    %c0_321 = arith.constant 0 : index
    %c0_322 = arith.constant 0 : index
    %808 = vector.load %arg29[%c4, %c0_321, %c0_322] : memref<8x32x128xf32, #tpu.memory_space<vmem>>, vector<1x32x128xf32>
    %809 = vector.shape_cast %808 : vector<1x32x128xf32> to vector<32x128xf32>
    %810 = vector.extract_strided_slice %774 {offsets = [4, 0], sizes = [1, 32], strides = [1, 1]} : vector<16x32xf32> to vector<1x32xf32>
    %cst_323 = arith.constant dense<0.000000e+00> : vector<1x128xf32>
    %811 = tpu.matmul %810, %809, %cst_323 {dimension_numbers = #tpu.dot_dimension_numbers<[1], [0], [0], [1], [0, 0, 1, 1], [], []>} : vector<1x32xf32>, vector<32x128xf32>, vector<1x128xf32> -> vector<1x128xf32>
    %812 = arith.addf %804, %811 : vector<1x128xf32>
    %813 = vector.extract_strided_slice %774 {offsets = [12, 0], sizes = [1, 32], strides = [1, 1]} : vector<16x32xf32> to vector<1x32xf32>
    %cst_324 = arith.constant dense<0.000000e+00> : vector<1x128xf32>
    %814 = tpu.matmul %813, %809, %cst_324 {dimension_numbers = #tpu.dot_dimension_numbers<[1], [0], [0], [1], [0, 0, 1, 1], [], []>} : vector<1x32xf32>, vector<32x128xf32>, vector<1x128xf32> -> vector<1x128xf32>
    %815 = arith.addf %807, %814 : vector<1x128xf32>
    %c5 = arith.constant 5 : index
    %c0_325 = arith.constant 0 : index
    %c0_326 = arith.constant 0 : index
    %816 = vector.load %arg29[%c5, %c0_325, %c0_326] : memref<8x32x128xf32, #tpu.memory_space<vmem>>, vector<1x32x128xf32>
    %817 = vector.shape_cast %816 : vector<1x32x128xf32> to vector<32x128xf32>
    %818 = vector.extract_strided_slice %774 {offsets = [5, 0], sizes = [1, 32], strides = [1, 1]} : vector<16x32xf32> to vector<1x32xf32>
    %cst_327 = arith.constant dense<0.000000e+00> : vector<1x128xf32>
    %819 = tpu.matmul %818, %817, %cst_327 {dimension_numbers = #tpu.dot_dimension_numbers<[1], [0], [0], [1], [0, 0, 1, 1], [], []>} : vector<1x32xf32>, vector<32x128xf32>, vector<1x128xf32> -> vector<1x128xf32>
    %820 = arith.addf %812, %819 : vector<1x128xf32>
    %821 = vector.extract_strided_slice %774 {offsets = [13, 0], sizes = [1, 32], strides = [1, 1]} : vector<16x32xf32> to vector<1x32xf32>
    %cst_328 = arith.constant dense<0.000000e+00> : vector<1x128xf32>
    %822 = tpu.matmul %821, %817, %cst_328 {dimension_numbers = #tpu.dot_dimension_numbers<[1], [0], [0], [1], [0, 0, 1, 1], [], []>} : vector<1x32xf32>, vector<32x128xf32>, vector<1x128xf32> -> vector<1x128xf32>
    %823 = arith.addf %815, %822 : vector<1x128xf32>
    %c6 = arith.constant 6 : index
    %c0_329 = arith.constant 0 : index
    %c0_330 = arith.constant 0 : index
    %824 = vector.load %arg29[%c6, %c0_329, %c0_330] : memref<8x32x128xf32, #tpu.memory_space<vmem>>, vector<1x32x128xf32>
    %825 = vector.shape_cast %824 : vector<1x32x128xf32> to vector<32x128xf32>
    %826 = vector.extract_strided_slice %774 {offsets = [6, 0], sizes = [1, 32], strides = [1, 1]} : vector<16x32xf32> to vector<1x32xf32>
    %cst_331 = arith.constant dense<0.000000e+00> : vector<1x128xf32>
    %827 = tpu.matmul %826, %825, %cst_331 {dimension_numbers = #tpu.dot_dimension_numbers<[1], [0], [0], [1], [0, 0, 1, 1], [], []>} : vector<1x32xf32>, vector<32x128xf32>, vector<1x128xf32> -> vector<1x128xf32>
    %828 = arith.addf %820, %827 : vector<1x128xf32>
    %829 = vector.extract_strided_slice %774 {offsets = [14, 0], sizes = [1, 32], strides = [1, 1]} : vector<16x32xf32> to vector<1x32xf32>
    %cst_332 = arith.constant dense<0.000000e+00> : vector<1x128xf32>
    %830 = tpu.matmul %829, %825, %cst_332 {dimension_numbers = #tpu.dot_dimension_numbers<[1], [0], [0], [1], [0, 0, 1, 1], [], []>} : vector<1x32xf32>, vector<32x128xf32>, vector<1x128xf32> -> vector<1x128xf32>
    %831 = arith.addf %823, %830 : vector<1x128xf32>
    %c7 = arith.constant 7 : index
    %c0_333 = arith.constant 0 : index
    %c0_334 = arith.constant 0 : index
    %832 = vector.load %arg29[%c7, %c0_333, %c0_334] : memref<8x32x128xf32, #tpu.memory_space<vmem>>, vector<1x32x128xf32>
    %833 = vector.shape_cast %832 : vector<1x32x128xf32> to vector<32x128xf32>
    %834 = vector.extract_strided_slice %774 {offsets = [7, 0], sizes = [1, 32], strides = [1, 1]} : vector<16x32xf32> to vector<1x32xf32>
    %cst_335 = arith.constant dense<0.000000e+00> : vector<1x128xf32>
    %835 = tpu.matmul %834, %833, %cst_335 {dimension_numbers = #tpu.dot_dimension_numbers<[1], [0], [0], [1], [0, 0, 1, 1], [], []>} : vector<1x32xf32>, vector<32x128xf32>, vector<1x128xf32> -> vector<1x128xf32>
    %836 = arith.addf %828, %835 : vector<1x128xf32>
    %837 = vector.extract_strided_slice %774 {offsets = [15, 0], sizes = [1, 32], strides = [1, 1]} : vector<16x32xf32> to vector<1x32xf32>
    %cst_336 = arith.constant dense<0.000000e+00> : vector<1x128xf32>
    %838 = tpu.matmul %837, %833, %cst_336 {dimension_numbers = #tpu.dot_dimension_numbers<[1], [0], [0], [1], [0, 0, 1, 1], [], []>} : vector<1x32xf32>, vector<32x128xf32>, vector<1x128xf32> -> vector<1x128xf32>
    %839 = arith.addf %831, %838 : vector<1x128xf32>
    %840 = tpu.concatenate %836, %839 in 0 : vector<1x128xf32>, vector<1x128xf32> -> vector<2x128xf32>
    %cst_337 = arith.constant dense<0xFF800000> : vector<2xf32>
    %841 = vector.multi_reduction <maximumf>, %840, %cst_337 [1] : vector<2x128xf32> to vector<2xf32>
    %842 = vector.shape_cast %841 : vector<2xf32> to vector<2x1xf32>
    %843 = vector.broadcast %842 : vector<2x1xf32> to vector<2x128xf32>
    %844 = arith.subf %840, %843 : vector<2x128xf32>
    %845 = math.exp %844 : vector<2x128xf32>
    %cst_338 = arith.constant dense<0.000000e+00> : vector<2xf32>
    %846 = vector.multi_reduction <add>, %845, %cst_338 [1] : vector<2x128xf32> to vector<2xf32>
    %847 = vector.shape_cast %846 : vector<2xf32> to vector<2x1xf32>
    %848 = vector.broadcast %847 : vector<2x1xf32> to vector<2x128xf32>
    %849 = arith.divf %845, %848 : vector<2x128xf32>
    %c0_339 = arith.constant 0 : index
    %c0_340 = arith.constant 0 : index
    %850 = vector.load %arg31[%c0_339, %c0_340] : memref<2x128xf32, #tpu.memory_space<vmem>>, vector<2x128xf32>
    tpu.vector_store %arg31[%c0_339, %c0_340], %849 {strides = array<i32>} : memref<2x128xf32, #tpu.memory_space<vmem>>, vector<2x128xf32>,
    return
  }
}

</mosaic_0001>

<llo_original>
// kernel: model_forward.1
$region0: #{model_forward.1}
  #allocation0 [shape = 'u32[]', space=smem, size = 0x4, offset = 0x4, fixed_abs, tag = 'smem constant byte address 0x4 - core index']
  #allocation1 [shape = 'u32[144,128]{1,0:T(1,128)}', space=vmem, size = 0x12000, scoped, tag = 'internal scratch']
  %s0 = inlined_call_operand.smem [shape: u32[32], index: -1, kind: input, shape index: {}]
  %s1 = sld [smem:[%s0]]
  %s2 = scalar_lea.smem %s0, 1
  %s3 = sld [smem:[%s2]]
  %s4 = scalar_lea.smem %s0, 2
  %s5 = sld [smem:[%s4]]
  %s6 = scalar_lea.smem %s0, 3
  %s7 = sld [smem:[%s6]]
  %s8 = scalar_lea.smem %s0, 4
  %s9 = sld [smem:[%s8]]
  %s10 = scalar_lea.smem %s0, 5
  %s11 = sld [smem:[%s10]]
  %s12 = scalar_lea.smem %s0, 6
  %s13 = sld [smem:[%s12]]
  %s14 = scalar_lea.smem %s0, 7
  %s15 = sld [smem:[%s14]]
  %s16 = scalar_lea.smem %s0, 8
  %s17 = sld [smem:[%s16]]
  %s18 = scalar_lea.smem %s0, 9
  %s19 = sld [smem:[%s18]]
  %s20 = scalar_lea.smem %s0, 10
  %s21 = sld [smem:[%s20]]
  %s22 = scalar_lea.smem %s0, 11
  %s23 = sld [smem:[%s22]]
  %s24 = scalar_lea.smem %s0, 12
  %s25 = sld [smem:[%s24]]
  %s26 = scalar_lea.smem %s0, 13
  %s27 = sld [smem:[%s26]]
  %s28 = scalar_lea.smem %s0, 14
  %s29 = sld [smem:[%s28]]
  %s30 = scalar_lea.smem %s0, 15
  %s31 = sld [smem:[%s30]]
  %s32 = scalar_lea.smem %s0, 16
  %s33 = sld [smem:[%s32]]
  %s34 = scalar_lea.smem %s0, 17
  %s35 = sld [smem:[%s34]]
  %s36 = scalar_lea.smem %s0, 18
  %s37 = sld [smem:[%s36]]
  %s38 = scalar_lea.smem %s0, 19
  %s39 = sld [smem:[%s38]]
  %s40 = scalar_lea.smem %s0, 20
  %s41 = sld [smem:[%s40]]
  %s42 = scalar_lea.smem %s0, 21
  %s43 = sld [smem:[%s42]]
  %s44 = scalar_lea.smem %s0, 22
  %s45 = sld [smem:[%s44]]
  %s46 = scalar_lea.smem %s0, 23
  %s47 = sld [smem:[%s46]]
  %s48 = scalar_lea.smem %s0, 24
  %s49 = sld [smem:[%s48]]
  %s50 = scalar_lea.smem %s0, 25
  %s51 = sld [smem:[%s50]]
  %s52 = scalar_lea.smem %s0, 26
  %s53 = sld [smem:[%s52]]
  %s54 = scalar_lea.smem %s0, 27
  %s55 = sld [smem:[%s54]]
  %s56 = scalar_lea.smem %s0, 28
  %s57 = sld [smem:[%s56]]
  %s58 = scalar_lea.smem %s0, 29
  %s59 = sld [smem:[%s58]]
  %s60 = scalar_lea.smem %s0, 30
  %s61 = sld [smem:[%s60]]
  %s62 = scalar_lea.smem %s0, 31
  %s63 = sld [smem:[%s62]]
  %s64 = sld [smem:[#allocation0]]
  $region142: #{model_forward.1} parent=0
    _
  %s66 = ssub.s32 1, %s64
  %s67 = scalar_select 0, %s66, %s64
  $region1: #{model_forward.1} parent=0
    #allocation2 [shape = 'u8[512]{0}', space=vmem, size = 0x400, scoped, tag = 'input window, operand 28, single buffered']
    #allocation3 [shape = 's32[1]{0}', space=sflag, size = 0x4, scoped, tag = 'scoped memory for model_forward.1']
    #allocation4 [shape = 's32[1]{0}', space=sflag, size = 0x4, scoped, tag = 'scoped memory for model_forward.1']
    #allocation5 [shape = 'u8[512]{0}', space=vmem, size = 0x400, scoped, tag = 'input window, operand 30, single buffered']
    #allocation6 [shape = 's32[1]{0}', space=sflag, size = 0x4, scoped, tag = 'scoped memory for model_forward.1']
    #allocation7 [shape = 'u8[1024]{0}', space=vmem, size = 0x400, scoped, tag = 'output window, operand 0, single buffered']
    %68 = vsyncpa [#allocation3], 0
    %69 = vsyncpa [#allocation6], 0
    %70 = vsyncpa [#allocation4], 0
    // Predicated region
    $region2: #{model_forward.1} parent=1 // pred_check
      _
    $region3: #{model_forward.1} parent=1 // pred_check_branch
      %72 = sbr.rel (0) target = $region5
    $region4: #{model_forward.1} parent=1 // pred_region
      _
    $region5: #{model_forward.1} parent=1 // pred_fallthru
      _
    // Predicated region
    $region6: #{model_forward.1} parent=1 // pred_check
      _
    $region7: #{model_forward.1} parent=1 // pred_check_branch
      %74 = sbr.rel (0) target = $region9
    $region8: #{model_forward.1} parent=1 // pred_region
      _
    $region9: #{model_forward.1} parent=1 // pred_fallthru
      _
    // Predicated region
    $region10: #{model_forward.1} parent=1 // pred_check
      _
    $region11: #{model_forward.1} parent=1 // pred_check_branch
      %76 = sbr.rel (0) target = $region13
    $region12: #{model_forward.1} parent=1 // pred_region
      _
    $region13: #{model_forward.1} parent=1 // pred_fallthru
      _
    // Predicated region
    $region14: #{model_forward.1} parent=1 // pred_check
      _
    $region15: #{model_forward.1} parent=1 // pred_check_branch
      %78 = sbr.rel (0) target = $region17
    $region16: #{model_forward.1} parent=1 // pred_region
      _
    $region17: #{model_forward.1} parent=1 // pred_fallthru
      _
    // Predicated region
    $region18: #{model_forward.1} parent=1 // pred_check
      _
    $region19: #{model_forward.1} parent=1 // pred_check_branch
      %80 = sbr.rel (0) target = $region21
    $region20: #{model_forward.1} parent=1 // pred_region
      _
    $region21: #{model_forward.1} parent=1 // pred_fallthru
      _
    // Predicated region
    $region22: #{model_forward.1} parent=1 // pred_check
      _
    $region23: #{model_forward.1} parent=1 // pred_check_branch
      %82 = sbr.rel (0) target = $region25
    $region24: #{model_forward.1} parent=1 // pred_region
      _
    $region25: #{model_forward.1} parent=1 // pred_fallthru
      _
    // Predicated region
    $region26: #{model_forward.1} parent=1 // pred_check
      _
    $region27: #{model_forward.1} parent=1 // pred_check_branch
      %84 = sbr.rel (0) target = $region29
    $region28: #{model_forward.1} parent=1 // pred_region
      _
    $region29: #{model_forward.1} parent=1 // pred_fallthru
      _
    // Predicated region
    $region30: #{model_forward.1} parent=1 // pred_check
      _
    $region31: #{model_forward.1} parent=1 // pred_check_branch
      %86 = sbr.rel (0) target = $region33
    $region32: #{model_forward.1} parent=1 // pred_region
      _
    $region33: #{model_forward.1} parent=1 // pred_fallthru
      _
    // Predicated region
    $region34: #{model_forward.1} parent=1 // pred_check
      _
    $region35: #{model_forward.1} parent=1 // pred_check_branch
      %88 = sbr.rel (0) target = $region37
    $region36: #{model_forward.1} parent=1 // pred_region
      _
    $region37: #{model_forward.1} parent=1 // pred_fallthru
      _
    // Predicated region
    $region38: #{model_forward.1} parent=1 // pred_check
      _
    $region39: #{model_forward.1} parent=1 // pred_check_branch
      %90 = sbr.rel (0) target = $region41
    $region40: #{model_forward.1} parent=1 // pred_region
      _
    $region41: #{model_forward.1} parent=1 // pred_fallthru
      _
    // Predicated region
    $region42: #{model_forward.1} parent=1 // pred_check
      _
    $region43: #{model_forward.1} parent=1 // pred_check_branch
      %92 = sbr.rel (0) target = $region45
    $region44: #{model_forward.1} parent=1 // pred_region
      _
    $region45: #{model_forward.1} parent=1 // pred_fallthru
      _
    // Predicated region
    $region46: #{model_forward.1} parent=1 // pred_check
      _
    $region47: #{model_forward.1} parent=1 // pred_check_branch
      %94 = sbr.rel (0) target = $region49
    $region48: #{model_forward.1} parent=1 // pred_region
      _
    $region49: #{model_forward.1} parent=1 // pred_fallthru
      _
    // Predicated region
    $region50: #{model_forward.1} parent=1 // pred_check
      _
    $region51: #{model_forward.1} parent=1 // pred_check_branch
      %96 = sbr.rel (0) target = $region53
    $region52: #{model_forward.1} parent=1 // pred_region
      _
    $region53: #{model_forward.1} parent=1 // pred_fallthru
      _
    // Predicated region
    $region54: #{model_forward.1} parent=1 // pred_check
      _
    $region55: #{model_forward.1} parent=1 // pred_check_branch
      %98 = sbr.rel (0) target = $region57
    $region56: #{model_forward.1} parent=1 // pred_region
      _
    $region57: #{model_forward.1} parent=1 // pred_fallthru
      _
    // Predicated region
    $region58: #{model_forward.1} parent=1 // pred_check
      _
    $region59: #{model_forward.1} parent=1 // pred_check_branch
      %100 = sbr.rel (0) target = $region61
    $region60: #{model_forward.1} parent=1 // pred_region
      _
    $region61: #{model_forward.1} parent=1 // pred_fallthru
      _
    // Predicated region
    $region62: #{model_forward.1} parent=1 // pred_check
      _
    $region63: #{model_forward.1} parent=1 // pred_check_branch
      %102 = sbr.rel (0) target = $region65
    $region64: #{model_forward.1} parent=1 // pred_region
      _
    $region65: #{model_forward.1} parent=1 // pred_fallthru
      _
    // Predicated region
    $region66: #{model_forward.1} parent=1 // pred_check
      _
    $region67: #{model_forward.1} parent=1 // pred_check_branch
      %104 = sbr.rel (0) target = $region69
    $region68: #{model_forward.1} parent=1 // pred_region
      _
    $region69: #{model_forward.1} parent=1 // pred_fallthru
      _
    // Predicated region
    $region70: #{model_forward.1} parent=1 // pred_check
      _
    $region71: #{model_forward.1} parent=1 // pred_check_branch
      %106 = sbr.rel (0) target = $region73
    $region72: #{model_forward.1} parent=1 // pred_region
      _
    $region73: #{model_forward.1} parent=1 // pred_fallthru
      _
    // Predicated region
    $region74: #{model_forward.1} parent=1 // pred_check
      _
    $region75: #{model_forward.1} parent=1 // pred_check_branch
      %108 = sbr.rel (0) target = $region77
    $region76: #{model_forward.1} parent=1 // pred_region
      _
    $region77: #{model_forward.1} parent=1 // pred_fallthru
      _
    // Predicated region
    $region78: #{model_forward.1} parent=1 // pred_check
      _
    $region79: #{model_forward.1} parent=1 // pred_check_branch
      %110 = sbr.rel (0) target = $region81
    $region80: #{model_forward.1} parent=1 // pred_region
      _
    $region81: #{model_forward.1} parent=1 // pred_fallthru
      _
    // Predicated region
    $region82: #{model_forward.1} parent=1 // pred_check
      _
    $region83: #{model_forward.1} parent=1 // pred_check_branch
      %112 = sbr.rel (0) target = $region85
    $region84: #{model_forward.1} parent=1 // pred_region
      _
    $region85: #{model_forward.1} parent=1 // pred_fallthru
      _
    // Predicated region
    $region86: #{model_forward.1} parent=1 // pred_check
      _
    $region87: #{model_forward.1} parent=1 // pred_check_branch
      %114 = sbr.rel (0) target = $region89
    $region88: #{model_forward.1} parent=1 // pred_region
      _
    $region89: #{model_forward.1} parent=1 // pred_fallthru
      _
    // Predicated region
    $region90: #{model_forward.1} parent=1 // pred_check
      _
    $region91: #{model_forward.1} parent=1 // pred_check_branch
      %116 = sbr.rel (0) target = $region93
    $region92: #{model_forward.1} parent=1 // pred_region
      _
    $region93: #{model_forward.1} parent=1 // pred_fallthru
      _
    // Predicated region
    $region94: #{model_forward.1} parent=1 // pred_check
      _
    $region95: #{model_forward.1} parent=1 // pred_check_branch
      %118 = sbr.rel (0) target = $region97
    $region96: #{model_forward.1} parent=1 // pred_region
      _
    $region97: #{model_forward.1} parent=1 // pred_fallthru
      _
    // Predicated region
    $region98: #{model_forward.1} parent=1 // pred_check
      _
    $region99: #{model_forward.1} parent=1 // pred_check_branch
      %120 = sbr.rel (0) target = $region101
    $region100: #{model_forward.1} parent=1 // pred_region
      _
    $region101: #{model_forward.1} parent=1 // pred_fallthru
      _
    // Predicated region
    $region102: #{model_forward.1} parent=1 // pred_check
      _
    $region103: #{model_forward.1} parent=1 // pred_check_branch
      %122 = sbr.rel (0) target = $region105
    $region104: #{model_forward.1} parent=1 // pred_region
      _
    $region105: #{model_forward.1} parent=1 // pred_fallthru
      _
    // Predicated region
    $region106: #{model_forward.1} parent=1 // pred_check
      _
    $region107: #{model_forward.1} parent=1 // pred_check_branch
      %124 = sbr.rel (0) target = $region109
    $region108: #{model_forward.1} parent=1 // pred_region
      _
    $region109: #{model_forward.1} parent=1 // pred_fallthru
      _
    // Predicated region
    $region110: #{model_forward.1} parent=1 // pred_check
      _
    $region111: #{model_forward.1} parent=1 // pred_check_branch
      %126 = sbr.rel (0) target = $region113
    $region112: #{model_forward.1} parent=1 // pred_region
      _
    $region113: #{model_forward.1} parent=1 // pred_fallthru
      _
    // Predicated region
    $region114: #{model_forward.1} parent=1 // pred_check
      _
    $region115: #{model_forward.1} parent=1 // pred_check_branch
      %128 = sbr.rel (0) target = $region117
    $region116: #{model_forward.1} parent=1 // pred_region
      %s130 = ssub.s32 16, 16
      %131 = vsyncadd [#allocation3], %s130
      %s133 = sshll.u32 [#allocation2], 4
      %s134 = int_to_ptr.vmem [resolvable:$true] %s133
      %136 = dma.hbm_to_vmem [thread:$0]  %s57, 16, %s134, [#allocation3]
    $region117: #{model_forward.1} parent=1 // pred_fallthru
      _
    // Predicated region
    $region118: #{model_forward.1} parent=1 // pred_check
      _
    $region119: #{model_forward.1} parent=1 // pred_check_branch
      %138 = sbr.rel (0) target = $region121
    $region120: #{model_forward.1} parent=1 // pred_region
      _
    $region121: #{model_forward.1} parent=1 // pred_fallthru
      _
    // Predicated region
    $region122: #{model_forward.1} parent=1 // pred_check
      _
    $region123: #{model_forward.1} parent=1 // pred_check_branch
      %140 = sbr.rel (0) target = $region125
    $region124: #{model_forward.1} parent=1 // pred_region
      %s142 = ssub.s32 16, 16
      %143 = vsyncadd [#allocation6], %s142
      %s145 = sshll.u32 [#allocation5], 4
      %s146 = int_to_ptr.vmem [resolvable:$true] %s145
      %148 = dma.hbm_to_vmem [thread:$0]  %s61, 16, %s146, [#allocation6]
    $region125: #{model_forward.1} parent=1 // pred_fallthru
      _
    // Predicated region
    $region126: #{model_forward.1} parent=1 // pred_check
      _
    $region127: #{model_forward.1} parent=1 // pred_check_branch
      %150 = sbr.rel (0) target = $region129
    $region128: #{model_forward.1} parent=1 // pred_region
      %151 = dma.done [#allocation3], 16
    $region129: #{model_forward.1} parent=1 // pred_fallthru
      _
    // Predicated region
    $region130: #{model_forward.1} parent=1 // pred_check
      _
    $region131: #{model_forward.1} parent=1 // pred_check_branch
      %153 = sbr.rel (0) target = $region133
    $region132: #{model_forward.1} parent=1 // pred_region
      %154 = dma.done [#allocation6], 16
    $region133: #{model_forward.1} parent=1 // pred_fallthru
      _
    %v155 = vld [vmem:[%s1] sm:$0xff]
    %v156 = vld [vmem:[%s1 + $0x8] sm:$0xff]
    %v157 = vld [vmem:[%s3] sm:$0xff]
    %v158 = vld [vmem:[%s3 + $0x8] sm:$0xff]
    %v159 = vld [vmem:[%s5] sm:$0xff]
    %v160 = vld [vmem:[%s5 + $0x8] sm:$0xff]
    %v161 = vld [vmem:[%s7] sm:$0xff]
    %v162 = vld [vmem:[%s7 + $0x8] sm:$0xff]
    %164 = vset.pattern.permute.xlu0 0
    %165 = vperm.xlu0 %164, %v155
    %v166 = vpop.permute.xlu0 %165
    %169 = vset.pattern.permute.xlu0 0
    %170 = vperm.xlu0 %169, %v156
    %v171 = vpop.permute.xlu0 %170
    %v173 = vmul.f32 %v166, %v161
    %v174 = vmul.f32 %v171, %v162
    %v175 = vld [vmem:[%s9] sm:$0xff]
    %v176 = vld [vmem:[%s9 + $0x8] sm:$0xff]
    %v177 = vadd.f32 %v173, %v175
    %v178 = vadd.f32 %v174, %v176
    %v179 = vadd.f32 %v177, %v159
    %v180 = vadd.f32 %v178, %v160
    %v181 = vld [vmem:[%s15] sm:$0x1]
    %v182 = vld [vmem:[%s17] sm:$0x1]
    %vm183 = vcmask 261120
    %v184 = vsel %vm183, %v179, 0.0
    %185 = vadd.xlane.f32.xlu0 %v184
    %v186 = vpop.xlane.xlu0 %185
    %v187 = vsel %vm183, %v180, 0.0
    %188 = vadd.xlane.f32.xlu0 %v187
    %v189 = vpop.xlane.xlu0 %188
    %v190 = vrcp.pop 32.0
    %v191 = vmul.f32 %v186, %v190
    %v192 = vmul.f32 %v189, %v190
    %v193 = vsub.f32 %v179, %v191
    %v194 = vsub.f32 %v180, %v192
    %v195 = vmul.f32 %v193, %v193
    %v196 = vmul.f32 %v194, %v194
    %v197 = vsel %vm183, %v195, 0.0
    %198 = vadd.xlane.f32.xlu0 %v197
    %v199 = vpop.xlane.xlu0 %198
    %v200 = vsel %vm183, %v196, 0.0
    %201 = vadd.xlane.f32.xlu0 %v200
    %v202 = vpop.xlane.xlu0 %201
    %v203 = vmul.f32 %v199, %v190
    %v204 = vmul.f32 %v202, %v190
    %v205 = vadd.f32 %v203, 1e-05
    %v206 = vadd.f32 %v204, 1e-05
    %v207 = vrsqrt.pop %v205
    %v208 = vrsqrt.pop %v206
    %v209 = vmul.f32 %v193, %v207
    %v210 = vmul.f32 %v194, %v208
    %v212 = vlaneseq
    %v213 = vshrl.u32 %v212, 7
    %v214 = vsub.s32 0, %v213
    %v215 = vrot.slane %v181, %v214
    %v217 = vmul.f32 %v209, %v215
    %v218 = vmul.f32 %v210, %v215
    %v220 = vlaneseq
    %v221 = vshrl.u32 %v220, 7
    %v222 = vsub.s32 0, %v221
    %v223 = vrot.slane %v182, %v222
    %v225 = vadd.f32 %v217, %v223
    %v226 = vadd.f32 %v218, %v223
    %v227 = vmul.f32 %v225, 0.35355338
    %v228 = vmul.f32 %v226, 0.35355338
    %vm229 = vcmask 64512
    %v231 = vsel %vm229, %v227, 0
    %v234 = vsel %vm229, %v228, 0
    %v237 = vsel %vm229, %v225, 0
    %v240 = vsel %vm229, %v226, 0
    %242 = vmatprep.subr.mxu0 0.0
    %243 = vmatpush1.xpose.msra.mxu0 %v237
    %244 = vmatprep.subr.mxu0 0.0
    %245 = vmatpush1.xpose.msra.mxu0 %v240
    %246 = vmatprep.subr.mxu0 0.0
    %247 = vmatpush1.xpose.msra.mxu0 0.0
    %248 = vmatprep.subr.mxu0 0.0
    %249 = vmatpush1.xpose.msra.mxu0 0.0
    %250 = vmatprep.subr.mxu0 0.0
    %251 = vmatpush1.xpose.msra.mxu0 0.0
    %252 = vmatprep.subr.mxu0 0.0
    %253 = vmatpush1.xpose.msra.mxu0 0.0
    %254 = vmatprep.subr.mxu0 0.0
    %255 = vmatpush1.xpose.msra.mxu0 0.0
    %256 = vmatprep.subr.mxu0 0.0
    %257 = vmatpush1.xpose.msra.mxu0 0.0
    %258 = vmatprep.subr.mxu0 0.0
    %259 = vmatpush1.xpose.msra.mxu0 0.0
    %260 = vmatprep.subr.mxu0 0.0
    %261 = vmatpush1.xpose.msra.mxu0 0.0
    %262 = vmatprep.subr.mxu0 0.0
    %263 = vmatpush1.xpose.msra.mxu0 0.0
    %264 = vmatprep.subr.mxu0 0.0
    %265 = vmatpush1.xpose.msra.mxu0 0.0
    %266 = vmatprep.subr.mxu0 0.0
    %267 = vmatpush1.xpose.msra.mxu0 0.0
    %268 = vmatprep.subr.mxu0 0.0
    %269 = vmatpush1.xpose.msra.mxu0 0.0
    %270 = vmatprep.subr.mxu0 0.0
    %271 = vmatpush1.xpose.msra.mxu0 0.0
    %272 = vmatprep.subr.mxu0 0.0
    %273 = vmatpush1.xpose.msra.mxu0 0.0
    %274 = vmatprep.subr.mxu0 0.0
    %275 = vmatpush1.xpose.msra.mxu0 0.0
    %276 = vmatprep.subr.mxu0 0.0
    %277 = vmatpush1.xpose.msra.mxu0 0.0
    %278 = vmatprep.subr.mxu0 0.0
    %279 = vmatpush1.xpose.msra.mxu0 0.0
    %280 = vmatprep.subr.mxu0 0.0
    %281 = vmatpush1.xpose.msra.mxu0 0.0
    %282 = vmatprep.subr.mxu0 0.0
    %283 = vmatpush1.xpose.msra.mxu0 0.0
    %284 = vmatprep.subr.mxu0 0.0
    %285 = vmatpush1.xpose.msra.mxu0 0.0
    %286 = vmatprep.subr.mxu0 0.0
    %287 = vmatpush1.xpose.msra.mxu0 0.0
    %288 = vmatprep.subr.mxu0 0.0
    %289 = vmatpush1.xpose.msra.mxu0 0.0
    %290 = vmatprep.subr.mxu0 0.0
    %291 = vmatpush1.xpose.msra.mxu0 0.0
    %292 = vmatprep.subr.mxu0 0.0
    %293 = vmatpush1.xpose.msra.mxu0 0.0
    %294 = vmatprep.subr.mxu0 0.0
    %295 = vmatpush1.xpose.msra.mxu0 0.0
    %296 = vmatprep.subr.mxu0 0.0
    %297 = vmatpush1.xpose.msra.mxu0 0.0
    %298 = vmatprep.subr.mxu0 0.0
    %299 = vmatpush1.xpose.msra.mxu0 0.0
    %300 = vmatprep.subr.mxu0 0.0
    %301 = vmatpush1.xpose.msra.mxu0 0.0
    %302 = vmatprep.subr.mxu0 0.0
    %303 = vmatpush1.xpose.msra.mxu0 0.0
    %304 = vmatprep.subr.mxu0 0.0
    %305 = vmatpush1.xpose.msra.mxu0 0.0
    %306 = vmatprep.mubr.f32.mxu0 0.0
    %307 = vmatmul.mubr.f32.gmra.mrb[0].mxu0 %v231
    %v308 = vpop.f32.mrb[0].mxu0
    %v309 = vadd.f32 %v157, %v308
    %v310 = vpop.f32.mrb[0].mxu0
    %311 = vmatprep.mubr.f32.mxu0 0.0
    %312 = vmatmul.mubr.f32.gmra.mrb[0].mxu0 %v234
    %v313 = vpop.f32.mrb[0].mxu0
    %v314 = vadd.f32 %v158, %v313
    %v315 = vpop.f32.mrb[0].mxu0
    %316 = vdwg.mxu0
    %vm317 = vcmask 130048
    %v318 = vsel %vm317, %v309, -inf
    %319 = vmax.xlane.f32.xlu0 %v318
    %v320 = vpop.xlane.xlu0 %319
    %v321 = vsel %vm317, %v314, -inf
    %322 = vmax.xlane.f32.xlu0 %v321
    %v323 = vpop.xlane.xlu0 %322
    %v324 = vsub.f32 %v309, %v320
    %v325 = vsub.f32 %v314, %v323
    %v326 = vmul.f32 %v324, 1.442695
    %v327 = vpow.pop %v326
    %v328 = vmul.f32 %v325, 1.442695
    %v329 = vpow.pop %v328
    %v330 = vsel %vm317, %v327, 0.0
    %331 = vadd.xlane.f32.xlu0 %v330
    %v332 = vpop.xlane.xlu0 %331
    %v333 = vsel %vm317, %v329, 0.0
    %334 = vadd.xlane.f32.xlu0 %v333
    %v335 = vpop.xlane.xlu0 %334
    %v336 = vrcp.pop %v332
    %v337 = vmul.f32 %v327, %v336
    %v338 = vrcp.pop %v335
    %v339 = vmul.f32 %v329, %v338
    %v341 = vsel %vm317, %v337, 0
    %v344 = vsel %vm317, %v339, 0
    %346 = vmatprep.subr.mxu0 0.0
    %347 = vmatpush1.msra.mxu0 %v225
    %348 = vmatprep.subr.mxu0 0.0
    %349 = vmatpush1.msra.mxu0 %v226
    %350 = vmatprep.subr.mxu0 0.0
    %351 = vmatpush1.msra.mxu0 0.0
    %352 = vmatprep.subr.mxu0 0.0
    %353 = vmatpush1.msra.mxu0 0.0
    %354 = vmatprep.subr.mxu0 0.0
    %355 = vmatpush1.msra.mxu0 0.0
    %356 = vmatprep.subr.mxu0 0.0
    %357 = vmatpush1.msra.mxu0 0.0
    %358 = vmatprep.subr.mxu0 0.0
    %359 = vmatpush1.msra.mxu0 0.0
    %360 = vmatprep.subr.mxu0 0.0
    %361 = vmatpush1.msra.mxu0 0.0
    %362 = vmatprep.subr.mxu0 0.0
    %363 = vmatpush1.msra.mxu0 0.0
    %364 = vmatprep.subr.mxu0 0.0
    %365 = vmatpush1.msra.mxu0 0.0
    %366 = vmatprep.subr.mxu0 0.0
    %367 = vmatpush1.msra.mxu0 0.0
    %368 = vmatprep.subr.mxu0 0.0
    %369 = vmatpush1.msra.mxu0 0.0
    %370 = vmatprep.subr.mxu0 0.0
    %371 = vmatpush1.msra.mxu0 0.0
    %372 = vmatprep.subr.mxu0 0.0
    %373 = vmatpush1.msra.mxu0 0.0
    %374 = vmatprep.subr.mxu0 0.0
    %375 = vmatpush1.msra.mxu0 0.0
    %376 = vmatprep.subr.mxu0 0.0
    %377 = vmatpush1.msra.mxu0 0.0
    %378 = vmatprep.subr.mxu0 0.0
    %379 = vmatpush1.msra.mxu0 0.0
    %380 = vmatprep.subr.mxu0 0.0
    %381 = vmatpush1.msra.mxu0 0.0
    %382 = vmatprep.subr.mxu0 0.0
    %383 = vmatpush1.msra.mxu0 0.0
    %384 = vmatprep.subr.mxu0 0.0
    %385 = vmatpush1.msra.mxu0 0.0
    %386 = vmatprep.subr.mxu0 0.0
    %387 = vmatpush1.msra.mxu0 0.0
    %388 = vmatprep.subr.mxu0 0.0
    %389 = vmatpush1.msra.mxu0 0.0
    %390 = vmatprep.subr.mxu0 0.0
    %391 = vmatpush1.msra.mxu0 0.0
    %392 = vmatprep.subr.mxu0 0.0
    %393 = vmatpush1.msra.mxu0 0.0
    %394 = vmatprep.subr.mxu0 0.0
    %395 = vmatpush1.msra.mxu0 0.0
    %396 = vmatprep.subr.mxu0 0.0
    %397 = vmatpush1.msra.mxu0 0.0
    %398 = vmatprep.subr.mxu0 0.0
    %399 = vmatpush1.msra.mxu0 0.0
    %400 = vmatprep.subr.mxu0 0.0
    %401 = vmatpush1.msra.mxu0 0.0
    %402 = vmatprep.subr.mxu0 0.0
    %403 = vmatpush1.msra.mxu0 0.0
    %404 = vmatprep.subr.mxu0 0.0
    %405 = vmatpush1.msra.mxu0 0.0
    %406 = vmatprep.subr.mxu0 0.0
    %407 = vmatpush1.msra.mxu0 0.0
    %408 = vmatprep.subr.mxu0 0.0
    %409 = vmatpush1.msra.mxu0 0.0
    %410 = vmatprep.mubr.f32.mxu0 0.0
    %411 = vmatmul.mubr.f32.gmra.mrb[0].mxu0 %v341
    %v412 = vpop.f32.mrb[0].mxu0
    %v413 = vadd.f32 0.0, %v412
    %v414 = vpop.f32.mrb[0].mxu0
    %415 = vmatprep.mubr.f32.mxu0 0.0
    %416 = vmatmul.mubr.f32.gmra.mrb[0].mxu0 %v344
    %v417 = vpop.f32.mrb[0].mxu0
    %v418 = vadd.f32 0.0, %v417
    %v419 = vpop.f32.mrb[0].mxu0
    %420 = vdwg.mxu0
    %421 = vrot.lane.b32.xlu0 %v227, 120
    %v422 = vpop.permute.xlu0 %421
    %423 = vrot.lane.b32.xlu0 %v228, 120
    %v424 = vpop.permute.xlu0 %423
    %425 = vrot.lane.b32.xlu0 %v225, 120
    %v426 = vpop.permute.xlu0 %425
    %427 = vrot.lane.b32.xlu0 %v226, 120
    %v428 = vpop.permute.xlu0 %427
    %v429 = vsel %vm229, %v422, 0
    %v431 = vsel %vm229, %v424, 0
    %v433 = vsel %vm229, %v426, 0
    %v435 = vsel %vm229, %v428, 0
    %437 = vmatprep.subr.mxu0 0.0
    %438 = vmatpush1.xpose.msra.mxu0 %v433
    %439 = vmatprep.subr.mxu0 0.0
    %440 = vmatpush1.xpose.msra.mxu0 %v435
    %441 = vmatprep.subr.mxu0 0.0
    %442 = vmatpush1.xpose.msra.mxu0 0.0
    %443 = vmatprep.subr.mxu0 0.0
    %444 = vmatpush1.xpose.msra.mxu0 0.0
    %445 = vmatprep.subr.mxu0 0.0
    %446 = vmatpush1.xpose.msra.mxu0 0.0
    %447 = vmatprep.subr.mxu0 0.0
    %448 = vmatpush1.xpose.msra.mxu0 0.0
    %449 = vmatprep.subr.mxu0 0.0
    %450 = vmatpush1.xpose.msra.mxu0 0.0
    %451 = vmatprep.subr.mxu0 0.0
    %452 = vmatpush1.xpose.msra.mxu0 0.0
    %453 = vmatprep.subr.mxu0 0.0
    %454 = vmatpush1.xpose.msra.mxu0 0.0
    %455 = vmatprep.subr.mxu0 0.0
    %456 = vmatpush1.xpose.msra.mxu0 0.0
    %457 = vmatprep.subr.mxu0 0.0
    %458 = vmatpush1.xpose.msra.mxu0 0.0
    %459 = vmatprep.subr.mxu0 0.0
    %460 = vmatpush1.xpose.msra.mxu0 0.0
    %461 = vmatprep.subr.mxu0 0.0
    %462 = vmatpush1.xpose.msra.mxu0 0.0
    %463 = vmatprep.subr.mxu0 0.0
    %464 = vmatpush1.xpose.msra.mxu0 0.0
    %465 = vmatprep.subr.mxu0 0.0
    %466 = vmatpush1.xpose.msra.mxu0 0.0
    %467 = vmatprep.subr.mxu0 0.0
    %468 = vmatpush1.xpose.msra.mxu0 0.0
    %469 = vmatprep.subr.mxu0 0.0
    %470 = vmatpush1.xpose.msra.mxu0 0.0
    %471 = vmatprep.subr.mxu0 0.0
    %472 = vmatpush1.xpose.msra.mxu0 0.0
    %473 = vmatprep.subr.mxu0 0.0
    %474 = vmatpush1.xpose.msra.mxu0 0.0
    %475 = vmatprep.subr.mxu0 0.0
    %476 = vmatpush1.xpose.msra.mxu0 0.0
    %477 = vmatprep.subr.mxu0 0.0
    %478 = vmatpush1.xpose.msra.mxu0 0.0
    %479 = vmatprep.subr.mxu0 0.0
    %480 = vmatpush1.xpose.msra.mxu0 0.0
    %481 = vmatprep.subr.mxu0 0.0
    %482 = vmatpush1.xpose.msra.mxu0 0.0
    %483 = vmatprep.subr.mxu0 0.0
    %484 = vmatpush1.xpose.msra.mxu0 0.0
    %485 = vmatprep.subr.mxu0 0.0
    %486 = vmatpush1.xpose.msra.mxu0 0.0
    %487 = vmatprep.subr.mxu0 0.0
    %488 = vmatpush1.xpose.msra.mxu0 0.0
    %489 = vmatprep.subr.mxu0 0.0
    %490 = vmatpush1.xpose.msra.mxu0 0.0
    %491 = vmatprep.subr.mxu0 0.0
    %492 = vmatpush1.xpose.msra.mxu0 0.0
    %493 = vmatprep.subr.mxu0 0.0
    %494 = vmatpush1.xpose.msra.mxu0 0.0
    %495 = vmatprep.subr.mxu0 0.0
    %496 = vmatpush1.xpose.msra.mxu0 0.0
    %497 = vmatprep.subr.mxu0 0.0
    %498 = vmatpush1.xpose.msra.mxu0 0.0
    %499 = vmatprep.subr.mxu0 0.0
    %500 = vmatpush1.xpose.msra.mxu0 0.0
    %501 = vmatprep.mubr.f32.mxu0 0.0
    %502 = vmatmul.mubr.f32.gmra.mrb[0].mxu0 %v429
    %v503 = vpop.f32.mrb[0].mxu0
    %v504 = vadd.f32 %v157, %v503
    %v505 = vpop.f32.mrb[0].mxu0
    %506 = vmatprep.mubr.f32.mxu0 0.0
    %507 = vmatmul.mubr.f32.gmra.mrb[0].mxu0 %v431
    %v508 = vpop.f32.mrb[0].mxu0
    %v509 = vadd.f32 %v158, %v508
    %v510 = vpop.f32.mrb[0].mxu0
    %511 = vdwg.mxu0
    %v512 = vsel %vm317, %v504, -inf
    %513 = vmax.xlane.f32.xlu0 %v512
    %v514 = vpop.xlane.xlu0 %513
    %v515 = vsel %vm317, %v509, -inf
    %516 = vmax.xlane.f32.xlu0 %v515
    %v517 = vpop.xlane.xlu0 %516
    %v518 = vsub.f32 %v504, %v514
    %v519 = vsub.f32 %v509, %v517
    %v520 = vmul.f32 %v518, 1.442695
    %v521 = vpow.pop %v520
    %v522 = vmul.f32 %v519, 1.442695
    %v523 = vpow.pop %v522
    %v524 = vsel %vm317, %v521, 0.0
    %525 = vadd.xlane.f32.xlu0 %v524
    %v526 = vpop.xlane.xlu0 %525
    %v527 = vsel %vm317, %v523, 0.0
    %528 = vadd.xlane.f32.xlu0 %v527
    %v529 = vpop.xlane.xlu0 %528
    %v530 = vrcp.pop %v526
    %v531 = vmul.f32 %v521, %v530
    %v532 = vrcp.pop %v529
    %v533 = vmul.f32 %v523, %v532
    %v537 = vsel %vm317, %v531, 0
    %v540 = vsel %vm317, %v533, 0
    %542 = vmatprep.subr.mxu0 0.0
    %543 = vmatpush1.msra.mxu0 %v426
    %544 = vmatprep.subr.mxu0 0.0
    %545 = vmatpush1.msra.mxu0 %v428
    %546 = vmatprep.subr.mxu0 0.0
    %547 = vmatpush1.msra.mxu0 0.0
    %548 = vmatprep.subr.mxu0 0.0
    %549 = vmatpush1.msra.mxu0 0.0
    %550 = vmatprep.subr.mxu0 0.0
    %551 = vmatpush1.msra.mxu0 0.0
    %552 = vmatprep.subr.mxu0 0.0
    %553 = vmatpush1.msra.mxu0 0.0
    %554 = vmatprep.subr.mxu0 0.0
    %555 = vmatpush1.msra.mxu0 0.0
    %556 = vmatprep.subr.mxu0 0.0
    %557 = vmatpush1.msra.mxu0 0.0
    %558 = vmatprep.subr.mxu0 0.0
    %559 = vmatpush1.msra.mxu0 0.0
    %560 = vmatprep.subr.mxu0 0.0
    %561 = vmatpush1.msra.mxu0 0.0
    %562 = vmatprep.subr.mxu0 0.0
    %563 = vmatpush1.msra.mxu0 0.0
    %564 = vmatprep.subr.mxu0 0.0
    %565 = vmatpush1.msra.mxu0 0.0
    %566 = vmatprep.subr.mxu0 0.0
    %567 = vmatpush1.msra.mxu0 0.0
    %568 = vmatprep.subr.mxu0 0.0
    %569 = vmatpush1.msra.mxu0 0.0
    %570 = vmatprep.subr.mxu0 0.0
    %571 = vmatpush1.msra.mxu0 0.0
    %572 = vmatprep.subr.mxu0 0.0
    %573 = vmatpush1.msra.mxu0 0.0
    %574 = vmatprep.subr.mxu0 0.0
    %575 = vmatpush1.msra.mxu0 0.0
    %576 = vmatprep.subr.mxu0 0.0
    %577 = vmatpush1.msra.mxu0 0.0
    %578 = vmatprep.subr.mxu0 0.0
    %579 = vmatpush1.msra.mxu0 0.0
    %580 = vmatprep.subr.mxu0 0.0
    %581 = vmatpush1.msra.mxu0 0.0
    %582 = vmatprep.subr.mxu0 0.0
    %583 = vmatpush1.msra.mxu0 0.0
    %584 = vmatprep.subr.mxu0 0.0
    %585 = vmatpush1.msra.mxu0 0.0
    %586 = vmatprep.subr.mxu0 0.0
    %587 = vmatpush1.msra.mxu0 0.0
    %588 = vmatprep.subr.mxu0 0.0
    %589 = vmatpush1.msra.mxu0 0.0
    %590 = vmatprep.subr.mxu0 0.0
    %591 = vmatpush1.msra.mxu0 0.0
    %592 = vmatprep.subr.mxu0 0.0
    %593 = vmatpush1.msra.mxu0 0.0
    %594 = vmatprep.subr.mxu0 0.0
    %595 = vmatpush1.msra.mxu0 0.0
    %596 = vmatprep.subr.mxu0 0.0
    %597 = vmatpush1.msra.mxu0 0.0
    %598 = vmatprep.subr.mxu0 0.0
    %599 = vmatpush1.msra.mxu0 0.0
    %600 = vmatprep.subr.mxu0 0.0
    %601 = vmatpush1.msra.mxu0 0.0
    %602 = vmatprep.subr.mxu0 0.0
    %603 = vmatpush1.msra.mxu0 0.0
    %604 = vmatprep.subr.mxu0 0.0
    %605 = vmatpush1.msra.mxu0 0.0
    %606 = vmatprep.mubr.f32.mxu0 0.0
    %607 = vmatmul.mubr.f32.gmra.mrb[0].mxu0 %v537
    %v608 = vpop.f32.mrb[0].mxu0
    %v609 = vadd.f32 0.0, %v608
    %v610 = vpop.f32.mrb[0].mxu0
    %611 = vmatprep.mubr.f32.mxu0 0.0
    %612 = vmatmul.mubr.f32.gmra.mrb[0].mxu0 %v540
    %v613 = vpop.f32.mrb[0].mxu0
    %v614 = vadd.f32 0.0, %v613
    %v615 = vpop.f32.mrb[0].mxu0
    %616 = vdwg.mxu0
    %617 = vrot.lane.b32.xlu0 %v227, 112
    %v618 = vpop.permute.xlu0 %617
    %619 = vrot.lane.b32.xlu0 %v228, 112
    %v620 = vpop.permute.xlu0 %619
    %621 = vrot.lane.b32.xlu0 %v225, 112
    %v622 = vpop.permute.xlu0 %621
    %623 = vrot.lane.b32.xlu0 %v226, 112
    %v624 = vpop.permute.xlu0 %623
    %v625 = vsel %vm229, %v618, 0
    %v627 = vsel %vm229, %v620, 0
    %v629 = vsel %vm229, %v622, 0
    %v631 = vsel %vm229, %v624, 0
    %633 = vmatprep.subr.mxu0 0.0
    %634 = vmatpush1.xpose.msra.mxu0 %v629
    %635 = vmatprep.subr.mxu0 0.0
    %636 = vmatpush1.xpose.msra.mxu0 %v631
    %637 = vmatprep.subr.mxu0 0.0
    %638 = vmatpush1.xpose.msra.mxu0 0.0
    %639 = vmatprep.subr.mxu0 0.0
    %640 = vmatpush1.xpose.msra.mxu0 0.0
    %641 = vmatprep.subr.mxu0 0.0
    %642 = vmatpush1.xpose.msra.mxu0 0.0
    %643 = vmatprep.subr.mxu0 0.0
    %644 = vmatpush1.xpose.msra.mxu0 0.0
    %645 = vmatprep.subr.mxu0 0.0
    %646 = vmatpush1.xpose.msra.mxu0 0.0
    %647 = vmatprep.subr.mxu0 0.0
    %648 = vmatpush1.xpose.msra.mxu0 0.0
    %649 = vmatprep.subr.mxu0 0.0
    %650 = vmatpush1.xpose.msra.mxu0 0.0
    %651 = vmatprep.subr.mxu0 0.0
    %652 = vmatpush1.xpose.msra.mxu0 0.0
    %653 = vmatprep.subr.mxu0 0.0
    %654 = vmatpush1.xpose.msra.mxu0 0.0
    %655 = vmatprep.subr.mxu0 0.0
    %656 = vmatpush1.xpose.msra.mxu0 0.0
    %657 = vmatprep.subr.mxu0 0.0
    %658 = vmatpush1.xpose.msra.mxu0 0.0
    %659 = vmatprep.subr.mxu0 0.0
    %660 = vmatpush1.xpose.msra.mxu0 0.0
    %661 = vmatprep.subr.mxu0 0.0
    %662 = vmatpush1.xpose.msra.mxu0 0.0
    %663 = vmatprep.subr.mxu0 0.0
    %664 = vmatpush1.xpose.msra.mxu0 0.0
    %665 = vmatprep.subr.mxu0 0.0
    %666 = vmatpush1.xpose.msra.mxu0 0.0
    %667 = vmatprep.subr.mxu0 0.0
    %668 = vmatpush1.xpose.msra.mxu0 0.0
    %669 = vmatprep.subr.mxu0 0.0
    %670 = vmatpush1.xpose.msra.mxu0 0.0
    %671 = vmatprep.subr.mxu0 0.0
    %672 = vmatpush1.xpose.msra.mxu0 0.0
    %673 = vmatprep.subr.mxu0 0.0
    %674 = vmatpush1.xpose.msra.mxu0 0.0
    %675 = vmatprep.subr.mxu0 0.0
    %676 = vmatpush1.xpose.msra.mxu0 0.0
    %677 = vmatprep.subr.mxu0 0.0
    %678 = vmatpush1.xpose.msra.mxu0 0.0
    %679 = vmatprep.subr.mxu0 0.0
    %680 = vmatpush1.xpose.msra.mxu0 0.0
    %681 = vmatprep.subr.mxu0 0.0
    %682 = vmatpush1.xpose.msra.mxu0 0.0
    %683 = vmatprep.subr.mxu0 0.0
    %684 = vmatpush1.xpose.msra.mxu0 0.0
    %685 = vmatprep.subr.mxu0 0.0
    %686 = vmatpush1.xpose.msra.mxu0 0.0
    %687 = vmatprep.subr.mxu0 0.0
    %688 = vmatpush1.xpose.msra.mxu0 0.0
    %689 = vmatprep.subr.mxu0 0.0
    %690 = vmatpush1.xpose.msra.mxu0 0.0
    %691 = vmatprep.subr.mxu0 0.0
    %692 = vmatpush1.xpose.msra.mxu0 0.0
    %693 = vmatprep.subr.mxu0 0.0
    %694 = vmatpush1.xpose.msra.mxu0 0.0
    %695 = vmatprep.subr.mxu0 0.0
    %696 = vmatpush1.xpose.msra.mxu0 0.0
    %697 = vmatprep.mubr.f32.mxu0 0.0
    %698 = vmatmul.mubr.f32.gmra.mrb[0].mxu0 %v625
    %v699 = vpop.f32.mrb[0].mxu0
    %v700 = vadd.f32 %v157, %v699
    %v701 = vpop.f32.mrb[0].mxu0
    %702 = vmatprep.mubr.f32.mxu0 0.0
    %703 = vmatmul.mubr.f32.gmra.mrb[0].mxu0 %v627
    %v704 = vpop.f32.mrb[0].mxu0
    %v705 = vadd.f32 %v158, %v704
    %v706 = vpop.f32.mrb[0].mxu0
    %707 = vdwg.mxu0
    %v708 = vsel %vm317, %v700, -inf
    %709 = vmax.xlane.f32.xlu0 %v708
    %v710 = vpop.xlane.xlu0 %709
    %v711 = vsel %vm317, %v705, -inf
    %712 = vmax.xlane.f32.xlu0 %v711
    %v713 = vpop.xlane.xlu0 %712
    %v714 = vsub.f32 %v700, %v710
    %v715 = vsub.f32 %v705, %v713
    %v716 = vmul.f32 %v714, 1.442695
    %v717 = vpow.pop %v716
    %v718 = vmul.f32 %v715, 1.442695
    %v719 = vpow.pop %v718
    %v720 = vsel %vm317, %v717, 0.0
    %721 = vadd.xlane.f32.xlu0 %v720
    %v722 = vpop.xlane.xlu0 %721
    %v723 = vsel %vm317, %v719, 0.0
    %724 = vadd.xlane.f32.xlu0 %v723
    %v725 = vpop.xlane.xlu0 %724
    %v726 = vrcp.pop %v722
    %v727 = vmul.f32 %v717, %v726
    %v728 = vrcp.pop %v725
    %v729 = vmul.f32 %v719, %v728
    %v733 = vsel %vm317, %v727, 0
    %v736 = vsel %vm317, %v729, 0
    %738 = vmatprep.subr.mxu0 0.0
    %739 = vmatpush1.msra.mxu0 %v622
    %740 = vmatprep.subr.mxu0 0.0
    %741 = vmatpush1.msra.mxu0 %v624
    %742 = vmatprep.subr.mxu0 0.0
    %743 = vmatpush1.msra.mxu0 0.0
    %744 = vmatprep.subr.mxu0 0.0
    %745 = vmatpush1.msra.mxu0 0.0
    %746 = vmatprep.subr.mxu0 0.0
    %747 = vmatpush1.msra.mxu0 0.0
    %748 = vmatprep.subr.mxu0 0.0
    %749 = vmatpush1.msra.mxu0 0.0
    %750 = vmatprep.subr.mxu0 0.0
    %751 = vmatpush1.msra.mxu0 0.0
    %752 = vmatprep.subr.mxu0 0.0
    %753 = vmatpush1.msra.mxu0 0.0
    %754 = vmatprep.subr.mxu0 0.0
    %755 = vmatpush1.msra.mxu0 0.0
    %756 = vmatprep.subr.mxu0 0.0
    %757 = vmatpush1.msra.mxu0 0.0
    %758 = vmatprep.subr.mxu0 0.0
    %759 = vmatpush1.msra.mxu0 0.0
    %760 = vmatprep.subr.mxu0 0.0
    %761 = vmatpush1.msra.mxu0 0.0
    %762 = vmatprep.subr.mxu0 0.0
    %763 = vmatpush1.msra.mxu0 0.0
    %764 = vmatprep.subr.mxu0 0.0
    %765 = vmatpush1.msra.mxu0 0.0
    %766 = vmatprep.subr.mxu0 0.0
    %767 = vmatpush1.msra.mxu0 0.0
    %768 = vmatprep.subr.mxu0 0.0
    %769 = vmatpush1.msra.mxu0 0.0
    %770 = vmatprep.subr.mxu0 0.0
    %771 = vmatpush1.msra.mxu0 0.0
    %772 = vmatprep.subr.mxu0 0.0
    %773 = vmatpush1.msra.mxu0 0.0
    %774 = vmatprep.subr.mxu0 0.0
    %775 = vmatpush1.msra.mxu0 0.0
    %776 = vmatprep.subr.mxu0 0.0
    %777 = vmatpush1.msra.mxu0 0.0
    %778 = vmatprep.subr.mxu0 0.0
    %779 = vmatpush1.msra.mxu0 0.0
    %780 = vmatprep.subr.mxu0 0.0
    %781 = vmatpush1.msra.mxu0 0.0
    %782 = vmatprep.subr.mxu0 0.0
    %783 = vmatpush1.msra.mxu0 0.0
    %784 = vmatprep.subr.mxu0 0.0
    %785 = vmatpush1.msra.mxu0 0.0
    %786 = vmatprep.subr.mxu0 0.0
    %787 = vmatpush1.msra.mxu0 0.0
    %788 = vmatprep.subr.mxu0 0.0
    %789 = vmatpush1.msra.mxu0 0.0
    %790 = vmatprep.subr.mxu0 0.0
    %791 = vmatpush1.msra.mxu0 0.0
    %792 = vmatprep.subr.mxu0 0.0
    %793 = vmatpush1.msra.mxu0 0.0
    %794 = vmatprep.subr.mxu0 0.0
    %795 = vmatpush1.msra.mxu0 0.0
    %796 = vmatprep.subr.mxu0 0.0
    %797 = vmatpush1.msra.mxu0 0.0
    %798 = vmatprep.subr.mxu0 0.0
    %799 = vmatpush1.msra.mxu0 0.0
    %800 = vmatprep.subr.mxu0 0.0
    %801 = vmatpush1.msra.mxu0 0.0
    %802 = vmatprep.mubr.f32.mxu0 0.0
    %803 = vmatmul.mubr.f32.gmra.mrb[0].mxu0 %v733
    %v804 = vpop.f32.mrb[0].mxu0
    %v805 = vadd.f32 0.0, %v804
    %v806 = vpop.f32.mrb[0].mxu0
    %807 = vmatprep.mubr.f32.mxu0 0.0
    %808 = vmatmul.mubr.f32.gmra.mrb[0].mxu0 %v736
    %v809 = vpop.f32.mrb[0].mxu0
    %v810 = vadd.f32 0.0, %v809
    %v811 = vpop.f32.mrb[0].mxu0
    %812 = vdwg.mxu0
    %813 = vrot.lane.b32.xlu0 %v227, 104
    %v814 = vpop.permute.xlu0 %813
    %815 = vrot.lane.b32.xlu0 %v228, 104
    %v816 = vpop.permute.xlu0 %815
    %817 = vrot.lane.b32.xlu0 %v225, 104
    %v818 = vpop.permute.xlu0 %817
    %819 = vrot.lane.b32.xlu0 %v226, 104
    %v820 = vpop.permute.xlu0 %819
    %v821 = vsel %vm229, %v814, 0
    %v823 = vsel %vm229, %v816, 0
    %v825 = vsel %vm229, %v818, 0
    %v827 = vsel %vm229, %v820, 0
    %829 = vmatprep.subr.mxu0 0.0
    %830 = vmatpush1.xpose.msra.mxu0 %v825
    %831 = vmatprep.subr.mxu0 0.0
    %832 = vmatpush1.xpose.msra.mxu0 %v827
    %833 = vmatprep.subr.mxu0 0.0
    %834 = vmatpush1.xpose.msra.mxu0 0.0
    %835 = vmatprep.subr.mxu0 0.0
    %836 = vmatpush1.xpose.msra.mxu0 0.0
    %837 = vmatprep.subr.mxu0 0.0
    %838 = vmatpush1.xpose.msra.mxu0 0.0
    %839 = vmatprep.subr.mxu0 0.0
    %840 = vmatpush1.xpose.msra.mxu0 0.0
    %841 = vmatprep.subr.mxu0 0.0
    %842 = vmatpush1.xpose.msra.mxu0 0.0
    %843 = vmatprep.subr.mxu0 0.0
    %844 = vmatpush1.xpose.msra.mxu0 0.0
    %845 = vmatprep.subr.mxu0 0.0
    %846 = vmatpush1.xpose.msra.mxu0 0.0
    %847 = vmatprep.subr.mxu0 0.0
    %848 = vmatpush1.xpose.msra.mxu0 0.0
    %849 = vmatprep.subr.mxu0 0.0
    %850 = vmatpush1.xpose.msra.mxu0 0.0
    %851 = vmatprep.subr.mxu0 0.0
    %852 = vmatpush1.xpose.msra.mxu0 0.0
    %853 = vmatprep.subr.mxu0 0.0
    %854 = vmatpush1.xpose.msra.mxu0 0.0
    %855 = vmatprep.subr.mxu0 0.0
    %856 = vmatpush1.xpose.msra.mxu0 0.0
    %857 = vmatprep.subr.mxu0 0.0
    %858 = vmatpush1.xpose.msra.mxu0 0.0
    %859 = vmatprep.subr.mxu0 0.0
    %860 = vmatpush1.xpose.msra.mxu0 0.0
    %861 = vmatprep.subr.mxu0 0.0
    %862 = vmatpush1.xpose.msra.mxu0 0.0
    %863 = vmatprep.subr.mxu0 0.0
    %864 = vmatpush1.xpose.msra.mxu0 0.0
    %865 = vmatprep.subr.mxu0 0.0
    %866 = vmatpush1.xpose.msra.mxu0 0.0
    %867 = vmatprep.subr.mxu0 0.0
    %868 = vmatpush1.xpose.msra.mxu0 0.0
    %869 = vmatprep.subr.mxu0 0.0
    %870 = vmatpush1.xpose.msra.mxu0 0.0
    %871 = vmatprep.subr.mxu0 0.0
    %872 = vmatpush1.xpose.msra.mxu0 0.0
    %873 = vmatprep.subr.mxu0 0.0
    %874 = vmatpush1.xpose.msra.mxu0 0.0
    %875 = vmatprep.subr.mxu0 0.0
    %876 = vmatpush1.xpose.msra.mxu0 0.0
    %877 = vmatprep.subr.mxu0 0.0
    %878 = vmatpush1.xpose.msra.mxu0 0.0
    %879 = vmatprep.subr.mxu0 0.0
    %880 = vmatpush1.xpose.msra.mxu0 0.0
    %881 = vmatprep.subr.mxu0 0.0
    %882 = vmatpush1.xpose.msra.mxu0 0.0
    %883 = vmatprep.subr.mxu0 0.0
    %884 = vmatpush1.xpose.msra.mxu0 0.0
    %885 = vmatprep.subr.mxu0 0.0
    %886 = vmatpush1.xpose.msra.mxu0 0.0
    %887 = vmatprep.subr.mxu0 0.0
    %888 = vmatpush1.xpose.msra.mxu0 0.0
    %889 = vmatprep.subr.mxu0 0.0
    %890 = vmatpush1.xpose.msra.mxu0 0.0
    %891 = vmatprep.subr.mxu0 0.0
    %892 = vmatpush1.xpose.msra.mxu0 0.0
    %893 = vmatprep.mubr.f32.mxu0 0.0
    %894 = vmatmul.mubr.f32.gmra.mrb[0].mxu0 %v821
    %v895 = vpop.f32.mrb[0].mxu0
    %v896 = vadd.f32 %v157, %v895
    %v897 = vpop.f32.mrb[0].mxu0
    %898 = vmatprep.mubr.f32.mxu0 0.0
    %899 = vmatmul.mubr.f32.gmra.mrb[0].mxu0 %v823
    %v900 = vpop.f32.mrb[0].mxu0
    %v901 = vadd.f32 %v158, %v900
    %v902 = vpop.f32.mrb[0].mxu0
    %903 = vdwg.mxu0
    %v904 = vsel %vm317, %v896, -inf
    %905 = vmax.xlane.f32.xlu0 %v904
    %v906 = vpop.xlane.xlu0 %905
    %v907 = vsel %vm317, %v901, -inf
    %908 = vmax.xlane.f32.xlu0 %v907
    %v909 = vpop.xlane.xlu0 %908
    %v910 = vsub.f32 %v896, %v906
    %v911 = vsub.f32 %v901, %v909
    %v912 = vmul.f32 %v910, 1.442695
    %v913 = vpow.pop %v912
    %v914 = vmul.f32 %v911, 1.442695
    %v915 = vpow.pop %v914
    %v916 = vsel %vm317, %v913, 0.0
    %917 = vadd.xlane.f32.xlu0 %v916
    %v918 = vpop.xlane.xlu0 %917
    %v919 = vsel %vm317, %v915, 0.0
    %920 = vadd.xlane.f32.xlu0 %v919
    %v921 = vpop.xlane.xlu0 %920
    %v922 = vrcp.pop %v918
    %v923 = vmul.f32 %v913, %v922
    %v924 = vrcp.pop %v921
    %v925 = vmul.f32 %v915, %v924
    %v929 = vsel %vm317, %v923, 0
    %v932 = vsel %vm317, %v925, 0
    %934 = vmatprep.subr.mxu0 0.0
    %935 = vmatpush1.msra.mxu0 %v818
    %936 = vmatprep.subr.mxu0 0.0
    %937 = vmatpush1.msra.mxu0 %v820
    %938 = vmatprep.subr.mxu0 0.0
    %939 = vmatpush1.msra.mxu0 0.0
    %940 = vmatprep.subr.mxu0 0.0
    %941 = vmatpush1.msra.mxu0 0.0
    %942 = vmatprep.subr.mxu0 0.0
    %943 = vmatpush1.msra.mxu0 0.0
    %944 = vmatprep.subr.mxu0 0.0
    %945 = vmatpush1.msra.mxu0 0.0
    %946 = vmatprep.subr.mxu0 0.0
    %947 = vmatpush1.msra.mxu0 0.0
    %948 = vmatprep.subr.mxu0 0.0
    %949 = vmatpush1.msra.mxu0 0.0
    %950 = vmatprep.subr.mxu0 0.0
    %951 = vmatpush1.msra.mxu0 0.0
    %952 = vmatprep.subr.mxu0 0.0
    %953 = vmatpush1.msra.mxu0 0.0
    %954 = vmatprep.subr.mxu0 0.0
    %955 = vmatpush1.msra.mxu0 0.0
    %956 = vmatprep.subr.mxu0 0.0
    %957 = vmatpush1.msra.mxu0 0.0
    %958 = vmatprep.subr.mxu0 0.0
    %959 = vmatpush1.msra.mxu0 0.0
    %960 = vmatprep.subr.mxu0 0.0
    %961 = vmatpush1.msra.mxu0 0.0
    %962 = vmatprep.subr.mxu0 0.0
    %963 = vmatpush1.msra.mxu0 0.0
    %964 = vmatprep.subr.mxu0 0.0
    %965 = vmatpush1.msra.mxu0 0.0
    %966 = vmatprep.subr.mxu0 0.0
    %967 = vmatpush1.msra.mxu0 0.0
    %968 = vmatprep.subr.mxu0 0.0
    %969 = vmatpush1.msra.mxu0 0.0
    %970 = vmatprep.subr.mxu0 0.0
    %971 = vmatpush1.msra.mxu0 0.0
    %972 = vmatprep.subr.mxu0 0.0
    %973 = vmatpush1.msra.mxu0 0.0
    %974 = vmatprep.subr.mxu0 0.0
    %975 = vmatpush1.msra.mxu0 0.0
    %976 = vmatprep.subr.mxu0 0.0
    %977 = vmatpush1.msra.mxu0 0.0
    %978 = vmatprep.subr.mxu0 0.0
    %979 = vmatpush1.msra.mxu0 0.0
    %980 = vmatprep.subr.mxu0 0.0
    %981 = vmatpush1.msra.mxu0 0.0
    %982 = vmatprep.subr.mxu0 0.0
    %983 = vmatpush1.msra.mxu0 0.0
    %984 = vmatprep.subr.mxu0 0.0
    %985 = vmatpush1.msra.mxu0 0.0
    %986 = vmatprep.subr.mxu0 0.0
    %987 = vmatpush1.msra.mxu0 0.0
    %988 = vmatprep.subr.mxu0 0.0
    %989 = vmatpush1.msra.mxu0 0.0
    %990 = vmatprep.subr.mxu0 0.0
    %991 = vmatpush1.msra.mxu0 0.0
    %992 = vmatprep.subr.mxu0 0.0
    %993 = vmatpush1.msra.mxu0 0.0
    %994 = vmatprep.subr.mxu0 0.0
    %995 = vmatpush1.msra.mxu0 0.0
    %996 = vmatprep.subr.mxu0 0.0
    %997 = vmatpush1.msra.mxu0 0.0
    %998 = vmatprep.mubr.f32.mxu0 0.0
    %999 = vmatmul.mubr.f32.gmra.mrb[0].mxu0 %v929
    %v1000 = vpop.f32.mrb[0].mxu0
    %v1001 = vadd.f32 0.0, %v1000
    %v1002 = vpop.f32.mrb[0].mxu0
    %1003 = vmatprep.mubr.f32.mxu0 0.0
    %1004 = vmatmul.mubr.f32.gmra.mrb[0].mxu0 %v932
    %v1005 = vpop.f32.mrb[0].mxu0
    %v1006 = vadd.f32 0.0, %v1005
    %v1007 = vpop.f32.mrb[0].mxu0
    %1008 = vdwg.mxu0
    %1011 = vrot.lane.b32.xlu0 %v609, 8
    %v1012 = vpop.permute.xlu0 %1011
    %1013 = vrot.lane.b32.xlu0 %v614, 8
    %v1014 = vpop.permute.xlu0 %1013
    %1019 = vrot.lane.b32.xlu0 %v805, 16
    %v1020 = vpop.permute.xlu0 %1019
    %1021 = vrot.lane.b32.xlu0 %v810, 16
    %v1022 = vpop.permute.xlu0 %1021
    %1027 = vrot.lane.b32.xlu0 %v1001, 24
    %v1028 = vpop.permute.xlu0 %1027
    %1029 = vrot.lane.b32.xlu0 %v1006, 24
    %v1030 = vpop.permute.xlu0 %1029
    %v1033 = vsel %vm229, %v413, %v1012
    %v1034 = vsel %vm229, %v418, %v1014
    %v1035 = vsel %vm317, %v1033, %v1020
    %v1036 = vsel %vm317, %v1034, %v1022
    %vm1037 = vcmask 195584
    %v1038 = vsel %vm1037, %v1035, %v1028
    %v1039 = vsel %vm1037, %v1036, %v1030
    %v1040 = vadd.f32 %v179, %v1038
    %v1041 = vadd.f32 %v180, %v1039
    %v1042 = vld [vmem:[%s19] sm:$0x1]
    %v1043 = vld [vmem:[%s21] sm:$0x1]
    %v1044 = vsel %vm183, %v1040, 0.0
    %1045 = vadd.xlane.f32.xlu0 %v1044
    %v1046 = vpop.xlane.xlu0 %1045
    %v1047 = vsel %vm183, %v1041, 0.0
    %1048 = vadd.xlane.f32.xlu0 %v1047
    %v1049 = vpop.xlane.xlu0 %1048
    %v1050 = vmul.f32 %v1046, %v190
    %v1051 = vmul.f32 %v1049, %v190
    %v1052 = vsub.f32 %v1040, %v1050
    %v1053 = vsub.f32 %v1041, %v1051
    %v1054 = vmul.f32 %v1052, %v1052
    %v1055 = vmul.f32 %v1053, %v1053
    %v1056 = vsel %vm183, %v1054, 0.0
    %1057 = vadd.xlane.f32.xlu0 %v1056
    %v1058 = vpop.xlane.xlu0 %1057
    %v1059 = vsel %vm183, %v1055, 0.0
    %1060 = vadd.xlane.f32.xlu0 %v1059
    %v1061 = vpop.xlane.xlu0 %1060
    %v1062 = vmul.f32 %v1058, %v190
    %v1063 = vmul.f32 %v1061, %v190
    %v1064 = vadd.f32 %v1062, 1e-05
    %v1065 = vadd.f32 %v1063, 1e-05
    %v1066 = vrsqrt.pop %v1064
    %v1067 = vrsqrt.pop %v1065
    %v1068 = vmul.f32 %v1052, %v1066
    %v1069 = vmul.f32 %v1053, %v1067
    %v1071 = vlaneseq
    %v1072 = vshrl.u32 %v1071, 7
    %v1073 = vsub.s32 0, %v1072
    %v1074 = vrot.slane %v1042, %v1073
    %v1076 = vmul.f32 %v1068, %v1074
    %v1077 = vmul.f32 %v1069, %v1074
    %v1079 = vlaneseq
    %v1080 = vshrl.u32 %v1079, 7
    %v1081 = vsub.s32 0, %v1080
    %v1082 = vrot.slane %v1043, %v1081
    %v1084 = vadd.f32 %v1076, %v1082
    %v1085 = vadd.f32 %v1077, %v1082
    %v1086 = vld [vmem:[%s23] sm:$0xff]
    %v1087 = vld [vmem:[%s23 + $0x8] sm:$0xff]
    %v1088 = vld [vmem:[%s23 + $0x10] sm:$0xff]
    %v1089 = vld [vmem:[%s23 + $0x18] sm:$0xff]
    %v1090 = vld [vmem:[%s25] sm:$0x1]
    %v1091 = vld [vmem:[%s27] sm:$0xff]
    %v1092 = vld [vmem:[%s27 + $0x8] sm:$0xff]
    %v1093 = vld [vmem:[%s27 + $0x10] sm:$0xff]
    %v1094 = vld [vmem:[%s27 + $0x18] sm:$0xff]
    %v1095 = vld [vmem:[%s27 + $0x20] sm:$0xff]
    %v1096 = vld [vmem:[%s27 + $0x28] sm:$0xff]
    %v1097 = vld [vmem:[%s27 + $0x30] sm:$0xff]
    %v1098 = vld [vmem:[%s27 + $0x38] sm:$0xff]
    %v1099 = vld [vmem:[%s29] sm:$0x1]
    %v1101 = vlaneseq
    %v1102 = vshrl.u32 %v1101, 7
    %v1103 = vsub.s32 0, %v1102
    %v1104 = vrot.slane %v1090, %v1103
    %v1107 = vsel %vm183, %v1084, 0
    %v1110 = vsel %vm183, %v1085, 0
    %1112 = vmatprep.subr.mxu0 0.0
    %1113 = vmatpush1.msra.mxu0 %v1086
    %1114 = vmatprep.subr.mxu0 0.0
    %1115 = vmatpush1.msra.mxu0 %v1087
    %1116 = vmatprep.subr.mxu0 0.0
    %1117 = vmatpush1.msra.mxu0 %v1088
    %1118 = vmatprep.subr.mxu0 0.0
    %1119 = vmatpush1.msra.mxu0 %v1089
    %1120 = vmatprep.subr.mxu0 0.0
    %1121 = vmatpush1.msra.mxu0 0.0
    %1122 = vmatprep.subr.mxu0 0.0
    %1123 = vmatpush1.msra.mxu0 0.0
    %1124 = vmatprep.subr.mxu0 0.0
    %1125 = vmatpush1.msra.mxu0 0.0
    %1126 = vmatprep.subr.mxu0 0.0
    %1127 = vmatpush1.msra.mxu0 0.0
    %1128 = vmatprep.subr.mxu0 0.0
    %1129 = vmatpush1.msra.mxu0 0.0
    %1130 = vmatprep.subr.mxu0 0.0
    %1131 = vmatpush1.msra.mxu0 0.0
    %1132 = vmatprep.subr.mxu0 0.0
    %1133 = vmatpush1.msra.mxu0 0.0
    %1134 = vmatprep.subr.mxu0 0.0
    %1135 = vmatpush1.msra.mxu0 0.0
    %1136 = vmatprep.subr.mxu0 0.0
    %1137 = vmatpush1.msra.mxu0 0.0
    %1138 = vmatprep.subr.mxu0 0.0
    %1139 = vmatpush1.msra.mxu0 0.0
    %1140 = vmatprep.subr.mxu0 0.0
    %1141 = vmatpush1.msra.mxu0 0.0
    %1142 = vmatprep.subr.mxu0 0.0
    %1143 = vmatpush1.msra.mxu0 0.0
    %1144 = vmatprep.subr.mxu0 0.0
    %1145 = vmatpush1.msra.mxu0 0.0
    %1146 = vmatprep.subr.mxu0 0.0
    %1147 = vmatpush1.msra.mxu0 0.0
    %1148 = vmatprep.subr.mxu0 0.0
    %1149 = vmatpush1.msra.mxu0 0.0
    %1150 = vmatprep.subr.mxu0 0.0
    %1151 = vmatpush1.msra.mxu0 0.0
    %1152 = vmatprep.subr.mxu0 0.0
    %1153 = vmatpush1.msra.mxu0 0.0
    %1154 = vmatprep.subr.mxu0 0.0
    %1155 = vmatpush1.msra.mxu0 0.0
    %1156 = vmatprep.subr.mxu0 0.0
    %1157 = vmatpush1.msra.mxu0 0.0
    %1158 = vmatprep.subr.mxu0 0.0
    %1159 = vmatpush1.msra.mxu0 0.0
    %1160 = vmatprep.subr.mxu0 0.0
    %1161 = vmatpush1.msra.mxu0 0.0
    %1162 = vmatprep.subr.mxu0 0.0
    %1163 = vmatpush1.msra.mxu0 0.0
    %1164 = vmatprep.subr.mxu0 0.0
    %1165 = vmatpush1.msra.mxu0 0.0
    %1166 = vmatprep.subr.mxu0 0.0
    %1167 = vmatpush1.msra.mxu0 0.0
    %1168 = vmatprep.subr.mxu0 0.0
    %1169 = vmatpush1.msra.mxu0 0.0
    %1170 = vmatprep.subr.mxu0 0.0
    %1171 = vmatpush1.msra.mxu0 0.0
    %1172 = vmatprep.subr.mxu0 0.0
    %1173 = vmatpush1.msra.mxu0 0.0
    %1174 = vmatprep.subr.mxu0 0.0
    %1175 = vmatpush1.msra.mxu0 0.0
    %1176 = vmatprep.mubr.f32.mxu0 0.0
    %1177 = vmatmul.mubr.f32.gmra.mrb[0].mxu0 %v1107
    %v1178 = vpop.f32.mrb[0].mxu0
    %v1179 = vadd.f32 %v1104, %v1178
    %v1180 = vpop.f32.mrb[0].mxu0
    %1181 = vmatprep.mubr.f32.mxu0 0.0
    %1182 = vmatmul.mubr.f32.gmra.mrb[0].mxu0 %v1110
    %v1183 = vpop.f32.mrb[0].mxu0
    %v1184 = vadd.f32 %v1104, %v1183
    %v1185 = vpop.f32.mrb[0].mxu0
    %1186 = vdwg.mxu0
    %v1187 = vmax.f32 %v1179, 0.0
    %v1188 = vmax.f32 %v1184, 0.0
    %v1190 = vlaneseq
    %v1191 = vshrl.u32 %v1190, 7
    %v1192 = vsub.s32 0, %v1191
    %v1193 = vrot.slane %v1099, %v1192
    %vm1195 = vcmask 523264
    %v1197 = vsel %vm1195, %v1187, 0
    %v1200 = vsel %vm1195, %v1188, 0
    %1202 = vmatprep.subr.mxu0 0.0
    %1203 = vmatpush1.msra.mxu0 %v1091
    %1204 = vmatprep.subr.mxu0 0.0
    %1205 = vmatpush1.msra.mxu0 %v1092
    %1206 = vmatprep.subr.mxu0 0.0
    %1207 = vmatpush1.msra.mxu0 %v1093
    %1208 = vmatprep.subr.mxu0 0.0
    %1209 = vmatpush1.msra.mxu0 %v1094
    %1210 = vmatprep.subr.mxu0 0.0
    %1211 = vmatpush1.msra.mxu0 %v1095
    %1212 = vmatprep.subr.mxu0 0.0
    %1213 = vmatpush1.msra.mxu0 %v1096
    %1214 = vmatprep.subr.mxu0 0.0
    %1215 = vmatpush1.msra.mxu0 %v1097
    %1216 = vmatprep.subr.mxu0 0.0
    %1217 = vmatpush1.msra.mxu0 %v1098
    %1218 = vmatprep.subr.mxu0 0.0
    %1219 = vmatpush1.msra.mxu0 0.0
    %1220 = vmatprep.subr.mxu0 0.0
    %1221 = vmatpush1.msra.mxu0 0.0
    %1222 = vmatprep.subr.mxu0 0.0
    %1223 = vmatpush1.msra.mxu0 0.0
    %1224 = vmatprep.subr.mxu0 0.0
    %1225 = vmatpush1.msra.mxu0 0.0
    %1226 = vmatprep.subr.mxu0 0.0
    %1227 = vmatpush1.msra.mxu0 0.0
    %1228 = vmatprep.subr.mxu0 0.0
    %1229 = vmatpush1.msra.mxu0 0.0
    %1230 = vmatprep.subr.mxu0 0.0
    %1231 = vmatpush1.msra.mxu0 0.0
    %1232 = vmatprep.subr.mxu0 0.0
    %1233 = vmatpush1.msra.mxu0 0.0
    %1234 = vmatprep.subr.mxu0 0.0
    %1235 = vmatpush1.msra.mxu0 0.0
    %1236 = vmatprep.subr.mxu0 0.0
    %1237 = vmatpush1.msra.mxu0 0.0
    %1238 = vmatprep.subr.mxu0 0.0
    %1239 = vmatpush1.msra.mxu0 0.0
    %1240 = vmatprep.subr.mxu0 0.0
    %1241 = vmatpush1.msra.mxu0 0.0
    %1242 = vmatprep.subr.mxu0 0.0
    %1243 = vmatpush1.msra.mxu0 0.0
    %1244 = vmatprep.subr.mxu0 0.0
    %1245 = vmatpush1.msra.mxu0 0.0
    %1246 = vmatprep.subr.mxu0 0.0
    %1247 = vmatpush1.msra.mxu0 0.0
    %1248 = vmatprep.subr.mxu0 0.0
    %1249 = vmatpush1.msra.mxu0 0.0
    %1250 = vmatprep.subr.mxu0 0.0
    %1251 = vmatpush1.msra.mxu0 0.0
    %1252 = vmatprep.subr.mxu0 0.0
    %1253 = vmatpush1.msra.mxu0 0.0
    %1254 = vmatprep.subr.mxu0 0.0
    %1255 = vmatpush1.msra.mxu0 0.0
    %1256 = vmatprep.subr.mxu0 0.0
    %1257 = vmatpush1.msra.mxu0 0.0
    %1258 = vmatprep.subr.mxu0 0.0
    %1259 = vmatpush1.msra.mxu0 0.0
    %1260 = vmatprep.subr.mxu0 0.0
    %1261 = vmatpush1.msra.mxu0 0.0
    %1262 = vmatprep.subr.mxu0 0.0
    %1263 = vmatpush1.msra.mxu0 0.0
    %1264 = vmatprep.subr.mxu0 0.0
    %1265 = vmatpush1.msra.mxu0 0.0
    %1266 = vmatprep.mubr.f32.mxu0 0.0
    %1267 = vmatmul.mubr.f32.gmra.mrb[0].mxu0 %v1197
    %v1268 = vpop.f32.mrb[0].mxu0
    %v1269 = vadd.f32 %v1193, %v1268
    %v1270 = vpop.f32.mrb[0].mxu0
    %1271 = vmatprep.mubr.f32.mxu0 0.0
    %1272 = vmatmul.mubr.f32.gmra.mrb[0].mxu0 %v1200
    %v1273 = vpop.f32.mrb[0].mxu0
    %v1274 = vadd.f32 %v1193, %v1273
    %v1275 = vpop.f32.mrb[0].mxu0
    %1276 = vdwg.mxu0
    %v1277 = vadd.f32 %v1084, %v1269
    %v1278 = vadd.f32 %v1085, %v1274
    %s1279 = scalar_lea.vmem %s15, 1
    %v1280 = vld [vmem:[%s1279] sm:$0x1]
    %s1281 = scalar_lea.vmem %s17, 1
    %v1282 = vld [vmem:[%s1281] sm:$0x1]
    %v1283 = vsel %vm183, %v1277, 0.0
    %1284 = vadd.xlane.f32.xlu0 %v1283
    %v1285 = vpop.xlane.xlu0 %1284
    %v1286 = vsel %vm183, %v1278, 0.0
    %1287 = vadd.xlane.f32.xlu0 %v1286
    %v1288 = vpop.xlane.xlu0 %1287
    %v1289 = vmul.f32 %v1285, %v190
    %v1290 = vmul.f32 %v1288, %v190
    %v1291 = vsub.f32 %v1277, %v1289
    %v1292 = vsub.f32 %v1278, %v1290
    %v1293 = vmul.f32 %v1291, %v1291
    %v1294 = vmul.f32 %v1292, %v1292
    %v1295 = vsel %vm183, %v1293, 0.0
    %1296 = vadd.xlane.f32.xlu0 %v1295
    %v1297 = vpop.xlane.xlu0 %1296
    %v1298 = vsel %vm183, %v1294, 0.0
    %1299 = vadd.xlane.f32.xlu0 %v1298
    %v1300 = vpop.xlane.xlu0 %1299
    %v1301 = vmul.f32 %v1297, %v190
    %v1302 = vmul.f32 %v1300, %v190
    %v1303 = vadd.f32 %v1301, 1e-05
    %v1304 = vadd.f32 %v1302, 1e-05
    %v1305 = vrsqrt.pop %v1303
    %v1306 = vrsqrt.pop %v1304
    %v1307 = vmul.f32 %v1291, %v1305
    %v1308 = vmul.f32 %v1292, %v1306
    %v1310 = vlaneseq
    %v1311 = vshrl.u32 %v1310, 7
    %v1312 = vsub.s32 0, %v1311
    %v1313 = vrot.slane %v1280, %v1312
    %v1315 = vmul.f32 %v1307, %v1313
    %v1316 = vmul.f32 %v1308, %v1313
    %v1318 = vlaneseq
    %v1319 = vshrl.u32 %v1318, 7
    %v1320 = vsub.s32 0, %v1319
    %v1321 = vrot.slane %v1282, %v1320
    %v1323 = vadd.f32 %v1315, %v1321
    %v1324 = vadd.f32 %v1316, %v1321
    %v1325 = vmul.f32 %v1323, 0.35355338
    %v1326 = vmul.f32 %v1324, 0.35355338
    %v1328 = vsel %vm229, %v1325, 0
    %v1331 = vsel %vm229, %v1326, 0
    %v1334 = vsel %vm229, %v1323, 0
    %v1337 = vsel %vm229, %v1324, 0
    %1339 = vmatprep.subr.mxu0 0.0
    %1340 = vmatpush1.xpose.msra.mxu0 %v1334
    %1341 = vmatprep.subr.mxu0 0.0
    %1342 = vmatpush1.xpose.msra.mxu0 %v1337
    %1343 = vmatprep.subr.mxu0 0.0
    %1344 = vmatpush1.xpose.msra.mxu0 0.0
    %1345 = vmatprep.subr.mxu0 0.0
    %1346 = vmatpush1.xpose.msra.mxu0 0.0
    %1347 = vmatprep.subr.mxu0 0.0
    %1348 = vmatpush1.xpose.msra.mxu0 0.0
    %1349 = vmatprep.subr.mxu0 0.0
    %1350 = vmatpush1.xpose.msra.mxu0 0.0
    %1351 = vmatprep.subr.mxu0 0.0
    %1352 = vmatpush1.xpose.msra.mxu0 0.0
    %1353 = vmatprep.subr.mxu0 0.0
    %1354 = vmatpush1.xpose.msra.mxu0 0.0
    %1355 = vmatprep.subr.mxu0 0.0
    %1356 = vmatpush1.xpose.msra.mxu0 0.0
    %1357 = vmatprep.subr.mxu0 0.0
    %1358 = vmatpush1.xpose.msra.mxu0 0.0
    %1359 = vmatprep.subr.mxu0 0.0
    %1360 = vmatpush1.xpose.msra.mxu0 0.0
    %1361 = vmatprep.subr.mxu0 0.0
    %1362 = vmatpush1.xpose.msra.mxu0 0.0
    %1363 = vmatprep.subr.mxu0 0.0
    %1364 = vmatpush1.xpose.msra.mxu0 0.0
    %1365 = vmatprep.subr.mxu0 0.0
    %1366 = vmatpush1.xpose.msra.mxu0 0.0
    %1367 = vmatprep.subr.mxu0 0.0
    %1368 = vmatpush1.xpose.msra.mxu0 0.0
    %1369 = vmatprep.subr.mxu0 0.0
    %1370 = vmatpush1.xpose.msra.mxu0 0.0
    %1371 = vmatprep.subr.mxu0 0.0
    %1372 = vmatpush1.xpose.msra.mxu0 0.0
    %1373 = vmatprep.subr.mxu0 0.0
    %1374 = vmatpush1.xpose.msra.mxu0 0.0
    %1375 = vmatprep.subr.mxu0 0.0
    %1376 = vmatpush1.xpose.msra.mxu0 0.0
    %1377 = vmatprep.subr.mxu0 0.0
    %1378 = vmatpush1.xpose.msra.mxu0 0.0
    %1379 = vmatprep.subr.mxu0 0.0
    %1380 = vmatpush1.xpose.msra.mxu0 0.0
    %1381 = vmatprep.subr.mxu0 0.0
    %1382 = vmatpush1.xpose.msra.mxu0 0.0
    %1383 = vmatprep.subr.mxu0 0.0
    %1384 = vmatpush1.xpose.msra.mxu0 0.0
    %1385 = vmatprep.subr.mxu0 0.0
    %1386 = vmatpush1.xpose.msra.mxu0 0.0
    %1387 = vmatprep.subr.mxu0 0.0
    %1388 = vmatpush1.xpose.msra.mxu0 0.0
    %1389 = vmatprep.subr.mxu0 0.0
    %1390 = vmatpush1.xpose.msra.mxu0 0.0
    %1391 = vmatprep.subr.mxu0 0.0
    %1392 = vmatpush1.xpose.msra.mxu0 0.0
    %1393 = vmatprep.subr.mxu0 0.0
    %1394 = vmatpush1.xpose.msra.mxu0 0.0
    %1395 = vmatprep.subr.mxu0 0.0
    %1396 = vmatpush1.xpose.msra.mxu0 0.0
    %1397 = vmatprep.subr.mxu0 0.0
    %1398 = vmatpush1.xpose.msra.mxu0 0.0
    %1399 = vmatprep.subr.mxu0 0.0
    %1400 = vmatpush1.xpose.msra.mxu0 0.0
    %1401 = vmatprep.subr.mxu0 0.0
    %1402 = vmatpush1.xpose.msra.mxu0 0.0
    %1403 = vmatprep.mubr.f32.mxu0 0.0
    %1404 = vmatmul.mubr.f32.gmra.mrb[0].mxu0 %v1328
    %v1405 = vpop.f32.mrb[0].mxu0
    %v1406 = vadd.f32 %v157, %v1405
    %v1407 = vpop.f32.mrb[0].mxu0
    %1408 = vmatprep.mubr.f32.mxu0 0.0
    %1409 = vmatmul.mubr.f32.gmra.mrb[0].mxu0 %v1331
    %v1410 = vpop.f32.mrb[0].mxu0
    %v1411 = vadd.f32 %v158, %v1410
    %v1412 = vpop.f32.mrb[0].mxu0
    %1413 = vdwg.mxu0
    %v1414 = vsel %vm317, %v1406, -inf
    %1415 = vmax.xlane.f32.xlu0 %v1414
    %v1416 = vpop.xlane.xlu0 %1415
    %v1417 = vsel %vm317, %v1411, -inf
    %1418 = vmax.xlane.f32.xlu0 %v1417
    %v1419 = vpop.xlane.xlu0 %1418
    %v1420 = vsub.f32 %v1406, %v1416
    %v1421 = vsub.f32 %v1411, %v1419
    %v1422 = vmul.f32 %v1420, 1.442695
    %v1423 = vpow.pop %v1422
    %v1424 = vmul.f32 %v1421, 1.442695
    %v1425 = vpow.pop %v1424
    %v1426 = vsel %vm317, %v1423, 0.0
    %1427 = vadd.xlane.f32.xlu0 %v1426
    %v1428 = vpop.xlane.xlu0 %1427
    %v1429 = vsel %vm317, %v1425, 0.0
    %1430 = vadd.xlane.f32.xlu0 %v1429
    %v1431 = vpop.xlane.xlu0 %1430
    %v1432 = vrcp.pop %v1428
    %v1433 = vmul.f32 %v1423, %v1432
    %v1434 = vrcp.pop %v1431
    %v1435 = vmul.f32 %v1425, %v1434
    %v1437 = vsel %vm317, %v1433, 0
    %v1440 = vsel %vm317, %v1435, 0
    %1442 = vmatprep.subr.mxu0 0.0
    %1443 = vmatpush1.msra.mxu0 %v1323
    %1444 = vmatprep.subr.mxu0 0.0
    %1445 = vmatpush1.msra.mxu0 %v1324
    %1446 = vmatprep.subr.mxu0 0.0
    %1447 = vmatpush1.msra.mxu0 0.0
    %1448 = vmatprep.subr.mxu0 0.0
    %1449 = vmatpush1.msra.mxu0 0.0
    %1450 = vmatprep.subr.mxu0 0.0
    %1451 = vmatpush1.msra.mxu0 0.0
    %1452 = vmatprep.subr.mxu0 0.0
    %1453 = vmatpush1.msra.mxu0 0.0
    %1454 = vmatprep.subr.mxu0 0.0
    %1455 = vmatpush1.msra.mxu0 0.0
    %1456 = vmatprep.subr.mxu0 0.0
    %1457 = vmatpush1.msra.mxu0 0.0
    %1458 = vmatprep.subr.mxu0 0.0
    %1459 = vmatpush1.msra.mxu0 0.0
    %1460 = vmatprep.subr.mxu0 0.0
    %1461 = vmatpush1.msra.mxu0 0.0
    %1462 = vmatprep.subr.mxu0 0.0
    %1463 = vmatpush1.msra.mxu0 0.0
    %1464 = vmatprep.subr.mxu0 0.0
    %1465 = vmatpush1.msra.mxu0 0.0
    %1466 = vmatprep.subr.mxu0 0.0
    %1467 = vmatpush1.msra.mxu0 0.0
    %1468 = vmatprep.subr.mxu0 0.0
    %1469 = vmatpush1.msra.mxu0 0.0
    %1470 = vmatprep.subr.mxu0 0.0
    %1471 = vmatpush1.msra.mxu0 0.0
    %1472 = vmatprep.subr.mxu0 0.0
    %1473 = vmatpush1.msra.mxu0 0.0
    %1474 = vmatprep.subr.mxu0 0.0
    %1475 = vmatpush1.msra.mxu0 0.0
    %1476 = vmatprep.subr.mxu0 0.0
    %1477 = vmatpush1.msra.mxu0 0.0
    %1478 = vmatprep.subr.mxu0 0.0
    %1479 = vmatpush1.msra.mxu0 0.0
    %1480 = vmatprep.subr.mxu0 0.0
    %1481 = vmatpush1.msra.mxu0 0.0
    %1482 = vmatprep.subr.mxu0 0.0
    %1483 = vmatpush1.msra.mxu0 0.0
    %1484 = vmatprep.subr.mxu0 0.0
    %1485 = vmatpush1.msra.mxu0 0.0
    %1486 = vmatprep.subr.mxu0 0.0
    %1487 = vmatpush1.msra.mxu0 0.0
    %1488 = vmatprep.subr.mxu0 0.0
    %1489 = vmatpush1.msra.mxu0 0.0
    %1490 = vmatprep.subr.mxu0 0.0
    %1491 = vmatpush1.msra.mxu0 0.0
    %1492 = vmatprep.subr.mxu0 0.0
    %1493 = vmatpush1.msra.mxu0 0.0
    %1494 = vmatprep.subr.mxu0 0.0
    %1495 = vmatpush1.msra.mxu0 0.0
    %1496 = vmatprep.subr.mxu0 0.0
    %1497 = vmatpush1.msra.mxu0 0.0
    %1498 = vmatprep.subr.mxu0 0.0
    %1499 = vmatpush1.msra.mxu0 0.0
    %1500 = vmatprep.subr.mxu0 0.0
    %1501 = vmatpush1.msra.mxu0 0.0
    %1502 = vmatprep.subr.mxu0 0.0
    %1503 = vmatpush1.msra.mxu0 0.0
    %1504 = vmatprep.subr.mxu0 0.0
    %1505 = vmatpush1.msra.mxu0 0.0
    %1506 = vmatprep.mubr.f32.mxu0 0.0
    %1507 = vmatmul.mubr.f32.gmra.mrb[0].mxu0 %v1437
    %v1508 = vpop.f32.mrb[0].mxu0
    %v1509 = vadd.f32 0.0, %v1508
    %v1510 = vpop.f32.mrb[0].mxu0
    %1511 = vmatprep.mubr.f32.mxu0 0.0
    %1512 = vmatmul.mubr.f32.gmra.mrb[0].mxu0 %v1440
    %v1513 = vpop.f32.mrb[0].mxu0
    %v1514 = vadd.f32 0.0, %v1513
    %v1515 = vpop.f32.mrb[0].mxu0
    %1516 = vdwg.mxu0
    %1517 = vrot.lane.b32.xlu0 %v1325, 120
    %v1518 = vpop.permute.xlu0 %1517
    %1519 = vrot.lane.b32.xlu0 %v1326, 120
    %v1520 = vpop.permute.xlu0 %1519
    %1521 = vrot.lane.b32.xlu0 %v1323, 120
    %v1522 = vpop.permute.xlu0 %1521
    %1523 = vrot.lane.b32.xlu0 %v1324, 120
    %v1524 = vpop.permute.xlu0 %1523
    %v1525 = vsel %vm229, %v1518, 0
    %v1527 = vsel %vm229, %v1520, 0
    %v1529 = vsel %vm229, %v1522, 0
    %v1531 = vsel %vm229, %v1524, 0
    %1533 = vmatprep.subr.mxu0 0.0
    %1534 = vmatpush1.xpose.msra.mxu0 %v1529
    %1535 = vmatprep.subr.mxu0 0.0
    %1536 = vmatpush1.xpose.msra.mxu0 %v1531
    %1537 = vmatprep.subr.mxu0 0.0
    %1538 = vmatpush1.xpose.msra.mxu0 0.0
    %1539 = vmatprep.subr.mxu0 0.0
    %1540 = vmatpush1.xpose.msra.mxu0 0.0
    %1541 = vmatprep.subr.mxu0 0.0
    %1542 = vmatpush1.xpose.msra.mxu0 0.0
    %1543 = vmatprep.subr.mxu0 0.0
    %1544 = vmatpush1.xpose.msra.mxu0 0.0
    %1545 = vmatprep.subr.mxu0 0.0
    %1546 = vmatpush1.xpose.msra.mxu0 0.0
    %1547 = vmatprep.subr.mxu0 0.0
    %1548 = vmatpush1.xpose.msra.mxu0 0.0
    %1549 = vmatprep.subr.mxu0 0.0
    %1550 = vmatpush1.xpose.msra.mxu0 0.0
    %1551 = vmatprep.subr.mxu0 0.0
    %1552 = vmatpush1.xpose.msra.mxu0 0.0
    %1553 = vmatprep.subr.mxu0 0.0
    %1554 = vmatpush1.xpose.msra.mxu0 0.0
    %1555 = vmatprep.subr.mxu0 0.0
    %1556 = vmatpush1.xpose.msra.mxu0 0.0
    %1557 = vmatprep.subr.mxu0 0.0
    %1558 = vmatpush1.xpose.msra.mxu0 0.0
    %1559 = vmatprep.subr.mxu0 0.0
    %1560 = vmatpush1.xpose.msra.mxu0 0.0
    %1561 = vmatprep.subr.mxu0 0.0
    %1562 = vmatpush1.xpose.msra.mxu0 0.0
    %1563 = vmatprep.subr.mxu0 0.0
    %1564 = vmatpush1.xpose.msra.mxu0 0.0
    %1565 = vmatprep.subr.mxu0 0.0
    %1566 = vmatpush1.xpose.msra.mxu0 0.0
    %1567 = vmatprep.subr.mxu0 0.0
    %1568 = vmatpush1.xpose.msra.mxu0 0.0
    %1569 = vmatprep.subr.mxu0 0.0
    %1570 = vmatpush1.xpose.msra.mxu0 0.0
    %1571 = vmatprep.subr.mxu0 0.0
    %1572 = vmatpush1.xpose.msra.mxu0 0.0
    %1573 = vmatprep.subr.mxu0 0.0
    %1574 = vmatpush1.xpose.msra.mxu0 0.0
    %1575 = vmatprep.subr.mxu0 0.0
    %1576 = vmatpush1.xpose.msra.mxu0 0.0
    %1577 = vmatprep.subr.mxu0 0.0
    %1578 = vmatpush1.xpose.msra.mxu0 0.0
    %1579 = vmatprep.subr.mxu0 0.0
    %1580 = vmatpush1.xpose.msra.mxu0 0.0
    %1581 = vmatprep.subr.mxu0 0.0
    %1582 = vmatpush1.xpose.msra.mxu0 0.0
    %1583 = vmatprep.subr.mxu0 0.0
    %1584 = vmatpush1.xpose.msra.mxu0 0.0
    %1585 = vmatprep.subr.mxu0 0.0
    %1586 = vmatpush1.xpose.msra.mxu0 0.0
    %1587 = vmatprep.subr.mxu0 0.0
    %1588 = vmatpush1.xpose.msra.mxu0 0.0
    %1589 = vmatprep.subr.mxu0 0.0
    %1590 = vmatpush1.xpose.msra.mxu0 0.0
    %1591 = vmatprep.subr.mxu0 0.0
    %1592 = vmatpush1.xpose.msra.mxu0 0.0
    %1593 = vmatprep.subr.mxu0 0.0
    %1594 = vmatpush1.xpose.msra.mxu0 0.0
    %1595 = vmatprep.subr.mxu0 0.0
    %1596 = vmatpush1.xpose.msra.mxu0 0.0
    %1597 = vmatprep.mubr.f32.mxu0 0.0
    %1598 = vmatmul.mubr.f32.gmra.mrb[0].mxu0 %v1525
    %v1599 = vpop.f32.mrb[0].mxu0
    %v1600 = vadd.f32 %v157, %v1599
    %v1601 = vpop.f32.mrb[0].mxu0
    %1602 = vmatprep.mubr.f32.mxu0 0.0
    %1603 = vmatmul.mubr.f32.gmra.mrb[0].mxu0 %v1527
    %v1604 = vpop.f32.mrb[0].mxu0
    %v1605 = vadd.f32 %v158, %v1604
    %v1606 = vpop.f32.mrb[0].mxu0
    %1607 = vdwg.mxu0
    %v1608 = vsel %vm317, %v1600, -inf
    %1609 = vmax.xlane.f32.xlu0 %v1608
    %v1610 = vpop.xlane.xlu0 %1609
    %v1611 = vsel %vm317, %v1605, -inf
    %1612 = vmax.xlane.f32.xlu0 %v1611
    %v1613 = vpop.xlane.xlu0 %1612
    %v1614 = vsub.f32 %v1600, %v1610
    %v1615 = vsub.f32 %v1605, %v1613
    %v1616 = vmul.f32 %v1614, 1.442695
    %v1617 = vpow.pop %v1616
    %v1618 = vmul.f32 %v1615, 1.442695
    %v1619 = vpow.pop %v1618
    %v1620 = vsel %vm317, %v1617, 0.0
    %1621 = vadd.xlane.f32.xlu0 %v1620
    %v1622 = vpop.xlane.xlu0 %1621
    %v1623 = vsel %vm317, %v1619, 0.0
    %1624 = vadd.xlane.f32.xlu0 %v1623
    %v1625 = vpop.xlane.xlu0 %1624
    %v1626 = vrcp.pop %v1622
    %v1627 = vmul.f32 %v1617, %v1626
    %v1628 = vrcp.pop %v1625
    %v1629 = vmul.f32 %v1619, %v1628
    %v1633 = vsel %vm317, %v1627, 0
    %v1636 = vsel %vm317, %v1629, 0
    %1638 = vmatprep.subr.mxu0 0.0
    %1639 = vmatpush1.msra.mxu0 %v1522
    %1640 = vmatprep.subr.mxu0 0.0
    %1641 = vmatpush1.msra.mxu0 %v1524
    %1642 = vmatprep.subr.mxu0 0.0
    %1643 = vmatpush1.msra.mxu0 0.0
    %1644 = vmatprep.subr.mxu0 0.0
    %1645 = vmatpush1.msra.mxu0 0.0
    %1646 = vmatprep.subr.mxu0 0.0
    %1647 = vmatpush1.msra.mxu0 0.0
    %1648 = vmatprep.subr.mxu0 0.0
    %1649 = vmatpush1.msra.mxu0 0.0
    %1650 = vmatprep.subr.mxu0 0.0
    %1651 = vmatpush1.msra.mxu0 0.0
    %1652 = vmatprep.subr.mxu0 0.0
    %1653 = vmatpush1.msra.mxu0 0.0
    %1654 = vmatprep.subr.mxu0 0.0
    %1655 = vmatpush1.msra.mxu0 0.0
    %1656 = vmatprep.subr.mxu0 0.0
    %1657 = vmatpush1.msra.mxu0 0.0
    %1658 = vmatprep.subr.mxu0 0.0
    %1659 = vmatpush1.msra.mxu0 0.0
    %1660 = vmatprep.subr.mxu0 0.0
    %1661 = vmatpush1.msra.mxu0 0.0
    %1662 = vmatprep.subr.mxu0 0.0
    %1663 = vmatpush1.msra.mxu0 0.0
    %1664 = vmatprep.subr.mxu0 0.0
    %1665 = vmatpush1.msra.mxu0 0.0
    %1666 = vmatprep.subr.mxu0 0.0
    %1667 = vmatpush1.msra.mxu0 0.0
    %1668 = vmatprep.subr.mxu0 0.0
    %1669 = vmatpush1.msra.mxu0 0.0
    %1670 = vmatprep.subr.mxu0 0.0
    %1671 = vmatpush1.msra.mxu0 0.0
    %1672 = vmatprep.subr.mxu0 0.0
    %1673 = vmatpush1.msra.mxu0 0.0
    %1674 = vmatprep.subr.mxu0 0.0
    %1675 = vmatpush1.msra.mxu0 0.0
    %1676 = vmatprep.subr.mxu0 0.0
    %1677 = vmatpush1.msra.mxu0 0.0
    %1678 = vmatprep.subr.mxu0 0.0
    %1679 = vmatpush1.msra.mxu0 0.0
    %1680 = vmatprep.subr.mxu0 0.0
    %1681 = vmatpush1.msra.mxu0 0.0
    %1682 = vmatprep.subr.mxu0 0.0
    %1683 = vmatpush1.msra.mxu0 0.0
    %1684 = vmatprep.subr.mxu0 0.0
    %1685 = vmatpush1.msra.mxu0 0.0
    %1686 = vmatprep.subr.mxu0 0.0
    %1687 = vmatpush1.msra.mxu0 0.0
    %1688 = vmatprep.subr.mxu0 0.0
    %1689 = vmatpush1.msra.mxu0 0.0
    %1690 = vmatprep.subr.mxu0 0.0
    %1691 = vmatpush1.msra.mxu0 0.0
    %1692 = vmatprep.subr.mxu0 0.0
    %1693 = vmatpush1.msra.mxu0 0.0
    %1694 = vmatprep.subr.mxu0 0.0
    %1695 = vmatpush1.msra.mxu0 0.0
    %1696 = vmatprep.subr.mxu0 0.0
    %1697 = vmatpush1.msra.mxu0 0.0
    %1698 = vmatprep.subr.mxu0 0.0
    %1699 = vmatpush1.msra.mxu0 0.0
    %1700 = vmatprep.subr.mxu0 0.0
    %1701 = vmatpush1.msra.mxu0 0.0
    %1702 = vmatprep.mubr.f32.mxu0 0.0
    %1703 = vmatmul.mubr.f32.gmra.mrb[0].mxu0 %v1633
    %v1704 = vpop.f32.mrb[0].mxu0
    %v1705 = vadd.f32 0.0, %v1704
    %v1706 = vpop.f32.mrb[0].mxu0
    %1707 = vmatprep.mubr.f32.mxu0 0.0
    %1708 = vmatmul.mubr.f32.gmra.mrb[0].mxu0 %v1636
    %v1709 = vpop.f32.mrb[0].mxu0
    %v1710 = vadd.f32 0.0, %v1709
    %v1711 = vpop.f32.mrb[0].mxu0
    %1712 = vdwg.mxu0
    %1713 = vrot.lane.b32.xlu0 %v1325, 112
    %v1714 = vpop.permute.xlu0 %1713
    %1715 = vrot.lane.b32.xlu0 %v1326, 112
    %v1716 = vpop.permute.xlu0 %1715
    %1717 = vrot.lane.b32.xlu0 %v1323, 112
    %v1718 = vpop.permute.xlu0 %1717
    %1719 = vrot.lane.b32.xlu0 %v1324, 112
    %v1720 = vpop.permute.xlu0 %1719
    %v1721 = vsel %vm229, %v1714, 0
    %v1723 = vsel %vm229, %v1716, 0
    %v1725 = vsel %vm229, %v1718, 0
    %v1727 = vsel %vm229, %v1720, 0
    %1729 = vmatprep.subr.mxu0 0.0
    %1730 = vmatpush1.xpose.msra.mxu0 %v1725
    %1731 = vmatprep.subr.mxu0 0.0
    %1732 = vmatpush1.xpose.msra.mxu0 %v1727
    %1733 = vmatprep.subr.mxu0 0.0
    %1734 = vmatpush1.xpose.msra.mxu0 0.0
    %1735 = vmatprep.subr.mxu0 0.0
    %1736 = vmatpush1.xpose.msra.mxu0 0.0
    %1737 = vmatprep.subr.mxu0 0.0
    %1738 = vmatpush1.xpose.msra.mxu0 0.0
    %1739 = vmatprep.subr.mxu0 0.0
    %1740 = vmatpush1.xpose.msra.mxu0 0.0
    %1741 = vmatprep.subr.mxu0 0.0
    %1742 = vmatpush1.xpose.msra.mxu0 0.0
    %1743 = vmatprep.subr.mxu0 0.0
    %1744 = vmatpush1.xpose.msra.mxu0 0.0
    %1745 = vmatprep.subr.mxu0 0.0
    %1746 = vmatpush1.xpose.msra.mxu0 0.0
    %1747 = vmatprep.subr.mxu0 0.0
    %1748 = vmatpush1.xpose.msra.mxu0 0.0
    %1749 = vmatprep.subr.mxu0 0.0
    %1750 = vmatpush1.xpose.msra.mxu0 0.0
    %1751 = vmatprep.subr.mxu0 0.0
    %1752 = vmatpush1.xpose.msra.mxu0 0.0
    %1753 = vmatprep.subr.mxu0 0.0
    %1754 = vmatpush1.xpose.msra.mxu0 0.0
    %1755 = vmatprep.subr.mxu0 0.0
    %1756 = vmatpush1.xpose.msra.mxu0 0.0
    %1757 = vmatprep.subr.mxu0 0.0
    %1758 = vmatpush1.xpose.msra.mxu0 0.0
    %1759 = vmatprep.subr.mxu0 0.0
    %1760 = vmatpush1.xpose.msra.mxu0 0.0
    %1761 = vmatprep.subr.mxu0 0.0
    %1762 = vmatpush1.xpose.msra.mxu0 0.0
    %1763 = vmatprep.subr.mxu0 0.0
    %1764 = vmatpush1.xpose.msra.mxu0 0.0
    %1765 = vmatprep.subr.mxu0 0.0
    %1766 = vmatpush1.xpose.msra.mxu0 0.0
    %1767 = vmatprep.subr.mxu0 0.0
    %1768 = vmatpush1.xpose.msra.mxu0 0.0
    %1769 = vmatprep.subr.mxu0 0.0
    %1770 = vmatpush1.xpose.msra.mxu0 0.0
    %1771 = vmatprep.subr.mxu0 0.0
    %1772 = vmatpush1.xpose.msra.mxu0 0.0
    %1773 = vmatprep.subr.mxu0 0.0
    %1774 = vmatpush1.xpose.msra.mxu0 0.0
    %1775 = vmatprep.subr.mxu0 0.0
    %1776 = vmatpush1.xpose.msra.mxu0 0.0
    %1777 = vmatprep.subr.mxu0 0.0
    %1778 = vmatpush1.xpose.msra.mxu0 0.0
    %1779 = vmatprep.subr.mxu0 0.0
    %1780 = vmatpush1.xpose.msra.mxu0 0.0
    %1781 = vmatprep.subr.mxu0 0.0
    %1782 = vmatpush1.xpose.msra.mxu0 0.0
    %1783 = vmatprep.subr.mxu0 0.0
    %1784 = vmatpush1.xpose.msra.mxu0 0.0
    %1785 = vmatprep.subr.mxu0 0.0
    %1786 = vmatpush1.xpose.msra.mxu0 0.0
    %1787 = vmatprep.subr.mxu0 0.0
    %1788 = vmatpush1.xpose.msra.mxu0 0.0
    %1789 = vmatprep.subr.mxu0 0.0
    %1790 = vmatpush1.xpose.msra.mxu0 0.0
    %1791 = vmatprep.subr.mxu0 0.0
    %1792 = vmatpush1.xpose.msra.mxu0 0.0
    %1793 = vmatprep.mubr.f32.mxu0 0.0
    %1794 = vmatmul.mubr.f32.gmra.mrb[0].mxu0 %v1721
    %v1795 = vpop.f32.mrb[0].mxu0
    %v1796 = vadd.f32 %v157, %v1795
    %v1797 = vpop.f32.mrb[0].mxu0
    %1798 = vmatprep.mubr.f32.mxu0 0.0
    %1799 = vmatmul.mubr.f32.gmra.mrb[0].mxu0 %v1723
    %v1800 = vpop.f32.mrb[0].mxu0
    %v1801 = vadd.f32 %v158, %v1800
    %v1802 = vpop.f32.mrb[0].mxu0
    %1803 = vdwg.mxu0
    %v1804 = vsel %vm317, %v1796, -inf
    %1805 = vmax.xlane.f32.xlu0 %v1804
    %v1806 = vpop.xlane.xlu0 %1805
    %v1807 = vsel %vm317, %v1801, -inf
    %1808 = vmax.xlane.f32.xlu0 %v1807
    %v1809 = vpop.xlane.xlu0 %1808
    %v1810 = vsub.f32 %v1796, %v1806
    %v1811 = vsub.f32 %v1801, %v1809
    %v1812 = vmul.f32 %v1810, 1.442695
    %v1813 = vpow.pop %v1812
    %v1814 = vmul.f32 %v1811, 1.442695
    %v1815 = vpow.pop %v1814
    %v1816 = vsel %vm317, %v1813, 0.0
    %1817 = vadd.xlane.f32.xlu0 %v1816
    %v1818 = vpop.xlane.xlu0 %1817
    %v1819 = vsel %vm317, %v1815, 0.0
    %1820 = vadd.xlane.f32.xlu0 %v1819
    %v1821 = vpop.xlane.xlu0 %1820
    %v1822 = vrcp.pop %v1818
    %v1823 = vmul.f32 %v1813, %v1822
    %v1824 = vrcp.pop %v1821
    %v1825 = vmul.f32 %v1815, %v1824
    %v1829 = vsel %vm317, %v1823, 0
    %v1832 = vsel %vm317, %v1825, 0
    %1834 = vmatprep.subr.mxu0 0.0
    %1835 = vmatpush1.msra.mxu0 %v1718
    %1836 = vmatprep.subr.mxu0 0.0
    %1837 = vmatpush1.msra.mxu0 %v1720
    %1838 = vmatprep.subr.mxu0 0.0
    %1839 = vmatpush1.msra.mxu0 0.0
    %1840 = vmatprep.subr.mxu0 0.0
    %1841 = vmatpush1.msra.mxu0 0.0
    %1842 = vmatprep.subr.mxu0 0.0
    %1843 = vmatpush1.msra.mxu0 0.0
    %1844 = vmatprep.subr.mxu0 0.0
    %1845 = vmatpush1.msra.mxu0 0.0
    %1846 = vmatprep.subr.mxu0 0.0
    %1847 = vmatpush1.msra.mxu0 0.0
    %1848 = vmatprep.subr.mxu0 0.0
    %1849 = vmatpush1.msra.mxu0 0.0
    %1850 = vmatprep.subr.mxu0 0.0
    %1851 = vmatpush1.msra.mxu0 0.0
    %1852 = vmatprep.subr.mxu0 0.0
    %1853 = vmatpush1.msra.mxu0 0.0
    %1854 = vmatprep.subr.mxu0 0.0
    %1855 = vmatpush1.msra.mxu0 0.0
    %1856 = vmatprep.subr.mxu0 0.0
    %1857 = vmatpush1.msra.mxu0 0.0
    %1858 = vmatprep.subr.mxu0 0.0
    %1859 = vmatpush1.msra.mxu0 0.0
    %1860 = vmatprep.subr.mxu0 0.0
    %1861 = vmatpush1.msra.mxu0 0.0
    %1862 = vmatprep.subr.mxu0 0.0
    %1863 = vmatpush1.msra.mxu0 0.0
    %1864 = vmatprep.subr.mxu0 0.0
    %1865 = vmatpush1.msra.mxu0 0.0
    %1866 = vmatprep.subr.mxu0 0.0
    %1867 = vmatpush1.msra.mxu0 0.0
    %1868 = vmatprep.subr.mxu0 0.0
    %1869 = vmatpush1.msra.mxu0 0.0
    %1870 = vmatprep.subr.mxu0 0.0
    %1871 = vmatpush1.msra.mxu0 0.0
    %1872 = vmatprep.subr.mxu0 0.0
    %1873 = vmatpush1.msra.mxu0 0.0
    %1874 = vmatprep.subr.mxu0 0.0
    %1875 = vmatpush1.msra.mxu0 0.0
    %1876 = vmatprep.subr.mxu0 0.0
    %1877 = vmatpush1.msra.mxu0 0.0
    %1878 = vmatprep.subr.mxu0 0.0
    %1879 = vmatpush1.msra.mxu0 0.0
    %1880 = vmatprep.subr.mxu0 0.0
    %1881 = vmatpush1.msra.mxu0 0.0
    %1882 = vmatprep.subr.mxu0 0.0
    %1883 = vmatpush1.msra.mxu0 0.0
    %1884 = vmatprep.subr.mxu0 0.0
    %1885 = vmatpush1.msra.mxu0 0.0
    %1886 = vmatprep.subr.mxu0 0.0
    %1887 = vmatpush1.msra.mxu0 0.0
    %1888 = vmatprep.subr.mxu0 0.0
    %1889 = vmatpush1.msra.mxu0 0.0
    %1890 = vmatprep.subr.mxu0 0.0
    %1891 = vmatpush1.msra.mxu0 0.0
    %1892 = vmatprep.subr.mxu0 0.0
    %1893 = vmatpush1.msra.mxu0 0.0
    %1894 = vmatprep.subr.mxu0 0.0
    %1895 = vmatpush1.msra.mxu0 0.0
    %1896 = vmatprep.subr.mxu0 0.0
    %1897 = vmatpush1.msra.mxu0 0.0
    %1898 = vmatprep.mubr.f32.mxu0 0.0
    %1899 = vmatmul.mubr.f32.gmra.mrb[0].mxu0 %v1829
    %v1900 = vpop.f32.mrb[0].mxu0
    %v1901 = vadd.f32 0.0, %v1900
    %v1902 = vpop.f32.mrb[0].mxu0
    %1903 = vmatprep.mubr.f32.mxu0 0.0
    %1904 = vmatmul.mubr.f32.gmra.mrb[0].mxu0 %v1832
    %v1905 = vpop.f32.mrb[0].mxu0
    %v1906 = vadd.f32 0.0, %v1905
    %v1907 = vpop.f32.mrb[0].mxu0
    %1908 = vdwg.mxu0
    %1909 = vrot.lane.b32.xlu0 %v1325, 104
    %v1910 = vpop.permute.xlu0 %1909
    %1911 = vrot.lane.b32.xlu0 %v1326, 104
    %v1912 = vpop.permute.xlu0 %1911
    %1913 = vrot.lane.b32.xlu0 %v1323, 104
    %v1914 = vpop.permute.xlu0 %1913
    %1915 = vrot.lane.b32.xlu0 %v1324, 104
    %v1916 = vpop.permute.xlu0 %1915
    %v1917 = vsel %vm229, %v1910, 0
    %v1919 = vsel %vm229, %v1912, 0
    %v1921 = vsel %vm229, %v1914, 0
    %v1923 = vsel %vm229, %v1916, 0
    %1925 = vmatprep.subr.mxu0 0.0
    %1926 = vmatpush1.xpose.msra.mxu0 %v1921
    %1927 = vmatprep.subr.mxu0 0.0
    %1928 = vmatpush1.xpose.msra.mxu0 %v1923
    %1929 = vmatprep.subr.mxu0 0.0
    %1930 = vmatpush1.xpose.msra.mxu0 0.0
    %1931 = vmatprep.subr.mxu0 0.0
    %1932 = vmatpush1.xpose.msra.mxu0 0.0
    %1933 = vmatprep.subr.mxu0 0.0
    %1934 = vmatpush1.xpose.msra.mxu0 0.0
    %1935 = vmatprep.subr.mxu0 0.0
    %1936 = vmatpush1.xpose.msra.mxu0 0.0
    %1937 = vmatprep.subr.mxu0 0.0
    %1938 = vmatpush1.xpose.msra.mxu0 0.0
    %1939 = vmatprep.subr.mxu0 0.0
    %1940 = vmatpush1.xpose.msra.mxu0 0.0
    %1941 = vmatprep.subr.mxu0 0.0
    %1942 = vmatpush1.xpose.msra.mxu0 0.0
    %1943 = vmatprep.subr.mxu0 0.0
    %1944 = vmatpush1.xpose.msra.mxu0 0.0
    %1945 = vmatprep.subr.mxu0 0.0
    %1946 = vmatpush1.xpose.msra.mxu0 0.0
    %1947 = vmatprep.subr.mxu0 0.0
    %1948 = vmatpush1.xpose.msra.mxu0 0.0
    %1949 = vmatprep.subr.mxu0 0.0
    %1950 = vmatpush1.xpose.msra.mxu0 0.0
    %1951 = vmatprep.subr.mxu0 0.0
    %1952 = vmatpush1.xpose.msra.mxu0 0.0
    %1953 = vmatprep.subr.mxu0 0.0
    %1954 = vmatpush1.xpose.msra.mxu0 0.0
    %1955 = vmatprep.subr.mxu0 0.0
    %1956 = vmatpush1.xpose.msra.mxu0 0.0
    %1957 = vmatprep.subr.mxu0 0.0
    %1958 = vmatpush1.xpose.msra.mxu0 0.0
    %1959 = vmatprep.subr.mxu0 0.0
    %1960 = vmatpush1.xpose.msra.mxu0 0.0
    %1961 = vmatprep.subr.mxu0 0.0
    %1962 = vmatpush1.xpose.msra.mxu0 0.0
    %1963 = vmatprep.subr.mxu0 0.0
    %1964 = vmatpush1.xpose.msra.mxu0 0.0
    %1965 = vmatprep.subr.mxu0 0.0
    %1966 = vmatpush1.xpose.msra.mxu0 0.0
    %1967 = vmatprep.subr.mxu0 0.0
    %1968 = vmatpush1.xpose.msra.mxu0 0.0
    %1969 = vmatprep.subr.mxu0 0.0
    %1970 = vmatpush1.xpose.msra.mxu0 0.0
    %1971 = vmatprep.subr.mxu0 0.0
    %1972 = vmatpush1.xpose.msra.mxu0 0.0
    %1973 = vmatprep.subr.mxu0 0.0
    %1974 = vmatpush1.xpose.msra.mxu0 0.0
    %1975 = vmatprep.subr.mxu0 0.0
    %1976 = vmatpush1.xpose.msra.mxu0 0.0
    %1977 = vmatprep.subr.mxu0 0.0
    %1978 = vmatpush1.xpose.msra.mxu0 0.0
    %1979 = vmatprep.subr.mxu0 0.0
    %1980 = vmatpush1.xpose.msra.mxu0 0.0
    %1981 = vmatprep.subr.mxu0 0.0
    %1982 = vmatpush1.xpose.msra.mxu0 0.0
    %1983 = vmatprep.subr.mxu0 0.0
    %1984 = vmatpush1.xpose.msra.mxu0 0.0
    %1985 = vmatprep.subr.mxu0 0.0
    %1986 = vmatpush1.xpose.msra.mxu0 0.0
    %1987 = vmatprep.subr.mxu0 0.0
    %1988 = vmatpush1.xpose.msra.mxu0 0.0
    %1989 = vmatprep.mubr.f32.mxu0 0.0
    %1990 = vmatmul.mubr.f32.gmra.mrb[0].mxu0 %v1917
    %v1991 = vpop.f32.mrb[0].mxu0
    %v1992 = vadd.f32 %v157, %v1991
    %v1993 = vpop.f32.mrb[0].mxu0
    %1994 = vmatprep.mubr.f32.mxu0 0.0
    %1995 = vmatmul.mubr.f32.gmra.mrb[0].mxu0 %v1919
    %v1996 = vpop.f32.mrb[0].mxu0
    %v1997 = vadd.f32 %v158, %v1996
    %v1998 = vpop.f32.mrb[0].mxu0
    %1999 = vdwg.mxu0
    %v2000 = vsel %vm317, %v1992, -inf
    %2001 = vmax.xlane.f32.xlu0 %v2000
    %v2002 = vpop.xlane.xlu0 %2001
    %v2003 = vsel %vm317, %v1997, -inf
    %2004 = vmax.xlane.f32.xlu0 %v2003
    %v2005 = vpop.xlane.xlu0 %2004
    %v2006 = vsub.f32 %v1992, %v2002
    %v2007 = vsub.f32 %v1997, %v2005
    %v2008 = vmul.f32 %v2006, 1.442695
    %v2009 = vpow.pop %v2008
    %v2010 = vmul.f32 %v2007, 1.442695
    %v2011 = vpow.pop %v2010
    %v2012 = vsel %vm317, %v2009, 0.0
    %2013 = vadd.xlane.f32.xlu0 %v2012
    %v2014 = vpop.xlane.xlu0 %2013
    %v2015 = vsel %vm317, %v2011, 0.0
    %2016 = vadd.xlane.f32.xlu0 %v2015
    %v2017 = vpop.xlane.xlu0 %2016
    %v2018 = vrcp.pop %v2014
    %v2019 = vmul.f32 %v2009, %v2018
    %v2020 = vrcp.pop %v2017
    %v2021 = vmul.f32 %v2011, %v2020
    %v2025 = vsel %vm317, %v2019, 0
    %v2028 = vsel %vm317, %v2021, 0
    %2030 = vmatprep.subr.mxu0 0.0
    %2031 = vmatpush1.msra.mxu0 %v1914
    %2032 = vmatprep.subr.mxu0 0.0
    %2033 = vmatpush1.msra.mxu0 %v1916
    %2034 = vmatprep.subr.mxu0 0.0
    %2035 = vmatpush1.msra.mxu0 0.0
    %2036 = vmatprep.subr.mxu0 0.0
    %2037 = vmatpush1.msra.mxu0 0.0
    %2038 = vmatprep.subr.mxu0 0.0
    %2039 = vmatpush1.msra.mxu0 0.0
    %2040 = vmatprep.subr.mxu0 0.0
    %2041 = vmatpush1.msra.mxu0 0.0
    %2042 = vmatprep.subr.mxu0 0.0
    %2043 = vmatpush1.msra.mxu0 0.0
    %2044 = vmatprep.subr.mxu0 0.0
    %2045 = vmatpush1.msra.mxu0 0.0
    %2046 = vmatprep.subr.mxu0 0.0
    %2047 = vmatpush1.msra.mxu0 0.0
    %2048 = vmatprep.subr.mxu0 0.0
    %2049 = vmatpush1.msra.mxu0 0.0
    %2050 = vmatprep.subr.mxu0 0.0
    %2051 = vmatpush1.msra.mxu0 0.0
    %2052 = vmatprep.subr.mxu0 0.0
    %2053 = vmatpush1.msra.mxu0 0.0
    %2054 = vmatprep.subr.mxu0 0.0
    %2055 = vmatpush1.msra.mxu0 0.0
    %2056 = vmatprep.subr.mxu0 0.0
    %2057 = vmatpush1.msra.mxu0 0.0
    %2058 = vmatprep.subr.mxu0 0.0
    %2059 = vmatpush1.msra.mxu0 0.0
    %2060 = vmatprep.subr.mxu0 0.0
    %2061 = vmatpush1.msra.mxu0 0.0
    %2062 = vmatprep.subr.mxu0 0.0
    %2063 = vmatpush1.msra.mxu0 0.0
    %2064 = vmatprep.subr.mxu0 0.0
    %2065 = vmatpush1.msra.mxu0 0.0
    %2066 = vmatprep.subr.mxu0 0.0
    %2067 = vmatpush1.msra.mxu0 0.0
    %2068 = vmatprep.subr.mxu0 0.0
    %2069 = vmatpush1.msra.mxu0 0.0
    %2070 = vmatprep.subr.mxu0 0.0
    %2071 = vmatpush1.msra.mxu0 0.0
    %2072 = vmatprep.subr.mxu0 0.0
    %2073 = vmatpush1.msra.mxu0 0.0
    %2074 = vmatprep.subr.mxu0 0.0
    %2075 = vmatpush1.msra.mxu0 0.0
    %2076 = vmatprep.subr.mxu0 0.0
    %2077 = vmatpush1.msra.mxu0 0.0
    %2078 = vmatprep.subr.mxu0 0.0
    %2079 = vmatpush1.msra.mxu0 0.0
    %2080 = vmatprep.subr.mxu0 0.0
    %2081 = vmatpush1.msra.mxu0 0.0
    %2082 = vmatprep.subr.mxu0 0.0
    %2083 = vmatpush1.msra.mxu0 0.0
    %2084 = vmatprep.subr.mxu0 0.0
    %2085 = vmatpush1.msra.mxu0 0.0
    %2086 = vmatprep.subr.mxu0 0.0
    %2087 = vmatpush1.msra.mxu0 0.0
    %2088 = vmatprep.subr.mxu0 0.0
    %2089 = vmatpush1.msra.mxu0 0.0
    %2090 = vmatprep.subr.mxu0 0.0
    %2091 = vmatpush1.msra.mxu0 0.0
    %2092 = vmatprep.subr.mxu0 0.0
    %2093 = vmatpush1.msra.mxu0 0.0
    %2094 = vmatprep.mubr.f32.mxu0 0.0
    %2095 = vmatmul.mubr.f32.gmra.mrb[0].mxu0 %v2025
    %v2096 = vpop.f32.mrb[0].mxu0
    %v2097 = vadd.f32 0.0, %v2096
    %v2098 = vpop.f32.mrb[0].mxu0
    %2099 = vmatprep.mubr.f32.mxu0 0.0
    %2100 = vmatmul.mubr.f32.gmra.mrb[0].mxu0 %v2028
    %v2101 = vpop.f32.mrb[0].mxu0
    %v2102 = vadd.f32 0.0, %v2101
    %v2103 = vpop.f32.mrb[0].mxu0
    %2104 = vdwg.mxu0
    %2107 = vrot.lane.b32.xlu0 %v1705, 8
    %v2108 = vpop.permute.xlu0 %2107
    %2109 = vrot.lane.b32.xlu0 %v1710, 8
    %v2110 = vpop.permute.xlu0 %2109
    %2115 = vrot.lane.b32.xlu0 %v1901, 16
    %v2116 = vpop.permute.xlu0 %2115
    %2117 = vrot.lane.b32.xlu0 %v1906, 16
    %v2118 = vpop.permute.xlu0 %2117
    %2123 = vrot.lane.b32.xlu0 %v2097, 24
    %v2124 = vpop.permute.xlu0 %2123
    %2125 = vrot.lane.b32.xlu0 %v2102, 24
    %v2126 = vpop.permute.xlu0 %2125
    %v2129 = vsel %vm229, %v1509, %v2108
    %v2130 = vsel %vm229, %v1514, %v2110
    %v2131 = vsel %vm317, %v2129, %v2116
    %v2132 = vsel %vm317, %v2130, %v2118
    %v2133 = vsel %vm1037, %v2131, %v2124
    %v2134 = vsel %vm1037, %v2132, %v2126
    %v2135 = vadd.f32 %v1277, %v2133
    %v2136 = vadd.f32 %v1278, %v2134
    %s2137 = scalar_lea.vmem %s19, 1
    %v2138 = vld [vmem:[%s2137] sm:$0x1]
    %s2139 = scalar_lea.vmem %s21, 1
    %v2140 = vld [vmem:[%s2139] sm:$0x1]
    %v2141 = vsel %vm183, %v2135, 0.0
    %2142 = vadd.xlane.f32.xlu0 %v2141
    %v2143 = vpop.xlane.xlu0 %2142
    %v2144 = vsel %vm183, %v2136, 0.0
    %2145 = vadd.xlane.f32.xlu0 %v2144
    %v2146 = vpop.xlane.xlu0 %2145
    %v2147 = vmul.f32 %v2143, %v190
    %v2148 = vmul.f32 %v2146, %v190
    %v2149 = vsub.f32 %v2135, %v2147
    %v2150 = vsub.f32 %v2136, %v2148
    %v2151 = vmul.f32 %v2149, %v2149
    %v2152 = vmul.f32 %v2150, %v2150
    %v2153 = vsel %vm183, %v2151, 0.0
    %2154 = vadd.xlane.f32.xlu0 %v2153
    %v2155 = vpop.xlane.xlu0 %2154
    %v2156 = vsel %vm183, %v2152, 0.0
    %2157 = vadd.xlane.f32.xlu0 %v2156
    %v2158 = vpop.xlane.xlu0 %2157
    %v2159 = vmul.f32 %v2155, %v190
    %v2160 = vmul.f32 %v2158, %v190
    %v2161 = vadd.f32 %v2159, 1e-05
    %v2162 = vadd.f32 %v2160, 1e-05
    %v2163 = vrsqrt.pop %v2161
    %v2164 = vrsqrt.pop %v2162
    %v2165 = vmul.f32 %v2149, %v2163
    %v2166 = vmul.f32 %v2150, %v2164
    %v2168 = vlaneseq
    %v2169 = vshrl.u32 %v2168, 7
    %v2170 = vsub.s32 0, %v2169
    %v2171 = vrot.slane %v2138, %v2170
    %v2173 = vmul.f32 %v2165, %v2171
    %v2174 = vmul.f32 %v2166, %v2171
    %v2176 = vlaneseq
    %v2177 = vshrl.u32 %v2176, 7
    %v2178 = vsub.s32 0, %v2177
    %v2179 = vrot.slane %v2140, %v2178
    %v2181 = vadd.f32 %v2173, %v2179
    %v2182 = vadd.f32 %v2174, %v2179
    %s2183 = scalar_lea.vmem %s23, 32
    %v2184 = vld [vmem:[%s2183] sm:$0xff]
    %v2185 = vld [vmem:[%s2183 + $0x8] sm:$0xff]
    %v2186 = vld [vmem:[%s2183 + $0x10] sm:$0xff]
    %v2187 = vld [vmem:[%s2183 + $0x18] sm:$0xff]
    %s2188 = scalar_lea.vmem %s25, 1
    %v2189 = vld [vmem:[%s2188] sm:$0x1]
    %s2190 = scalar_lea.vmem %s27, 64
    %v2191 = vld [vmem:[%s2190] sm:$0xff]
    %v2192 = vld [vmem:[%s2190 + $0x8] sm:$0xff]
    %v2193 = vld [vmem:[%s2190 + $0x10] sm:$0xff]
    %v2194 = vld [vmem:[%s2190 + $0x18] sm:$0xff]
    %v2195 = vld [vmem:[%s2190 + $0x20] sm:$0xff]
    %v2196 = vld [vmem:[%s2190 + $0x28] sm:$0xff]
    %v2197 = vld [vmem:[%s2190 + $0x30] sm:$0xff]
    %v2198 = vld [vmem:[%s2190 + $0x38] sm:$0xff]
    %s2199 = scalar_lea.vmem %s29, 1
    %v2200 = vld [vmem:[%s2199] sm:$0x1]
    %v2202 = vlaneseq
    %v2203 = vshrl.u32 %v2202, 7
    %v2204 = vsub.s32 0, %v2203
    %v2205 = vrot.slane %v2189, %v2204
    %v2208 = vsel %vm183, %v2181, 0
    %v2211 = vsel %vm183, %v2182, 0
    %2213 = vmatprep.subr.mxu0 0.0
    %2214 = vmatpush1.msra.mxu0 %v2184
    %2215 = vmatprep.subr.mxu0 0.0
    %2216 = vmatpush1.msra.mxu0 %v2185
    %2217 = vmatprep.subr.mxu0 0.0
    %2218 = vmatpush1.msra.mxu0 %v2186
    %2219 = vmatprep.subr.mxu0 0.0
    %2220 = vmatpush1.msra.mxu0 %v2187
    %2221 = vmatprep.subr.mxu0 0.0
    %2222 = vmatpush1.msra.mxu0 0.0
    %2223 = vmatprep.subr.mxu0 0.0
    %2224 = vmatpush1.msra.mxu0 0.0
    %2225 = vmatprep.subr.mxu0 0.0
    %2226 = vmatpush1.msra.mxu0 0.0
    %2227 = vmatprep.subr.mxu0 0.0
    %2228 = vmatpush1.msra.mxu0 0.0
    %2229 = vmatprep.subr.mxu0 0.0
    %2230 = vmatpush1.msra.mxu0 0.0
    %2231 = vmatprep.subr.mxu0 0.0
    %2232 = vmatpush1.msra.mxu0 0.0
    %2233 = vmatprep.subr.mxu0 0.0
    %2234 = vmatpush1.msra.mxu0 0.0
    %2235 = vmatprep.subr.mxu0 0.0
    %2236 = vmatpush1.msra.mxu0 0.0
    %2237 = vmatprep.subr.mxu0 0.0
    %2238 = vmatpush1.msra.mxu0 0.0
    %2239 = vmatprep.subr.mxu0 0.0
    %2240 = vmatpush1.msra.mxu0 0.0
    %2241 = vmatprep.subr.mxu0 0.0
    %2242 = vmatpush1.msra.mxu0 0.0
    %2243 = vmatprep.subr.mxu0 0.0
    %2244 = vmatpush1.msra.mxu0 0.0
    %2245 = vmatprep.subr.mxu0 0.0
    %2246 = vmatpush1.msra.mxu0 0.0
    %2247 = vmatprep.subr.mxu0 0.0
    %2248 = vmatpush1.msra.mxu0 0.0
    %2249 = vmatprep.subr.mxu0 0.0
    %2250 = vmatpush1.msra.mxu0 0.0
    %2251 = vmatprep.subr.mxu0 0.0
    %2252 = vmatpush1.msra.mxu0 0.0
    %2253 = vmatprep.subr.mxu0 0.0
    %2254 = vmatpush1.msra.mxu0 0.0
    %2255 = vmatprep.subr.mxu0 0.0
    %2256 = vmatpush1.msra.mxu0 0.0
    %2257 = vmatprep.subr.mxu0 0.0
    %2258 = vmatpush1.msra.mxu0 0.0
    %2259 = vmatprep.subr.mxu0 0.0
    %2260 = vmatpush1.msra.mxu0 0.0
    %2261 = vmatprep.subr.mxu0 0.0
    %2262 = vmatpush1.msra.mxu0 0.0
    %2263 = vmatprep.subr.mxu0 0.0
    %2264 = vmatpush1.msra.mxu0 0.0
    %2265 = vmatprep.subr.mxu0 0.0
    %2266 = vmatpush1.msra.mxu0 0.0
    %2267 = vmatprep.subr.mxu0 0.0
    %2268 = vmatpush1.msra.mxu0 0.0
    %2269 = vmatprep.subr.mxu0 0.0
    %2270 = vmatpush1.msra.mxu0 0.0
    %2271 = vmatprep.subr.mxu0 0.0
    %2272 = vmatpush1.msra.mxu0 0.0
    %2273 = vmatprep.subr.mxu0 0.0
    %2274 = vmatpush1.msra.mxu0 0.0
    %2275 = vmatprep.subr.mxu0 0.0
    %2276 = vmatpush1.msra.mxu0 0.0
    %2277 = vmatprep.mubr.f32.mxu0 0.0
    %2278 = vmatmul.mubr.f32.gmra.mrb[0].mxu0 %v2208
    %v2279 = vpop.f32.mrb[0].mxu0
    %v2280 = vadd.f32 %v2205, %v2279
    %v2281 = vpop.f32.mrb[0].mxu0
    %2282 = vmatprep.mubr.f32.mxu0 0.0
    %2283 = vmatmul.mubr.f32.gmra.mrb[0].mxu0 %v2211
    %v2284 = vpop.f32.mrb[0].mxu0
    %v2285 = vadd.f32 %v2205, %v2284
    %v2286 = vpop.f32.mrb[0].mxu0
    %2287 = vdwg.mxu0
    %v2288 = vmax.f32 %v2280, 0.0
    %v2289 = vmax.f32 %v2285, 0.0
    %v2291 = vlaneseq
    %v2292 = vshrl.u32 %v2291, 7
    %v2293 = vsub.s32 0, %v2292
    %v2294 = vrot.slane %v2200, %v2293
    %v2297 = vsel %vm1195, %v2288, 0
    %v2300 = vsel %vm1195, %v2289, 0
    %2302 = vmatprep.subr.mxu0 0.0
    %2303 = vmatpush1.msra.mxu0 %v2191
    %2304 = vmatprep.subr.mxu0 0.0
    %2305 = vmatpush1.msra.mxu0 %v2192
    %2306 = vmatprep.subr.mxu0 0.0
    %2307 = vmatpush1.msra.mxu0 %v2193
    %2308 = vmatprep.subr.mxu0 0.0
    %2309 = vmatpush1.msra.mxu0 %v2194
    %2310 = vmatprep.subr.mxu0 0.0
    %2311 = vmatpush1.msra.mxu0 %v2195
    %2312 = vmatprep.subr.mxu0 0.0
    %2313 = vmatpush1.msra.mxu0 %v2196
    %2314 = vmatprep.subr.mxu0 0.0
    %2315 = vmatpush1.msra.mxu0 %v2197
    %2316 = vmatprep.subr.mxu0 0.0
    %2317 = vmatpush1.msra.mxu0 %v2198
    %2318 = vmatprep.subr.mxu0 0.0
    %2319 = vmatpush1.msra.mxu0 0.0
    %2320 = vmatprep.subr.mxu0 0.0
    %2321 = vmatpush1.msra.mxu0 0.0
    %2322 = vmatprep.subr.mxu0 0.0
    %2323 = vmatpush1.msra.mxu0 0.0
    %2324 = vmatprep.subr.mxu0 0.0
    %2325 = vmatpush1.msra.mxu0 0.0
    %2326 = vmatprep.subr.mxu0 0.0
    %2327 = vmatpush1.msra.mxu0 0.0
    %2328 = vmatprep.subr.mxu0 0.0
    %2329 = vmatpush1.msra.mxu0 0.0
    %2330 = vmatprep.subr.mxu0 0.0
    %2331 = vmatpush1.msra.mxu0 0.0
    %2332 = vmatprep.subr.mxu0 0.0
    %2333 = vmatpush1.msra.mxu0 0.0
    %2334 = vmatprep.subr.mxu0 0.0
    %2335 = vmatpush1.msra.mxu0 0.0
    %2336 = vmatprep.subr.mxu0 0.0
    %2337 = vmatpush1.msra.mxu0 0.0
    %2338 = vmatprep.subr.mxu0 0.0
    %2339 = vmatpush1.msra.mxu0 0.0
    %2340 = vmatprep.subr.mxu0 0.0
    %2341 = vmatpush1.msra.mxu0 0.0
    %2342 = vmatprep.subr.mxu0 0.0
    %2343 = vmatpush1.msra.mxu0 0.0
    %2344 = vmatprep.subr.mxu0 0.0
    %2345 = vmatpush1.msra.mxu0 0.0
    %2346 = vmatprep.subr.mxu0 0.0
    %2347 = vmatpush1.msra.mxu0 0.0
    %2348 = vmatprep.subr.mxu0 0.0
    %2349 = vmatpush1.msra.mxu0 0.0
    %2350 = vmatprep.subr.mxu0 0.0
    %2351 = vmatpush1.msra.mxu0 0.0
    %2352 = vmatprep.subr.mxu0 0.0
    %2353 = vmatpush1.msra.mxu0 0.0
    %2354 = vmatprep.subr.mxu0 0.0
    %2355 = vmatpush1.msra.mxu0 0.0
    %2356 = vmatprep.subr.mxu0 0.0
    %2357 = vmatpush1.msra.mxu0 0.0
    %2358 = vmatprep.subr.mxu0 0.0
    %2359 = vmatpush1.msra.mxu0 0.0
    %2360 = vmatprep.subr.mxu0 0.0
    %2361 = vmatpush1.msra.mxu0 0.0
    %2362 = vmatprep.subr.mxu0 0.0
    %2363 = vmatpush1.msra.mxu0 0.0
    %2364 = vmatprep.subr.mxu0 0.0
    %2365 = vmatpush1.msra.mxu0 0.0
    %2366 = vmatprep.mubr.f32.mxu0 0.0
    %2367 = vmatmul.mubr.f32.gmra.mrb[0].mxu0 %v2297
    %v2368 = vpop.f32.mrb[0].mxu0
    %v2369 = vadd.f32 %v2294, %v2368
    %v2370 = vpop.f32.mrb[0].mxu0
    %2371 = vmatprep.mubr.f32.mxu0 0.0
    %2372 = vmatmul.mubr.f32.gmra.mrb[0].mxu0 %v2300
    %v2373 = vpop.f32.mrb[0].mxu0
    %v2374 = vadd.f32 %v2294, %v2373
    %v2375 = vpop.f32.mrb[0].mxu0
    %2376 = vdwg.mxu0
    %v2377 = vadd.f32 %v2181, %v2369
    %v2378 = vadd.f32 %v2182, %v2374
    %v2379 = vld [vmem:[%s31] sm:$0x1]
    %v2380 = vld [vmem:[%s33] sm:$0x1]
    %v2381 = vsel %vm183, %v2377, 0.0
    %2382 = vadd.xlane.f32.xlu0 %v2381
    %v2383 = vpop.xlane.xlu0 %2382
    %v2384 = vsel %vm183, %v2378, 0.0
    %2385 = vadd.xlane.f32.xlu0 %v2384
    %v2386 = vpop.xlane.xlu0 %2385
    %v2387 = vmul.f32 %v2383, %v190
    %v2388 = vmul.f32 %v2386, %v190
    %v2389 = vsub.f32 %v2377, %v2387
    %v2390 = vsub.f32 %v2378, %v2388
    %v2391 = vmul.f32 %v2389, %v2389
    %v2392 = vmul.f32 %v2390, %v2390
    %v2393 = vsel %vm183, %v2391, 0.0
    %2394 = vadd.xlane.f32.xlu0 %v2393
    %v2395 = vpop.xlane.xlu0 %2394
    %v2396 = vsel %vm183, %v2392, 0.0
    %2397 = vadd.xlane.f32.xlu0 %v2396
    %v2398 = vpop.xlane.xlu0 %2397
    %v2399 = vmul.f32 %v2395, %v190
    %v2400 = vmul.f32 %v2398, %v190
    %v2401 = vadd.f32 %v2399, 1e-05
    %v2402 = vadd.f32 %v2400, 1e-05
    %v2403 = vrsqrt.pop %v2401
    %v2404 = vrsqrt.pop %v2402
    %v2405 = vmul.f32 %v2389, %v2403
    %v2406 = vmul.f32 %v2390, %v2404
    %v2408 = vlaneseq
    %v2409 = vshrl.u32 %v2408, 7
    %v2410 = vsub.s32 0, %v2409
    %v2411 = vrot.slane %v2379, %v2410
    %v2413 = vmul.f32 %v2405, %v2411
    %v2414 = vmul.f32 %v2406, %v2411
    %v2416 = vlaneseq
    %v2417 = vshrl.u32 %v2416, 7
    %v2418 = vsub.s32 0, %v2417
    %v2419 = vrot.slane %v2380, %v2418
    %v2421 = vadd.f32 %v2413, %v2419
    %v2422 = vadd.f32 %v2414, %v2419
    %v2423 = vld [vmem:[%s11] sm:$0xff]
    %v2424 = vld [vmem:[%s11 + $0x8] sm:$0xff]
    %v2425 = vmul.f32 %v166, %v2423
    %v2426 = vmul.f32 %v171, %v2424
    %v2427 = vld [vmem:[%s13] sm:$0xff]
    %v2428 = vld [vmem:[%s13 + $0x8] sm:$0xff]
    %v2429 = vadd.f32 %v2425, %v2427
    %v2430 = vadd.f32 %v2426, %v2428
    %v2431 = vadd.f32 %v2429, %v159
    %v2432 = vadd.f32 %v2430, %v160
    %v2433 = vld [vmem:[%s35] sm:$0x1]
    %v2434 = vld [vmem:[%s37] sm:$0x1]
    %v2435 = vsel %vm183, %v2431, 0.0
    %2436 = vadd.xlane.f32.xlu0 %v2435
    %v2437 = vpop.xlane.xlu0 %2436
    %v2438 = vsel %vm183, %v2432, 0.0
    %2439 = vadd.xlane.f32.xlu0 %v2438
    %v2440 = vpop.xlane.xlu0 %2439
    %v2441 = vmul.f32 %v2437, %v190
    %v2442 = vmul.f32 %v2440, %v190
    %v2443 = vsub.f32 %v2431, %v2441
    %v2444 = vsub.f32 %v2432, %v2442
    %v2445 = vmul.f32 %v2443, %v2443
    %v2446 = vmul.f32 %v2444, %v2444
    %v2447 = vsel %vm183, %v2445, 0.0
    %2448 = vadd.xlane.f32.xlu0 %v2447
    %v2449 = vpop.xlane.xlu0 %2448
    %v2450 = vsel %vm183, %v2446, 0.0
    %2451 = vadd.xlane.f32.xlu0 %v2450
    %v2452 = vpop.xlane.xlu0 %2451
    %v2453 = vmul.f32 %v2449, %v190
    %v2454 = vmul.f32 %v2452, %v190
    %v2455 = vadd.f32 %v2453, 1e-05
    %v2456 = vadd.f32 %v2454, 1e-05
    %v2457 = vrsqrt.pop %v2455
    %v2458 = vrsqrt.pop %v2456
    %v2459 = vmul.f32 %v2443, %v2457
    %v2460 = vmul.f32 %v2444, %v2458
    %v2462 = vlaneseq
    %v2463 = vshrl.u32 %v2462, 7
    %v2464 = vsub.s32 0, %v2463
    %v2465 = vrot.slane %v2433, %v2464
    %v2467 = vmul.f32 %v2459, %v2465
    %v2468 = vmul.f32 %v2460, %v2465
    %v2470 = vlaneseq
    %v2471 = vshrl.u32 %v2470, 7
    %v2472 = vsub.s32 0, %v2471
    %v2473 = vrot.slane %v2434, %v2472
    %v2475 = vadd.f32 %v2467, %v2473
    %v2476 = vadd.f32 %v2468, %v2473
    %v2477 = vmul.f32 %v2475, 0.35355338
    %v2478 = vmul.f32 %v2476, 0.35355338
    %v2480 = vsel %vm229, %v2477, 0
    %v2483 = vsel %vm229, %v2478, 0
    %v2486 = vsel %vm229, %v2475, 0
    %v2489 = vsel %vm229, %v2476, 0
    %2491 = vmatprep.subr.mxu0 0.0
    %2492 = vmatpush1.xpose.msra.mxu0 %v2486
    %2493 = vmatprep.subr.mxu0 0.0
    %2494 = vmatpush1.xpose.msra.mxu0 %v2489
    %2495 = vmatprep.subr.mxu0 0.0
    %2496 = vmatpush1.xpose.msra.mxu0 0.0
    %2497 = vmatprep.subr.mxu0 0.0
    %2498 = vmatpush1.xpose.msra.mxu0 0.0
    %2499 = vmatprep.subr.mxu0 0.0
    %2500 = vmatpush1.xpose.msra.mxu0 0.0
    %2501 = vmatprep.subr.mxu0 0.0
    %2502 = vmatpush1.xpose.msra.mxu0 0.0
    %2503 = vmatprep.subr.mxu0 0.0
    %2504 = vmatpush1.xpose.msra.mxu0 0.0
    %2505 = vmatprep.subr.mxu0 0.0
    %2506 = vmatpush1.xpose.msra.mxu0 0.0
    %2507 = vmatprep.subr.mxu0 0.0
    %2508 = vmatpush1.xpose.msra.mxu0 0.0
    %2509 = vmatprep.subr.mxu0 0.0
    %2510 = vmatpush1.xpose.msra.mxu0 0.0
    %2511 = vmatprep.subr.mxu0 0.0
    %2512 = vmatpush1.xpose.msra.mxu0 0.0
    %2513 = vmatprep.subr.mxu0 0.0
    %2514 = vmatpush1.xpose.msra.mxu0 0.0
    %2515 = vmatprep.subr.mxu0 0.0
    %2516 = vmatpush1.xpose.msra.mxu0 0.0
    %2517 = vmatprep.subr.mxu0 0.0
    %2518 = vmatpush1.xpose.msra.mxu0 0.0
    %2519 = vmatprep.subr.mxu0 0.0
    %2520 = vmatpush1.xpose.msra.mxu0 0.0
    %2521 = vmatprep.subr.mxu0 0.0
    %2522 = vmatpush1.xpose.msra.mxu0 0.0
    %2523 = vmatprep.subr.mxu0 0.0
    %2524 = vmatpush1.xpose.msra.mxu0 0.0
    %2525 = vmatprep.subr.mxu0 0.0
    %2526 = vmatpush1.xpose.msra.mxu0 0.0
    %2527 = vmatprep.subr.mxu0 0.0
    %2528 = vmatpush1.xpose.msra.mxu0 0.0
    %2529 = vmatprep.subr.mxu0 0.0
    %2530 = vmatpush1.xpose.msra.mxu0 0.0
    %2531 = vmatprep.subr.mxu0 0.0
    %2532 = vmatpush1.xpose.msra.mxu0 0.0
    %2533 = vmatprep.subr.mxu0 0.0
    %2534 = vmatpush1.xpose.msra.mxu0 0.0
    %2535 = vmatprep.subr.mxu0 0.0
    %2536 = vmatpush1.xpose.msra.mxu0 0.0
    %2537 = vmatprep.subr.mxu0 0.0
    %2538 = vmatpush1.xpose.msra.mxu0 0.0
    %2539 = vmatprep.subr.mxu0 0.0
    %2540 = vmatpush1.xpose.msra.mxu0 0.0
    %2541 = vmatprep.subr.mxu0 0.0
    %2542 = vmatpush1.xpose.msra.mxu0 0.0
    %2543 = vmatprep.subr.mxu0 0.0
    %2544 = vmatpush1.xpose.msra.mxu0 0.0
    %2545 = vmatprep.subr.mxu0 0.0
    %2546 = vmatpush1.xpose.msra.mxu0 0.0
    %2547 = vmatprep.subr.mxu0 0.0
    %2548 = vmatpush1.xpose.msra.mxu0 0.0
    %2549 = vmatprep.subr.mxu0 0.0
    %2550 = vmatpush1.xpose.msra.mxu0 0.0
    %2551 = vmatprep.subr.mxu0 0.0
    %2552 = vmatpush1.xpose.msra.mxu0 0.0
    %2553 = vmatprep.subr.mxu0 0.0
    %2554 = vmatpush1.xpose.msra.mxu0 0.0
    %2555 = vmatprep.mubr.f32.mxu0 0.0
    %2556 = vmatmul.mubr.f32.gmra.mrb[0].mxu0 %v2480
    %v2557 = vpop.f32.mrb[0].mxu0
    %v2558 = vadd.f32 %v157, %v2557
    %v2559 = vpop.f32.mrb[0].mxu0
    %2560 = vmatprep.mubr.f32.mxu0 0.0
    %2561 = vmatmul.mubr.f32.gmra.mrb[0].mxu0 %v2483
    %v2562 = vpop.f32.mrb[0].mxu0
    %v2563 = vadd.f32 %v158, %v2562
    %v2564 = vpop.f32.mrb[0].mxu0
    %2565 = vdwg.mxu0
    %v2566 = vsel %vm317, %v2558, -inf
    %2567 = vmax.xlane.f32.xlu0 %v2566
    %v2568 = vpop.xlane.xlu0 %2567
    %v2569 = vsel %vm317, %v2563, -inf
    %2570 = vmax.xlane.f32.xlu0 %v2569
    %v2571 = vpop.xlane.xlu0 %2570
    %v2572 = vsub.f32 %v2558, %v2568
    %v2573 = vsub.f32 %v2563, %v2571
    %v2574 = vmul.f32 %v2572, 1.442695
    %v2575 = vpow.pop %v2574
    %v2576 = vmul.f32 %v2573, 1.442695
    %v2577 = vpow.pop %v2576
    %v2578 = vsel %vm317, %v2575, 0.0
    %2579 = vadd.xlane.f32.xlu0 %v2578
    %v2580 = vpop.xlane.xlu0 %2579
    %v2581 = vsel %vm317, %v2577, 0.0
    %2582 = vadd.xlane.f32.xlu0 %v2581
    %v2583 = vpop.xlane.xlu0 %2582
    %v2584 = vrcp.pop %v2580
    %v2585 = vmul.f32 %v2575, %v2584
    %v2586 = vrcp.pop %v2583
    %v2587 = vmul.f32 %v2577, %v2586
    %v2589 = vsel %vm317, %v2585, 0
    %v2592 = vsel %vm317, %v2587, 0
    %2594 = vmatprep.subr.mxu0 0.0
    %2595 = vmatpush1.msra.mxu0 %v2475
    %2596 = vmatprep.subr.mxu0 0.0
    %2597 = vmatpush1.msra.mxu0 %v2476
    %2598 = vmatprep.subr.mxu0 0.0
    %2599 = vmatpush1.msra.mxu0 0.0
    %2600 = vmatprep.subr.mxu0 0.0
    %2601 = vmatpush1.msra.mxu0 0.0
    %2602 = vmatprep.subr.mxu0 0.0
    %2603 = vmatpush1.msra.mxu0 0.0
    %2604 = vmatprep.subr.mxu0 0.0
    %2605 = vmatpush1.msra.mxu0 0.0
    %2606 = vmatprep.subr.mxu0 0.0
    %2607 = vmatpush1.msra.mxu0 0.0
    %2608 = vmatprep.subr.mxu0 0.0
    %2609 = vmatpush1.msra.mxu0 0.0
    %2610 = vmatprep.subr.mxu0 0.0
    %2611 = vmatpush1.msra.mxu0 0.0
    %2612 = vmatprep.subr.mxu0 0.0
    %2613 = vmatpush1.msra.mxu0 0.0
    %2614 = vmatprep.subr.mxu0 0.0
    %2615 = vmatpush1.msra.mxu0 0.0
    %2616 = vmatprep.subr.mxu0 0.0
    %2617 = vmatpush1.msra.mxu0 0.0
    %2618 = vmatprep.subr.mxu0 0.0
    %2619 = vmatpush1.msra.mxu0 0.0
    %2620 = vmatprep.subr.mxu0 0.0
    %2621 = vmatpush1.msra.mxu0 0.0
    %2622 = vmatprep.subr.mxu0 0.0
    %2623 = vmatpush1.msra.mxu0 0.0
    %2624 = vmatprep.subr.mxu0 0.0
    %2625 = vmatpush1.msra.mxu0 0.0
    %2626 = vmatprep.subr.mxu0 0.0
    %2627 = vmatpush1.msra.mxu0 0.0
    %2628 = vmatprep.subr.mxu0 0.0
    %2629 = vmatpush1.msra.mxu0 0.0
    %2630 = vmatprep.subr.mxu0 0.0
    %2631 = vmatpush1.msra.mxu0 0.0
    %2632 = vmatprep.subr.mxu0 0.0
    %2633 = vmatpush1.msra.mxu0 0.0
    %2634 = vmatprep.subr.mxu0 0.0
    %2635 = vmatpush1.msra.mxu0 0.0
    %2636 = vmatprep.subr.mxu0 0.0
    %2637 = vmatpush1.msra.mxu0 0.0
    %2638 = vmatprep.subr.mxu0 0.0
    %2639 = vmatpush1.msra.mxu0 0.0
    %2640 = vmatprep.subr.mxu0 0.0
    %2641 = vmatpush1.msra.mxu0 0.0
    %2642 = vmatprep.subr.mxu0 0.0
    %2643 = vmatpush1.msra.mxu0 0.0
    %2644 = vmatprep.subr.mxu0 0.0
    %2645 = vmatpush1.msra.mxu0 0.0
    %2646 = vmatprep.subr.mxu0 0.0
    %2647 = vmatpush1.msra.mxu0 0.0
    %2648 = vmatprep.subr.mxu0 0.0
    %2649 = vmatpush1.msra.mxu0 0.0
    %2650 = vmatprep.subr.mxu0 0.0
    %2651 = vmatpush1.msra.mxu0 0.0
    %2652 = vmatprep.subr.mxu0 0.0
    %2653 = vmatpush1.msra.mxu0 0.0
    %2654 = vmatprep.subr.mxu0 0.0
    %2655 = vmatpush1.msra.mxu0 0.0
    %2656 = vmatprep.subr.mxu0 0.0
    %2657 = vmatpush1.msra.mxu0 0.0
    %2658 = vmatprep.mubr.f32.mxu0 0.0
    %2659 = vmatmul.mubr.f32.gmra.mrb[0].mxu0 %v2589
    %v2660 = vpop.f32.mrb[0].mxu0
    %v2661 = vadd.f32 0.0, %v2660
    %v2662 = vpop.f32.mrb[0].mxu0
    %2663 = vmatprep.mubr.f32.mxu0 0.0
    %2664 = vmatmul.mubr.f32.gmra.mrb[0].mxu0 %v2592
    %v2665 = vpop.f32.mrb[0].mxu0
    %v2666 = vadd.f32 0.0, %v2665
    %v2667 = vpop.f32.mrb[0].mxu0
    %2668 = vdwg.mxu0
    %2669 = vrot.lane.b32.xlu0 %v2477, 120
    %v2670 = vpop.permute.xlu0 %2669
    %2671 = vrot.lane.b32.xlu0 %v2478, 120
    %v2672 = vpop.permute.xlu0 %2671
    %2673 = vrot.lane.b32.xlu0 %v2475, 120
    %v2674 = vpop.permute.xlu0 %2673
    %2675 = vrot.lane.b32.xlu0 %v2476, 120
    %v2676 = vpop.permute.xlu0 %2675
    %v2677 = vsel %vm229, %v2670, 0
    %v2679 = vsel %vm229, %v2672, 0
    %v2681 = vsel %vm229, %v2674, 0
    %v2683 = vsel %vm229, %v2676, 0
    %2685 = vmatprep.subr.mxu0 0.0
    %2686 = vmatpush1.xpose.msra.mxu0 %v2681
    %2687 = vmatprep.subr.mxu0 0.0
    %2688 = vmatpush1.xpose.msra.mxu0 %v2683
    %2689 = vmatprep.subr.mxu0 0.0
    %2690 = vmatpush1.xpose.msra.mxu0 0.0
    %2691 = vmatprep.subr.mxu0 0.0
    %2692 = vmatpush1.xpose.msra.mxu0 0.0
    %2693 = vmatprep.subr.mxu0 0.0
    %2694 = vmatpush1.xpose.msra.mxu0 0.0
    %2695 = vmatprep.subr.mxu0 0.0
    %2696 = vmatpush1.xpose.msra.mxu0 0.0
    %2697 = vmatprep.subr.mxu0 0.0
    %2698 = vmatpush1.xpose.msra.mxu0 0.0
    %2699 = vmatprep.subr.mxu0 0.0
    %2700 = vmatpush1.xpose.msra.mxu0 0.0
    %2701 = vmatprep.subr.mxu0 0.0
    %2702 = vmatpush1.xpose.msra.mxu0 0.0
    %2703 = vmatprep.subr.mxu0 0.0
    %2704 = vmatpush1.xpose.msra.mxu0 0.0
    %2705 = vmatprep.subr.mxu0 0.0
    %2706 = vmatpush1.xpose.msra.mxu0 0.0
    %2707 = vmatprep.subr.mxu0 0.0
    %2708 = vmatpush1.xpose.msra.mxu0 0.0
    %2709 = vmatprep.subr.mxu0 0.0
    %2710 = vmatpush1.xpose.msra.mxu0 0.0
    %2711 = vmatprep.subr.mxu0 0.0
    %2712 = vmatpush1.xpose.msra.mxu0 0.0
    %2713 = vmatprep.subr.mxu0 0.0
    %2714 = vmatpush1.xpose.msra.mxu0 0.0
    %2715 = vmatprep.subr.mxu0 0.0
    %2716 = vmatpush1.xpose.msra.mxu0 0.0
    %2717 = vmatprep.subr.mxu0 0.0
    %2718 = vmatpush1.xpose.msra.mxu0 0.0
    %2719 = vmatprep.subr.mxu0 0.0
    %2720 = vmatpush1.xpose.msra.mxu0 0.0
    %2721 = vmatprep.subr.mxu0 0.0
    %2722 = vmatpush1.xpose.msra.mxu0 0.0
    %2723 = vmatprep.subr.mxu0 0.0
    %2724 = vmatpush1.xpose.msra.mxu0 0.0
    %2725 = vmatprep.subr.mxu0 0.0
    %2726 = vmatpush1.xpose.msra.mxu0 0.0
    %2727 = vmatprep.subr.mxu0 0.0
    %2728 = vmatpush1.xpose.msra.mxu0 0.0
    %2729 = vmatprep.subr.mxu0 0.0
    %2730 = vmatpush1.xpose.msra.mxu0 0.0
    %2731 = vmatprep.subr.mxu0 0.0
    %2732 = vmatpush1.xpose.msra.mxu0 0.0
    %2733 = vmatprep.subr.mxu0 0.0
    %2734 = vmatpush1.xpose.msra.mxu0 0.0
    %2735 = vmatprep.subr.mxu0 0.0
    %2736 = vmatpush1.xpose.msra.mxu0 0.0
    %2737 = vmatprep.subr.mxu0 0.0
    %2738 = vmatpush1.xpose.msra.mxu0 0.0
    %2739 = vmatprep.subr.mxu0 0.0
    %2740 = vmatpush1.xpose.msra.mxu0 0.0
    %2741 = vmatprep.subr.mxu0 0.0
    %2742 = vmatpush1.xpose.msra.mxu0 0.0
    %2743 = vmatprep.subr.mxu0 0.0
    %2744 = vmatpush1.xpose.msra.mxu0 0.0
    %2745 = vmatprep.subr.mxu0 0.0
    %2746 = vmatpush1.xpose.msra.mxu0 0.0
    %2747 = vmatprep.subr.mxu0 0.0
    %2748 = vmatpush1.xpose.msra.mxu0 0.0
    %2749 = vmatprep.mubr.f32.mxu0 0.0
    %2750 = vmatmul.mubr.f32.gmra.mrb[0].mxu0 %v2677
    %v2751 = vpop.f32.mrb[0].mxu0
    %v2752 = vadd.f32 %v157, %v2751
    %v2753 = vpop.f32.mrb[0].mxu0
    %2754 = vmatprep.mubr.f32.mxu0 0.0
    %2755 = vmatmul.mubr.f32.gmra.mrb[0].mxu0 %v2679
    %v2756 = vpop.f32.mrb[0].mxu0
    %v2757 = vadd.f32 %v158, %v2756
    %v2758 = vpop.f32.mrb[0].mxu0
    %2759 = vdwg.mxu0
    %v2760 = vsel %vm317, %v2752, -inf
    %2761 = vmax.xlane.f32.xlu0 %v2760
    %v2762 = vpop.xlane.xlu0 %2761
    %v2763 = vsel %vm317, %v2757, -inf
    %2764 = vmax.xlane.f32.xlu0 %v2763
    %v2765 = vpop.xlane.xlu0 %2764
    %v2766 = vsub.f32 %v2752, %v2762
    %v2767 = vsub.f32 %v2757, %v2765
    %v2768 = vmul.f32 %v2766, 1.442695
    %v2769 = vpow.pop %v2768
    %v2770 = vmul.f32 %v2767, 1.442695
    %v2771 = vpow.pop %v2770
    %v2772 = vsel %vm317, %v2769, 0.0
    %2773 = vadd.xlane.f32.xlu0 %v2772
    %v2774 = vpop.xlane.xlu0 %2773
    %v2775 = vsel %vm317, %v2771, 0.0
    %2776 = vadd.xlane.f32.xlu0 %v2775
    %v2777 = vpop.xlane.xlu0 %2776
    %v2778 = vrcp.pop %v2774
    %v2779 = vmul.f32 %v2769, %v2778
    %v2780 = vrcp.pop %v2777
    %v2781 = vmul.f32 %v2771, %v2780
    %v2785 = vsel %vm317, %v2779, 0
    %v2788 = vsel %vm317, %v2781, 0
    %2790 = vmatprep.subr.mxu0 0.0
    %2791 = vmatpush1.msra.mxu0 %v2674
    %2792 = vmatprep.subr.mxu0 0.0
    %2793 = vmatpush1.msra.mxu0 %v2676
    %2794 = vmatprep.subr.mxu0 0.0
    %2795 = vmatpush1.msra.mxu0 0.0
    %2796 = vmatprep.subr.mxu0 0.0
    %2797 = vmatpush1.msra.mxu0 0.0
    %2798 = vmatprep.subr.mxu0 0.0
    %2799 = vmatpush1.msra.mxu0 0.0
    %2800 = vmatprep.subr.mxu0 0.0
    %2801 = vmatpush1.msra.mxu0 0.0
    %2802 = vmatprep.subr.mxu0 0.0
    %2803 = vmatpush1.msra.mxu0 0.0
    %2804 = vmatprep.subr.mxu0 0.0
    %2805 = vmatpush1.msra.mxu0 0.0
    %2806 = vmatprep.subr.mxu0 0.0
    %2807 = vmatpush1.msra.mxu0 0.0
    %2808 = vmatprep.subr.mxu0 0.0
    %2809 = vmatpush1.msra.mxu0 0.0
    %2810 = vmatprep.subr.mxu0 0.0
    %2811 = vmatpush1.msra.mxu0 0.0
    %2812 = vmatprep.subr.mxu0 0.0
    %2813 = vmatpush1.msra.mxu0 0.0
    %2814 = vmatprep.subr.mxu0 0.0
    %2815 = vmatpush1.msra.mxu0 0.0
    %2816 = vmatprep.subr.mxu0 0.0
    %2817 = vmatpush1.msra.mxu0 0.0
    %2818 = vmatprep.subr.mxu0 0.0
    %2819 = vmatpush1.msra.mxu0 0.0
    %2820 = vmatprep.subr.mxu0 0.0
    %2821 = vmatpush1.msra.mxu0 0.0
    %2822 = vmatprep.subr.mxu0 0.0
    %2823 = vmatpush1.msra.mxu0 0.0
    %2824 = vmatprep.subr.mxu0 0.0
    %2825 = vmatpush1.msra.mxu0 0.0
    %2826 = vmatprep.subr.mxu0 0.0
    %2827 = vmatpush1.msra.mxu0 0.0
    %2828 = vmatprep.subr.mxu0 0.0
    %2829 = vmatpush1.msra.mxu0 0.0
    %2830 = vmatprep.subr.mxu0 0.0
    %2831 = vmatpush1.msra.mxu0 0.0
    %2832 = vmatprep.subr.mxu0 0.0
    %2833 = vmatpush1.msra.mxu0 0.0
    %2834 = vmatprep.subr.mxu0 0.0
    %2835 = vmatpush1.msra.mxu0 0.0
    %2836 = vmatprep.subr.mxu0 0.0
    %2837 = vmatpush1.msra.mxu0 0.0
    %2838 = vmatprep.subr.mxu0 0.0
    %2839 = vmatpush1.msra.mxu0 0.0
    %2840 = vmatprep.subr.mxu0 0.0
    %2841 = vmatpush1.msra.mxu0 0.0
    %2842 = vmatprep.subr.mxu0 0.0
    %2843 = vmatpush1.msra.mxu0 0.0
    %2844 = vmatprep.subr.mxu0 0.0
    %2845 = vmatpush1.msra.mxu0 0.0
    %2846 = vmatprep.subr.mxu0 0.0
    %2847 = vmatpush1.msra.mxu0 0.0
    %2848 = vmatprep.subr.mxu0 0.0
    %2849 = vmatpush1.msra.mxu0 0.0
    %2850 = vmatprep.subr.mxu0 0.0
    %2851 = vmatpush1.msra.mxu0 0.0
    %2852 = vmatprep.subr.mxu0 0.0
    %2853 = vmatpush1.msra.mxu0 0.0
    %2854 = vmatprep.mubr.f32.mxu0 0.0
    %2855 = vmatmul.mubr.f32.gmra.mrb[0].mxu0 %v2785
    %v2856 = vpop.f32.mrb[0].mxu0
    %v2857 = vadd.f32 0.0, %v2856
    %v2858 = vpop.f32.mrb[0].mxu0
    %2859 = vmatprep.mubr.f32.mxu0 0.0
    %2860 = vmatmul.mubr.f32.gmra.mrb[0].mxu0 %v2788
    %v2861 = vpop.f32.mrb[0].mxu0
    %v2862 = vadd.f32 0.0, %v2861
    %v2863 = vpop.f32.mrb[0].mxu0
    %2864 = vdwg.mxu0
    %2865 = vrot.lane.b32.xlu0 %v2477, 112
    %v2866 = vpop.permute.xlu0 %2865
    %2867 = vrot.lane.b32.xlu0 %v2478, 112
    %v2868 = vpop.permute.xlu0 %2867
    %2869 = vrot.lane.b32.xlu0 %v2475, 112
    %v2870 = vpop.permute.xlu0 %2869
    %2871 = vrot.lane.b32.xlu0 %v2476, 112
    %v2872 = vpop.permute.xlu0 %2871
    %v2873 = vsel %vm229, %v2866, 0
    %v2875 = vsel %vm229, %v2868, 0
    %v2877 = vsel %vm229, %v2870, 0
    %v2879 = vsel %vm229, %v2872, 0
    %2881 = vmatprep.subr.mxu0 0.0
    %2882 = vmatpush1.xpose.msra.mxu0 %v2877
    %2883 = vmatprep.subr.mxu0 0.0
    %2884 = vmatpush1.xpose.msra.mxu0 %v2879
    %2885 = vmatprep.subr.mxu0 0.0
    %2886 = vmatpush1.xpose.msra.mxu0 0.0
    %2887 = vmatprep.subr.mxu0 0.0
    %2888 = vmatpush1.xpose.msra.mxu0 0.0
    %2889 = vmatprep.subr.mxu0 0.0
    %2890 = vmatpush1.xpose.msra.mxu0 0.0
    %2891 = vmatprep.subr.mxu0 0.0
    %2892 = vmatpush1.xpose.msra.mxu0 0.0
    %2893 = vmatprep.subr.mxu0 0.0
    %2894 = vmatpush1.xpose.msra.mxu0 0.0
    %2895 = vmatprep.subr.mxu0 0.0
    %2896 = vmatpush1.xpose.msra.mxu0 0.0
    %2897 = vmatprep.subr.mxu0 0.0
    %2898 = vmatpush1.xpose.msra.mxu0 0.0
    %2899 = vmatprep.subr.mxu0 0.0
    %2900 = vmatpush1.xpose.msra.mxu0 0.0
    %2901 = vmatprep.subr.mxu0 0.0
    %2902 = vmatpush1.xpose.msra.mxu0 0.0
    %2903 = vmatprep.subr.mxu0 0.0
    %2904 = vmatpush1.xpose.msra.mxu0 0.0
    %2905 = vmatprep.subr.mxu0 0.0
    %2906 = vmatpush1.xpose.msra.mxu0 0.0
    %2907 = vmatprep.subr.mxu0 0.0
    %2908 = vmatpush1.xpose.msra.mxu0 0.0
    %2909 = vmatprep.subr.mxu0 0.0
    %2910 = vmatpush1.xpose.msra.mxu0 0.0
    %2911 = vmatprep.subr.mxu0 0.0
    %2912 = vmatpush1.xpose.msra.mxu0 0.0
    %2913 = vmatprep.subr.mxu0 0.0
    %2914 = vmatpush1.xpose.msra.mxu0 0.0
    %2915 = vmatprep.subr.mxu0 0.0
    %2916 = vmatpush1.xpose.msra.mxu0 0.0
    %2917 = vmatprep.subr.mxu0 0.0
    %2918 = vmatpush1.xpose.msra.mxu0 0.0
    %2919 = vmatprep.subr.mxu0 0.0
    %2920 = vmatpush1.xpose.msra.mxu0 0.0
    %2921 = vmatprep.subr.mxu0 0.0
    %2922 = vmatpush1.xpose.msra.mxu0 0.0
    %2923 = vmatprep.subr.mxu0 0.0
    %2924 = vmatpush1.xpose.msra.mxu0 0.0
    %2925 = vmatprep.subr.mxu0 0.0
    %2926 = vmatpush1.xpose.msra.mxu0 0.0
    %2927 = vmatprep.subr.mxu0 0.0
    %2928 = vmatpush1.xpose.msra.mxu0 0.0
    %2929 = vmatprep.subr.mxu0 0.0
    %2930 = vmatpush1.xpose.msra.mxu0 0.0
    %2931 = vmatprep.subr.mxu0 0.0
    %2932 = vmatpush1.xpose.msra.mxu0 0.0
    %2933 = vmatprep.subr.mxu0 0.0
    %2934 = vmatpush1.xpose.msra.mxu0 0.0
    %2935 = vmatprep.subr.mxu0 0.0
    %2936 = vmatpush1.xpose.msra.mxu0 0.0
    %2937 = vmatprep.subr.mxu0 0.0
    %2938 = vmatpush1.xpose.msra.mxu0 0.0
    %2939 = vmatprep.subr.mxu0 0.0
    %2940 = vmatpush1.xpose.msra.mxu0 0.0
    %2941 = vmatprep.subr.mxu0 0.0
    %2942 = vmatpush1.xpose.msra.mxu0 0.0
    %2943 = vmatprep.subr.mxu0 0.0
    %2944 = vmatpush1.xpose.msra.mxu0 0.0
    %2945 = vmatprep.mubr.f32.mxu0 0.0
    %2946 = vmatmul.mubr.f32.gmra.mrb[0].mxu0 %v2873
    %v2947 = vpop.f32.mrb[0].mxu0
    %v2948 = vadd.f32 %v157, %v2947
    %v2949 = vpop.f32.mrb[0].mxu0
    %2950 = vmatprep.mubr.f32.mxu0 0.0
    %2951 = vmatmul.mubr.f32.gmra.mrb[0].mxu0 %v2875
    %v2952 = vpop.f32.mrb[0].mxu0
    %v2953 = vadd.f32 %v158, %v2952
    %v2954 = vpop.f32.mrb[0].mxu0
    %2955 = vdwg.mxu0
    %v2956 = vsel %vm317, %v2948, -inf
    %2957 = vmax.xlane.f32.xlu0 %v2956
    %v2958 = vpop.xlane.xlu0 %2957
    %v2959 = vsel %vm317, %v2953, -inf
    %2960 = vmax.xlane.f32.xlu0 %v2959
    %v2961 = vpop.xlane.xlu0 %2960
    %v2962 = vsub.f32 %v2948, %v2958
    %v2963 = vsub.f32 %v2953, %v2961
    %v2964 = vmul.f32 %v2962, 1.442695
    %v2965 = vpow.pop %v2964
    %v2966 = vmul.f32 %v2963, 1.442695
    %v2967 = vpow.pop %v2966
    %v2968 = vsel %vm317, %v2965, 0.0
    %2969 = vadd.xlane.f32.xlu0 %v2968
    %v2970 = vpop.xlane.xlu0 %2969
    %v2971 = vsel %vm317, %v2967, 0.0
    %2972 = vadd.xlane.f32.xlu0 %v2971
    %v2973 = vpop.xlane.xlu0 %2972
    %v2974 = vrcp.pop %v2970
    %v2975 = vmul.f32 %v2965, %v2974
    %v2976 = vrcp.pop %v2973
    %v2977 = vmul.f32 %v2967, %v2976
    %v2981 = vsel %vm317, %v2975, 0
    %v2984 = vsel %vm317, %v2977, 0
    %2986 = vmatprep.subr.mxu0 0.0
    %2987 = vmatpush1.msra.mxu0 %v2870
    %2988 = vmatprep.subr.mxu0 0.0
    %2989 = vmatpush1.msra.mxu0 %v2872
    %2990 = vmatprep.subr.mxu0 0.0
    %2991 = vmatpush1.msra.mxu0 0.0
    %2992 = vmatprep.subr.mxu0 0.0
    %2993 = vmatpush1.msra.mxu0 0.0
    %2994 = vmatprep.subr.mxu0 0.0
    %2995 = vmatpush1.msra.mxu0 0.0
    %2996 = vmatprep.subr.mxu0 0.0
    %2997 = vmatpush1.msra.mxu0 0.0
    %2998 = vmatprep.subr.mxu0 0.0
    %2999 = vmatpush1.msra.mxu0 0.0
    %3000 = vmatprep.subr.mxu0 0.0
    %3001 = vmatpush1.msra.mxu0 0.0
    %3002 = vmatprep.subr.mxu0 0.0
    %3003 = vmatpush1.msra.mxu0 0.0
    %3004 = vmatprep.subr.mxu0 0.0
    %3005 = vmatpush1.msra.mxu0 0.0
    %3006 = vmatprep.subr.mxu0 0.0
    %3007 = vmatpush1.msra.mxu0 0.0
    %3008 = vmatprep.subr.mxu0 0.0
    %3009 = vmatpush1.msra.mxu0 0.0
    %3010 = vmatprep.subr.mxu0 0.0
    %3011 = vmatpush1.msra.mxu0 0.0
    %3012 = vmatprep.subr.mxu0 0.0
    %3013 = vmatpush1.msra.mxu0 0.0
    %3014 = vmatprep.subr.mxu0 0.0
    %3015 = vmatpush1.msra.mxu0 0.0
    %3016 = vmatprep.subr.mxu0 0.0
    %3017 = vmatpush1.msra.mxu0 0.0
    %3018 = vmatprep.subr.mxu0 0.0
    %3019 = vmatpush1.msra.mxu0 0.0
    %3020 = vmatprep.subr.mxu0 0.0
    %3021 = vmatpush1.msra.mxu0 0.0
    %3022 = vmatprep.subr.mxu0 0.0
    %3023 = vmatpush1.msra.mxu0 0.0
    %3024 = vmatprep.subr.mxu0 0.0
    %3025 = vmatpush1.msra.mxu0 0.0
    %3026 = vmatprep.subr.mxu0 0.0
    %3027 = vmatpush1.msra.mxu0 0.0
    %3028 = vmatprep.subr.mxu0 0.0
    %3029 = vmatpush1.msra.mxu0 0.0
    %3030 = vmatprep.subr.mxu0 0.0
    %3031 = vmatpush1.msra.mxu0 0.0
    %3032 = vmatprep.subr.mxu0 0.0
    %3033 = vmatpush1.msra.mxu0 0.0
    %3034 = vmatprep.subr.mxu0 0.0
    %3035 = vmatpush1.msra.mxu0 0.0
    %3036 = vmatprep.subr.mxu0 0.0
    %3037 = vmatpush1.msra.mxu0 0.0
    %3038 = vmatprep.subr.mxu0 0.0
    %3039 = vmatpush1.msra.mxu0 0.0
    %3040 = vmatprep.subr.mxu0 0.0
    %3041 = vmatpush1.msra.mxu0 0.0
    %3042 = vmatprep.subr.mxu0 0.0
    %3043 = vmatpush1.msra.mxu0 0.0
    %3044 = vmatprep.subr.mxu0 0.0
    %3045 = vmatpush1.msra.mxu0 0.0
    %3046 = vmatprep.subr.mxu0 0.0
    %3047 = vmatpush1.msra.mxu0 0.0
    %3048 = vmatprep.subr.mxu0 0.0
    %3049 = vmatpush1.msra.mxu0 0.0
    %3050 = vmatprep.mubr.f32.mxu0 0.0
    %3051 = vmatmul.mubr.f32.gmra.mrb[0].mxu0 %v2981
    %v3052 = vpop.f32.mrb[0].mxu0
    %v3053 = vadd.f32 0.0, %v3052
    %v3054 = vpop.f32.mrb[0].mxu0
    %3055 = vmatprep.mubr.f32.mxu0 0.0
    %3056 = vmatmul.mubr.f32.gmra.mrb[0].mxu0 %v2984
    %v3057 = vpop.f32.mrb[0].mxu0
    %v3058 = vadd.f32 0.0, %v3057
    %v3059 = vpop.f32.mrb[0].mxu0
    %3060 = vdwg.mxu0
    %3061 = vrot.lane.b32.xlu0 %v2477, 104
    %v3062 = vpop.permute.xlu0 %3061
    %3063 = vrot.lane.b32.xlu0 %v2478, 104
    %v3064 = vpop.permute.xlu0 %3063
    %3065 = vrot.lane.b32.xlu0 %v2475, 104
    %v3066 = vpop.permute.xlu0 %3065
    %3067 = vrot.lane.b32.xlu0 %v2476, 104
    %v3068 = vpop.permute.xlu0 %3067
    %v3069 = vsel %vm229, %v3062, 0
    %v3071 = vsel %vm229, %v3064, 0
    %v3073 = vsel %vm229, %v3066, 0
    %v3075 = vsel %vm229, %v3068, 0
    %3077 = vmatprep.subr.mxu0 0.0
    %3078 = vmatpush1.xpose.msra.mxu0 %v3073
    %3079 = vmatprep.subr.mxu0 0.0
    %3080 = vmatpush1.xpose.msra.mxu0 %v3075
    %3081 = vmatprep.subr.mxu0 0.0
    %3082 = vmatpush1.xpose.msra.mxu0 0.0
    %3083 = vmatprep.subr.mxu0 0.0
    %3084 = vmatpush1.xpose.msra.mxu0 0.0
    %3085 = vmatprep.subr.mxu0 0.0
    %3086 = vmatpush1.xpose.msra.mxu0 0.0
    %3087 = vmatprep.subr.mxu0 0.0
    %3088 = vmatpush1.xpose.msra.mxu0 0.0
    %3089 = vmatprep.subr.mxu0 0.0
    %3090 = vmatpush1.xpose.msra.mxu0 0.0
    %3091 = vmatprep.subr.mxu0 0.0
    %3092 = vmatpush1.xpose.msra.mxu0 0.0
    %3093 = vmatprep.subr.mxu0 0.0
    %3094 = vmatpush1.xpose.msra.mxu0 0.0
    %3095 = vmatprep.subr.mxu0 0.0
    %3096 = vmatpush1.xpose.msra.mxu0 0.0
    %3097 = vmatprep.subr.mxu0 0.0
    %3098 = vmatpush1.xpose.msra.mxu0 0.0
    %3099 = vmatprep.subr.mxu0 0.0
    %3100 = vmatpush1.xpose.msra.mxu0 0.0
    %3101 = vmatprep.subr.mxu0 0.0
    %3102 = vmatpush1.xpose.msra.mxu0 0.0
    %3103 = vmatprep.subr.mxu0 0.0
    %3104 = vmatpush1.xpose.msra.mxu0 0.0
    %3105 = vmatprep.subr.mxu0 0.0
    %3106 = vmatpush1.xpose.msra.mxu0 0.0
    %3107 = vmatprep.subr.mxu0 0.0
    %3108 = vmatpush1.xpose.msra.mxu0 0.0
    %3109 = vmatprep.subr.mxu0 0.0
    %3110 = vmatpush1.xpose.msra.mxu0 0.0
    %3111 = vmatprep.subr.mxu0 0.0
    %3112 = vmatpush1.xpose.msra.mxu0 0.0
    %3113 = vmatprep.subr.mxu0 0.0
    %3114 = vmatpush1.xpose.msra.mxu0 0.0
    %3115 = vmatprep.subr.mxu0 0.0
    %3116 = vmatpush1.xpose.msra.mxu0 0.0
    %3117 = vmatprep.subr.mxu0 0.0
    %3118 = vmatpush1.xpose.msra.mxu0 0.0
    %3119 = vmatprep.subr.mxu0 0.0
    %3120 = vmatpush1.xpose.msra.mxu0 0.0
    %3121 = vmatprep.subr.mxu0 0.0
    %3122 = vmatpush1.xpose.msra.mxu0 0.0
    %3123 = vmatprep.subr.mxu0 0.0
    %3124 = vmatpush1.xpose.msra.mxu0 0.0
    %3125 = vmatprep.subr.mxu0 0.0
    %3126 = vmatpush1.xpose.msra.mxu0 0.0
    %3127 = vmatprep.subr.mxu0 0.0
    %3128 = vmatpush1.xpose.msra.mxu0 0.0
    %3129 = vmatprep.subr.mxu0 0.0
    %3130 = vmatpush1.xpose.msra.mxu0 0.0
    %3131 = vmatprep.subr.mxu0 0.0
    %3132 = vmatpush1.xpose.msra.mxu0 0.0
    %3133 = vmatprep.subr.mxu0 0.0
    %3134 = vmatpush1.xpose.msra.mxu0 0.0
    %3135 = vmatprep.subr.mxu0 0.0
    %3136 = vmatpush1.xpose.msra.mxu0 0.0
    %3137 = vmatprep.subr.mxu0 0.0
    %3138 = vmatpush1.xpose.msra.mxu0 0.0
    %3139 = vmatprep.subr.mxu0 0.0
    %3140 = vmatpush1.xpose.msra.mxu0 0.0
    %3141 = vmatprep.mubr.f32.mxu0 0.0
    %3142 = vmatmul.mubr.f32.gmra.mrb[0].mxu0 %v3069
    %v3143 = vpop.f32.mrb[0].mxu0
    %v3144 = vadd.f32 %v157, %v3143
    %v3145 = vpop.f32.mrb[0].mxu0
    %3146 = vmatprep.mubr.f32.mxu0 0.0
    %3147 = vmatmul.mubr.f32.gmra.mrb[0].mxu0 %v3071
    %v3148 = vpop.f32.mrb[0].mxu0
    %v3149 = vadd.f32 %v158, %v3148
    %v3150 = vpop.f32.mrb[0].mxu0
    %3151 = vdwg.mxu0
    %v3152 = vsel %vm317, %v3144, -inf
    %3153 = vmax.xlane.f32.xlu0 %v3152
    %v3154 = vpop.xlane.xlu0 %3153
    %v3155 = vsel %vm317, %v3149, -inf
    %3156 = vmax.xlane.f32.xlu0 %v3155
    %v3157 = vpop.xlane.xlu0 %3156
    %v3158 = vsub.f32 %v3144, %v3154
    %v3159 = vsub.f32 %v3149, %v3157
    %v3160 = vmul.f32 %v3158, 1.442695
    %v3161 = vpow.pop %v3160
    %v3162 = vmul.f32 %v3159, 1.442695
    %v3163 = vpow.pop %v3162
    %v3164 = vsel %vm317, %v3161, 0.0
    %3165 = vadd.xlane.f32.xlu0 %v3164
    %v3166 = vpop.xlane.xlu0 %3165
    %v3167 = vsel %vm317, %v3163, 0.0
    %3168 = vadd.xlane.f32.xlu0 %v3167
    %v3169 = vpop.xlane.xlu0 %3168
    %v3170 = vrcp.pop %v3166
    %v3171 = vmul.f32 %v3161, %v3170
    %v3172 = vrcp.pop %v3169
    %v3173 = vmul.f32 %v3163, %v3172
    %v3177 = vsel %vm317, %v3171, 0
    %v3180 = vsel %vm317, %v3173, 0
    %3182 = vmatprep.subr.mxu0 0.0
    %3183 = vmatpush1.msra.mxu0 %v3066
    %3184 = vmatprep.subr.mxu0 0.0
    %3185 = vmatpush1.msra.mxu0 %v3068
    %3186 = vmatprep.subr.mxu0 0.0
    %3187 = vmatpush1.msra.mxu0 0.0
    %3188 = vmatprep.subr.mxu0 0.0
    %3189 = vmatpush1.msra.mxu0 0.0
    %3190 = vmatprep.subr.mxu0 0.0
    %3191 = vmatpush1.msra.mxu0 0.0
    %3192 = vmatprep.subr.mxu0 0.0
    %3193 = vmatpush1.msra.mxu0 0.0
    %3194 = vmatprep.subr.mxu0 0.0
    %3195 = vmatpush1.msra.mxu0 0.0
    %3196 = vmatprep.subr.mxu0 0.0
    %3197 = vmatpush1.msra.mxu0 0.0
    %3198 = vmatprep.subr.mxu0 0.0
    %3199 = vmatpush1.msra.mxu0 0.0
    %3200 = vmatprep.subr.mxu0 0.0
    %3201 = vmatpush1.msra.mxu0 0.0
    %3202 = vmatprep.subr.mxu0 0.0
    %3203 = vmatpush1.msra.mxu0 0.0
    %3204 = vmatprep.subr.mxu0 0.0
    %3205 = vmatpush1.msra.mxu0 0.0
    %3206 = vmatprep.subr.mxu0 0.0
    %3207 = vmatpush1.msra.mxu0 0.0
    %3208 = vmatprep.subr.mxu0 0.0
    %3209 = vmatpush1.msra.mxu0 0.0
    %3210 = vmatprep.subr.mxu0 0.0
    %3211 = vmatpush1.msra.mxu0 0.0
    %3212 = vmatprep.subr.mxu0 0.0
    %3213 = vmatpush1.msra.mxu0 0.0
    %3214 = vmatprep.subr.mxu0 0.0
    %3215 = vmatpush1.msra.mxu0 0.0
    %3216 = vmatprep.subr.mxu0 0.0
    %3217 = vmatpush1.msra.mxu0 0.0
    %3218 = vmatprep.subr.mxu0 0.0
    %3219 = vmatpush1.msra.mxu0 0.0
    %3220 = vmatprep.subr.mxu0 0.0
    %3221 = vmatpush1.msra.mxu0 0.0
    %3222 = vmatprep.subr.mxu0 0.0
    %3223 = vmatpush1.msra.mxu0 0.0
    %3224 = vmatprep.subr.mxu0 0.0
    %3225 = vmatpush1.msra.mxu0 0.0
    %3226 = vmatprep.subr.mxu0 0.0
    %3227 = vmatpush1.msra.mxu0 0.0
    %3228 = vmatprep.subr.mxu0 0.0
    %3229 = vmatpush1.msra.mxu0 0.0
    %3230 = vmatprep.subr.mxu0 0.0
    %3231 = vmatpush1.msra.mxu0 0.0
    %3232 = vmatprep.subr.mxu0 0.0
    %3233 = vmatpush1.msra.mxu0 0.0
    %3234 = vmatprep.subr.mxu0 0.0
    %3235 = vmatpush1.msra.mxu0 0.0
    %3236 = vmatprep.subr.mxu0 0.0
    %3237 = vmatpush1.msra.mxu0 0.0
    %3238 = vmatprep.subr.mxu0 0.0
    %3239 = vmatpush1.msra.mxu0 0.0
    %3240 = vmatprep.subr.mxu0 0.0
    %3241 = vmatpush1.msra.mxu0 0.0
    %3242 = vmatprep.subr.mxu0 0.0
    %3243 = vmatpush1.msra.mxu0 0.0
    %3244 = vmatprep.subr.mxu0 0.0
    %3245 = vmatpush1.msra.mxu0 0.0
    %3246 = vmatprep.mubr.f32.mxu0 0.0
    %3247 = vmatmul.mubr.f32.gmra.mrb[0].mxu0 %v3177
    %v3248 = vpop.f32.mrb[0].mxu0
    %v3249 = vadd.f32 0.0, %v3248
    %v3250 = vpop.f32.mrb[0].mxu0
    %3251 = vmatprep.mubr.f32.mxu0 0.0
    %3252 = vmatmul.mubr.f32.gmra.mrb[0].mxu0 %v3180
    %v3253 = vpop.f32.mrb[0].mxu0
    %v3254 = vadd.f32 0.0, %v3253
    %v3255 = vpop.f32.mrb[0].mxu0
    %3256 = vdwg.mxu0
    %3259 = vrot.lane.b32.xlu0 %v2857, 8
    %v3260 = vpop.permute.xlu0 %3259
    %3261 = vrot.lane.b32.xlu0 %v2862, 8
    %v3262 = vpop.permute.xlu0 %3261
    %3267 = vrot.lane.b32.xlu0 %v3053, 16
    %v3268 = vpop.permute.xlu0 %3267
    %3269 = vrot.lane.b32.xlu0 %v3058, 16
    %v3270 = vpop.permute.xlu0 %3269
    %3275 = vrot.lane.b32.xlu0 %v3249, 24
    %v3276 = vpop.permute.xlu0 %3275
    %3277 = vrot.lane.b32.xlu0 %v3254, 24
    %v3278 = vpop.permute.xlu0 %3277
    %v3281 = vsel %vm229, %v2661, %v3260
    %v3282 = vsel %vm229, %v2666, %v3262
    %v3283 = vsel %vm317, %v3281, %v3268
    %v3284 = vsel %vm317, %v3282, %v3270
    %v3285 = vsel %vm1037, %v3283, %v3276
    %v3286 = vsel %vm1037, %v3284, %v3278
    %v3287 = vadd.f32 %v2431, %v3285
    %v3288 = vadd.f32 %v2432, %v3286
    %v3289 = vld [vmem:[%s39] sm:$0x1]
    %v3290 = vld [vmem:[%s41] sm:$0x1]
    %v3291 = vsel %vm183, %v3287, 0.0
    %3292 = vadd.xlane.f32.xlu0 %v3291
    %v3293 = vpop.xlane.xlu0 %3292
    %v3294 = vsel %vm183, %v3288, 0.0
    %3295 = vadd.xlane.f32.xlu0 %v3294
    %v3296 = vpop.xlane.xlu0 %3295
    %v3297 = vmul.f32 %v3293, %v190
    %v3298 = vmul.f32 %v3296, %v190
    %v3299 = vsub.f32 %v3287, %v3297
    %v3300 = vsub.f32 %v3288, %v3298
    %v3301 = vmul.f32 %v3299, %v3299
    %v3302 = vmul.f32 %v3300, %v3300
    %v3303 = vsel %vm183, %v3301, 0.0
    %3304 = vadd.xlane.f32.xlu0 %v3303
    %v3305 = vpop.xlane.xlu0 %3304
    %v3306 = vsel %vm183, %v3302, 0.0
    %3307 = vadd.xlane.f32.xlu0 %v3306
    %v3308 = vpop.xlane.xlu0 %3307
    %v3309 = vmul.f32 %v3305, %v190
    %v3310 = vmul.f32 %v3308, %v190
    %v3311 = vadd.f32 %v3309, 1e-05
    %v3312 = vadd.f32 %v3310, 1e-05
    %v3313 = vrsqrt.pop %v3311
    %v3314 = vrsqrt.pop %v3312
    %v3315 = vmul.f32 %v3299, %v3313
    %v3316 = vmul.f32 %v3300, %v3314
    %v3318 = vlaneseq
    %v3319 = vshrl.u32 %v3318, 7
    %v3320 = vsub.s32 0, %v3319
    %v3321 = vrot.slane %v3289, %v3320
    %v3323 = vmul.f32 %v3315, %v3321
    %v3324 = vmul.f32 %v3316, %v3321
    %v3326 = vlaneseq
    %v3327 = vshrl.u32 %v3326, 7
    %v3328 = vsub.s32 0, %v3327
    %v3329 = vrot.slane %v3290, %v3328
    %v3331 = vadd.f32 %v3323, %v3329
    %v3332 = vadd.f32 %v3324, %v3329
    %v3333 = vmul.f32 %v3331, 0.35355338
    %v3334 = vmul.f32 %v3332, 0.35355338
    %v3336 = vsel %vm229, %v3333, 0
    %v3339 = vsel %vm229, %v3334, 0
    %v3342 = vsel %vm229, %v2421, 0
    %v3345 = vsel %vm229, %v2422, 0
    %3347 = vmatprep.subr.mxu0 0.0
    %3348 = vmatpush1.xpose.msra.mxu0 %v3342
    %3349 = vmatprep.subr.mxu0 0.0
    %3350 = vmatpush1.xpose.msra.mxu0 %v3345
    %3351 = vmatprep.subr.mxu0 0.0
    %3352 = vmatpush1.xpose.msra.mxu0 0.0
    %3353 = vmatprep.subr.mxu0 0.0
    %3354 = vmatpush1.xpose.msra.mxu0 0.0
    %3355 = vmatprep.subr.mxu0 0.0
    %3356 = vmatpush1.xpose.msra.mxu0 0.0
    %3357 = vmatprep.subr.mxu0 0.0
    %3358 = vmatpush1.xpose.msra.mxu0 0.0
    %3359 = vmatprep.subr.mxu0 0.0
    %3360 = vmatpush1.xpose.msra.mxu0 0.0
    %3361 = vmatprep.subr.mxu0 0.0
    %3362 = vmatpush1.xpose.msra.mxu0 0.0
    %3363 = vmatprep.subr.mxu0 0.0
    %3364 = vmatpush1.xpose.msra.mxu0 0.0
    %3365 = vmatprep.subr.mxu0 0.0
    %3366 = vmatpush1.xpose.msra.mxu0 0.0
    %3367 = vmatprep.subr.mxu0 0.0
    %3368 = vmatpush1.xpose.msra.mxu0 0.0
    %3369 = vmatprep.subr.mxu0 0.0
    %3370 = vmatpush1.xpose.msra.mxu0 0.0
    %3371 = vmatprep.subr.mxu0 0.0
    %3372 = vmatpush1.xpose.msra.mxu0 0.0
    %3373 = vmatprep.subr.mxu0 0.0
    %3374 = vmatpush1.xpose.msra.mxu0 0.0
    %3375 = vmatprep.subr.mxu0 0.0
    %3376 = vmatpush1.xpose.msra.mxu0 0.0
    %3377 = vmatprep.subr.mxu0 0.0
    %3378 = vmatpush1.xpose.msra.mxu0 0.0
    %3379 = vmatprep.subr.mxu0 0.0
    %3380 = vmatpush1.xpose.msra.mxu0 0.0
    %3381 = vmatprep.subr.mxu0 0.0
    %3382 = vmatpush1.xpose.msra.mxu0 0.0
    %3383 = vmatprep.subr.mxu0 0.0
    %3384 = vmatpush1.xpose.msra.mxu0 0.0
    %3385 = vmatprep.subr.mxu0 0.0
    %3386 = vmatpush1.xpose.msra.mxu0 0.0
    %3387 = vmatprep.subr.mxu0 0.0
    %3388 = vmatpush1.xpose.msra.mxu0 0.0
    %3389 = vmatprep.subr.mxu0 0.0
    %3390 = vmatpush1.xpose.msra.mxu0 0.0
    %3391 = vmatprep.subr.mxu0 0.0
    %3392 = vmatpush1.xpose.msra.mxu0 0.0
    %3393 = vmatprep.subr.mxu0 0.0
    %3394 = vmatpush1.xpose.msra.mxu0 0.0
    %3395 = vmatprep.subr.mxu0 0.0
    %3396 = vmatpush1.xpose.msra.mxu0 0.0
    %3397 = vmatprep.subr.mxu0 0.0
    %3398 = vmatpush1.xpose.msra.mxu0 0.0
    %3399 = vmatprep.subr.mxu0 0.0
    %3400 = vmatpush1.xpose.msra.mxu0 0.0
    %3401 = vmatprep.subr.mxu0 0.0
    %3402 = vmatpush1.xpose.msra.mxu0 0.0
    %3403 = vmatprep.subr.mxu0 0.0
    %3404 = vmatpush1.xpose.msra.mxu0 0.0
    %3405 = vmatprep.subr.mxu0 0.0
    %3406 = vmatpush1.xpose.msra.mxu0 0.0
    %3407 = vmatprep.subr.mxu0 0.0
    %3408 = vmatpush1.xpose.msra.mxu0 0.0
    %3409 = vmatprep.subr.mxu0 0.0
    %3410 = vmatpush1.xpose.msra.mxu0 0.0
    %3411 = vmatprep.mubr.f32.mxu0 0.0
    %3412 = vmatmul.mubr.f32.gmra.mrb[0].mxu0 %v3336
    %v3413 = vpop.f32.mrb[0].mxu0
    %v3414 = vadd.f32 %v157, %v3413
    %v3415 = vpop.f32.mrb[0].mxu0
    %3416 = vmatprep.mubr.f32.mxu0 0.0
    %3417 = vmatmul.mubr.f32.gmra.mrb[0].mxu0 %v3339
    %v3418 = vpop.f32.mrb[0].mxu0
    %v3419 = vadd.f32 %v158, %v3418
    %v3420 = vpop.f32.mrb[0].mxu0
    %3421 = vdwg.mxu0
    %v3422 = vsel %vm317, %v3414, -inf
    %3423 = vmax.xlane.f32.xlu0 %v3422
    %v3424 = vpop.xlane.xlu0 %3423
    %v3425 = vsel %vm317, %v3419, -inf
    %3426 = vmax.xlane.f32.xlu0 %v3425
    %v3427 = vpop.xlane.xlu0 %3426
    %v3428 = vsub.f32 %v3414, %v3424
    %v3429 = vsub.f32 %v3419, %v3427
    %v3430 = vmul.f32 %v3428, 1.442695
    %v3431 = vpow.pop %v3430
    %v3432 = vmul.f32 %v3429, 1.442695
    %v3433 = vpow.pop %v3432
    %v3434 = vsel %vm317, %v3431, 0.0
    %3435 = vadd.xlane.f32.xlu0 %v3434
    %v3436 = vpop.xlane.xlu0 %3435
    %v3437 = vsel %vm317, %v3433, 0.0
    %3438 = vadd.xlane.f32.xlu0 %v3437
    %v3439 = vpop.xlane.xlu0 %3438
    %v3440 = vrcp.pop %v3436
    %v3441 = vmul.f32 %v3431, %v3440
    %v3442 = vrcp.pop %v3439
    %v3443 = vmul.f32 %v3433, %v3442
    %v3445 = vsel %vm317, %v3441, 0
    %v3448 = vsel %vm317, %v3443, 0
    %3450 = vmatprep.subr.mxu0 0.0
    %3451 = vmatpush1.msra.mxu0 %v2421
    %3452 = vmatprep.subr.mxu0 0.0
    %3453 = vmatpush1.msra.mxu0 %v2422
    %3454 = vmatprep.subr.mxu0 0.0
    %3455 = vmatpush1.msra.mxu0 0.0
    %3456 = vmatprep.subr.mxu0 0.0
    %3457 = vmatpush1.msra.mxu0 0.0
    %3458 = vmatprep.subr.mxu0 0.0
    %3459 = vmatpush1.msra.mxu0 0.0
    %3460 = vmatprep.subr.mxu0 0.0
    %3461 = vmatpush1.msra.mxu0 0.0
    %3462 = vmatprep.subr.mxu0 0.0
    %3463 = vmatpush1.msra.mxu0 0.0
    %3464 = vmatprep.subr.mxu0 0.0
    %3465 = vmatpush1.msra.mxu0 0.0
    %3466 = vmatprep.subr.mxu0 0.0
    %3467 = vmatpush1.msra.mxu0 0.0
    %3468 = vmatprep.subr.mxu0 0.0
    %3469 = vmatpush1.msra.mxu0 0.0
    %3470 = vmatprep.subr.mxu0 0.0
    %3471 = vmatpush1.msra.mxu0 0.0
    %3472 = vmatprep.subr.mxu0 0.0
    %3473 = vmatpush1.msra.mxu0 0.0
    %3474 = vmatprep.subr.mxu0 0.0
    %3475 = vmatpush1.msra.mxu0 0.0
    %3476 = vmatprep.subr.mxu0 0.0
    %3477 = vmatpush1.msra.mxu0 0.0
    %3478 = vmatprep.subr.mxu0 0.0
    %3479 = vmatpush1.msra.mxu0 0.0
    %3480 = vmatprep.subr.mxu0 0.0
    %3481 = vmatpush1.msra.mxu0 0.0
    %3482 = vmatprep.subr.mxu0 0.0
    %3483 = vmatpush1.msra.mxu0 0.0
    %3484 = vmatprep.subr.mxu0 0.0
    %3485 = vmatpush1.msra.mxu0 0.0
    %3486 = vmatprep.subr.mxu0 0.0
    %3487 = vmatpush1.msra.mxu0 0.0
    %3488 = vmatprep.subr.mxu0 0.0
    %3489 = vmatpush1.msra.mxu0 0.0
    %3490 = vmatprep.subr.mxu0 0.0
    %3491 = vmatpush1.msra.mxu0 0.0
    %3492 = vmatprep.subr.mxu0 0.0
    %3493 = vmatpush1.msra.mxu0 0.0
    %3494 = vmatprep.subr.mxu0 0.0
    %3495 = vmatpush1.msra.mxu0 0.0
    %3496 = vmatprep.subr.mxu0 0.0
    %3497 = vmatpush1.msra.mxu0 0.0
    %3498 = vmatprep.subr.mxu0 0.0
    %3499 = vmatpush1.msra.mxu0 0.0
    %3500 = vmatprep.subr.mxu0 0.0
    %3501 = vmatpush1.msra.mxu0 0.0
    %3502 = vmatprep.subr.mxu0 0.0
    %3503 = vmatpush1.msra.mxu0 0.0
    %3504 = vmatprep.subr.mxu0 0.0
    %3505 = vmatpush1.msra.mxu0 0.0
    %3506 = vmatprep.subr.mxu0 0.0
    %3507 = vmatpush1.msra.mxu0 0.0
    %3508 = vmatprep.subr.mxu0 0.0
    %3509 = vmatpush1.msra.mxu0 0.0
    %3510 = vmatprep.subr.mxu0 0.0
    %3511 = vmatpush1.msra.mxu0 0.0
    %3512 = vmatprep.subr.mxu0 0.0
    %3513 = vmatpush1.msra.mxu0 0.0
    %3514 = vmatprep.mubr.f32.mxu0 0.0
    %3515 = vmatmul.mubr.f32.gmra.mrb[0].mxu0 %v3445
    %v3516 = vpop.f32.mrb[0].mxu0
    %v3517 = vadd.f32 0.0, %v3516
    %v3518 = vpop.f32.mrb[0].mxu0
    %3519 = vmatprep.mubr.f32.mxu0 0.0
    %3520 = vmatmul.mubr.f32.gmra.mrb[0].mxu0 %v3448
    %v3521 = vpop.f32.mrb[0].mxu0
    %v3522 = vadd.f32 0.0, %v3521
    %v3523 = vpop.f32.mrb[0].mxu0
    %3524 = vdwg.mxu0
    %3525 = vrot.lane.b32.xlu0 %v3333, 120
    %v3526 = vpop.permute.xlu0 %3525
    %3527 = vrot.lane.b32.xlu0 %v3334, 120
    %v3528 = vpop.permute.xlu0 %3527
    %3529 = vrot.lane.b32.xlu0 %v2421, 120
    %v3530 = vpop.permute.xlu0 %3529
    %3531 = vrot.lane.b32.xlu0 %v2422, 120
    %v3532 = vpop.permute.xlu0 %3531
    %v3533 = vsel %vm229, %v3526, 0
    %v3535 = vsel %vm229, %v3528, 0
    %v3537 = vsel %vm229, %v3530, 0
    %v3539 = vsel %vm229, %v3532, 0
    %3541 = vmatprep.subr.mxu0 0.0
    %3542 = vmatpush1.xpose.msra.mxu0 %v3537
    %3543 = vmatprep.subr.mxu0 0.0
    %3544 = vmatpush1.xpose.msra.mxu0 %v3539
    %3545 = vmatprep.subr.mxu0 0.0
    %3546 = vmatpush1.xpose.msra.mxu0 0.0
    %3547 = vmatprep.subr.mxu0 0.0
    %3548 = vmatpush1.xpose.msra.mxu0 0.0
    %3549 = vmatprep.subr.mxu0 0.0
    %3550 = vmatpush1.xpose.msra.mxu0 0.0
    %3551 = vmatprep.subr.mxu0 0.0
    %3552 = vmatpush1.xpose.msra.mxu0 0.0
    %3553 = vmatprep.subr.mxu0 0.0
    %3554 = vmatpush1.xpose.msra.mxu0 0.0
    %3555 = vmatprep.subr.mxu0 0.0
    %3556 = vmatpush1.xpose.msra.mxu0 0.0
    %3557 = vmatprep.subr.mxu0 0.0
    %3558 = vmatpush1.xpose.msra.mxu0 0.0
    %3559 = vmatprep.subr.mxu0 0.0
    %3560 = vmatpush1.xpose.msra.mxu0 0.0
    %3561 = vmatprep.subr.mxu0 0.0
    %3562 = vmatpush1.xpose.msra.mxu0 0.0
    %3563 = vmatprep.subr.mxu0 0.0
    %3564 = vmatpush1.xpose.msra.mxu0 0.0
    %3565 = vmatprep.subr.mxu0 0.0
    %3566 = vmatpush1.xpose.msra.mxu0 0.0
    %3567 = vmatprep.subr.mxu0 0.0
    %3568 = vmatpush1.xpose.msra.mxu0 0.0
    %3569 = vmatprep.subr.mxu0 0.0
    %3570 = vmatpush1.xpose.msra.mxu0 0.0
    %3571 = vmatprep.subr.mxu0 0.0
    %3572 = vmatpush1.xpose.msra.mxu0 0.0
    %3573 = vmatprep.subr.mxu0 0.0
    %3574 = vmatpush1.xpose.msra.mxu0 0.0
    %3575 = vmatprep.subr.mxu0 0.0
    %3576 = vmatpush1.xpose.msra.mxu0 0.0
    %3577 = vmatprep.subr.mxu0 0.0
    %3578 = vmatpush1.xpose.msra.mxu0 0.0
    %3579 = vmatprep.subr.mxu0 0.0
    %3580 = vmatpush1.xpose.msra.mxu0 0.0
    %3581 = vmatprep.subr.mxu0 0.0
    %3582 = vmatpush1.xpose.msra.mxu0 0.0
    %3583 = vmatprep.subr.mxu0 0.0
    %3584 = vmatpush1.xpose.msra.mxu0 0.0
    %3585 = vmatprep.subr.mxu0 0.0
    %3586 = vmatpush1.xpose.msra.mxu0 0.0
    %3587 = vmatprep.subr.mxu0 0.0
    %3588 = vmatpush1.xpose.msra.mxu0 0.0
    %3589 = vmatprep.subr.mxu0 0.0
    %3590 = vmatpush1.xpose.msra.mxu0 0.0
    %3591 = vmatprep.subr.mxu0 0.0
    %3592 = vmatpush1.xpose.msra.mxu0 0.0
    %3593 = vmatprep.subr.mxu0 0.0
    %3594 = vmatpush1.xpose.msra.mxu0 0.0
    %3595 = vmatprep.subr.mxu0 0.0
    %3596 = vmatpush1.xpose.msra.mxu0 0.0
    %3597 = vmatprep.subr.mxu0 0.0
    %3598 = vmatpush1.xpose.msra.mxu0 0.0
    %3599 = vmatprep.subr.mxu0 0.0
    %3600 = vmatpush1.xpose.msra.mxu0 0.0
    %3601 = vmatprep.subr.mxu0 0.0
    %3602 = vmatpush1.xpose.msra.mxu0 0.0
    %3603 = vmatprep.subr.mxu0 0.0
    %3604 = vmatpush1.xpose.msra.mxu0 0.0
    %3605 = vmatprep.mubr.f32.mxu0 0.0
    %3606 = vmatmul.mubr.f32.gmra.mrb[0].mxu0 %v3533
    %v3607 = vpop.f32.mrb[0].mxu0
    %v3608 = vadd.f32 %v157, %v3607
    %v3609 = vpop.f32.mrb[0].mxu0
    %3610 = vmatprep.mubr.f32.mxu0 0.0
    %3611 = vmatmul.mubr.f32.gmra.mrb[0].mxu0 %v3535
    %v3612 = vpop.f32.mrb[0].mxu0
    %v3613 = vadd.f32 %v158, %v3612
    %v3614 = vpop.f32.mrb[0].mxu0
    %3615 = vdwg.mxu0
    %v3616 = vsel %vm317, %v3608, -inf
    %3617 = vmax.xlane.f32.xlu0 %v3616
    %v3618 = vpop.xlane.xlu0 %3617
    %v3619 = vsel %vm317, %v3613, -inf
    %3620 = vmax.xlane.f32.xlu0 %v3619
    %v3621 = vpop.xlane.xlu0 %3620
    %v3622 = vsub.f32 %v3608, %v3618
    %v3623 = vsub.f32 %v3613, %v3621
    %v3624 = vmul.f32 %v3622, 1.442695
    %v3625 = vpow.pop %v3624
    %v3626 = vmul.f32 %v3623, 1.442695
    %v3627 = vpow.pop %v3626
    %v3628 = vsel %vm317, %v3625, 0.0
    %3629 = vadd.xlane.f32.xlu0 %v3628
    %v3630 = vpop.xlane.xlu0 %3629
    %v3631 = vsel %vm317, %v3627, 0.0
    %3632 = vadd.xlane.f32.xlu0 %v3631
    %v3633 = vpop.xlane.xlu0 %3632
    %v3634 = vrcp.pop %v3630
    %v3635 = vmul.f32 %v3625, %v3634
    %v3636 = vrcp.pop %v3633
    %v3637 = vmul.f32 %v3627, %v3636
    %v3641 = vsel %vm317, %v3635, 0
    %v3644 = vsel %vm317, %v3637, 0
    %3646 = vmatprep.subr.mxu0 0.0
    %3647 = vmatpush1.msra.mxu0 %v3530
    %3648 = vmatprep.subr.mxu0 0.0
    %3649 = vmatpush1.msra.mxu0 %v3532
    %3650 = vmatprep.subr.mxu0 0.0
    %3651 = vmatpush1.msra.mxu0 0.0
    %3652 = vmatprep.subr.mxu0 0.0
    %3653 = vmatpush1.msra.mxu0 0.0
    %3654 = vmatprep.subr.mxu0 0.0
    %3655 = vmatpush1.msra.mxu0 0.0
    %3656 = vmatprep.subr.mxu0 0.0
    %3657 = vmatpush1.msra.mxu0 0.0
    %3658 = vmatprep.subr.mxu0 0.0
    %3659 = vmatpush1.msra.mxu0 0.0
    %3660 = vmatprep.subr.mxu0 0.0
    %3661 = vmatpush1.msra.mxu0 0.0
    %3662 = vmatprep.subr.mxu0 0.0
    %3663 = vmatpush1.msra.mxu0 0.0
    %3664 = vmatprep.subr.mxu0 0.0
    %3665 = vmatpush1.msra.mxu0 0.0
    %3666 = vmatprep.subr.mxu0 0.0
    %3667 = vmatpush1.msra.mxu0 0.0
    %3668 = vmatprep.subr.mxu0 0.0
    %3669 = vmatpush1.msra.mxu0 0.0
    %3670 = vmatprep.subr.mxu0 0.0
    %3671 = vmatpush1.msra.mxu0 0.0
    %3672 = vmatprep.subr.mxu0 0.0
    %3673 = vmatpush1.msra.mxu0 0.0
    %3674 = vmatprep.subr.mxu0 0.0
    %3675 = vmatpush1.msra.mxu0 0.0
    %3676 = vmatprep.subr.mxu0 0.0
    %3677 = vmatpush1.msra.mxu0 0.0
    %3678 = vmatprep.subr.mxu0 0.0
    %3679 = vmatpush1.msra.mxu0 0.0
    %3680 = vmatprep.subr.mxu0 0.0
    %3681 = vmatpush1.msra.mxu0 0.0
    %3682 = vmatprep.subr.mxu0 0.0
    %3683 = vmatpush1.msra.mxu0 0.0
    %3684 = vmatprep.subr.mxu0 0.0
    %3685 = vmatpush1.msra.mxu0 0.0
    %3686 = vmatprep.subr.mxu0 0.0
    %3687 = vmatpush1.msra.mxu0 0.0
    %3688 = vmatprep.subr.mxu0 0.0
    %3689 = vmatpush1.msra.mxu0 0.0
    %3690 = vmatprep.subr.mxu0 0.0
    %3691 = vmatpush1.msra.mxu0 0.0
    %3692 = vmatprep.subr.mxu0 0.0
    %3693 = vmatpush1.msra.mxu0 0.0
    %3694 = vmatprep.subr.mxu0 0.0
    %3695 = vmatpush1.msra.mxu0 0.0
    %3696 = vmatprep.subr.mxu0 0.0
    %3697 = vmatpush1.msra.mxu0 0.0
    %3698 = vmatprep.subr.mxu0 0.0
    %3699 = vmatpush1.msra.mxu0 0.0
    %3700 = vmatprep.subr.mxu0 0.0
    %3701 = vmatpush1.msra.mxu0 0.0
    %3702 = vmatprep.subr.mxu0 0.0
    %3703 = vmatpush1.msra.mxu0 0.0
    %3704 = vmatprep.subr.mxu0 0.0
    %3705 = vmatpush1.msra.mxu0 0.0
    %3706 = vmatprep.subr.mxu0 0.0
    %3707 = vmatpush1.msra.mxu0 0.0
    %3708 = vmatprep.subr.mxu0 0.0
    %3709 = vmatpush1.msra.mxu0 0.0
    %3710 = vmatprep.mubr.f32.mxu0 0.0
    %3711 = vmatmul.mubr.f32.gmra.mrb[0].mxu0 %v3641
    %v3712 = vpop.f32.mrb[0].mxu0
    %v3713 = vadd.f32 0.0, %v3712
    %v3714 = vpop.f32.mrb[0].mxu0
    %3715 = vmatprep.mubr.f32.mxu0 0.0
    %3716 = vmatmul.mubr.f32.gmra.mrb[0].mxu0 %v3644
    %v3717 = vpop.f32.mrb[0].mxu0
    %v3718 = vadd.f32 0.0, %v3717
    %v3719 = vpop.f32.mrb[0].mxu0
    %3720 = vdwg.mxu0
    %3721 = vrot.lane.b32.xlu0 %v3333, 112
    %v3722 = vpop.permute.xlu0 %3721
    %3723 = vrot.lane.b32.xlu0 %v3334, 112
    %v3724 = vpop.permute.xlu0 %3723
    %3725 = vrot.lane.b32.xlu0 %v2421, 112
    %v3726 = vpop.permute.xlu0 %3725
    %3727 = vrot.lane.b32.xlu0 %v2422, 112
    %v3728 = vpop.permute.xlu0 %3727
    %v3729 = vsel %vm229, %v3722, 0
    %v3731 = vsel %vm229, %v3724, 0
    %v3733 = vsel %vm229, %v3726, 0
    %v3735 = vsel %vm229, %v3728, 0
    %3737 = vmatprep.subr.mxu0 0.0
    %3738 = vmatpush1.xpose.msra.mxu0 %v3733
    %3739 = vmatprep.subr.mxu0 0.0
    %3740 = vmatpush1.xpose.msra.mxu0 %v3735
    %3741 = vmatprep.subr.mxu0 0.0
    %3742 = vmatpush1.xpose.msra.mxu0 0.0
    %3743 = vmatprep.subr.mxu0 0.0
    %3744 = vmatpush1.xpose.msra.mxu0 0.0
    %3745 = vmatprep.subr.mxu0 0.0
    %3746 = vmatpush1.xpose.msra.mxu0 0.0
    %3747 = vmatprep.subr.mxu0 0.0
    %3748 = vmatpush1.xpose.msra.mxu0 0.0
    %3749 = vmatprep.subr.mxu0 0.0
    %3750 = vmatpush1.xpose.msra.mxu0 0.0
    %3751 = vmatprep.subr.mxu0 0.0
    %3752 = vmatpush1.xpose.msra.mxu0 0.0
    %3753 = vmatprep.subr.mxu0 0.0
    %3754 = vmatpush1.xpose.msra.mxu0 0.0
    %3755 = vmatprep.subr.mxu0 0.0
    %3756 = vmatpush1.xpose.msra.mxu0 0.0
    %3757 = vmatprep.subr.mxu0 0.0
    %3758 = vmatpush1.xpose.msra.mxu0 0.0
    %3759 = vmatprep.subr.mxu0 0.0
    %3760 = vmatpush1.xpose.msra.mxu0 0.0
    %3761 = vmatprep.subr.mxu0 0.0
    %3762 = vmatpush1.xpose.msra.mxu0 0.0
    %3763 = vmatprep.subr.mxu0 0.0
    %3764 = vmatpush1.xpose.msra.mxu0 0.0
    %3765 = vmatprep.subr.mxu0 0.0
    %3766 = vmatpush1.xpose.msra.mxu0 0.0
    %3767 = vmatprep.subr.mxu0 0.0
    %3768 = vmatpush1.xpose.msra.mxu0 0.0
    %3769 = vmatprep.subr.mxu0 0.0
    %3770 = vmatpush1.xpose.msra.mxu0 0.0
    %3771 = vmatprep.subr.mxu0 0.0
    %3772 = vmatpush1.xpose.msra.mxu0 0.0
    %3773 = vmatprep.subr.mxu0 0.0
    %3774 = vmatpush1.xpose.msra.mxu0 0.0
    %3775 = vmatprep.subr.mxu0 0.0
    %3776 = vmatpush1.xpose.msra.mxu0 0.0
    %3777 = vmatprep.subr.mxu0 0.0
    %3778 = vmatpush1.xpose.msra.mxu0 0.0
    %3779 = vmatprep.subr.mxu0 0.0
    %3780 = vmatpush1.xpose.msra.mxu0 0.0
    %3781 = vmatprep.subr.mxu0 0.0
    %3782 = vmatpush1.xpose.msra.mxu0 0.0
    %3783 = vmatprep.subr.mxu0 0.0
    %3784 = vmatpush1.xpose.msra.mxu0 0.0
    %3785 = vmatprep.subr.mxu0 0.0
    %3786 = vmatpush1.xpose.msra.mxu0 0.0
    %3787 = vmatprep.subr.mxu0 0.0
    %3788 = vmatpush1.xpose.msra.mxu0 0.0
    %3789 = vmatprep.subr.mxu0 0.0
    %3790 = vmatpush1.xpose.msra.mxu0 0.0
    %3791 = vmatprep.subr.mxu0 0.0
    %3792 = vmatpush1.xpose.msra.mxu0 0.0
    %3793 = vmatprep.subr.mxu0 0.0
    %3794 = vmatpush1.xpose.msra.mxu0 0.0
    %3795 = vmatprep.subr.mxu0 0.0
    %3796 = vmatpush1.xpose.msra.mxu0 0.0
    %3797 = vmatprep.subr.mxu0 0.0
    %3798 = vmatpush1.xpose.msra.mxu0 0.0
    %3799 = vmatprep.subr.mxu0 0.0
    %3800 = vmatpush1.xpose.msra.mxu0 0.0
    %3801 = vmatprep.mubr.f32.mxu0 0.0
    %3802 = vmatmul.mubr.f32.gmra.mrb[0].mxu0 %v3729
    %v3803 = vpop.f32.mrb[0].mxu0
    %v3804 = vadd.f32 %v157, %v3803
    %v3805 = vpop.f32.mrb[0].mxu0
    %3806 = vmatprep.mubr.f32.mxu0 0.0
    %3807 = vmatmul.mubr.f32.gmra.mrb[0].mxu0 %v3731
    %v3808 = vpop.f32.mrb[0].mxu0
    %v3809 = vadd.f32 %v158, %v3808
    %v3810 = vpop.f32.mrb[0].mxu0
    %3811 = vdwg.mxu0
    %v3812 = vsel %vm317, %v3804, -inf
    %3813 = vmax.xlane.f32.xlu0 %v3812
    %v3814 = vpop.xlane.xlu0 %3813
    %v3815 = vsel %vm317, %v3809, -inf
    %3816 = vmax.xlane.f32.xlu0 %v3815
    %v3817 = vpop.xlane.xlu0 %3816
    %v3818 = vsub.f32 %v3804, %v3814
    %v3819 = vsub.f32 %v3809, %v3817
    %v3820 = vmul.f32 %v3818, 1.442695
    %v3821 = vpow.pop %v3820
    %v3822 = vmul.f32 %v3819, 1.442695
    %v3823 = vpow.pop %v3822
    %v3824 = vsel %vm317, %v3821, 0.0
    %3825 = vadd.xlane.f32.xlu0 %v3824
    %v3826 = vpop.xlane.xlu0 %3825
    %v3827 = vsel %vm317, %v3823, 0.0
    %3828 = vadd.xlane.f32.xlu0 %v3827
    %v3829 = vpop.xlane.xlu0 %3828
    %v3830 = vrcp.pop %v3826
    %v3831 = vmul.f32 %v3821, %v3830
    %v3832 = vrcp.pop %v3829
    %v3833 = vmul.f32 %v3823, %v3832
    %v3837 = vsel %vm317, %v3831, 0
    %v3840 = vsel %vm317, %v3833, 0
    %3842 = vmatprep.subr.mxu0 0.0
    %3843 = vmatpush1.msra.mxu0 %v3726
    %3844 = vmatprep.subr.mxu0 0.0
    %3845 = vmatpush1.msra.mxu0 %v3728
    %3846 = vmatprep.subr.mxu0 0.0
    %3847 = vmatpush1.msra.mxu0 0.0
    %3848 = vmatprep.subr.mxu0 0.0
    %3849 = vmatpush1.msra.mxu0 0.0
    %3850 = vmatprep.subr.mxu0 0.0
    %3851 = vmatpush1.msra.mxu0 0.0
    %3852 = vmatprep.subr.mxu0 0.0
    %3853 = vmatpush1.msra.mxu0 0.0
    %3854 = vmatprep.subr.mxu0 0.0
    %3855 = vmatpush1.msra.mxu0 0.0
    %3856 = vmatprep.subr.mxu0 0.0
    %3857 = vmatpush1.msra.mxu0 0.0
    %3858 = vmatprep.subr.mxu0 0.0
    %3859 = vmatpush1.msra.mxu0 0.0
    %3860 = vmatprep.subr.mxu0 0.0
    %3861 = vmatpush1.msra.mxu0 0.0
    %3862 = vmatprep.subr.mxu0 0.0
    %3863 = vmatpush1.msra.mxu0 0.0
    %3864 = vmatprep.subr.mxu0 0.0
    %3865 = vmatpush1.msra.mxu0 0.0
    %3866 = vmatprep.subr.mxu0 0.0
    %3867 = vmatpush1.msra.mxu0 0.0
    %3868 = vmatprep.subr.mxu0 0.0
    %3869 = vmatpush1.msra.mxu0 0.0
    %3870 = vmatprep.subr.mxu0 0.0
    %3871 = vmatpush1.msra.mxu0 0.0
    %3872 = vmatprep.subr.mxu0 0.0
    %3873 = vmatpush1.msra.mxu0 0.0
    %3874 = vmatprep.subr.mxu0 0.0
    %3875 = vmatpush1.msra.mxu0 0.0
    %3876 = vmatprep.subr.mxu0 0.0
    %3877 = vmatpush1.msra.mxu0 0.0
    %3878 = vmatprep.subr.mxu0 0.0
    %3879 = vmatpush1.msra.mxu0 0.0
    %3880 = vmatprep.subr.mxu0 0.0
    %3881 = vmatpush1.msra.mxu0 0.0
    %3882 = vmatprep.subr.mxu0 0.0
    %3883 = vmatpush1.msra.mxu0 0.0
    %3884 = vmatprep.subr.mxu0 0.0
    %3885 = vmatpush1.msra.mxu0 0.0
    %3886 = vmatprep.subr.mxu0 0.0
    %3887 = vmatpush1.msra.mxu0 0.0
    %3888 = vmatprep.subr.mxu0 0.0
    %3889 = vmatpush1.msra.mxu0 0.0
    %3890 = vmatprep.subr.mxu0 0.0
    %3891 = vmatpush1.msra.mxu0 0.0
    %3892 = vmatprep.subr.mxu0 0.0
    %3893 = vmatpush1.msra.mxu0 0.0
    %3894 = vmatprep.subr.mxu0 0.0
    %3895 = vmatpush1.msra.mxu0 0.0
    %3896 = vmatprep.subr.mxu0 0.0
    %3897 = vmatpush1.msra.mxu0 0.0
    %3898 = vmatprep.subr.mxu0 0.0
    %3899 = vmatpush1.msra.mxu0 0.0
    %3900 = vmatprep.subr.mxu0 0.0
    %3901 = vmatpush1.msra.mxu0 0.0
    %3902 = vmatprep.subr.mxu0 0.0
    %3903 = vmatpush1.msra.mxu0 0.0
    %3904 = vmatprep.subr.mxu0 0.0
    %3905 = vmatpush1.msra.mxu0 0.0
    %3906 = vmatprep.mubr.f32.mxu0 0.0
    %3907 = vmatmul.mubr.f32.gmra.mrb[0].mxu0 %v3837
    %v3908 = vpop.f32.mrb[0].mxu0
    %v3909 = vadd.f32 0.0, %v3908
    %v3910 = vpop.f32.mrb[0].mxu0
    %3911 = vmatprep.mubr.f32.mxu0 0.0
    %3912 = vmatmul.mubr.f32.gmra.mrb[0].mxu0 %v3840
    %v3913 = vpop.f32.mrb[0].mxu0
    %v3914 = vadd.f32 0.0, %v3913
    %v3915 = vpop.f32.mrb[0].mxu0
    %3916 = vdwg.mxu0
    %3917 = vrot.lane.b32.xlu0 %v3333, 104
    %v3918 = vpop.permute.xlu0 %3917
    %3919 = vrot.lane.b32.xlu0 %v3334, 104
    %v3920 = vpop.permute.xlu0 %3919
    %3921 = vrot.lane.b32.xlu0 %v2421, 104
    %v3922 = vpop.permute.xlu0 %3921
    %3923 = vrot.lane.b32.xlu0 %v2422, 104
    %v3924 = vpop.permute.xlu0 %3923
    %v3925 = vsel %vm229, %v3918, 0
    %v3927 = vsel %vm229, %v3920, 0
    %v3929 = vsel %vm229, %v3922, 0
    %v3931 = vsel %vm229, %v3924, 0
    %3933 = vmatprep.subr.mxu0 0.0
    %3934 = vmatpush1.xpose.msra.mxu0 %v3929
    %3935 = vmatprep.subr.mxu0 0.0
    %3936 = vmatpush1.xpose.msra.mxu0 %v3931
    %3937 = vmatprep.subr.mxu0 0.0
    %3938 = vmatpush1.xpose.msra.mxu0 0.0
    %3939 = vmatprep.subr.mxu0 0.0
    %3940 = vmatpush1.xpose.msra.mxu0 0.0
    %3941 = vmatprep.subr.mxu0 0.0
    %3942 = vmatpush1.xpose.msra.mxu0 0.0
    %3943 = vmatprep.subr.mxu0 0.0
    %3944 = vmatpush1.xpose.msra.mxu0 0.0
    %3945 = vmatprep.subr.mxu0 0.0
    %3946 = vmatpush1.xpose.msra.mxu0 0.0
    %3947 = vmatprep.subr.mxu0 0.0
    %3948 = vmatpush1.xpose.msra.mxu0 0.0
    %3949 = vmatprep.subr.mxu0 0.0
    %3950 = vmatpush1.xpose.msra.mxu0 0.0
    %3951 = vmatprep.subr.mxu0 0.0
    %3952 = vmatpush1.xpose.msra.mxu0 0.0
    %3953 = vmatprep.subr.mxu0 0.0
    %3954 = vmatpush1.xpose.msra.mxu0 0.0
    %3955 = vmatprep.subr.mxu0 0.0
    %3956 = vmatpush1.xpose.msra.mxu0 0.0
    %3957 = vmatprep.subr.mxu0 0.0
    %3958 = vmatpush1.xpose.msra.mxu0 0.0
    %3959 = vmatprep.subr.mxu0 0.0
    %3960 = vmatpush1.xpose.msra.mxu0 0.0
    %3961 = vmatprep.subr.mxu0 0.0
    %3962 = vmatpush1.xpose.msra.mxu0 0.0
    %3963 = vmatprep.subr.mxu0 0.0
    %3964 = vmatpush1.xpose.msra.mxu0 0.0
    %3965 = vmatprep.subr.mxu0 0.0
    %3966 = vmatpush1.xpose.msra.mxu0 0.0
    %3967 = vmatprep.subr.mxu0 0.0
    %3968 = vmatpush1.xpose.msra.mxu0 0.0
    %3969 = vmatprep.subr.mxu0 0.0
    %3970 = vmatpush1.xpose.msra.mxu0 0.0
    %3971 = vmatprep.subr.mxu0 0.0
    %3972 = vmatpush1.xpose.msra.mxu0 0.0
    %3973 = vmatprep.subr.mxu0 0.0
    %3974 = vmatpush1.xpose.msra.mxu0 0.0
    %3975 = vmatprep.subr.mxu0 0.0
    %3976 = vmatpush1.xpose.msra.mxu0 0.0
    %3977 = vmatprep.subr.mxu0 0.0
    %3978 = vmatpush1.xpose.msra.mxu0 0.0
    %3979 = vmatprep.subr.mxu0 0.0
    %3980 = vmatpush1.xpose.msra.mxu0 0.0
    %3981 = vmatprep.subr.mxu0 0.0
    %3982 = vmatpush1.xpose.msra.mxu0 0.0
    %3983 = vmatprep.subr.mxu0 0.0
    %3984 = vmatpush1.xpose.msra.mxu0 0.0
    %3985 = vmatprep.subr.mxu0 0.0
    %3986 = vmatpush1.xpose.msra.mxu0 0.0
    %3987 = vmatprep.subr.mxu0 0.0
    %3988 = vmatpush1.xpose.msra.mxu0 0.0
    %3989 = vmatprep.subr.mxu0 0.0
    %3990 = vmatpush1.xpose.msra.mxu0 0.0
    %3991 = vmatprep.subr.mxu0 0.0
    %3992 = vmatpush1.xpose.msra.mxu0 0.0
    %3993 = vmatprep.subr.mxu0 0.0
    %3994 = vmatpush1.xpose.msra.mxu0 0.0
    %3995 = vmatprep.subr.mxu0 0.0
    %3996 = vmatpush1.xpose.msra.mxu0 0.0
    %3997 = vmatprep.mubr.f32.mxu0 0.0
    %3998 = vmatmul.mubr.f32.gmra.mrb[0].mxu0 %v3925
    %v3999 = vpop.f32.mrb[0].mxu0
    %v4000 = vadd.f32 %v157, %v3999
    %v4001 = vpop.f32.mrb[0].mxu0
    %4002 = vmatprep.mubr.f32.mxu0 0.0
    %4003 = vmatmul.mubr.f32.gmra.mrb[0].mxu0 %v3927
    %v4004 = vpop.f32.mrb[0].mxu0
    %v4005 = vadd.f32 %v158, %v4004
    %v4006 = vpop.f32.mrb[0].mxu0
    %4007 = vdwg.mxu0
    %v4008 = vsel %vm317, %v4000, -inf
    %4009 = vmax.xlane.f32.xlu0 %v4008
    %v4010 = vpop.xlane.xlu0 %4009
    %v4011 = vsel %vm317, %v4005, -inf
    %4012 = vmax.xlane.f32.xlu0 %v4011
    %v4013 = vpop.xlane.xlu0 %4012
    %v4014 = vsub.f32 %v4000, %v4010
    %v4015 = vsub.f32 %v4005, %v4013
    %v4016 = vmul.f32 %v4014, 1.442695
    %v4017 = vpow.pop %v4016
    %v4018 = vmul.f32 %v4015, 1.442695
    %v4019 = vpow.pop %v4018
    %v4020 = vsel %vm317, %v4017, 0.0
    %4021 = vadd.xlane.f32.xlu0 %v4020
    %v4022 = vpop.xlane.xlu0 %4021
    %v4023 = vsel %vm317, %v4019, 0.0
    %4024 = vadd.xlane.f32.xlu0 %v4023
    %v4025 = vpop.xlane.xlu0 %4024
    %v4026 = vrcp.pop %v4022
    %v4027 = vmul.f32 %v4017, %v4026
    %v4028 = vrcp.pop %v4025
    %v4029 = vmul.f32 %v4019, %v4028
    %v4033 = vsel %vm317, %v4027, 0
    %v4036 = vsel %vm317, %v4029, 0
    %4038 = vmatprep.subr.mxu0 0.0
    %4039 = vmatpush1.msra.mxu0 %v3922
    %4040 = vmatprep.subr.mxu0 0.0
    %4041 = vmatpush1.msra.mxu0 %v3924
    %4042 = vmatprep.subr.mxu0 0.0
    %4043 = vmatpush1.msra.mxu0 0.0
    %4044 = vmatprep.subr.mxu0 0.0
    %4045 = vmatpush1.msra.mxu0 0.0
    %4046 = vmatprep.subr.mxu0 0.0
    %4047 = vmatpush1.msra.mxu0 0.0
    %4048 = vmatprep.subr.mxu0 0.0
    %4049 = vmatpush1.msra.mxu0 0.0
    %4050 = vmatprep.subr.mxu0 0.0
    %4051 = vmatpush1.msra.mxu0 0.0
    %4052 = vmatprep.subr.mxu0 0.0
    %4053 = vmatpush1.msra.mxu0 0.0
    %4054 = vmatprep.subr.mxu0 0.0
    %4055 = vmatpush1.msra.mxu0 0.0
    %4056 = vmatprep.subr.mxu0 0.0
    %4057 = vmatpush1.msra.mxu0 0.0
    %4058 = vmatprep.subr.mxu0 0.0
    %4059 = vmatpush1.msra.mxu0 0.0
    %4060 = vmatprep.subr.mxu0 0.0
    %4061 = vmatpush1.msra.mxu0 0.0
    %4062 = vmatprep.subr.mxu0 0.0
    %4063 = vmatpush1.msra.mxu0 0.0
    %4064 = vmatprep.subr.mxu0 0.0
    %4065 = vmatpush1.msra.mxu0 0.0
    %4066 = vmatprep.subr.mxu0 0.0
    %4067 = vmatpush1.msra.mxu0 0.0
    %4068 = vmatprep.subr.mxu0 0.0
    %4069 = vmatpush1.msra.mxu0 0.0
    %4070 = vmatprep.subr.mxu0 0.0
    %4071 = vmatpush1.msra.mxu0 0.0
    %4072 = vmatprep.subr.mxu0 0.0
    %4073 = vmatpush1.msra.mxu0 0.0
    %4074 = vmatprep.subr.mxu0 0.0
    %4075 = vmatpush1.msra.mxu0 0.0
    %4076 = vmatprep.subr.mxu0 0.0
    %4077 = vmatpush1.msra.mxu0 0.0
    %4078 = vmatprep.subr.mxu0 0.0
    %4079 = vmatpush1.msra.mxu0 0.0
    %4080 = vmatprep.subr.mxu0 0.0
    %4081 = vmatpush1.msra.mxu0 0.0
    %4082 = vmatprep.subr.mxu0 0.0
    %4083 = vmatpush1.msra.mxu0 0.0
    %4084 = vmatprep.subr.mxu0 0.0
    %4085 = vmatpush1.msra.mxu0 0.0
    %4086 = vmatprep.subr.mxu0 0.0
    %4087 = vmatpush1.msra.mxu0 0.0
    %4088 = vmatprep.subr.mxu0 0.0
    %4089 = vmatpush1.msra.mxu0 0.0
    %4090 = vmatprep.subr.mxu0 0.0
    %4091 = vmatpush1.msra.mxu0 0.0
    %4092 = vmatprep.subr.mxu0 0.0
    %4093 = vmatpush1.msra.mxu0 0.0
    %4094 = vmatprep.subr.mxu0 0.0
    %4095 = vmatpush1.msra.mxu0 0.0
    %4096 = vmatprep.subr.mxu0 0.0
    %4097 = vmatpush1.msra.mxu0 0.0
    %4098 = vmatprep.subr.mxu0 0.0
    %4099 = vmatpush1.msra.mxu0 0.0
    %4100 = vmatprep.subr.mxu0 0.0
    %4101 = vmatpush1.msra.mxu0 0.0
    %4102 = vmatprep.mubr.f32.mxu0 0.0
    %4103 = vmatmul.mubr.f32.gmra.mrb[0].mxu0 %v4033
    %v4104 = vpop.f32.mrb[0].mxu0
    %v4105 = vadd.f32 0.0, %v4104
    %v4106 = vpop.f32.mrb[0].mxu0
    %4107 = vmatprep.mubr.f32.mxu0 0.0
    %4108 = vmatmul.mubr.f32.gmra.mrb[0].mxu0 %v4036
    %v4109 = vpop.f32.mrb[0].mxu0
    %v4110 = vadd.f32 0.0, %v4109
    %v4111 = vpop.f32.mrb[0].mxu0
    %4112 = vdwg.mxu0
    %4115 = vrot.lane.b32.xlu0 %v3713, 8
    %v4116 = vpop.permute.xlu0 %4115
    %4117 = vrot.lane.b32.xlu0 %v3718, 8
    %v4118 = vpop.permute.xlu0 %4117
    %4123 = vrot.lane.b32.xlu0 %v3909, 16
    %v4124 = vpop.permute.xlu0 %4123
    %4125 = vrot.lane.b32.xlu0 %v3914, 16
    %v4126 = vpop.permute.xlu0 %4125
    %4131 = vrot.lane.b32.xlu0 %v4105, 24
    %v4132 = vpop.permute.xlu0 %4131
    %4133 = vrot.lane.b32.xlu0 %v4110, 24
    %v4134 = vpop.permute.xlu0 %4133
    %v4137 = vsel %vm229, %v3517, %v4116
    %v4138 = vsel %vm229, %v3522, %v4118
    %v4139 = vsel %vm317, %v4137, %v4124
    %v4140 = vsel %vm317, %v4138, %v4126
    %v4141 = vsel %vm1037, %v4139, %v4132
    %v4142 = vsel %vm1037, %v4140, %v4134
    %v4143 = vadd.f32 %v3287, %v4141
    %v4144 = vadd.f32 %v3288, %v4142
    %v4145 = vld [vmem:[%s43] sm:$0x1]
    %v4146 = vld [vmem:[%s45] sm:$0x1]
    %v4147 = vsel %vm183, %v4143, 0.0
    %4148 = vadd.xlane.f32.xlu0 %v4147
    %v4149 = vpop.xlane.xlu0 %4148
    %v4150 = vsel %vm183, %v4144, 0.0
    %4151 = vadd.xlane.f32.xlu0 %v4150
    %v4152 = vpop.xlane.xlu0 %4151
    %v4153 = vmul.f32 %v4149, %v190
    %v4154 = vmul.f32 %v4152, %v190
    %v4155 = vsub.f32 %v4143, %v4153
    %v4156 = vsub.f32 %v4144, %v4154
    %v4157 = vmul.f32 %v4155, %v4155
    %v4158 = vmul.f32 %v4156, %v4156
    %v4159 = vsel %vm183, %v4157, 0.0
    %4160 = vadd.xlane.f32.xlu0 %v4159
    %v4161 = vpop.xlane.xlu0 %4160
    %v4162 = vsel %vm183, %v4158, 0.0
    %4163 = vadd.xlane.f32.xlu0 %v4162
    %v4164 = vpop.xlane.xlu0 %4163
    %v4165 = vmul.f32 %v4161, %v190
    %v4166 = vmul.f32 %v4164, %v190
    %v4167 = vadd.f32 %v4165, 1e-05
    %v4168 = vadd.f32 %v4166, 1e-05
    %v4169 = vrsqrt.pop %v4167
    %v4170 = vrsqrt.pop %v4168
    %v4171 = vmul.f32 %v4155, %v4169
    %v4172 = vmul.f32 %v4156, %v4170
    %v4174 = vlaneseq
    %v4175 = vshrl.u32 %v4174, 7
    %v4176 = vsub.s32 0, %v4175
    %v4177 = vrot.slane %v4145, %v4176
    %v4179 = vmul.f32 %v4171, %v4177
    %v4180 = vmul.f32 %v4172, %v4177
    %v4182 = vlaneseq
    %v4183 = vshrl.u32 %v4182, 7
    %v4184 = vsub.s32 0, %v4183
    %v4185 = vrot.slane %v4146, %v4184
    %v4187 = vadd.f32 %v4179, %v4185
    %v4188 = vadd.f32 %v4180, %v4185
    %v4189 = vld [vmem:[%s47] sm:$0xff]
    %v4190 = vld [vmem:[%s47 + $0x8] sm:$0xff]
    %v4191 = vld [vmem:[%s47 + $0x10] sm:$0xff]
    %v4192 = vld [vmem:[%s47 + $0x18] sm:$0xff]
    %v4193 = vld [vmem:[%s49] sm:$0x1]
    %v4194 = vld [vmem:[%s51] sm:$0xff]
    %v4195 = vld [vmem:[%s51 + $0x8] sm:$0xff]
    %v4196 = vld [vmem:[%s51 + $0x10] sm:$0xff]
    %v4197 = vld [vmem:[%s51 + $0x18] sm:$0xff]
    %v4198 = vld [vmem:[%s51 + $0x20] sm:$0xff]
    %v4199 = vld [vmem:[%s51 + $0x28] sm:$0xff]
    %v4200 = vld [vmem:[%s51 + $0x30] sm:$0xff]
    %v4201 = vld [vmem:[%s51 + $0x38] sm:$0xff]
    %v4202 = vld [vmem:[%s53] sm:$0x1]
    %v4204 = vlaneseq
    %v4205 = vshrl.u32 %v4204, 7
    %v4206 = vsub.s32 0, %v4205
    %v4207 = vrot.slane %v4193, %v4206
    %v4210 = vsel %vm183, %v4187, 0
    %v4213 = vsel %vm183, %v4188, 0
    %4215 = vmatprep.subr.mxu0 0.0
    %4216 = vmatpush1.msra.mxu0 %v4189
    %4217 = vmatprep.subr.mxu0 0.0
    %4218 = vmatpush1.msra.mxu0 %v4190
    %4219 = vmatprep.subr.mxu0 0.0
    %4220 = vmatpush1.msra.mxu0 %v4191
    %4221 = vmatprep.subr.mxu0 0.0
    %4222 = vmatpush1.msra.mxu0 %v4192
    %4223 = vmatprep.subr.mxu0 0.0
    %4224 = vmatpush1.msra.mxu0 0.0
    %4225 = vmatprep.subr.mxu0 0.0
    %4226 = vmatpush1.msra.mxu0 0.0
    %4227 = vmatprep.subr.mxu0 0.0
    %4228 = vmatpush1.msra.mxu0 0.0
    %4229 = vmatprep.subr.mxu0 0.0
    %4230 = vmatpush1.msra.mxu0 0.0
    %4231 = vmatprep.subr.mxu0 0.0
    %4232 = vmatpush1.msra.mxu0 0.0
    %4233 = vmatprep.subr.mxu0 0.0
    %4234 = vmatpush1.msra.mxu0 0.0
    %4235 = vmatprep.subr.mxu0 0.0
    %4236 = vmatpush1.msra.mxu0 0.0
    %4237 = vmatprep.subr.mxu0 0.0
    %4238 = vmatpush1.msra.mxu0 0.0
    %4239 = vmatprep.subr.mxu0 0.0
    %4240 = vmatpush1.msra.mxu0 0.0
    %4241 = vmatprep.subr.mxu0 0.0
    %4242 = vmatpush1.msra.mxu0 0.0
    %4243 = vmatprep.subr.mxu0 0.0
    %4244 = vmatpush1.msra.mxu0 0.0
    %4245 = vmatprep.subr.mxu0 0.0
    %4246 = vmatpush1.msra.mxu0 0.0
    %4247 = vmatprep.subr.mxu0 0.0
    %4248 = vmatpush1.msra.mxu0 0.0
    %4249 = vmatprep.subr.mxu0 0.0
    %4250 = vmatpush1.msra.mxu0 0.0
    %4251 = vmatprep.subr.mxu0 0.0
    %4252 = vmatpush1.msra.mxu0 0.0
    %4253 = vmatprep.subr.mxu0 0.0
    %4254 = vmatpush1.msra.mxu0 0.0
    %4255 = vmatprep.subr.mxu0 0.0
    %4256 = vmatpush1.msra.mxu0 0.0
    %4257 = vmatprep.subr.mxu0 0.0
    %4258 = vmatpush1.msra.mxu0 0.0
    %4259 = vmatprep.subr.mxu0 0.0
    %4260 = vmatpush1.msra.mxu0 0.0
    %4261 = vmatprep.subr.mxu0 0.0
    %4262 = vmatpush1.msra.mxu0 0.0
    %4263 = vmatprep.subr.mxu0 0.0
    %4264 = vmatpush1.msra.mxu0 0.0
    %4265 = vmatprep.subr.mxu0 0.0
    %4266 = vmatpush1.msra.mxu0 0.0
    %4267 = vmatprep.subr.mxu0 0.0
    %4268 = vmatpush1.msra.mxu0 0.0
    %4269 = vmatprep.subr.mxu0 0.0
    %4270 = vmatpush1.msra.mxu0 0.0
    %4271 = vmatprep.subr.mxu0 0.0
    %4272 = vmatpush1.msra.mxu0 0.0
    %4273 = vmatprep.subr.mxu0 0.0
    %4274 = vmatpush1.msra.mxu0 0.0
    %4275 = vmatprep.subr.mxu0 0.0
    %4276 = vmatpush1.msra.mxu0 0.0
    %4277 = vmatprep.subr.mxu0 0.0
    %4278 = vmatpush1.msra.mxu0 0.0
    %4279 = vmatprep.mubr.f32.mxu0 0.0
    %4280 = vmatmul.mubr.f32.gmra.mrb[0].mxu0 %v4210
    %v4281 = vpop.f32.mrb[0].mxu0
    %v4282 = vadd.f32 %v4207, %v4281
    %v4283 = vpop.f32.mrb[0].mxu0
    %4284 = vmatprep.mubr.f32.mxu0 0.0
    %4285 = vmatmul.mubr.f32.gmra.mrb[0].mxu0 %v4213
    %v4286 = vpop.f32.mrb[0].mxu0
    %v4287 = vadd.f32 %v4207, %v4286
    %v4288 = vpop.f32.mrb[0].mxu0
    %4289 = vdwg.mxu0
    %v4290 = vmax.f32 %v4282, 0.0
    %v4291 = vmax.f32 %v4287, 0.0
    %v4293 = vlaneseq
    %v4294 = vshrl.u32 %v4293, 7
    %v4295 = vsub.s32 0, %v4294
    %v4296 = vrot.slane %v4202, %v4295
    %v4299 = vsel %vm1195, %v4290, 0
    %v4302 = vsel %vm1195, %v4291, 0
    %4304 = vmatprep.subr.mxu0 0.0
    %4305 = vmatpush1.msra.mxu0 %v4194
    %4306 = vmatprep.subr.mxu0 0.0
    %4307 = vmatpush1.msra.mxu0 %v4195
    %4308 = vmatprep.subr.mxu0 0.0
    %4309 = vmatpush1.msra.mxu0 %v4196
    %4310 = vmatprep.subr.mxu0 0.0
    %4311 = vmatpush1.msra.mxu0 %v4197
    %4312 = vmatprep.subr.mxu0 0.0
    %4313 = vmatpush1.msra.mxu0 %v4198
    %4314 = vmatprep.subr.mxu0 0.0
    %4315 = vmatpush1.msra.mxu0 %v4199
    %4316 = vmatprep.subr.mxu0 0.0
    %4317 = vmatpush1.msra.mxu0 %v4200
    %4318 = vmatprep.subr.mxu0 0.0
    %4319 = vmatpush1.msra.mxu0 %v4201
    %4320 = vmatprep.subr.mxu0 0.0
    %4321 = vmatpush1.msra.mxu0 0.0
    %4322 = vmatprep.subr.mxu0 0.0
    %4323 = vmatpush1.msra.mxu0 0.0
    %4324 = vmatprep.subr.mxu0 0.0
    %4325 = vmatpush1.msra.mxu0 0.0
    %4326 = vmatprep.subr.mxu0 0.0
    %4327 = vmatpush1.msra.mxu0 0.0
    %4328 = vmatprep.subr.mxu0 0.0
    %4329 = vmatpush1.msra.mxu0 0.0
    %4330 = vmatprep.subr.mxu0 0.0
    %4331 = vmatpush1.msra.mxu0 0.0
    %4332 = vmatprep.subr.mxu0 0.0
    %4333 = vmatpush1.msra.mxu0 0.0
    %4334 = vmatprep.subr.mxu0 0.0
    %4335 = vmatpush1.msra.mxu0 0.0
    %4336 = vmatprep.subr.mxu0 0.0
    %4337 = vmatpush1.msra.mxu0 0.0
    %4338 = vmatprep.subr.mxu0 0.0
    %4339 = vmatpush1.msra.mxu0 0.0
    %4340 = vmatprep.subr.mxu0 0.0
    %4341 = vmatpush1.msra.mxu0 0.0
    %4342 = vmatprep.subr.mxu0 0.0
    %4343 = vmatpush1.msra.mxu0 0.0
    %4344 = vmatprep.subr.mxu0 0.0
    %4345 = vmatpush1.msra.mxu0 0.0
    %4346 = vmatprep.subr.mxu0 0.0
    %4347 = vmatpush1.msra.mxu0 0.0
    %4348 = vmatprep.subr.mxu0 0.0
    %4349 = vmatpush1.msra.mxu0 0.0
    %4350 = vmatprep.subr.mxu0 0.0
    %4351 = vmatpush1.msra.mxu0 0.0
    %4352 = vmatprep.subr.mxu0 0.0
    %4353 = vmatpush1.msra.mxu0 0.0
    %4354 = vmatprep.subr.mxu0 0.0
    %4355 = vmatpush1.msra.mxu0 0.0
    %4356 = vmatprep.subr.mxu0 0.0
    %4357 = vmatpush1.msra.mxu0 0.0
    %4358 = vmatprep.subr.mxu0 0.0
    %4359 = vmatpush1.msra.mxu0 0.0
    %4360 = vmatprep.subr.mxu0 0.0
    %4361 = vmatpush1.msra.mxu0 0.0
    %4362 = vmatprep.subr.mxu0 0.0
    %4363 = vmatpush1.msra.mxu0 0.0
    %4364 = vmatprep.subr.mxu0 0.0
    %4365 = vmatpush1.msra.mxu0 0.0
    %4366 = vmatprep.subr.mxu0 0.0
    %4367 = vmatpush1.msra.mxu0 0.0
    %4368 = vmatprep.mubr.f32.mxu0 0.0
    %4369 = vmatmul.mubr.f32.gmra.mrb[0].mxu0 %v4299
    %v4370 = vpop.f32.mrb[0].mxu0
    %v4371 = vadd.f32 %v4296, %v4370
    %v4372 = vpop.f32.mrb[0].mxu0
    %4373 = vmatprep.mubr.f32.mxu0 0.0
    %4374 = vmatmul.mubr.f32.gmra.mrb[0].mxu0 %v4302
    %v4375 = vpop.f32.mrb[0].mxu0
    %v4376 = vadd.f32 %v4296, %v4375
    %v4377 = vpop.f32.mrb[0].mxu0
    %4378 = vdwg.mxu0
    %v4379 = vadd.f32 %v4143, %v4371
    %v4380 = vadd.f32 %v4144, %v4376
    %s4381 = scalar_lea.vmem %s35, 1
    %v4382 = vld [vmem:[%s4381] sm:$0x1]
    %s4383 = scalar_lea.vmem %s37, 1
    %v4384 = vld [vmem:[%s4383] sm:$0x1]
    %v4385 = vsel %vm183, %v4379, 0.0
    %4386 = vadd.xlane.f32.xlu0 %v4385
    %v4387 = vpop.xlane.xlu0 %4386
    %v4388 = vsel %vm183, %v4380, 0.0
    %4389 = vadd.xlane.f32.xlu0 %v4388
    %v4390 = vpop.xlane.xlu0 %4389
    %v4391 = vmul.f32 %v4387, %v190
    %v4392 = vmul.f32 %v4390, %v190
    %v4393 = vsub.f32 %v4379, %v4391
    %v4394 = vsub.f32 %v4380, %v4392
    %v4395 = vmul.f32 %v4393, %v4393
    %v4396 = vmul.f32 %v4394, %v4394
    %v4397 = vsel %vm183, %v4395, 0.0
    %4398 = vadd.xlane.f32.xlu0 %v4397
    %v4399 = vpop.xlane.xlu0 %4398
    %v4400 = vsel %vm183, %v4396, 0.0
    %4401 = vadd.xlane.f32.xlu0 %v4400
    %v4402 = vpop.xlane.xlu0 %4401
    %v4403 = vmul.f32 %v4399, %v190
    %v4404 = vmul.f32 %v4402, %v190
    %v4405 = vadd.f32 %v4403, 1e-05
    %v4406 = vadd.f32 %v4404, 1e-05
    %v4407 = vrsqrt.pop %v4405
    %v4408 = vrsqrt.pop %v4406
    %v4409 = vmul.f32 %v4393, %v4407
    %v4410 = vmul.f32 %v4394, %v4408
    %v4412 = vlaneseq
    %v4413 = vshrl.u32 %v4412, 7
    %v4414 = vsub.s32 0, %v4413
    %v4415 = vrot.slane %v4382, %v4414
    %v4417 = vmul.f32 %v4409, %v4415
    %v4418 = vmul.f32 %v4410, %v4415
    %v4420 = vlaneseq
    %v4421 = vshrl.u32 %v4420, 7
    %v4422 = vsub.s32 0, %v4421
    %v4423 = vrot.slane %v4384, %v4422
    %v4425 = vadd.f32 %v4417, %v4423
    %v4426 = vadd.f32 %v4418, %v4423
    %v4427 = vmul.f32 %v4425, 0.35355338
    %v4428 = vmul.f32 %v4426, 0.35355338
    %v4430 = vsel %vm229, %v4427, 0
    %v4433 = vsel %vm229, %v4428, 0
    %v4436 = vsel %vm229, %v4425, 0
    %v4439 = vsel %vm229, %v4426, 0
    %4441 = vmatprep.subr.mxu0 0.0
    %4442 = vmatpush1.xpose.msra.mxu0 %v4436
    %4443 = vmatprep.subr.mxu0 0.0
    %4444 = vmatpush1.xpose.msra.mxu0 %v4439
    %4445 = vmatprep.subr.mxu0 0.0
    %4446 = vmatpush1.xpose.msra.mxu0 0.0
    %4447 = vmatprep.subr.mxu0 0.0
    %4448 = vmatpush1.xpose.msra.mxu0 0.0
    %4449 = vmatprep.subr.mxu0 0.0
    %4450 = vmatpush1.xpose.msra.mxu0 0.0
    %4451 = vmatprep.subr.mxu0 0.0
    %4452 = vmatpush1.xpose.msra.mxu0 0.0
    %4453 = vmatprep.subr.mxu0 0.0
    %4454 = vmatpush1.xpose.msra.mxu0 0.0
    %4455 = vmatprep.subr.mxu0 0.0
    %4456 = vmatpush1.xpose.msra.mxu0 0.0
    %4457 = vmatprep.subr.mxu0 0.0
    %4458 = vmatpush1.xpose.msra.mxu0 0.0
    %4459 = vmatprep.subr.mxu0 0.0
    %4460 = vmatpush1.xpose.msra.mxu0 0.0
    %4461 = vmatprep.subr.mxu0 0.0
    %4462 = vmatpush1.xpose.msra.mxu0 0.0
    %4463 = vmatprep.subr.mxu0 0.0
    %4464 = vmatpush1.xpose.msra.mxu0 0.0
    %4465 = vmatprep.subr.mxu0 0.0
    %4466 = vmatpush1.xpose.msra.mxu0 0.0
    %4467 = vmatprep.subr.mxu0 0.0
    %4468 = vmatpush1.xpose.msra.mxu0 0.0
    %4469 = vmatprep.subr.mxu0 0.0
    %4470 = vmatpush1.xpose.msra.mxu0 0.0
    %4471 = vmatprep.subr.mxu0 0.0
    %4472 = vmatpush1.xpose.msra.mxu0 0.0
    %4473 = vmatprep.subr.mxu0 0.0
    %4474 = vmatpush1.xpose.msra.mxu0 0.0
    %4475 = vmatprep.subr.mxu0 0.0
    %4476 = vmatpush1.xpose.msra.mxu0 0.0
    %4477 = vmatprep.subr.mxu0 0.0
    %4478 = vmatpush1.xpose.msra.mxu0 0.0
    %4479 = vmatprep.subr.mxu0 0.0
    %4480 = vmatpush1.xpose.msra.mxu0 0.0
    %4481 = vmatprep.subr.mxu0 0.0
    %4482 = vmatpush1.xpose.msra.mxu0 0.0
    %4483 = vmatprep.subr.mxu0 0.0
    %4484 = vmatpush1.xpose.msra.mxu0 0.0
    %4485 = vmatprep.subr.mxu0 0.0
    %4486 = vmatpush1.xpose.msra.mxu0 0.0
    %4487 = vmatprep.subr.mxu0 0.0
    %4488 = vmatpush1.xpose.msra.mxu0 0.0
    %4489 = vmatprep.subr.mxu0 0.0
    %4490 = vmatpush1.xpose.msra.mxu0 0.0
    %4491 = vmatprep.subr.mxu0 0.0
    %4492 = vmatpush1.xpose.msra.mxu0 0.0
    %4493 = vmatprep.subr.mxu0 0.0
    %4494 = vmatpush1.xpose.msra.mxu0 0.0
    %4495 = vmatprep.subr.mxu0 0.0
    %4496 = vmatpush1.xpose.msra.mxu0 0.0
    %4497 = vmatprep.subr.mxu0 0.0
    %4498 = vmatpush1.xpose.msra.mxu0 0.0
    %4499 = vmatprep.subr.mxu0 0.0
    %4500 = vmatpush1.xpose.msra.mxu0 0.0
    %4501 = vmatprep.subr.mxu0 0.0
    %4502 = vmatpush1.xpose.msra.mxu0 0.0
    %4503 = vmatprep.subr.mxu0 0.0
    %4504 = vmatpush1.xpose.msra.mxu0 0.0
    %4505 = vmatprep.mubr.f32.mxu0 0.0
    %4506 = vmatmul.mubr.f32.gmra.mrb[0].mxu0 %v4430
    %v4507 = vpop.f32.mrb[0].mxu0
    %v4508 = vadd.f32 %v157, %v4507
    %v4509 = vpop.f32.mrb[0].mxu0
    %4510 = vmatprep.mubr.f32.mxu0 0.0
    %4511 = vmatmul.mubr.f32.gmra.mrb[0].mxu0 %v4433
    %v4512 = vpop.f32.mrb[0].mxu0
    %v4513 = vadd.f32 %v158, %v4512
    %v4514 = vpop.f32.mrb[0].mxu0
    %4515 = vdwg.mxu0
    %v4516 = vsel %vm317, %v4508, -inf
    %4517 = vmax.xlane.f32.xlu0 %v4516
    %v4518 = vpop.xlane.xlu0 %4517
    %v4519 = vsel %vm317, %v4513, -inf
    %4520 = vmax.xlane.f32.xlu0 %v4519
    %v4521 = vpop.xlane.xlu0 %4520
    %v4522 = vsub.f32 %v4508, %v4518
    %v4523 = vsub.f32 %v4513, %v4521
    %v4524 = vmul.f32 %v4522, 1.442695
    %v4525 = vpow.pop %v4524
    %v4526 = vmul.f32 %v4523, 1.442695
    %v4527 = vpow.pop %v4526
    %v4528 = vsel %vm317, %v4525, 0.0
    %4529 = vadd.xlane.f32.xlu0 %v4528
    %v4530 = vpop.xlane.xlu0 %4529
    %v4531 = vsel %vm317, %v4527, 0.0
    %4532 = vadd.xlane.f32.xlu0 %v4531
    %v4533 = vpop.xlane.xlu0 %4532
    %v4534 = vrcp.pop %v4530
    %v4535 = vmul.f32 %v4525, %v4534
    %v4536 = vrcp.pop %v4533
    %v4537 = vmul.f32 %v4527, %v4536
    %v4539 = vsel %vm317, %v4535, 0
    %v4542 = vsel %vm317, %v4537, 0
    %4544 = vmatprep.subr.mxu0 0.0
    %4545 = vmatpush1.msra.mxu0 %v4425
    %4546 = vmatprep.subr.mxu0 0.0
    %4547 = vmatpush1.msra.mxu0 %v4426
    %4548 = vmatprep.subr.mxu0 0.0
    %4549 = vmatpush1.msra.mxu0 0.0
    %4550 = vmatprep.subr.mxu0 0.0
    %4551 = vmatpush1.msra.mxu0 0.0
    %4552 = vmatprep.subr.mxu0 0.0
    %4553 = vmatpush1.msra.mxu0 0.0
    %4554 = vmatprep.subr.mxu0 0.0
    %4555 = vmatpush1.msra.mxu0 0.0
    %4556 = vmatprep.subr.mxu0 0.0
    %4557 = vmatpush1.msra.mxu0 0.0
    %4558 = vmatprep.subr.mxu0 0.0
    %4559 = vmatpush1.msra.mxu0 0.0
    %4560 = vmatprep.subr.mxu0 0.0
    %4561 = vmatpush1.msra.mxu0 0.0
    %4562 = vmatprep.subr.mxu0 0.0
    %4563 = vmatpush1.msra.mxu0 0.0
    %4564 = vmatprep.subr.mxu0 0.0
    %4565 = vmatpush1.msra.mxu0 0.0
    %4566 = vmatprep.subr.mxu0 0.0
    %4567 = vmatpush1.msra.mxu0 0.0
    %4568 = vmatprep.subr.mxu0 0.0
    %4569 = vmatpush1.msra.mxu0 0.0
    %4570 = vmatprep.subr.mxu0 0.0
    %4571 = vmatpush1.msra.mxu0 0.0
    %4572 = vmatprep.subr.mxu0 0.0
    %4573 = vmatpush1.msra.mxu0 0.0
    %4574 = vmatprep.subr.mxu0 0.0
    %4575 = vmatpush1.msra.mxu0 0.0
    %4576 = vmatprep.subr.mxu0 0.0
    %4577 = vmatpush1.msra.mxu0 0.0
    %4578 = vmatprep.subr.mxu0 0.0
    %4579 = vmatpush1.msra.mxu0 0.0
    %4580 = vmatprep.subr.mxu0 0.0
    %4581 = vmatpush1.msra.mxu0 0.0
    %4582 = vmatprep.subr.mxu0 0.0
    %4583 = vmatpush1.msra.mxu0 0.0
    %4584 = vmatprep.subr.mxu0 0.0
    %4585 = vmatpush1.msra.mxu0 0.0
    %4586 = vmatprep.subr.mxu0 0.0
    %4587 = vmatpush1.msra.mxu0 0.0
    %4588 = vmatprep.subr.mxu0 0.0
    %4589 = vmatpush1.msra.mxu0 0.0
    %4590 = vmatprep.subr.mxu0 0.0
    %4591 = vmatpush1.msra.mxu0 0.0
    %4592 = vmatprep.subr.mxu0 0.0
    %4593 = vmatpush1.msra.mxu0 0.0
    %4594 = vmatprep.subr.mxu0 0.0
    %4595 = vmatpush1.msra.mxu0 0.0
    %4596 = vmatprep.subr.mxu0 0.0
    %4597 = vmatpush1.msra.mxu0 0.0
    %4598 = vmatprep.subr.mxu0 0.0
    %4599 = vmatpush1.msra.mxu0 0.0
    %4600 = vmatprep.subr.mxu0 0.0
    %4601 = vmatpush1.msra.mxu0 0.0
    %4602 = vmatprep.subr.mxu0 0.0
    %4603 = vmatpush1.msra.mxu0 0.0
    %4604 = vmatprep.subr.mxu0 0.0
    %4605 = vmatpush1.msra.mxu0 0.0
    %4606 = vmatprep.subr.mxu0 0.0
    %4607 = vmatpush1.msra.mxu0 0.0
    %4608 = vmatprep.mubr.f32.mxu0 0.0
    %4609 = vmatmul.mubr.f32.gmra.mrb[0].mxu0 %v4539
    %v4610 = vpop.f32.mrb[0].mxu0
    %v4611 = vadd.f32 0.0, %v4610
    %v4612 = vpop.f32.mrb[0].mxu0
    %4613 = vmatprep.mubr.f32.mxu0 0.0
    %4614 = vmatmul.mubr.f32.gmra.mrb[0].mxu0 %v4542
    %v4615 = vpop.f32.mrb[0].mxu0
    %v4616 = vadd.f32 0.0, %v4615
    %v4617 = vpop.f32.mrb[0].mxu0
    %4618 = vdwg.mxu0
    %4619 = vrot.lane.b32.xlu0 %v4427, 120
    %v4620 = vpop.permute.xlu0 %4619
    %4621 = vrot.lane.b32.xlu0 %v4428, 120
    %v4622 = vpop.permute.xlu0 %4621
    %4623 = vrot.lane.b32.xlu0 %v4425, 120
    %v4624 = vpop.permute.xlu0 %4623
    %4625 = vrot.lane.b32.xlu0 %v4426, 120
    %v4626 = vpop.permute.xlu0 %4625
    %v4627 = vsel %vm229, %v4620, 0
    %v4629 = vsel %vm229, %v4622, 0
    %v4631 = vsel %vm229, %v4624, 0
    %v4633 = vsel %vm229, %v4626, 0
    %4635 = vmatprep.subr.mxu0 0.0
    %4636 = vmatpush1.xpose.msra.mxu0 %v4631
    %4637 = vmatprep.subr.mxu0 0.0
    %4638 = vmatpush1.xpose.msra.mxu0 %v4633
    %4639 = vmatprep.subr.mxu0 0.0
    %4640 = vmatpush1.xpose.msra.mxu0 0.0
    %4641 = vmatprep.subr.mxu0 0.0
    %4642 = vmatpush1.xpose.msra.mxu0 0.0
    %4643 = vmatprep.subr.mxu0 0.0
    %4644 = vmatpush1.xpose.msra.mxu0 0.0
    %4645 = vmatprep.subr.mxu0 0.0
    %4646 = vmatpush1.xpose.msra.mxu0 0.0
    %4647 = vmatprep.subr.mxu0 0.0
    %4648 = vmatpush1.xpose.msra.mxu0 0.0
    %4649 = vmatprep.subr.mxu0 0.0
    %4650 = vmatpush1.xpose.msra.mxu0 0.0
    %4651 = vmatprep.subr.mxu0 0.0
    %4652 = vmatpush1.xpose.msra.mxu0 0.0
    %4653 = vmatprep.subr.mxu0 0.0
    %4654 = vmatpush1.xpose.msra.mxu0 0.0
    %4655 = vmatprep.subr.mxu0 0.0
    %4656 = vmatpush1.xpose.msra.mxu0 0.0
    %4657 = vmatprep.subr.mxu0 0.0
    %4658 = vmatpush1.xpose.msra.mxu0 0.0
    %4659 = vmatprep.subr.mxu0 0.0
    %4660 = vmatpush1.xpose.msra.mxu0 0.0
    %4661 = vmatprep.subr.mxu0 0.0
    %4662 = vmatpush1.xpose.msra.mxu0 0.0
    %4663 = vmatprep.subr.mxu0 0.0
    %4664 = vmatpush1.xpose.msra.mxu0 0.0
    %4665 = vmatprep.subr.mxu0 0.0
    %4666 = vmatpush1.xpose.msra.mxu0 0.0
    %4667 = vmatprep.subr.mxu0 0.0
    %4668 = vmatpush1.xpose.msra.mxu0 0.0
    %4669 = vmatprep.subr.mxu0 0.0
    %4670 = vmatpush1.xpose.msra.mxu0 0.0
    %4671 = vmatprep.subr.mxu0 0.0
    %4672 = vmatpush1.xpose.msra.mxu0 0.0
    %4673 = vmatprep.subr.mxu0 0.0
    %4674 = vmatpush1.xpose.msra.mxu0 0.0
    %4675 = vmatprep.subr.mxu0 0.0
    %4676 = vmatpush1.xpose.msra.mxu0 0.0
    %4677 = vmatprep.subr.mxu0 0.0
    %4678 = vmatpush1.xpose.msra.mxu0 0.0
    %4679 = vmatprep.subr.mxu0 0.0
    %4680 = vmatpush1.xpose.msra.mxu0 0.0
    %4681 = vmatprep.subr.mxu0 0.0
    %4682 = vmatpush1.xpose.msra.mxu0 0.0
    %4683 = vmatprep.subr.mxu0 0.0
    %4684 = vmatpush1.xpose.msra.mxu0 0.0
    %4685 = vmatprep.subr.mxu0 0.0
    %4686 = vmatpush1.xpose.msra.mxu0 0.0
    %4687 = vmatprep.subr.mxu0 0.0
    %4688 = vmatpush1.xpose.msra.mxu0 0.0
    %4689 = vmatprep.subr.mxu0 0.0
    %4690 = vmatpush1.xpose.msra.mxu0 0.0
    %4691 = vmatprep.subr.mxu0 0.0
    %4692 = vmatpush1.xpose.msra.mxu0 0.0
    %4693 = vmatprep.subr.mxu0 0.0
    %4694 = vmatpush1.xpose.msra.mxu0 0.0
    %4695 = vmatprep.subr.mxu0 0.0
    %4696 = vmatpush1.xpose.msra.mxu0 0.0
    %4697 = vmatprep.subr.mxu0 0.0
    %4698 = vmatpush1.xpose.msra.mxu0 0.0
    %4699 = vmatprep.mubr.f32.mxu0 0.0
    %4700 = vmatmul.mubr.f32.gmra.mrb[0].mxu0 %v4627
    %v4701 = vpop.f32.mrb[0].mxu0
    %v4702 = vadd.f32 %v157, %v4701
    %v4703 = vpop.f32.mrb[0].mxu0
    %4704 = vmatprep.mubr.f32.mxu0 0.0
    %4705 = vmatmul.mubr.f32.gmra.mrb[0].mxu0 %v4629
    %v4706 = vpop.f32.mrb[0].mxu0
    %v4707 = vadd.f32 %v158, %v4706
    %v4708 = vpop.f32.mrb[0].mxu0
    %4709 = vdwg.mxu0
    %v4710 = vsel %vm317, %v4702, -inf
    %4711 = vmax.xlane.f32.xlu0 %v4710
    %v4712 = vpop.xlane.xlu0 %4711
    %v4713 = vsel %vm317, %v4707, -inf
    %4714 = vmax.xlane.f32.xlu0 %v4713
    %v4715 = vpop.xlane.xlu0 %4714
    %v4716 = vsub.f32 %v4702, %v4712
    %v4717 = vsub.f32 %v4707, %v4715
    %v4718 = vmul.f32 %v4716, 1.442695
    %v4719 = vpow.pop %v4718
    %v4720 = vmul.f32 %v4717, 1.442695
    %v4721 = vpow.pop %v4720
    %v4722 = vsel %vm317, %v4719, 0.0
    %4723 = vadd.xlane.f32.xlu0 %v4722
    %v4724 = vpop.xlane.xlu0 %4723
    %v4725 = vsel %vm317, %v4721, 0.0
    %4726 = vadd.xlane.f32.xlu0 %v4725
    %v4727 = vpop.xlane.xlu0 %4726
    %v4728 = vrcp.pop %v4724
    %v4729 = vmul.f32 %v4719, %v4728
    %v4730 = vrcp.pop %v4727
    %v4731 = vmul.f32 %v4721, %v4730
    %v4735 = vsel %vm317, %v4729, 0
    %v4738 = vsel %vm317, %v4731, 0
    %4740 = vmatprep.subr.mxu0 0.0
    %4741 = vmatpush1.msra.mxu0 %v4624
    %4742 = vmatprep.subr.mxu0 0.0
    %4743 = vmatpush1.msra.mxu0 %v4626
    %4744 = vmatprep.subr.mxu0 0.0
    %4745 = vmatpush1.msra.mxu0 0.0
    %4746 = vmatprep.subr.mxu0 0.0
    %4747 = vmatpush1.msra.mxu0 0.0
    %4748 = vmatprep.subr.mxu0 0.0
    %4749 = vmatpush1.msra.mxu0 0.0
    %4750 = vmatprep.subr.mxu0 0.0
    %4751 = vmatpush1.msra.mxu0 0.0
    %4752 = vmatprep.subr.mxu0 0.0
    %4753 = vmatpush1.msra.mxu0 0.0
    %4754 = vmatprep.subr.mxu0 0.0
    %4755 = vmatpush1.msra.mxu0 0.0
    %4756 = vmatprep.subr.mxu0 0.0
    %4757 = vmatpush1.msra.mxu0 0.0
    %4758 = vmatprep.subr.mxu0 0.0
    %4759 = vmatpush1.msra.mxu0 0.0
    %4760 = vmatprep.subr.mxu0 0.0
    %4761 = vmatpush1.msra.mxu0 0.0
    %4762 = vmatprep.subr.mxu0 0.0
    %4763 = vmatpush1.msra.mxu0 0.0
    %4764 = vmatprep.subr.mxu0 0.0
    %4765 = vmatpush1.msra.mxu0 0.0
    %4766 = vmatprep.subr.mxu0 0.0
    %4767 = vmatpush1.msra.mxu0 0.0
    %4768 = vmatprep.subr.mxu0 0.0
    %4769 = vmatpush1.msra.mxu0 0.0
    %4770 = vmatprep.subr.mxu0 0.0
    %4771 = vmatpush1.msra.mxu0 0.0
    %4772 = vmatprep.subr.mxu0 0.0
    %4773 = vmatpush1.msra.mxu0 0.0
    %4774 = vmatprep.subr.mxu0 0.0
    %4775 = vmatpush1.msra.mxu0 0.0
    %4776 = vmatprep.subr.mxu0 0.0
    %4777 = vmatpush1.msra.mxu0 0.0
    %4778 = vmatprep.subr.mxu0 0.0
    %4779 = vmatpush1.msra.mxu0 0.0
    %4780 = vmatprep.subr.mxu0 0.0
    %4781 = vmatpush1.msra.mxu0 0.0
    %4782 = vmatprep.subr.mxu0 0.0
    %4783 = vmatpush1.msra.mxu0 0.0
    %4784 = vmatprep.subr.mxu0 0.0
    %4785 = vmatpush1.msra.mxu0 0.0
    %4786 = vmatprep.subr.mxu0 0.0
    %4787 = vmatpush1.msra.mxu0 0.0
    %4788 = vmatprep.subr.mxu0 0.0
    %4789 = vmatpush1.msra.mxu0 0.0
    %4790 = vmatprep.subr.mxu0 0.0
    %4791 = vmatpush1.msra.mxu0 0.0
    %4792 = vmatprep.subr.mxu0 0.0
    %4793 = vmatpush1.msra.mxu0 0.0
    %4794 = vmatprep.subr.mxu0 0.0
    %4795 = vmatpush1.msra.mxu0 0.0
    %4796 = vmatprep.subr.mxu0 0.0
    %4797 = vmatpush1.msra.mxu0 0.0
    %4798 = vmatprep.subr.mxu0 0.0
    %4799 = vmatpush1.msra.mxu0 0.0
    %4800 = vmatprep.subr.mxu0 0.0
    %4801 = vmatpush1.msra.mxu0 0.0
    %4802 = vmatprep.subr.mxu0 0.0
    %4803 = vmatpush1.msra.mxu0 0.0
    %4804 = vmatprep.mubr.f32.mxu0 0.0
    %4805 = vmatmul.mubr.f32.gmra.mrb[0].mxu0 %v4735
    %v4806 = vpop.f32.mrb[0].mxu0
    %v4807 = vadd.f32 0.0, %v4806
    %v4808 = vpop.f32.mrb[0].mxu0
    %4809 = vmatprep.mubr.f32.mxu0 0.0
    %4810 = vmatmul.mubr.f32.gmra.mrb[0].mxu0 %v4738
    %v4811 = vpop.f32.mrb[0].mxu0
    %v4812 = vadd.f32 0.0, %v4811
    %v4813 = vpop.f32.mrb[0].mxu0
    %4814 = vdwg.mxu0
    %4815 = vrot.lane.b32.xlu0 %v4427, 112
    %v4816 = vpop.permute.xlu0 %4815
    %4817 = vrot.lane.b32.xlu0 %v4428, 112
    %v4818 = vpop.permute.xlu0 %4817
    %4819 = vrot.lane.b32.xlu0 %v4425, 112
    %v4820 = vpop.permute.xlu0 %4819
    %4821 = vrot.lane.b32.xlu0 %v4426, 112
    %v4822 = vpop.permute.xlu0 %4821
    %v4823 = vsel %vm229, %v4816, 0
    %v4825 = vsel %vm229, %v4818, 0
    %v4827 = vsel %vm229, %v4820, 0
    %v4829 = vsel %vm229, %v4822, 0
    %4831 = vmatprep.subr.mxu0 0.0
    %4832 = vmatpush1.xpose.msra.mxu0 %v4827
    %4833 = vmatprep.subr.mxu0 0.0
    %4834 = vmatpush1.xpose.msra.mxu0 %v4829
    %4835 = vmatprep.subr.mxu0 0.0
    %4836 = vmatpush1.xpose.msra.mxu0 0.0
    %4837 = vmatprep.subr.mxu0 0.0
    %4838 = vmatpush1.xpose.msra.mxu0 0.0
    %4839 = vmatprep.subr.mxu0 0.0
    %4840 = vmatpush1.xpose.msra.mxu0 0.0
    %4841 = vmatprep.subr.mxu0 0.0
    %4842 = vmatpush1.xpose.msra.mxu0 0.0
    %4843 = vmatprep.subr.mxu0 0.0
    %4844 = vmatpush1.xpose.msra.mxu0 0.0
    %4845 = vmatprep.subr.mxu0 0.0
    %4846 = vmatpush1.xpose.msra.mxu0 0.0
    %4847 = vmatprep.subr.mxu0 0.0
    %4848 = vmatpush1.xpose.msra.mxu0 0.0
    %4849 = vmatprep.subr.mxu0 0.0
    %4850 = vmatpush1.xpose.msra.mxu0 0.0
    %4851 = vmatprep.subr.mxu0 0.0
    %4852 = vmatpush1.xpose.msra.mxu0 0.0
    %4853 = vmatprep.subr.mxu0 0.0
    %4854 = vmatpush1.xpose.msra.mxu0 0.0
    %4855 = vmatprep.subr.mxu0 0.0
    %4856 = vmatpush1.xpose.msra.mxu0 0.0
    %4857 = vmatprep.subr.mxu0 0.0
    %4858 = vmatpush1.xpose.msra.mxu0 0.0
    %4859 = vmatprep.subr.mxu0 0.0
    %4860 = vmatpush1.xpose.msra.mxu0 0.0
    %4861 = vmatprep.subr.mxu0 0.0
    %4862 = vmatpush1.xpose.msra.mxu0 0.0
    %4863 = vmatprep.subr.mxu0 0.0
    %4864 = vmatpush1.xpose.msra.mxu0 0.0
    %4865 = vmatprep.subr.mxu0 0.0
    %4866 = vmatpush1.xpose.msra.mxu0 0.0
    %4867 = vmatprep.subr.mxu0 0.0
    %4868 = vmatpush1.xpose.msra.mxu0 0.0
    %4869 = vmatprep.subr.mxu0 0.0
    %4870 = vmatpush1.xpose.msra.mxu0 0.0
    %4871 = vmatprep.subr.mxu0 0.0
    %4872 = vmatpush1.xpose.msra.mxu0 0.0
    %4873 = vmatprep.subr.mxu0 0.0
    %4874 = vmatpush1.xpose.msra.mxu0 0.0
    %4875 = vmatprep.subr.mxu0 0.0
    %4876 = vmatpush1.xpose.msra.mxu0 0.0
    %4877 = vmatprep.subr.mxu0 0.0
    %4878 = vmatpush1.xpose.msra.mxu0 0.0
    %4879 = vmatprep.subr.mxu0 0.0
    %4880 = vmatpush1.xpose.msra.mxu0 0.0
    %4881 = vmatprep.subr.mxu0 0.0
    %4882 = vmatpush1.xpose.msra.mxu0 0.0
    %4883 = vmatprep.subr.mxu0 0.0
    %4884 = vmatpush1.xpose.msra.mxu0 0.0
    %4885 = vmatprep.subr.mxu0 0.0
    %4886 = vmatpush1.xpose.msra.mxu0 0.0
    %4887 = vmatprep.subr.mxu0 0.0
    %4888 = vmatpush1.xpose.msra.mxu0 0.0
    %4889 = vmatprep.subr.mxu0 0.0
    %4890 = vmatpush1.xpose.msra.mxu0 0.0
    %4891 = vmatprep.subr.mxu0 0.0
    %4892 = vmatpush1.xpose.msra.mxu0 0.0
    %4893 = vmatprep.subr.mxu0 0.0
    %4894 = vmatpush1.xpose.msra.mxu0 0.0
    %4895 = vmatprep.mubr.f32.mxu0 0.0
    %4896 = vmatmul.mubr.f32.gmra.mrb[0].mxu0 %v4823
    %v4897 = vpop.f32.mrb[0].mxu0
    %v4898 = vadd.f32 %v157, %v4897
    %v4899 = vpop.f32.mrb[0].mxu0
    %4900 = vmatprep.mubr.f32.mxu0 0.0
    %4901 = vmatmul.mubr.f32.gmra.mrb[0].mxu0 %v4825
    %v4902 = vpop.f32.mrb[0].mxu0
    %v4903 = vadd.f32 %v158, %v4902
    %v4904 = vpop.f32.mrb[0].mxu0
    %4905 = vdwg.mxu0
    %v4906 = vsel %vm317, %v4898, -inf
    %4907 = vmax.xlane.f32.xlu0 %v4906
    %v4908 = vpop.xlane.xlu0 %4907
    %v4909 = vsel %vm317, %v4903, -inf
    %4910 = vmax.xlane.f32.xlu0 %v4909
    %v4911 = vpop.xlane.xlu0 %4910
    %v4912 = vsub.f32 %v4898, %v4908
    %v4913 = vsub.f32 %v4903, %v4911
    %v4914 = vmul.f32 %v4912, 1.442695
    %v4915 = vpow.pop %v4914
    %v4916 = vmul.f32 %v4913, 1.442695
    %v4917 = vpow.pop %v4916
    %v4918 = vsel %vm317, %v4915, 0.0
    %4919 = vadd.xlane.f32.xlu0 %v4918
    %v4920 = vpop.xlane.xlu0 %4919
    %v4921 = vsel %vm317, %v4917, 0.0
    %4922 = vadd.xlane.f32.xlu0 %v4921
    %v4923 = vpop.xlane.xlu0 %4922
    %v4924 = vrcp.pop %v4920
    %v4925 = vmul.f32 %v4915, %v4924
    %v4926 = vrcp.pop %v4923
    %v4927 = vmul.f32 %v4917, %v4926
    %v4931 = vsel %vm317, %v4925, 0
    %v4934 = vsel %vm317, %v4927, 0
    %4936 = vmatprep.subr.mxu0 0.0
    %4937 = vmatpush1.msra.mxu0 %v4820
    %4938 = vmatprep.subr.mxu0 0.0
    %4939 = vmatpush1.msra.mxu0 %v4822
    %4940 = vmatprep.subr.mxu0 0.0
    %4941 = vmatpush1.msra.mxu0 0.0
    %4942 = vmatprep.subr.mxu0 0.0
    %4943 = vmatpush1.msra.mxu0 0.0
    %4944 = vmatprep.subr.mxu0 0.0
    %4945 = vmatpush1.msra.mxu0 0.0
    %4946 = vmatprep.subr.mxu0 0.0
    %4947 = vmatpush1.msra.mxu0 0.0
    %4948 = vmatprep.subr.mxu0 0.0
    %4949 = vmatpush1.msra.mxu0 0.0
    %4950 = vmatprep.subr.mxu0 0.0
    %4951 = vmatpush1.msra.mxu0 0.0
    %4952 = vmatprep.subr.mxu0 0.0
    %4953 = vmatpush1.msra.mxu0 0.0
    %4954 = vmatprep.subr.mxu0 0.0
    %4955 = vmatpush1.msra.mxu0 0.0
    %4956 = vmatprep.subr.mxu0 0.0
    %4957 = vmatpush1.msra.mxu0 0.0
    %4958 = vmatprep.subr.mxu0 0.0
    %4959 = vmatpush1.msra.mxu0 0.0
    %4960 = vmatprep.subr.mxu0 0.0
    %4961 = vmatpush1.msra.mxu0 0.0
    %4962 = vmatprep.subr.mxu0 0.0
    %4963 = vmatpush1.msra.mxu0 0.0
    %4964 = vmatprep.subr.mxu0 0.0
    %4965 = vmatpush1.msra.mxu0 0.0
    %4966 = vmatprep.subr.mxu0 0.0
    %4967 = vmatpush1.msra.mxu0 0.0
    %4968 = vmatprep.subr.mxu0 0.0
    %4969 = vmatpush1.msra.mxu0 0.0
    %4970 = vmatprep.subr.mxu0 0.0
    %4971 = vmatpush1.msra.mxu0 0.0
    %4972 = vmatprep.subr.mxu0 0.0
    %4973 = vmatpush1.msra.mxu0 0.0
    %4974 = vmatprep.subr.mxu0 0.0
    %4975 = vmatpush1.msra.mxu0 0.0
    %4976 = vmatprep.subr.mxu0 0.0
    %4977 = vmatpush1.msra.mxu0 0.0
    %4978 = vmatprep.subr.mxu0 0.0
    %4979 = vmatpush1.msra.mxu0 0.0
    %4980 = vmatprep.subr.mxu0 0.0
    %4981 = vmatpush1.msra.mxu0 0.0
    %4982 = vmatprep.subr.mxu0 0.0
    %4983 = vmatpush1.msra.mxu0 0.0
    %4984 = vmatprep.subr.mxu0 0.0
    %4985 = vmatpush1.msra.mxu0 0.0
    %4986 = vmatprep.subr.mxu0 0.0
    %4987 = vmatpush1.msra.mxu0 0.0
    %4988 = vmatprep.subr.mxu0 0.0
    %4989 = vmatpush1.msra.mxu0 0.0
    %4990 = vmatprep.subr.mxu0 0.0
    %4991 = vmatpush1.msra.mxu0 0.0
    %4992 = vmatprep.subr.mxu0 0.0
    %4993 = vmatpush1.msra.mxu0 0.0
    %4994 = vmatprep.subr.mxu0 0.0
    %4995 = vmatpush1.msra.mxu0 0.0
    %4996 = vmatprep.subr.mxu0 0.0
    %4997 = vmatpush1.msra.mxu0 0.0
    %4998 = vmatprep.subr.mxu0 0.0
    %4999 = vmatpush1.msra.mxu0 0.0
    %5000 = vmatprep.mubr.f32.mxu0 0.0
    %5001 = vmatmul.mubr.f32.gmra.mrb[0].mxu0 %v4931
    %v5002 = vpop.f32.mrb[0].mxu0
    %v5003 = vadd.f32 0.0, %v5002
    %v5004 = vpop.f32.mrb[0].mxu0
    %5005 = vmatprep.mubr.f32.mxu0 0.0
    %5006 = vmatmul.mubr.f32.gmra.mrb[0].mxu0 %v4934
    %v5007 = vpop.f32.mrb[0].mxu0
    %v5008 = vadd.f32 0.0, %v5007
    %v5009 = vpop.f32.mrb[0].mxu0
    %5010 = vdwg.mxu0
    %5011 = vrot.lane.b32.xlu0 %v4427, 104
    %v5012 = vpop.permute.xlu0 %5011
    %5013 = vrot.lane.b32.xlu0 %v4428, 104
    %v5014 = vpop.permute.xlu0 %5013
    %5015 = vrot.lane.b32.xlu0 %v4425, 104
    %v5016 = vpop.permute.xlu0 %5015
    %5017 = vrot.lane.b32.xlu0 %v4426, 104
    %v5018 = vpop.permute.xlu0 %5017
    %v5019 = vsel %vm229, %v5012, 0
    %v5021 = vsel %vm229, %v5014, 0
    %v5023 = vsel %vm229, %v5016, 0
    %v5025 = vsel %vm229, %v5018, 0
    %5027 = vmatprep.subr.mxu0 0.0
    %5028 = vmatpush1.xpose.msra.mxu0 %v5023
    %5029 = vmatprep.subr.mxu0 0.0
    %5030 = vmatpush1.xpose.msra.mxu0 %v5025
    %5031 = vmatprep.subr.mxu0 0.0
    %5032 = vmatpush1.xpose.msra.mxu0 0.0
    %5033 = vmatprep.subr.mxu0 0.0
    %5034 = vmatpush1.xpose.msra.mxu0 0.0
    %5035 = vmatprep.subr.mxu0 0.0
    %5036 = vmatpush1.xpose.msra.mxu0 0.0
    %5037 = vmatprep.subr.mxu0 0.0
    %5038 = vmatpush1.xpose.msra.mxu0 0.0
    %5039 = vmatprep.subr.mxu0 0.0
    %5040 = vmatpush1.xpose.msra.mxu0 0.0
    %5041 = vmatprep.subr.mxu0 0.0
    %5042 = vmatpush1.xpose.msra.mxu0 0.0
    %5043 = vmatprep.subr.mxu0 0.0
    %5044 = vmatpush1.xpose.msra.mxu0 0.0
    %5045 = vmatprep.subr.mxu0 0.0
    %5046 = vmatpush1.xpose.msra.mxu0 0.0
    %5047 = vmatprep.subr.mxu0 0.0
    %5048 = vmatpush1.xpose.msra.mxu0 0.0
    %5049 = vmatprep.subr.mxu0 0.0
    %5050 = vmatpush1.xpose.msra.mxu0 0.0
    %5051 = vmatprep.subr.mxu0 0.0
    %5052 = vmatpush1.xpose.msra.mxu0 0.0
    %5053 = vmatprep.subr.mxu0 0.0
    %5054 = vmatpush1.xpose.msra.mxu0 0.0
    %5055 = vmatprep.subr.mxu0 0.0
    %5056 = vmatpush1.xpose.msra.mxu0 0.0
    %5057 = vmatprep.subr.mxu0 0.0
    %5058 = vmatpush1.xpose.msra.mxu0 0.0
    %5059 = vmatprep.subr.mxu0 0.0
    %5060 = vmatpush1.xpose.msra.mxu0 0.0
    %5061 = vmatprep.subr.mxu0 0.0
    %5062 = vmatpush1.xpose.msra.mxu0 0.0
    %5063 = vmatprep.subr.mxu0 0.0
    %5064 = vmatpush1.xpose.msra.mxu0 0.0
    %5065 = vmatprep.subr.mxu0 0.0
    %5066 = vmatpush1.xpose.msra.mxu0 0.0
    %5067 = vmatprep.subr.mxu0 0.0
    %5068 = vmatpush1.xpose.msra.mxu0 0.0
    %5069 = vmatprep.subr.mxu0 0.0
    %5070 = vmatpush1.xpose.msra.mxu0 0.0
    %5071 = vmatprep.subr.mxu0 0.0
    %5072 = vmatpush1.xpose.msra.mxu0 0.0
    %5073 = vmatprep.subr.mxu0 0.0
    %5074 = vmatpush1.xpose.msra.mxu0 0.0
    %5075 = vmatprep.subr.mxu0 0.0
    %5076 = vmatpush1.xpose.msra.mxu0 0.0
    %5077 = vmatprep.subr.mxu0 0.0
    %5078 = vmatpush1.xpose.msra.mxu0 0.0
    %5079 = vmatprep.subr.mxu0 0.0
    %5080 = vmatpush1.xpose.msra.mxu0 0.0
    %5081 = vmatprep.subr.mxu0 0.0
    %5082 = vmatpush1.xpose.msra.mxu0 0.0
    %5083 = vmatprep.subr.mxu0 0.0
    %5084 = vmatpush1.xpose.msra.mxu0 0.0
    %5085 = vmatprep.subr.mxu0 0.0
    %5086 = vmatpush1.xpose.msra.mxu0 0.0
    %5087 = vmatprep.subr.mxu0 0.0
    %5088 = vmatpush1.xpose.msra.mxu0 0.0
    %5089 = vmatprep.subr.mxu0 0.0
    %5090 = vmatpush1.xpose.msra.mxu0 0.0
    %5091 = vmatprep.mubr.f32.mxu0 0.0
    %5092 = vmatmul.mubr.f32.gmra.mrb[0].mxu0 %v5019
    %v5093 = vpop.f32.mrb[0].mxu0
    %v5094 = vadd.f32 %v157, %v5093
    %v5095 = vpop.f32.mrb[0].mxu0
    %5096 = vmatprep.mubr.f32.mxu0 0.0
    %5097 = vmatmul.mubr.f32.gmra.mrb[0].mxu0 %v5021
    %v5098 = vpop.f32.mrb[0].mxu0
    %v5099 = vadd.f32 %v158, %v5098
    %v5100 = vpop.f32.mrb[0].mxu0
    %5101 = vdwg.mxu0
    %v5102 = vsel %vm317, %v5094, -inf
    %5103 = vmax.xlane.f32.xlu0 %v5102
    %v5104 = vpop.xlane.xlu0 %5103
    %v5105 = vsel %vm317, %v5099, -inf
    %5106 = vmax.xlane.f32.xlu0 %v5105
    %v5107 = vpop.xlane.xlu0 %5106
    %v5108 = vsub.f32 %v5094, %v5104
    %v5109 = vsub.f32 %v5099, %v5107
    %v5110 = vmul.f32 %v5108, 1.442695
    %v5111 = vpow.pop %v5110
    %v5112 = vmul.f32 %v5109, 1.442695
    %v5113 = vpow.pop %v5112
    %v5114 = vsel %vm317, %v5111, 0.0
    %5115 = vadd.xlane.f32.xlu0 %v5114
    %v5116 = vpop.xlane.xlu0 %5115
    %v5117 = vsel %vm317, %v5113, 0.0
    %5118 = vadd.xlane.f32.xlu0 %v5117
    %v5119 = vpop.xlane.xlu0 %5118
    %v5120 = vrcp.pop %v5116
    %v5121 = vmul.f32 %v5111, %v5120
    %v5122 = vrcp.pop %v5119
    %v5123 = vmul.f32 %v5113, %v5122
    %v5127 = vsel %vm317, %v5121, 0
    %v5130 = vsel %vm317, %v5123, 0
    %5132 = vmatprep.subr.mxu0 0.0
    %5133 = vmatpush1.msra.mxu0 %v5016
    %5134 = vmatprep.subr.mxu0 0.0
    %5135 = vmatpush1.msra.mxu0 %v5018
    %5136 = vmatprep.subr.mxu0 0.0
    %5137 = vmatpush1.msra.mxu0 0.0
    %5138 = vmatprep.subr.mxu0 0.0
    %5139 = vmatpush1.msra.mxu0 0.0
    %5140 = vmatprep.subr.mxu0 0.0
    %5141 = vmatpush1.msra.mxu0 0.0
    %5142 = vmatprep.subr.mxu0 0.0
    %5143 = vmatpush1.msra.mxu0 0.0
    %5144 = vmatprep.subr.mxu0 0.0
    %5145 = vmatpush1.msra.mxu0 0.0
    %5146 = vmatprep.subr.mxu0 0.0
    %5147 = vmatpush1.msra.mxu0 0.0
    %5148 = vmatprep.subr.mxu0 0.0
    %5149 = vmatpush1.msra.mxu0 0.0
    %5150 = vmatprep.subr.mxu0 0.0
    %5151 = vmatpush1.msra.mxu0 0.0
    %5152 = vmatprep.subr.mxu0 0.0
    %5153 = vmatpush1.msra.mxu0 0.0
    %5154 = vmatprep.subr.mxu0 0.0
    %5155 = vmatpush1.msra.mxu0 0.0
    %5156 = vmatprep.subr.mxu0 0.0
    %5157 = vmatpush1.msra.mxu0 0.0
    %5158 = vmatprep.subr.mxu0 0.0
    %5159 = vmatpush1.msra.mxu0 0.0
    %5160 = vmatprep.subr.mxu0 0.0
    %5161 = vmatpush1.msra.mxu0 0.0
    %5162 = vmatprep.subr.mxu0 0.0
    %5163 = vmatpush1.msra.mxu0 0.0
    %5164 = vmatprep.subr.mxu0 0.0
    %5165 = vmatpush1.msra.mxu0 0.0
    %5166 = vmatprep.subr.mxu0 0.0
    %5167 = vmatpush1.msra.mxu0 0.0
    %5168 = vmatprep.subr.mxu0 0.0
    %5169 = vmatpush1.msra.mxu0 0.0
    %5170 = vmatprep.subr.mxu0 0.0
    %5171 = vmatpush1.msra.mxu0 0.0
    %5172 = vmatprep.subr.mxu0 0.0
    %5173 = vmatpush1.msra.mxu0 0.0
    %5174 = vmatprep.subr.mxu0 0.0
    %5175 = vmatpush1.msra.mxu0 0.0
    %5176 = vmatprep.subr.mxu0 0.0
    %5177 = vmatpush1.msra.mxu0 0.0
    %5178 = vmatprep.subr.mxu0 0.0
    %5179 = vmatpush1.msra.mxu0 0.0
    %5180 = vmatprep.subr.mxu0 0.0
    %5181 = vmatpush1.msra.mxu0 0.0
    %5182 = vmatprep.subr.mxu0 0.0
    %5183 = vmatpush1.msra.mxu0 0.0
    %5184 = vmatprep.subr.mxu0 0.0
    %5185 = vmatpush1.msra.mxu0 0.0
    %5186 = vmatprep.subr.mxu0 0.0
    %5187 = vmatpush1.msra.mxu0 0.0
    %5188 = vmatprep.subr.mxu0 0.0
    %5189 = vmatpush1.msra.mxu0 0.0
    %5190 = vmatprep.subr.mxu0 0.0
    %5191 = vmatpush1.msra.mxu0 0.0
    %5192 = vmatprep.subr.mxu0 0.0
    %5193 = vmatpush1.msra.mxu0 0.0
    %5194 = vmatprep.subr.mxu0 0.0
    %5195 = vmatpush1.msra.mxu0 0.0
    %5196 = vmatprep.mubr.f32.mxu0 0.0
    %5197 = vmatmul.mubr.f32.gmra.mrb[0].mxu0 %v5127
    %v5198 = vpop.f32.mrb[0].mxu0
    %v5199 = vadd.f32 0.0, %v5198
    %v5200 = vpop.f32.mrb[0].mxu0
    %5201 = vmatprep.mubr.f32.mxu0 0.0
    %5202 = vmatmul.mubr.f32.gmra.mrb[0].mxu0 %v5130
    %v5203 = vpop.f32.mrb[0].mxu0
    %v5204 = vadd.f32 0.0, %v5203
    %v5205 = vpop.f32.mrb[0].mxu0
    %5206 = vdwg.mxu0
    %5209 = vrot.lane.b32.xlu0 %v4807, 8
    %v5210 = vpop.permute.xlu0 %5209
    %5211 = vrot.lane.b32.xlu0 %v4812, 8
    %v5212 = vpop.permute.xlu0 %5211
    %5217 = vrot.lane.b32.xlu0 %v5003, 16
    %v5218 = vpop.permute.xlu0 %5217
    %5219 = vrot.lane.b32.xlu0 %v5008, 16
    %v5220 = vpop.permute.xlu0 %5219
    %5225 = vrot.lane.b32.xlu0 %v5199, 24
    %v5226 = vpop.permute.xlu0 %5225
    %5227 = vrot.lane.b32.xlu0 %v5204, 24
    %v5228 = vpop.permute.xlu0 %5227
    %v5231 = vsel %vm229, %v4611, %v5210
    %v5232 = vsel %vm229, %v4616, %v5212
    %v5233 = vsel %vm317, %v5231, %v5218
    %v5234 = vsel %vm317, %v5232, %v5220
    %v5235 = vsel %vm1037, %v5233, %v5226
    %v5236 = vsel %vm1037, %v5234, %v5228
    %v5237 = vadd.f32 %v4379, %v5235
    %v5238 = vadd.f32 %v4380, %v5236
    %s5239 = scalar_lea.vmem %s39, 1
    %v5240 = vld [vmem:[%s5239] sm:$0x1]
    %s5241 = scalar_lea.vmem %s41, 1
    %v5242 = vld [vmem:[%s5241] sm:$0x1]
    %v5243 = vsel %vm183, %v5237, 0.0
    %5244 = vadd.xlane.f32.xlu0 %v5243
    %v5245 = vpop.xlane.xlu0 %5244
    %v5246 = vsel %vm183, %v5238, 0.0
    %5247 = vadd.xlane.f32.xlu0 %v5246
    %v5248 = vpop.xlane.xlu0 %5247
    %v5249 = vmul.f32 %v5245, %v190
    %v5250 = vmul.f32 %v5248, %v190
    %v5251 = vsub.f32 %v5237, %v5249
    %v5252 = vsub.f32 %v5238, %v5250
    %v5253 = vmul.f32 %v5251, %v5251
    %v5254 = vmul.f32 %v5252, %v5252
    %v5255 = vsel %vm183, %v5253, 0.0
    %5256 = vadd.xlane.f32.xlu0 %v5255
    %v5257 = vpop.xlane.xlu0 %5256
    %v5258 = vsel %vm183, %v5254, 0.0
    %5259 = vadd.xlane.f32.xlu0 %v5258
    %v5260 = vpop.xlane.xlu0 %5259
    %v5261 = vmul.f32 %v5257, %v190
    %v5262 = vmul.f32 %v5260, %v190
    %v5263 = vadd.f32 %v5261, 1e-05
    %v5264 = vadd.f32 %v5262, 1e-05
    %v5265 = vrsqrt.pop %v5263
    %v5266 = vrsqrt.pop %v5264
    %v5267 = vmul.f32 %v5251, %v5265
    %v5268 = vmul.f32 %v5252, %v5266
    %v5270 = vlaneseq
    %v5271 = vshrl.u32 %v5270, 7
    %v5272 = vsub.s32 0, %v5271
    %v5273 = vrot.slane %v5240, %v5272
    %v5275 = vmul.f32 %v5267, %v5273
    %v5276 = vmul.f32 %v5268, %v5273
    %v5278 = vlaneseq
    %v5279 = vshrl.u32 %v5278, 7
    %v5280 = vsub.s32 0, %v5279
    %v5281 = vrot.slane %v5242, %v5280
    %v5283 = vadd.f32 %v5275, %v5281
    %v5284 = vadd.f32 %v5276, %v5281
    %v5285 = vmul.f32 %v5283, 0.35355338
    %v5286 = vmul.f32 %v5284, 0.35355338
    %v5288 = vsel %vm229, %v5285, 0
    %v5291 = vsel %vm229, %v5286, 0
    %5293 = vmatprep.subr.mxu0 0.0
    %5294 = vmatpush1.xpose.msra.mxu0 %v3342
    %5295 = vmatprep.subr.mxu0 0.0
    %5296 = vmatpush1.xpose.msra.mxu0 %v3345
    %5297 = vmatprep.subr.mxu0 0.0
    %5298 = vmatpush1.xpose.msra.mxu0 0.0
    %5299 = vmatprep.subr.mxu0 0.0
    %5300 = vmatpush1.xpose.msra.mxu0 0.0
    %5301 = vmatprep.subr.mxu0 0.0
    %5302 = vmatpush1.xpose.msra.mxu0 0.0
    %5303 = vmatprep.subr.mxu0 0.0
    %5304 = vmatpush1.xpose.msra.mxu0 0.0
    %5305 = vmatprep.subr.mxu0 0.0
    %5306 = vmatpush1.xpose.msra.mxu0 0.0
    %5307 = vmatprep.subr.mxu0 0.0
    %5308 = vmatpush1.xpose.msra.mxu0 0.0
    %5309 = vmatprep.subr.mxu0 0.0
    %5310 = vmatpush1.xpose.msra.mxu0 0.0
    %5311 = vmatprep.subr.mxu0 0.0
    %5312 = vmatpush1.xpose.msra.mxu0 0.0
    %5313 = vmatprep.subr.mxu0 0.0
    %5314 = vmatpush1.xpose.msra.mxu0 0.0
    %5315 = vmatprep.subr.mxu0 0.0
    %5316 = vmatpush1.xpose.msra.mxu0 0.0
    %5317 = vmatprep.subr.mxu0 0.0
    %5318 = vmatpush1.xpose.msra.mxu0 0.0
    %5319 = vmatprep.subr.mxu0 0.0
    %5320 = vmatpush1.xpose.msra.mxu0 0.0
    %5321 = vmatprep.subr.mxu0 0.0
    %5322 = vmatpush1.xpose.msra.mxu0 0.0
    %5323 = vmatprep.subr.mxu0 0.0
    %5324 = vmatpush1.xpose.msra.mxu0 0.0
    %5325 = vmatprep.subr.mxu0 0.0
    %5326 = vmatpush1.xpose.msra.mxu0 0.0
    %5327 = vmatprep.subr.mxu0 0.0
    %5328 = vmatpush1.xpose.msra.mxu0 0.0
    %5329 = vmatprep.subr.mxu0 0.0
    %5330 = vmatpush1.xpose.msra.mxu0 0.0
    %5331 = vmatprep.subr.mxu0 0.0
    %5332 = vmatpush1.xpose.msra.mxu0 0.0
    %5333 = vmatprep.subr.mxu0 0.0
    %5334 = vmatpush1.xpose.msra.mxu0 0.0
    %5335 = vmatprep.subr.mxu0 0.0
    %5336 = vmatpush1.xpose.msra.mxu0 0.0
    %5337 = vmatprep.subr.mxu0 0.0
    %5338 = vmatpush1.xpose.msra.mxu0 0.0
    %5339 = vmatprep.subr.mxu0 0.0
    %5340 = vmatpush1.xpose.msra.mxu0 0.0
    %5341 = vmatprep.subr.mxu0 0.0
    %5342 = vmatpush1.xpose.msra.mxu0 0.0
    %5343 = vmatprep.subr.mxu0 0.0
    %5344 = vmatpush1.xpose.msra.mxu0 0.0
    %5345 = vmatprep.subr.mxu0 0.0
    %5346 = vmatpush1.xpose.msra.mxu0 0.0
    %5347 = vmatprep.subr.mxu0 0.0
    %5348 = vmatpush1.xpose.msra.mxu0 0.0
    %5349 = vmatprep.subr.mxu0 0.0
    %5350 = vmatpush1.xpose.msra.mxu0 0.0
    %5351 = vmatprep.subr.mxu0 0.0
    %5352 = vmatpush1.xpose.msra.mxu0 0.0
    %5353 = vmatprep.subr.mxu0 0.0
    %5354 = vmatpush1.xpose.msra.mxu0 0.0
    %5355 = vmatprep.subr.mxu0 0.0
    %5356 = vmatpush1.xpose.msra.mxu0 0.0
    %5357 = vmatprep.mubr.f32.mxu0 0.0
    %5358 = vmatmul.mubr.f32.gmra.mrb[0].mxu0 %v5288
    %v5359 = vpop.f32.mrb[0].mxu0
    %v5360 = vadd.f32 %v157, %v5359
    %v5361 = vpop.f32.mrb[0].mxu0
    %5362 = vmatprep.mubr.f32.mxu0 0.0
    %5363 = vmatmul.mubr.f32.gmra.mrb[0].mxu0 %v5291
    %v5364 = vpop.f32.mrb[0].mxu0
    %v5365 = vadd.f32 %v158, %v5364
    %v5366 = vpop.f32.mrb[0].mxu0
    %5367 = vdwg.mxu0
    %v5368 = vsel %vm317, %v5360, -inf
    %5369 = vmax.xlane.f32.xlu0 %v5368
    %v5370 = vpop.xlane.xlu0 %5369
    %v5371 = vsel %vm317, %v5365, -inf
    %5372 = vmax.xlane.f32.xlu0 %v5371
    %v5373 = vpop.xlane.xlu0 %5372
    %v5374 = vsub.f32 %v5360, %v5370
    %v5375 = vsub.f32 %v5365, %v5373
    %v5376 = vmul.f32 %v5374, 1.442695
    %v5377 = vpow.pop %v5376
    %v5378 = vmul.f32 %v5375, 1.442695
    %v5379 = vpow.pop %v5378
    %v5380 = vsel %vm317, %v5377, 0.0
    %5381 = vadd.xlane.f32.xlu0 %v5380
    %v5382 = vpop.xlane.xlu0 %5381
    %v5383 = vsel %vm317, %v5379, 0.0
    %5384 = vadd.xlane.f32.xlu0 %v5383
    %v5385 = vpop.xlane.xlu0 %5384
    %v5386 = vrcp.pop %v5382
    %v5387 = vmul.f32 %v5377, %v5386
    %v5388 = vrcp.pop %v5385
    %v5389 = vmul.f32 %v5379, %v5388
    %v5391 = vsel %vm317, %v5387, 0
    %v5394 = vsel %vm317, %v5389, 0
    %5396 = vmatprep.subr.mxu0 0.0
    %5397 = vmatpush1.msra.mxu0 %v2421
    %5398 = vmatprep.subr.mxu0 0.0
    %5399 = vmatpush1.msra.mxu0 %v2422
    %5400 = vmatprep.subr.mxu0 0.0
    %5401 = vmatpush1.msra.mxu0 0.0
    %5402 = vmatprep.subr.mxu0 0.0
    %5403 = vmatpush1.msra.mxu0 0.0
    %5404 = vmatprep.subr.mxu0 0.0
    %5405 = vmatpush1.msra.mxu0 0.0
    %5406 = vmatprep.subr.mxu0 0.0
    %5407 = vmatpush1.msra.mxu0 0.0
    %5408 = vmatprep.subr.mxu0 0.0
    %5409 = vmatpush1.msra.mxu0 0.0
    %5410 = vmatprep.subr.mxu0 0.0
    %5411 = vmatpush1.msra.mxu0 0.0
    %5412 = vmatprep.subr.mxu0 0.0
    %5413 = vmatpush1.msra.mxu0 0.0
    %5414 = vmatprep.subr.mxu0 0.0
    %5415 = vmatpush1.msra.mxu0 0.0
    %5416 = vmatprep.subr.mxu0 0.0
    %5417 = vmatpush1.msra.mxu0 0.0
    %5418 = vmatprep.subr.mxu0 0.0
    %5419 = vmatpush1.msra.mxu0 0.0
    %5420 = vmatprep.subr.mxu0 0.0
    %5421 = vmatpush1.msra.mxu0 0.0
    %5422 = vmatprep.subr.mxu0 0.0
    %5423 = vmatpush1.msra.mxu0 0.0
    %5424 = vmatprep.subr.mxu0 0.0
    %5425 = vmatpush1.msra.mxu0 0.0
    %5426 = vmatprep.subr.mxu0 0.0
    %5427 = vmatpush1.msra.mxu0 0.0
    %5428 = vmatprep.subr.mxu0 0.0
    %5429 = vmatpush1.msra.mxu0 0.0
    %5430 = vmatprep.subr.mxu0 0.0
    %5431 = vmatpush1.msra.mxu0 0.0
    %5432 = vmatprep.subr.mxu0 0.0
    %5433 = vmatpush1.msra.mxu0 0.0
    %5434 = vmatprep.subr.mxu0 0.0
    %5435 = vmatpush1.msra.mxu0 0.0
    %5436 = vmatprep.subr.mxu0 0.0
    %5437 = vmatpush1.msra.mxu0 0.0
    %5438 = vmatprep.subr.mxu0 0.0
    %5439 = vmatpush1.msra.mxu0 0.0
    %5440 = vmatprep.subr.mxu0 0.0
    %5441 = vmatpush1.msra.mxu0 0.0
    %5442 = vmatprep.subr.mxu0 0.0
    %5443 = vmatpush1.msra.mxu0 0.0
    %5444 = vmatprep.subr.mxu0 0.0
    %5445 = vmatpush1.msra.mxu0 0.0
    %5446 = vmatprep.subr.mxu0 0.0
    %5447 = vmatpush1.msra.mxu0 0.0
    %5448 = vmatprep.subr.mxu0 0.0
    %5449 = vmatpush1.msra.mxu0 0.0
    %5450 = vmatprep.subr.mxu0 0.0
    %5451 = vmatpush1.msra.mxu0 0.0
    %5452 = vmatprep.subr.mxu0 0.0
    %5453 = vmatpush1.msra.mxu0 0.0
    %5454 = vmatprep.subr.mxu0 0.0
    %5455 = vmatpush1.msra.mxu0 0.0
    %5456 = vmatprep.subr.mxu0 0.0
    %5457 = vmatpush1.msra.mxu0 0.0
    %5458 = vmatprep.subr.mxu0 0.0
    %5459 = vmatpush1.msra.mxu0 0.0
    %5460 = vmatprep.mubr.f32.mxu0 0.0
    %5461 = vmatmul.mubr.f32.gmra.mrb[0].mxu0 %v5391
    %v5462 = vpop.f32.mrb[0].mxu0
    %v5463 = vadd.f32 0.0, %v5462
    %v5464 = vpop.f32.mrb[0].mxu0
    %5465 = vmatprep.mubr.f32.mxu0 0.0
    %5466 = vmatmul.mubr.f32.gmra.mrb[0].mxu0 %v5394
    %v5467 = vpop.f32.mrb[0].mxu0
    %v5468 = vadd.f32 0.0, %v5467
    %v5469 = vpop.f32.mrb[0].mxu0
    %5470 = vdwg.mxu0
    %5471 = vrot.lane.b32.xlu0 %v5285, 120
    %v5472 = vpop.permute.xlu0 %5471
    %5473 = vrot.lane.b32.xlu0 %v5286, 120
    %v5474 = vpop.permute.xlu0 %5473
    %v5475 = vsel %vm229, %v5472, 0
    %v5477 = vsel %vm229, %v5474, 0
    %5479 = vmatprep.subr.mxu0 0.0
    %5480 = vmatpush1.xpose.msra.mxu0 %v3537
    %5481 = vmatprep.subr.mxu0 0.0
    %5482 = vmatpush1.xpose.msra.mxu0 %v3539
    %5483 = vmatprep.subr.mxu0 0.0
    %5484 = vmatpush1.xpose.msra.mxu0 0.0
    %5485 = vmatprep.subr.mxu0 0.0
    %5486 = vmatpush1.xpose.msra.mxu0 0.0
    %5487 = vmatprep.subr.mxu0 0.0
    %5488 = vmatpush1.xpose.msra.mxu0 0.0
    %5489 = vmatprep.subr.mxu0 0.0
    %5490 = vmatpush1.xpose.msra.mxu0 0.0
    %5491 = vmatprep.subr.mxu0 0.0
    %5492 = vmatpush1.xpose.msra.mxu0 0.0
    %5493 = vmatprep.subr.mxu0 0.0
    %5494 = vmatpush1.xpose.msra.mxu0 0.0
    %5495 = vmatprep.subr.mxu0 0.0
    %5496 = vmatpush1.xpose.msra.mxu0 0.0
    %5497 = vmatprep.subr.mxu0 0.0
    %5498 = vmatpush1.xpose.msra.mxu0 0.0
    %5499 = vmatprep.subr.mxu0 0.0
    %5500 = vmatpush1.xpose.msra.mxu0 0.0
    %5501 = vmatprep.subr.mxu0 0.0
    %5502 = vmatpush1.xpose.msra.mxu0 0.0
    %5503 = vmatprep.subr.mxu0 0.0
    %5504 = vmatpush1.xpose.msra.mxu0 0.0
    %5505 = vmatprep.subr.mxu0 0.0
    %5506 = vmatpush1.xpose.msra.mxu0 0.0
    %5507 = vmatprep.subr.mxu0 0.0
    %5508 = vmatpush1.xpose.msra.mxu0 0.0
    %5509 = vmatprep.subr.mxu0 0.0
    %5510 = vmatpush1.xpose.msra.mxu0 0.0
    %5511 = vmatprep.subr.mxu0 0.0
    %5512 = vmatpush1.xpose.msra.mxu0 0.0
    %5513 = vmatprep.subr.mxu0 0.0
    %5514 = vmatpush1.xpose.msra.mxu0 0.0
    %5515 = vmatprep.subr.mxu0 0.0
    %5516 = vmatpush1.xpose.msra.mxu0 0.0
    %5517 = vmatprep.subr.mxu0 0.0
    %5518 = vmatpush1.xpose.msra.mxu0 0.0
    %5519 = vmatprep.subr.mxu0 0.0
    %5520 = vmatpush1.xpose.msra.mxu0 0.0
    %5521 = vmatprep.subr.mxu0 0.0
    %5522 = vmatpush1.xpose.msra.mxu0 0.0
    %5523 = vmatprep.subr.mxu0 0.0
    %5524 = vmatpush1.xpose.msra.mxu0 0.0
    %5525 = vmatprep.subr.mxu0 0.0
    %5526 = vmatpush1.xpose.msra.mxu0 0.0
    %5527 = vmatprep.subr.mxu0 0.0
    %5528 = vmatpush1.xpose.msra.mxu0 0.0
    %5529 = vmatprep.subr.mxu0 0.0
    %5530 = vmatpush1.xpose.msra.mxu0 0.0
    %5531 = vmatprep.subr.mxu0 0.0
    %5532 = vmatpush1.xpose.msra.mxu0 0.0
    %5533 = vmatprep.subr.mxu0 0.0
    %5534 = vmatpush1.xpose.msra.mxu0 0.0
    %5535 = vmatprep.subr.mxu0 0.0
    %5536 = vmatpush1.xpose.msra.mxu0 0.0
    %5537 = vmatprep.subr.mxu0 0.0
    %5538 = vmatpush1.xpose.msra.mxu0 0.0
    %5539 = vmatprep.subr.mxu0 0.0
    %5540 = vmatpush1.xpose.msra.mxu0 0.0
    %5541 = vmatprep.subr.mxu0 0.0
    %5542 = vmatpush1.xpose.msra.mxu0 0.0
    %5543 = vmatprep.mubr.f32.mxu0 0.0
    %5544 = vmatmul.mubr.f32.gmra.mrb[0].mxu0 %v5475
    %v5545 = vpop.f32.mrb[0].mxu0
    %v5546 = vadd.f32 %v157, %v5545
    %v5547 = vpop.f32.mrb[0].mxu0
    %5548 = vmatprep.mubr.f32.mxu0 0.0
    %5549 = vmatmul.mubr.f32.gmra.mrb[0].mxu0 %v5477
    %v5550 = vpop.f32.mrb[0].mxu0
    %v5551 = vadd.f32 %v158, %v5550
    %v5552 = vpop.f32.mrb[0].mxu0
    %5553 = vdwg.mxu0
    %v5554 = vsel %vm317, %v5546, -inf
    %5555 = vmax.xlane.f32.xlu0 %v5554
    %v5556 = vpop.xlane.xlu0 %5555
    %v5557 = vsel %vm317, %v5551, -inf
    %5558 = vmax.xlane.f32.xlu0 %v5557
    %v5559 = vpop.xlane.xlu0 %5558
    %v5560 = vsub.f32 %v5546, %v5556
    %v5561 = vsub.f32 %v5551, %v5559
    %v5562 = vmul.f32 %v5560, 1.442695
    %v5563 = vpow.pop %v5562
    %v5564 = vmul.f32 %v5561, 1.442695
    %v5565 = vpow.pop %v5564
    %v5566 = vsel %vm317, %v5563, 0.0
    %5567 = vadd.xlane.f32.xlu0 %v5566
    %v5568 = vpop.xlane.xlu0 %5567
    %v5569 = vsel %vm317, %v5565, 0.0
    %5570 = vadd.xlane.f32.xlu0 %v5569
    %v5571 = vpop.xlane.xlu0 %5570
    %v5572 = vrcp.pop %v5568
    %v5573 = vmul.f32 %v5563, %v5572
    %v5574 = vrcp.pop %v5571
    %v5575 = vmul.f32 %v5565, %v5574
    %v5577 = vsel %vm317, %v5573, 0
    %v5580 = vsel %vm317, %v5575, 0
    %5582 = vmatprep.subr.mxu0 0.0
    %5583 = vmatpush1.msra.mxu0 %v3530
    %5584 = vmatprep.subr.mxu0 0.0
    %5585 = vmatpush1.msra.mxu0 %v3532
    %5586 = vmatprep.subr.mxu0 0.0
    %5587 = vmatpush1.msra.mxu0 0.0
    %5588 = vmatprep.subr.mxu0 0.0
    %5589 = vmatpush1.msra.mxu0 0.0
    %5590 = vmatprep.subr.mxu0 0.0
    %5591 = vmatpush1.msra.mxu0 0.0
    %5592 = vmatprep.subr.mxu0 0.0
    %5593 = vmatpush1.msra.mxu0 0.0
    %5594 = vmatprep.subr.mxu0 0.0
    %5595 = vmatpush1.msra.mxu0 0.0
    %5596 = vmatprep.subr.mxu0 0.0
    %5597 = vmatpush1.msra.mxu0 0.0
    %5598 = vmatprep.subr.mxu0 0.0
    %5599 = vmatpush1.msra.mxu0 0.0
    %5600 = vmatprep.subr.mxu0 0.0
    %5601 = vmatpush1.msra.mxu0 0.0
    %5602 = vmatprep.subr.mxu0 0.0
    %5603 = vmatpush1.msra.mxu0 0.0
    %5604 = vmatprep.subr.mxu0 0.0
    %5605 = vmatpush1.msra.mxu0 0.0
    %5606 = vmatprep.subr.mxu0 0.0
    %5607 = vmatpush1.msra.mxu0 0.0
    %5608 = vmatprep.subr.mxu0 0.0
    %5609 = vmatpush1.msra.mxu0 0.0
    %5610 = vmatprep.subr.mxu0 0.0
    %5611 = vmatpush1.msra.mxu0 0.0
    %5612 = vmatprep.subr.mxu0 0.0
    %5613 = vmatpush1.msra.mxu0 0.0
    %5614 = vmatprep.subr.mxu0 0.0
    %5615 = vmatpush1.msra.mxu0 0.0
    %5616 = vmatprep.subr.mxu0 0.0
    %5617 = vmatpush1.msra.mxu0 0.0
    %5618 = vmatprep.subr.mxu0 0.0
    %5619 = vmatpush1.msra.mxu0 0.0
    %5620 = vmatprep.subr.mxu0 0.0
    %5621 = vmatpush1.msra.mxu0 0.0
    %5622 = vmatprep.subr.mxu0 0.0
    %5623 = vmatpush1.msra.mxu0 0.0
    %5624 = vmatprep.subr.mxu0 0.0
    %5625 = vmatpush1.msra.mxu0 0.0
    %5626 = vmatprep.subr.mxu0 0.0
    %5627 = vmatpush1.msra.mxu0 0.0
    %5628 = vmatprep.subr.mxu0 0.0
    %5629 = vmatpush1.msra.mxu0 0.0
    %5630 = vmatprep.subr.mxu0 0.0
    %5631 = vmatpush1.msra.mxu0 0.0
    %5632 = vmatprep.subr.mxu0 0.0
    %5633 = vmatpush1.msra.mxu0 0.0
    %5634 = vmatprep.subr.mxu0 0.0
    %5635 = vmatpush1.msra.mxu0 0.0
    %5636 = vmatprep.subr.mxu0 0.0
    %5637 = vmatpush1.msra.mxu0 0.0
    %5638 = vmatprep.subr.mxu0 0.0
    %5639 = vmatpush1.msra.mxu0 0.0
    %5640 = vmatprep.subr.mxu0 0.0
    %5641 = vmatpush1.msra.mxu0 0.0
    %5642 = vmatprep.subr.mxu0 0.0
    %5643 = vmatpush1.msra.mxu0 0.0
    %5644 = vmatprep.subr.mxu0 0.0
    %5645 = vmatpush1.msra.mxu0 0.0
    %5646 = vmatprep.mubr.f32.mxu0 0.0
    %5647 = vmatmul.mubr.f32.gmra.mrb[0].mxu0 %v5577
    %v5648 = vpop.f32.mrb[0].mxu0
    %v5649 = vadd.f32 0.0, %v5648
    %v5650 = vpop.f32.mrb[0].mxu0
    %5651 = vmatprep.mubr.f32.mxu0 0.0
    %5652 = vmatmul.mubr.f32.gmra.mrb[0].mxu0 %v5580
    %v5653 = vpop.f32.mrb[0].mxu0
    %v5654 = vadd.f32 0.0, %v5653
    %v5655 = vpop.f32.mrb[0].mxu0
    %5656 = vdwg.mxu0
    %5657 = vrot.lane.b32.xlu0 %v5285, 112
    %v5658 = vpop.permute.xlu0 %5657
    %5659 = vrot.lane.b32.xlu0 %v5286, 112
    %v5660 = vpop.permute.xlu0 %5659
    %v5661 = vsel %vm229, %v5658, 0
    %v5663 = vsel %vm229, %v5660, 0
    %5665 = vmatprep.subr.mxu0 0.0
    %5666 = vmatpush1.xpose.msra.mxu0 %v3733
    %5667 = vmatprep.subr.mxu0 0.0
    %5668 = vmatpush1.xpose.msra.mxu0 %v3735
    %5669 = vmatprep.subr.mxu0 0.0
    %5670 = vmatpush1.xpose.msra.mxu0 0.0
    %5671 = vmatprep.subr.mxu0 0.0
    %5672 = vmatpush1.xpose.msra.mxu0 0.0
    %5673 = vmatprep.subr.mxu0 0.0
    %5674 = vmatpush1.xpose.msra.mxu0 0.0
    %5675 = vmatprep.subr.mxu0 0.0
    %5676 = vmatpush1.xpose.msra.mxu0 0.0
    %5677 = vmatprep.subr.mxu0 0.0
    %5678 = vmatpush1.xpose.msra.mxu0 0.0
    %5679 = vmatprep.subr.mxu0 0.0
    %5680 = vmatpush1.xpose.msra.mxu0 0.0
    %5681 = vmatprep.subr.mxu0 0.0
    %5682 = vmatpush1.xpose.msra.mxu0 0.0
    %5683 = vmatprep.subr.mxu0 0.0
    %5684 = vmatpush1.xpose.msra.mxu0 0.0
    %5685 = vmatprep.subr.mxu0 0.0
    %5686 = vmatpush1.xpose.msra.mxu0 0.0
    %5687 = vmatprep.subr.mxu0 0.0
    %5688 = vmatpush1.xpose.msra.mxu0 0.0
    %5689 = vmatprep.subr.mxu0 0.0
    %5690 = vmatpush1.xpose.msra.mxu0 0.0
    %5691 = vmatprep.subr.mxu0 0.0
    %5692 = vmatpush1.xpose.msra.mxu0 0.0
    %5693 = vmatprep.subr.mxu0 0.0
    %5694 = vmatpush1.xpose.msra.mxu0 0.0
    %5695 = vmatprep.subr.mxu0 0.0
    %5696 = vmatpush1.xpose.msra.mxu0 0.0
    %5697 = vmatprep.subr.mxu0 0.0
    %5698 = vmatpush1.xpose.msra.mxu0 0.0
    %5699 = vmatprep.subr.mxu0 0.0
    %5700 = vmatpush1.xpose.msra.mxu0 0.0
    %5701 = vmatprep.subr.mxu0 0.0
    %5702 = vmatpush1.xpose.msra.mxu0 0.0
    %5703 = vmatprep.subr.mxu0 0.0
    %5704 = vmatpush1.xpose.msra.mxu0 0.0
    %5705 = vmatprep.subr.mxu0 0.0
    %5706 = vmatpush1.xpose.msra.mxu0 0.0
    %5707 = vmatprep.subr.mxu0 0.0
    %5708 = vmatpush1.xpose.msra.mxu0 0.0
    %5709 = vmatprep.subr.mxu0 0.0
    %5710 = vmatpush1.xpose.msra.mxu0 0.0
    %5711 = vmatprep.subr.mxu0 0.0
    %5712 = vmatpush1.xpose.msra.mxu0 0.0
    %5713 = vmatprep.subr.mxu0 0.0
    %5714 = vmatpush1.xpose.msra.mxu0 0.0
    %5715 = vmatprep.subr.mxu0 0.0
    %5716 = vmatpush1.xpose.msra.mxu0 0.0
    %5717 = vmatprep.subr.mxu0 0.0
    %5718 = vmatpush1.xpose.msra.mxu0 0.0
    %5719 = vmatprep.subr.mxu0 0.0
    %5720 = vmatpush1.xpose.msra.mxu0 0.0
    %5721 = vmatprep.subr.mxu0 0.0
    %5722 = vmatpush1.xpose.msra.mxu0 0.0
    %5723 = vmatprep.subr.mxu0 0.0
    %5724 = vmatpush1.xpose.msra.mxu0 0.0
    %5725 = vmatprep.subr.mxu0 0.0
    %5726 = vmatpush1.xpose.msra.mxu0 0.0
    %5727 = vmatprep.subr.mxu0 0.0
    %5728 = vmatpush1.xpose.msra.mxu0 0.0
    %5729 = vmatprep.mubr.f32.mxu0 0.0
    %5730 = vmatmul.mubr.f32.gmra.mrb[0].mxu0 %v5661
    %v5731 = vpop.f32.mrb[0].mxu0
    %v5732 = vadd.f32 %v157, %v5731
    %v5733 = vpop.f32.mrb[0].mxu0
    %5734 = vmatprep.mubr.f32.mxu0 0.0
    %5735 = vmatmul.mubr.f32.gmra.mrb[0].mxu0 %v5663
    %v5736 = vpop.f32.mrb[0].mxu0
    %v5737 = vadd.f32 %v158, %v5736
    %v5738 = vpop.f32.mrb[0].mxu0
    %5739 = vdwg.mxu0
    %v5740 = vsel %vm317, %v5732, -inf
    %5741 = vmax.xlane.f32.xlu0 %v5740
    %v5742 = vpop.xlane.xlu0 %5741
    %v5743 = vsel %vm317, %v5737, -inf
    %5744 = vmax.xlane.f32.xlu0 %v5743
    %v5745 = vpop.xlane.xlu0 %5744
    %v5746 = vsub.f32 %v5732, %v5742
    %v5747 = vsub.f32 %v5737, %v5745
    %v5748 = vmul.f32 %v5746, 1.442695
    %v5749 = vpow.pop %v5748
    %v5750 = vmul.f32 %v5747, 1.442695
    %v5751 = vpow.pop %v5750
    %v5752 = vsel %vm317, %v5749, 0.0
    %5753 = vadd.xlane.f32.xlu0 %v5752
    %v5754 = vpop.xlane.xlu0 %5753
    %v5755 = vsel %vm317, %v5751, 0.0
    %5756 = vadd.xlane.f32.xlu0 %v5755
    %v5757 = vpop.xlane.xlu0 %5756
    %v5758 = vrcp.pop %v5754
    %v5759 = vmul.f32 %v5749, %v5758
    %v5760 = vrcp.pop %v5757
    %v5761 = vmul.f32 %v5751, %v5760
    %v5763 = vsel %vm317, %v5759, 0
    %v5766 = vsel %vm317, %v5761, 0
    %5768 = vmatprep.subr.mxu0 0.0
    %5769 = vmatpush1.msra.mxu0 %v3726
    %5770 = vmatprep.subr.mxu0 0.0
    %5771 = vmatpush1.msra.mxu0 %v3728
    %5772 = vmatprep.subr.mxu0 0.0
    %5773 = vmatpush1.msra.mxu0 0.0
    %5774 = vmatprep.subr.mxu0 0.0
    %5775 = vmatpush1.msra.mxu0 0.0
    %5776 = vmatprep.subr.mxu0 0.0
    %5777 = vmatpush1.msra.mxu0 0.0
    %5778 = vmatprep.subr.mxu0 0.0
    %5779 = vmatpush1.msra.mxu0 0.0
    %5780 = vmatprep.subr.mxu0 0.0
    %5781 = vmatpush1.msra.mxu0 0.0
    %5782 = vmatprep.subr.mxu0 0.0
    %5783 = vmatpush1.msra.mxu0 0.0
    %5784 = vmatprep.subr.mxu0 0.0
    %5785 = vmatpush1.msra.mxu0 0.0
    %5786 = vmatprep.subr.mxu0 0.0
    %5787 = vmatpush1.msra.mxu0 0.0
    %5788 = vmatprep.subr.mxu0 0.0
    %5789 = vmatpush1.msra.mxu0 0.0
    %5790 = vmatprep.subr.mxu0 0.0
    %5791 = vmatpush1.msra.mxu0 0.0
    %5792 = vmatprep.subr.mxu0 0.0
    %5793 = vmatpush1.msra.mxu0 0.0
    %5794 = vmatprep.subr.mxu0 0.0
    %5795 = vmatpush1.msra.mxu0 0.0
    %5796 = vmatprep.subr.mxu0 0.0
    %5797 = vmatpush1.msra.mxu0 0.0
    %5798 = vmatprep.subr.mxu0 0.0
    %5799 = vmatpush1.msra.mxu0 0.0
    %5800 = vmatprep.subr.mxu0 0.0
    %5801 = vmatpush1.msra.mxu0 0.0
    %5802 = vmatprep.subr.mxu0 0.0
    %5803 = vmatpush1.msra.mxu0 0.0
    %5804 = vmatprep.subr.mxu0 0.0
    %5805 = vmatpush1.msra.mxu0 0.0
    %5806 = vmatprep.subr.mxu0 0.0
    %5807 = vmatpush1.msra.mxu0 0.0
    %5808 = vmatprep.subr.mxu0 0.0
    %5809 = vmatpush1.msra.mxu0 0.0
    %5810 = vmatprep.subr.mxu0 0.0
    %5811 = vmatpush1.msra.mxu0 0.0
    %5812 = vmatprep.subr.mxu0 0.0
    %5813 = vmatpush1.msra.mxu0 0.0
    %5814 = vmatprep.subr.mxu0 0.0
    %5815 = vmatpush1.msra.mxu0 0.0
    %5816 = vmatprep.subr.mxu0 0.0
    %5817 = vmatpush1.msra.mxu0 0.0
    %5818 = vmatprep.subr.mxu0 0.0
    %5819 = vmatpush1.msra.mxu0 0.0
    %5820 = vmatprep.subr.mxu0 0.0
    %5821 = vmatpush1.msra.mxu0 0.0
    %5822 = vmatprep.subr.mxu0 0.0
    %5823 = vmatpush1.msra.mxu0 0.0
    %5824 = vmatprep.subr.mxu0 0.0
    %5825 = vmatpush1.msra.mxu0 0.0
    %5826 = vmatprep.subr.mxu0 0.0
    %5827 = vmatpush1.msra.mxu0 0.0
    %5828 = vmatprep.subr.mxu0 0.0
    %5829 = vmatpush1.msra.mxu0 0.0
    %5830 = vmatprep.subr.mxu0 0.0
    %5831 = vmatpush1.msra.mxu0 0.0
    %5832 = vmatprep.mubr.f32.mxu0 0.0
    %5833 = vmatmul.mubr.f32.gmra.mrb[0].mxu0 %v5763
    %v5834 = vpop.f32.mrb[0].mxu0
    %v5835 = vadd.f32 0.0, %v5834
    %v5836 = vpop.f32.mrb[0].mxu0
    %5837 = vmatprep.mubr.f32.mxu0 0.0
    %5838 = vmatmul.mubr.f32.gmra.mrb[0].mxu0 %v5766
    %v5839 = vpop.f32.mrb[0].mxu0
    %v5840 = vadd.f32 0.0, %v5839
    %v5841 = vpop.f32.mrb[0].mxu0
    %5842 = vdwg.mxu0
    %5843 = vrot.lane.b32.xlu0 %v5285, 104
    %v5844 = vpop.permute.xlu0 %5843
    %5845 = vrot.lane.b32.xlu0 %v5286, 104
    %v5846 = vpop.permute.xlu0 %5845
    %v5847 = vsel %vm229, %v5844, 0
    %v5849 = vsel %vm229, %v5846, 0
    %5851 = vmatprep.subr.mxu0 0.0
    %5852 = vmatpush1.xpose.msra.mxu0 %v3929
    %5853 = vmatprep.subr.mxu0 0.0
    %5854 = vmatpush1.xpose.msra.mxu0 %v3931
    %5855 = vmatprep.subr.mxu0 0.0
    %5856 = vmatpush1.xpose.msra.mxu0 0.0
    %5857 = vmatprep.subr.mxu0 0.0
    %5858 = vmatpush1.xpose.msra.mxu0 0.0
    %5859 = vmatprep.subr.mxu0 0.0
    %5860 = vmatpush1.xpose.msra.mxu0 0.0
    %5861 = vmatprep.subr.mxu0 0.0
    %5862 = vmatpush1.xpose.msra.mxu0 0.0
    %5863 = vmatprep.subr.mxu0 0.0
    %5864 = vmatpush1.xpose.msra.mxu0 0.0
    %5865 = vmatprep.subr.mxu0 0.0
    %5866 = vmatpush1.xpose.msra.mxu0 0.0
    %5867 = vmatprep.subr.mxu0 0.0
    %5868 = vmatpush1.xpose.msra.mxu0 0.0
    %5869 = vmatprep.subr.mxu0 0.0
    %5870 = vmatpush1.xpose.msra.mxu0 0.0
    %5871 = vmatprep.subr.mxu0 0.0
    %5872 = vmatpush1.xpose.msra.mxu0 0.0
    %5873 = vmatprep.subr.mxu0 0.0
    %5874 = vmatpush1.xpose.msra.mxu0 0.0
    %5875 = vmatprep.subr.mxu0 0.0
    %5876 = vmatpush1.xpose.msra.mxu0 0.0
    %5877 = vmatprep.subr.mxu0 0.0
    %5878 = vmatpush1.xpose.msra.mxu0 0.0
    %5879 = vmatprep.subr.mxu0 0.0
    %5880 = vmatpush1.xpose.msra.mxu0 0.0
    %5881 = vmatprep.subr.mxu0 0.0
    %5882 = vmatpush1.xpose.msra.mxu0 0.0
    %5883 = vmatprep.subr.mxu0 0.0
    %5884 = vmatpush1.xpose.msra.mxu0 0.0
    %5885 = vmatprep.subr.mxu0 0.0
    %5886 = vmatpush1.xpose.msra.mxu0 0.0
    %5887 = vmatprep.subr.mxu0 0.0
    %5888 = vmatpush1.xpose.msra.mxu0 0.0
    %5889 = vmatprep.subr.mxu0 0.0
    %5890 = vmatpush1.xpose.msra.mxu0 0.0
    %5891 = vmatprep.subr.mxu0 0.0
    %5892 = vmatpush1.xpose.msra.mxu0 0.0
    %5893 = vmatprep.subr.mxu0 0.0
    %5894 = vmatpush1.xpose.msra.mxu0 0.0
    %5895 = vmatprep.subr.mxu0 0.0
    %5896 = vmatpush1.xpose.msra.mxu0 0.0
    %5897 = vmatprep.subr.mxu0 0.0
    %5898 = vmatpush1.xpose.msra.mxu0 0.0
    %5899 = vmatprep.subr.mxu0 0.0
    %5900 = vmatpush1.xpose.msra.mxu0 0.0
    %5901 = vmatprep.subr.mxu0 0.0
    %5902 = vmatpush1.xpose.msra.mxu0 0.0
    %5903 = vmatprep.subr.mxu0 0.0
    %5904 = vmatpush1.xpose.msra.mxu0 0.0
    %5905 = vmatprep.subr.mxu0 0.0
    %5906 = vmatpush1.xpose.msra.mxu0 0.0
    %5907 = vmatprep.subr.mxu0 0.0
    %5908 = vmatpush1.xpose.msra.mxu0 0.0
    %5909 = vmatprep.subr.mxu0 0.0
    %5910 = vmatpush1.xpose.msra.mxu0 0.0
    %5911 = vmatprep.subr.mxu0 0.0
    %5912 = vmatpush1.xpose.msra.mxu0 0.0
    %5913 = vmatprep.subr.mxu0 0.0
    %5914 = vmatpush1.xpose.msra.mxu0 0.0
    %5915 = vmatprep.mubr.f32.mxu0 0.0
    %5916 = vmatmul.mubr.f32.gmra.mrb[0].mxu0 %v5847
    %v5917 = vpop.f32.mrb[0].mxu0
    %v5918 = vadd.f32 %v157, %v5917
    %v5919 = vpop.f32.mrb[0].mxu0
    %5920 = vmatprep.mubr.f32.mxu0 0.0
    %5921 = vmatmul.mubr.f32.gmra.mrb[0].mxu0 %v5849
    %v5922 = vpop.f32.mrb[0].mxu0
    %v5923 = vadd.f32 %v158, %v5922
    %v5924 = vpop.f32.mrb[0].mxu0
    %5925 = vdwg.mxu0
    %v5926 = vsel %vm317, %v5918, -inf
    %5927 = vmax.xlane.f32.xlu0 %v5926
    %v5928 = vpop.xlane.xlu0 %5927
    %v5929 = vsel %vm317, %v5923, -inf
    %5930 = vmax.xlane.f32.xlu0 %v5929
    %v5931 = vpop.xlane.xlu0 %5930
    %v5932 = vsub.f32 %v5918, %v5928
    %v5933 = vsub.f32 %v5923, %v5931
    %v5934 = vmul.f32 %v5932, 1.442695
    %v5935 = vpow.pop %v5934
    %v5936 = vmul.f32 %v5933, 1.442695
    %v5937 = vpow.pop %v5936
    %v5938 = vsel %vm317, %v5935, 0.0
    %5939 = vadd.xlane.f32.xlu0 %v5938
    %v5940 = vpop.xlane.xlu0 %5939
    %v5941 = vsel %vm317, %v5937, 0.0
    %5942 = vadd.xlane.f32.xlu0 %v5941
    %v5943 = vpop.xlane.xlu0 %5942
    %v5944 = vrcp.pop %v5940
    %v5945 = vmul.f32 %v5935, %v5944
    %v5946 = vrcp.pop %v5943
    %v5947 = vmul.f32 %v5937, %v5946
    %v5949 = vsel %vm317, %v5945, 0
    %v5952 = vsel %vm317, %v5947, 0
    %5954 = vmatprep.subr.mxu0 0.0
    %5955 = vmatpush1.msra.mxu0 %v3922
    %5956 = vmatprep.subr.mxu0 0.0
    %5957 = vmatpush1.msra.mxu0 %v3924
    %5958 = vmatprep.subr.mxu0 0.0
    %5959 = vmatpush1.msra.mxu0 0.0
    %5960 = vmatprep.subr.mxu0 0.0
    %5961 = vmatpush1.msra.mxu0 0.0
    %5962 = vmatprep.subr.mxu0 0.0
    %5963 = vmatpush1.msra.mxu0 0.0
    %5964 = vmatprep.subr.mxu0 0.0
    %5965 = vmatpush1.msra.mxu0 0.0
    %5966 = vmatprep.subr.mxu0 0.0
    %5967 = vmatpush1.msra.mxu0 0.0
    %5968 = vmatprep.subr.mxu0 0.0
    %5969 = vmatpush1.msra.mxu0 0.0
    %5970 = vmatprep.subr.mxu0 0.0
    %5971 = vmatpush1.msra.mxu0 0.0
    %5972 = vmatprep.subr.mxu0 0.0
    %5973 = vmatpush1.msra.mxu0 0.0
    %5974 = vmatprep.subr.mxu0 0.0
    %5975 = vmatpush1.msra.mxu0 0.0
    %5976 = vmatprep.subr.mxu0 0.0
    %5977 = vmatpush1.msra.mxu0 0.0
    %5978 = vmatprep.subr.mxu0 0.0
    %5979 = vmatpush1.msra.mxu0 0.0
    %5980 = vmatprep.subr.mxu0 0.0
    %5981 = vmatpush1.msra.mxu0 0.0
    %5982 = vmatprep.subr.mxu0 0.0
    %5983 = vmatpush1.msra.mxu0 0.0
    %5984 = vmatprep.subr.mxu0 0.0
    %5985 = vmatpush1.msra.mxu0 0.0
    %5986 = vmatprep.subr.mxu0 0.0
    %5987 = vmatpush1.msra.mxu0 0.0
    %5988 = vmatprep.subr.mxu0 0.0
    %5989 = vmatpush1.msra.mxu0 0.0
    %5990 = vmatprep.subr.mxu0 0.0
    %5991 = vmatpush1.msra.mxu0 0.0
    %5992 = vmatprep.subr.mxu0 0.0
    %5993 = vmatpush1.msra.mxu0 0.0
    %5994 = vmatprep.subr.mxu0 0.0
    %5995 = vmatpush1.msra.mxu0 0.0
    %5996 = vmatprep.subr.mxu0 0.0
    %5997 = vmatpush1.msra.mxu0 0.0
    %5998 = vmatprep.subr.mxu0 0.0
    %5999 = vmatpush1.msra.mxu0 0.0
    %6000 = vmatprep.subr.mxu0 0.0
    %6001 = vmatpush1.msra.mxu0 0.0
    %6002 = vmatprep.subr.mxu0 0.0
    %6003 = vmatpush1.msra.mxu0 0.0
    %6004 = vmatprep.subr.mxu0 0.0
    %6005 = vmatpush1.msra.mxu0 0.0
    %6006 = vmatprep.subr.mxu0 0.0
    %6007 = vmatpush1.msra.mxu0 0.0
    %6008 = vmatprep.subr.mxu0 0.0
    %6009 = vmatpush1.msra.mxu0 0.0
    %6010 = vmatprep.subr.mxu0 0.0
    %6011 = vmatpush1.msra.mxu0 0.0
    %6012 = vmatprep.subr.mxu0 0.0
    %6013 = vmatpush1.msra.mxu0 0.0
    %6014 = vmatprep.subr.mxu0 0.0
    %6015 = vmatpush1.msra.mxu0 0.0
    %6016 = vmatprep.subr.mxu0 0.0
    %6017 = vmatpush1.msra.mxu0 0.0
    %6018 = vmatprep.mubr.f32.mxu0 0.0
    %6019 = vmatmul.mubr.f32.gmra.mrb[0].mxu0 %v5949
    %v6020 = vpop.f32.mrb[0].mxu0
    %v6021 = vadd.f32 0.0, %v6020
    %v6022 = vpop.f32.mrb[0].mxu0
    %6023 = vmatprep.mubr.f32.mxu0 0.0
    %6024 = vmatmul.mubr.f32.gmra.mrb[0].mxu0 %v5952
    %v6025 = vpop.f32.mrb[0].mxu0
    %v6026 = vadd.f32 0.0, %v6025
    %v6027 = vpop.f32.mrb[0].mxu0
    %6028 = vdwg.mxu0
    %6031 = vrot.lane.b32.xlu0 %v5649, 8
    %v6032 = vpop.permute.xlu0 %6031
    %6033 = vrot.lane.b32.xlu0 %v5654, 8
    %v6034 = vpop.permute.xlu0 %6033
    %6039 = vrot.lane.b32.xlu0 %v5835, 16
    %v6040 = vpop.permute.xlu0 %6039
    %6041 = vrot.lane.b32.xlu0 %v5840, 16
    %v6042 = vpop.permute.xlu0 %6041
    %6047 = vrot.lane.b32.xlu0 %v6021, 24
    %v6048 = vpop.permute.xlu0 %6047
    %6049 = vrot.lane.b32.xlu0 %v6026, 24
    %v6050 = vpop.permute.xlu0 %6049
    %v6053 = vsel %vm229, %v5463, %v6032
    %v6054 = vsel %vm229, %v5468, %v6034
    %v6055 = vsel %vm317, %v6053, %v6040
    %v6056 = vsel %vm317, %v6054, %v6042
    %v6057 = vsel %vm1037, %v6055, %v6048
    %v6058 = vsel %vm1037, %v6056, %v6050
    %v6059 = vadd.f32 %v5237, %v6057
    %v6060 = vadd.f32 %v5238, %v6058
    %s6061 = scalar_lea.vmem %s43, 1
    %v6062 = vld [vmem:[%s6061] sm:$0x1]
    %s6063 = scalar_lea.vmem %s45, 1
    %v6064 = vld [vmem:[%s6063] sm:$0x1]
    %v6065 = vsel %vm183, %v6059, 0.0
    %6066 = vadd.xlane.f32.xlu0 %v6065
    %v6067 = vpop.xlane.xlu0 %6066
    %v6068 = vsel %vm183, %v6060, 0.0
    %6069 = vadd.xlane.f32.xlu0 %v6068
    %v6070 = vpop.xlane.xlu0 %6069
    %v6071 = vmul.f32 %v6067, %v190
    %v6072 = vmul.f32 %v6070, %v190
    %v6073 = vsub.f32 %v6059, %v6071
    %v6074 = vsub.f32 %v6060, %v6072
    %v6075 = vmul.f32 %v6073, %v6073
    %v6076 = vmul.f32 %v6074, %v6074
    %v6077 = vsel %vm183, %v6075, 0.0
    %6078 = vadd.xlane.f32.xlu0 %v6077
    %v6079 = vpop.xlane.xlu0 %6078
    %v6080 = vsel %vm183, %v6076, 0.0
    %6081 = vadd.xlane.f32.xlu0 %v6080
    %v6082 = vpop.xlane.xlu0 %6081
    %v6083 = vmul.f32 %v6079, %v190
    %v6084 = vmul.f32 %v6082, %v190
    %v6085 = vadd.f32 %v6083, 1e-05
    %v6086 = vadd.f32 %v6084, 1e-05
    %v6087 = vrsqrt.pop %v6085
    %v6088 = vrsqrt.pop %v6086
    %v6089 = vmul.f32 %v6073, %v6087
    %v6090 = vmul.f32 %v6074, %v6088
    %v6092 = vlaneseq
    %v6093 = vshrl.u32 %v6092, 7
    %v6094 = vsub.s32 0, %v6093
    %v6095 = vrot.slane %v6062, %v6094
    %v6097 = vmul.f32 %v6089, %v6095
    %v6098 = vmul.f32 %v6090, %v6095
    %v6100 = vlaneseq
    %v6101 = vshrl.u32 %v6100, 7
    %v6102 = vsub.s32 0, %v6101
    %v6103 = vrot.slane %v6064, %v6102
    %v6105 = vadd.f32 %v6097, %v6103
    %v6106 = vadd.f32 %v6098, %v6103
    %s6107 = scalar_lea.vmem %s47, 32
    %v6108 = vld [vmem:[%s6107] sm:$0xff]
    %v6109 = vld [vmem:[%s6107 + $0x8] sm:$0xff]
    %v6110 = vld [vmem:[%s6107 + $0x10] sm:$0xff]
    %v6111 = vld [vmem:[%s6107 + $0x18] sm:$0xff]
    %s6112 = scalar_lea.vmem %s49, 1
    %v6113 = vld [vmem:[%s6112] sm:$0x1]
    %s6114 = scalar_lea.vmem %s51, 64
    %v6115 = vld [vmem:[%s6114] sm:$0xff]
    %v6116 = vld [vmem:[%s6114 + $0x8] sm:$0xff]
    %v6117 = vld [vmem:[%s6114 + $0x10] sm:$0xff]
    %v6118 = vld [vmem:[%s6114 + $0x18] sm:$0xff]
    %v6119 = vld [vmem:[%s6114 + $0x20] sm:$0xff]
    %v6120 = vld [vmem:[%s6114 + $0x28] sm:$0xff]
    %v6121 = vld [vmem:[%s6114 + $0x30] sm:$0xff]
    %v6122 = vld [vmem:[%s6114 + $0x38] sm:$0xff]
    %s6123 = scalar_lea.vmem %s53, 1
    %v6124 = vld [vmem:[%s6123] sm:$0x1]
    %v6126 = vlaneseq
    %v6127 = vshrl.u32 %v6126, 7
    %v6128 = vsub.s32 0, %v6127
    %v6129 = vrot.slane %v6113, %v6128
    %v6132 = vsel %vm183, %v6105, 0
    %v6135 = vsel %vm183, %v6106, 0
    %6137 = vmatprep.subr.mxu0 0.0
    %6138 = vmatpush1.msra.mxu0 %v6108
    %6139 = vmatprep.subr.mxu0 0.0
    %6140 = vmatpush1.msra.mxu0 %v6109
    %6141 = vmatprep.subr.mxu0 0.0
    %6142 = vmatpush1.msra.mxu0 %v6110
    %6143 = vmatprep.subr.mxu0 0.0
    %6144 = vmatpush1.msra.mxu0 %v6111
    %6145 = vmatprep.subr.mxu0 0.0
    %6146 = vmatpush1.msra.mxu0 0.0
    %6147 = vmatprep.subr.mxu0 0.0
    %6148 = vmatpush1.msra.mxu0 0.0
    %6149 = vmatprep.subr.mxu0 0.0
    %6150 = vmatpush1.msra.mxu0 0.0
    %6151 = vmatprep.subr.mxu0 0.0
    %6152 = vmatpush1.msra.mxu0 0.0
    %6153 = vmatprep.subr.mxu0 0.0
    %6154 = vmatpush1.msra.mxu0 0.0
    %6155 = vmatprep.subr.mxu0 0.0
    %6156 = vmatpush1.msra.mxu0 0.0
    %6157 = vmatprep.subr.mxu0 0.0
    %6158 = vmatpush1.msra.mxu0 0.0
    %6159 = vmatprep.subr.mxu0 0.0
    %6160 = vmatpush1.msra.mxu0 0.0
    %6161 = vmatprep.subr.mxu0 0.0
    %6162 = vmatpush1.msra.mxu0 0.0
    %6163 = vmatprep.subr.mxu0 0.0
    %6164 = vmatpush1.msra.mxu0 0.0
    %6165 = vmatprep.subr.mxu0 0.0
    %6166 = vmatpush1.msra.mxu0 0.0
    %6167 = vmatprep.subr.mxu0 0.0
    %6168 = vmatpush1.msra.mxu0 0.0
    %6169 = vmatprep.subr.mxu0 0.0
    %6170 = vmatpush1.msra.mxu0 0.0
    %6171 = vmatprep.subr.mxu0 0.0
    %6172 = vmatpush1.msra.mxu0 0.0
    %6173 = vmatprep.subr.mxu0 0.0
    %6174 = vmatpush1.msra.mxu0 0.0
    %6175 = vmatprep.subr.mxu0 0.0
    %6176 = vmatpush1.msra.mxu0 0.0
    %6177 = vmatprep.subr.mxu0 0.0
    %6178 = vmatpush1.msra.mxu0 0.0
    %6179 = vmatprep.subr.mxu0 0.0
    %6180 = vmatpush1.msra.mxu0 0.0
    %6181 = vmatprep.subr.mxu0 0.0
    %6182 = vmatpush1.msra.mxu0 0.0
    %6183 = vmatprep.subr.mxu0 0.0
    %6184 = vmatpush1.msra.mxu0 0.0
    %6185 = vmatprep.subr.mxu0 0.0
    %6186 = vmatpush1.msra.mxu0 0.0
    %6187 = vmatprep.subr.mxu0 0.0
    %6188 = vmatpush1.msra.mxu0 0.0
    %6189 = vmatprep.subr.mxu0 0.0
    %6190 = vmatpush1.msra.mxu0 0.0
    %6191 = vmatprep.subr.mxu0 0.0
    %6192 = vmatpush1.msra.mxu0 0.0
    %6193 = vmatprep.subr.mxu0 0.0
    %6194 = vmatpush1.msra.mxu0 0.0
    %6195 = vmatprep.subr.mxu0 0.0
    %6196 = vmatpush1.msra.mxu0 0.0
    %6197 = vmatprep.subr.mxu0 0.0
    %6198 = vmatpush1.msra.mxu0 0.0
    %6199 = vmatprep.subr.mxu0 0.0
    %6200 = vmatpush1.msra.mxu0 0.0
    %6201 = vmatprep.mubr.f32.mxu0 0.0
    %6202 = vmatmul.mubr.f32.gmra.mrb[0].mxu0 %v6132
    %v6203 = vpop.f32.mrb[0].mxu0
    %v6204 = vadd.f32 %v6129, %v6203
    %v6205 = vpop.f32.mrb[0].mxu0
    %6206 = vmatprep.mubr.f32.mxu0 0.0
    %6207 = vmatmul.mubr.f32.gmra.mrb[0].mxu0 %v6135
    %v6208 = vpop.f32.mrb[0].mxu0
    %v6209 = vadd.f32 %v6129, %v6208
    %v6210 = vpop.f32.mrb[0].mxu0
    %6211 = vdwg.mxu0
    %v6212 = vmax.f32 %v6204, 0.0
    %v6213 = vmax.f32 %v6209, 0.0
    %v6215 = vlaneseq
    %v6216 = vshrl.u32 %v6215, 7
    %v6217 = vsub.s32 0, %v6216
    %v6218 = vrot.slane %v6124, %v6217
    %v6221 = vsel %vm1195, %v6212, 0
    %v6224 = vsel %vm1195, %v6213, 0
    %6226 = vmatprep.subr.mxu0 0.0
    %6227 = vmatpush1.msra.mxu0 %v6115
    %6228 = vmatprep.subr.mxu0 0.0
    %6229 = vmatpush1.msra.mxu0 %v6116
    %6230 = vmatprep.subr.mxu0 0.0
    %6231 = vmatpush1.msra.mxu0 %v6117
    %6232 = vmatprep.subr.mxu0 0.0
    %6233 = vmatpush1.msra.mxu0 %v6118
    %6234 = vmatprep.subr.mxu0 0.0
    %6235 = vmatpush1.msra.mxu0 %v6119
    %6236 = vmatprep.subr.mxu0 0.0
    %6237 = vmatpush1.msra.mxu0 %v6120
    %6238 = vmatprep.subr.mxu0 0.0
    %6239 = vmatpush1.msra.mxu0 %v6121
    %6240 = vmatprep.subr.mxu0 0.0
    %6241 = vmatpush1.msra.mxu0 %v6122
    %6242 = vmatprep.subr.mxu0 0.0
    %6243 = vmatpush1.msra.mxu0 0.0
    %6244 = vmatprep.subr.mxu0 0.0
    %6245 = vmatpush1.msra.mxu0 0.0
    %6246 = vmatprep.subr.mxu0 0.0
    %6247 = vmatpush1.msra.mxu0 0.0
    %6248 = vmatprep.subr.mxu0 0.0
    %6249 = vmatpush1.msra.mxu0 0.0
    %6250 = vmatprep.subr.mxu0 0.0
    %6251 = vmatpush1.msra.mxu0 0.0
    %6252 = vmatprep.subr.mxu0 0.0
    %6253 = vmatpush1.msra.mxu0 0.0
    %6254 = vmatprep.subr.mxu0 0.0
    %6255 = vmatpush1.msra.mxu0 0.0
    %6256 = vmatprep.subr.mxu0 0.0
    %6257 = vmatpush1.msra.mxu0 0.0
    %6258 = vmatprep.subr.mxu0 0.0
    %6259 = vmatpush1.msra.mxu0 0.0
    %6260 = vmatprep.subr.mxu0 0.0
    %6261 = vmatpush1.msra.mxu0 0.0
    %6262 = vmatprep.subr.mxu0 0.0
    %6263 = vmatpush1.msra.mxu0 0.0
    %6264 = vmatprep.subr.mxu0 0.0
    %6265 = vmatpush1.msra.mxu0 0.0
    %6266 = vmatprep.subr.mxu0 0.0
    %6267 = vmatpush1.msra.mxu0 0.0
    %6268 = vmatprep.subr.mxu0 0.0
    %6269 = vmatpush1.msra.mxu0 0.0
    %6270 = vmatprep.subr.mxu0 0.0
    %6271 = vmatpush1.msra.mxu0 0.0
    %6272 = vmatprep.subr.mxu0 0.0
    %6273 = vmatpush1.msra.mxu0 0.0
    %6274 = vmatprep.subr.mxu0 0.0
    %6275 = vmatpush1.msra.mxu0 0.0
    %6276 = vmatprep.subr.mxu0 0.0
    %6277 = vmatpush1.msra.mxu0 0.0
    %6278 = vmatprep.subr.mxu0 0.0
    %6279 = vmatpush1.msra.mxu0 0.0
    %6280 = vmatprep.subr.mxu0 0.0
    %6281 = vmatpush1.msra.mxu0 0.0
    %6282 = vmatprep.subr.mxu0 0.0
    %6283 = vmatpush1.msra.mxu0 0.0
    %6284 = vmatprep.subr.mxu0 0.0
    %6285 = vmatpush1.msra.mxu0 0.0
    %6286 = vmatprep.subr.mxu0 0.0
    %6287 = vmatpush1.msra.mxu0 0.0
    %6288 = vmatprep.subr.mxu0 0.0
    %6289 = vmatpush1.msra.mxu0 0.0
    %6290 = vmatprep.mubr.f32.mxu0 0.0
    %6291 = vmatmul.mubr.f32.gmra.mrb[0].mxu0 %v6221
    %v6292 = vpop.f32.mrb[0].mxu0
    %v6293 = vadd.f32 %v6218, %v6292
    %v6294 = vpop.f32.mrb[0].mxu0
    %6295 = vmatprep.mubr.f32.mxu0 0.0
    %6296 = vmatmul.mubr.f32.gmra.mrb[0].mxu0 %v6224
    %v6297 = vpop.f32.mrb[0].mxu0
    %v6298 = vadd.f32 %v6218, %v6297
    %v6299 = vpop.f32.mrb[0].mxu0
    %6300 = vdwg.mxu0
    %v6301 = vadd.f32 %v6059, %v6293
    %v6302 = vadd.f32 %v6060, %v6298
    %v6303 = vld [vmem:[%s55] sm:$0x1]
    %v6304 = vld [vmem:[#allocation2] sm:$0x1]
    %v6305 = vsel %vm183, %v6301, 0.0
    %6306 = vadd.xlane.f32.xlu0 %v6305
    %v6307 = vpop.xlane.xlu0 %6306
    %v6308 = vsel %vm183, %v6302, 0.0
    %6309 = vadd.xlane.f32.xlu0 %v6308
    %v6310 = vpop.xlane.xlu0 %6309
    %v6311 = vmul.f32 %v6307, %v190
    %v6312 = vmul.f32 %v6310, %v190
    %v6313 = vsub.f32 %v6301, %v6311
    %v6314 = vsub.f32 %v6302, %v6312
    %v6315 = vmul.f32 %v6313, %v6313
    %v6316 = vmul.f32 %v6314, %v6314
    %v6317 = vsel %vm183, %v6315, 0.0
    %6318 = vadd.xlane.f32.xlu0 %v6317
    %v6319 = vpop.xlane.xlu0 %6318
    %v6320 = vsel %vm183, %v6316, 0.0
    %6321 = vadd.xlane.f32.xlu0 %v6320
    %v6322 = vpop.xlane.xlu0 %6321
    %v6323 = vmul.f32 %v6319, %v190
    %v6324 = vmul.f32 %v6322, %v190
    %v6325 = vadd.f32 %v6323, 1e-05
    %v6326 = vadd.f32 %v6324, 1e-05
    %v6327 = vrsqrt.pop %v6325
    %v6328 = vrsqrt.pop %v6326
    %v6329 = vmul.f32 %v6313, %v6327
    %v6330 = vmul.f32 %v6314, %v6328
    %v6332 = vlaneseq
    %v6333 = vshrl.u32 %v6332, 7
    %v6334 = vsub.s32 0, %v6333
    %v6335 = vrot.slane %v6303, %v6334
    %v6337 = vmul.f32 %v6329, %v6335
    %v6338 = vmul.f32 %v6330, %v6335
    %v6340 = vlaneseq
    %v6341 = vshrl.u32 %v6340, 7
    %v6342 = vsub.s32 0, %v6341
    %v6343 = vrot.slane %v6304, %v6342
    %v6345 = vadd.f32 %v6337, %v6343
    %v6346 = vadd.f32 %v6338, %v6343
    %v6347 = vld [vmem:[#allocation5] sm:$0x1]
    %v6348 = vld [vmem:[%s59] sm:$0xff]
    %v6349 = vld [vmem:[%s59 + $0x8] sm:$0xff]
    %v6350 = vld [vmem:[%s59 + $0x10] sm:$0xff]
    %v6351 = vld [vmem:[%s59 + $0x18] sm:$0xff]
    %v6353 = vsel %vm183, %v6345, 0
    %6355 = vmatprep.subr.mxu0 0.0
    %6356 = vmatpush1.msra.mxu0 %v6348
    %6357 = vmatprep.subr.mxu0 0.0
    %6358 = vmatpush1.msra.mxu0 %v6349
    %6359 = vmatprep.subr.mxu0 0.0
    %6360 = vmatpush1.msra.mxu0 %v6350
    %6361 = vmatprep.subr.mxu0 0.0
    %6362 = vmatpush1.msra.mxu0 %v6351
    %6363 = vmatprep.subr.mxu0 0.0
    %6364 = vmatpush1.msra.mxu0 0.0
    %6365 = vmatprep.subr.mxu0 0.0
    %6366 = vmatpush1.msra.mxu0 0.0
    %6367 = vmatprep.subr.mxu0 0.0
    %6368 = vmatpush1.msra.mxu0 0.0
    %6369 = vmatprep.subr.mxu0 0.0
    %6370 = vmatpush1.msra.mxu0 0.0
    %6371 = vmatprep.subr.mxu0 0.0
    %6372 = vmatpush1.msra.mxu0 0.0
    %6373 = vmatprep.subr.mxu0 0.0
    %6374 = vmatpush1.msra.mxu0 0.0
    %6375 = vmatprep.subr.mxu0 0.0
    %6376 = vmatpush1.msra.mxu0 0.0
    %6377 = vmatprep.subr.mxu0 0.0
    %6378 = vmatpush1.msra.mxu0 0.0
    %6379 = vmatprep.subr.mxu0 0.0
    %6380 = vmatpush1.msra.mxu0 0.0
    %6381 = vmatprep.subr.mxu0 0.0
    %6382 = vmatpush1.msra.mxu0 0.0
    %6383 = vmatprep.subr.mxu0 0.0
    %6384 = vmatpush1.msra.mxu0 0.0
    %6385 = vmatprep.subr.mxu0 0.0
    %6386 = vmatpush1.msra.mxu0 0.0
    %6387 = vmatprep.subr.mxu0 0.0
    %6388 = vmatpush1.msra.mxu0 0.0
    %6389 = vmatprep.subr.mxu0 0.0
    %6390 = vmatpush1.msra.mxu0 0.0
    %6391 = vmatprep.subr.mxu0 0.0
    %6392 = vmatpush1.msra.mxu0 0.0
    %6393 = vmatprep.subr.mxu0 0.0
    %6394 = vmatpush1.msra.mxu0 0.0
    %6395 = vmatprep.subr.mxu0 0.0
    %6396 = vmatpush1.msra.mxu0 0.0
    %6397 = vmatprep.subr.mxu0 0.0
    %6398 = vmatpush1.msra.mxu0 0.0
    %6399 = vmatprep.subr.mxu0 0.0
    %6400 = vmatpush1.msra.mxu0 0.0
    %6401 = vmatprep.subr.mxu0 0.0
    %6402 = vmatpush1.msra.mxu0 0.0
    %6403 = vmatprep.subr.mxu0 0.0
    %6404 = vmatpush1.msra.mxu0 0.0
    %6405 = vmatprep.subr.mxu0 0.0
    %6406 = vmatpush1.msra.mxu0 0.0
    %6407 = vmatprep.subr.mxu0 0.0
    %6408 = vmatpush1.msra.mxu0 0.0
    %6409 = vmatprep.subr.mxu0 0.0
    %6410 = vmatpush1.msra.mxu0 0.0
    %6411 = vmatprep.subr.mxu0 0.0
    %6412 = vmatpush1.msra.mxu0 0.0
    %6413 = vmatprep.subr.mxu0 0.0
    %6414 = vmatpush1.msra.mxu0 0.0
    %6415 = vmatprep.subr.mxu0 0.0
    %6416 = vmatpush1.msra.mxu0 0.0
    %6417 = vmatprep.subr.mxu0 0.0
    %6418 = vmatpush1.msra.mxu0 0.0
    %6419 = vmatprep.mubr.f32.mxu0 0.0
    %6420 = vmatmul.mubr.f32.gmra.mrb[0].mxu0 %v6353
    %v6421 = vpop.f32.mrb[0].mxu0
    %v6422 = vadd.f32 0.0, %v6421
    %v6423 = vpop.f32.mrb[0].mxu0
    %6424 = vdwg.mxu0
    %v6425 = vadd.f32 %v6347, %v6422
    %v6427 = vsel %vm183, %v6346, 0
    %6429 = vmatprep.subr.mxu0 0.0
    %6430 = vmatpush1.msra.mxu0 %v6348
    %6431 = vmatprep.subr.mxu0 0.0
    %6432 = vmatpush1.msra.mxu0 %v6349
    %6433 = vmatprep.subr.mxu0 0.0
    %6434 = vmatpush1.msra.mxu0 %v6350
    %6435 = vmatprep.subr.mxu0 0.0
    %6436 = vmatpush1.msra.mxu0 %v6351
    %6437 = vmatprep.subr.mxu0 0.0
    %6438 = vmatpush1.msra.mxu0 0.0
    %6439 = vmatprep.subr.mxu0 0.0
    %6440 = vmatpush1.msra.mxu0 0.0
    %6441 = vmatprep.subr.mxu0 0.0
    %6442 = vmatpush1.msra.mxu0 0.0
    %6443 = vmatprep.subr.mxu0 0.0
    %6444 = vmatpush1.msra.mxu0 0.0
    %6445 = vmatprep.subr.mxu0 0.0
    %6446 = vmatpush1.msra.mxu0 0.0
    %6447 = vmatprep.subr.mxu0 0.0
    %6448 = vmatpush1.msra.mxu0 0.0
    %6449 = vmatprep.subr.mxu0 0.0
    %6450 = vmatpush1.msra.mxu0 0.0
    %6451 = vmatprep.subr.mxu0 0.0
    %6452 = vmatpush1.msra.mxu0 0.0
    %6453 = vmatprep.subr.mxu0 0.0
    %6454 = vmatpush1.msra.mxu0 0.0
    %6455 = vmatprep.subr.mxu0 0.0
    %6456 = vmatpush1.msra.mxu0 0.0
    %6457 = vmatprep.subr.mxu0 0.0
    %6458 = vmatpush1.msra.mxu0 0.0
    %6459 = vmatprep.subr.mxu0 0.0
    %6460 = vmatpush1.msra.mxu0 0.0
    %6461 = vmatprep.subr.mxu0 0.0
    %6462 = vmatpush1.msra.mxu0 0.0
    %6463 = vmatprep.subr.mxu0 0.0
    %6464 = vmatpush1.msra.mxu0 0.0
    %6465 = vmatprep.subr.mxu0 0.0
    %6466 = vmatpush1.msra.mxu0 0.0
    %6467 = vmatprep.subr.mxu0 0.0
    %6468 = vmatpush1.msra.mxu0 0.0
    %6469 = vmatprep.subr.mxu0 0.0
    %6470 = vmatpush1.msra.mxu0 0.0
    %6471 = vmatprep.subr.mxu0 0.0
    %6472 = vmatpush1.msra.mxu0 0.0
    %6473 = vmatprep.subr.mxu0 0.0
    %6474 = vmatpush1.msra.mxu0 0.0
    %6475 = vmatprep.subr.mxu0 0.0
    %6476 = vmatpush1.msra.mxu0 0.0
    %6477 = vmatprep.subr.mxu0 0.0
    %6478 = vmatpush1.msra.mxu0 0.0
    %6479 = vmatprep.subr.mxu0 0.0
    %6480 = vmatpush1.msra.mxu0 0.0
    %6481 = vmatprep.subr.mxu0 0.0
    %6482 = vmatpush1.msra.mxu0 0.0
    %6483 = vmatprep.subr.mxu0 0.0
    %6484 = vmatpush1.msra.mxu0 0.0
    %6485 = vmatprep.subr.mxu0 0.0
    %6486 = vmatpush1.msra.mxu0 0.0
    %6487 = vmatprep.subr.mxu0 0.0
    %6488 = vmatpush1.msra.mxu0 0.0
    %6489 = vmatprep.subr.mxu0 0.0
    %6490 = vmatpush1.msra.mxu0 0.0
    %6491 = vmatprep.subr.mxu0 0.0
    %6492 = vmatpush1.msra.mxu0 0.0
    %6493 = vmatprep.mubr.f32.mxu0 0.0
    %6494 = vmatmul.mubr.f32.gmra.mrb[0].mxu0 %v6427
    %v6495 = vpop.f32.mrb[0].mxu0
    %v6496 = vadd.f32 0.0, %v6495
    %v6497 = vpop.f32.mrb[0].mxu0
    %6498 = vdwg.mxu0
    %v6499 = vadd.f32 %v6347, %v6496
    %s6500 = scalar_lea.vmem %s59, 32
    %v6501 = vld [vmem:[%s6500] sm:$0xff]
    %v6502 = vld [vmem:[%s6500 + $0x8] sm:$0xff]
    %v6503 = vld [vmem:[%s6500 + $0x10] sm:$0xff]
    %v6504 = vld [vmem:[%s6500 + $0x18] sm:$0xff]
    %v6505 = vrot.slane %v6345, 1
    %v6506 = vsel %vm183, %v6505, 0
    %6508 = vmatprep.subr.mxu0 0.0
    %6509 = vmatpush1.msra.mxu0 %v6501
    %6510 = vmatprep.subr.mxu0 0.0
    %6511 = vmatpush1.msra.mxu0 %v6502
    %6512 = vmatprep.subr.mxu0 0.0
    %6513 = vmatpush1.msra.mxu0 %v6503
    %6514 = vmatprep.subr.mxu0 0.0
    %6515 = vmatpush1.msra.mxu0 %v6504
    %6516 = vmatprep.subr.mxu0 0.0
    %6517 = vmatpush1.msra.mxu0 0.0
    %6518 = vmatprep.subr.mxu0 0.0
    %6519 = vmatpush1.msra.mxu0 0.0
    %6520 = vmatprep.subr.mxu0 0.0
    %6521 = vmatpush1.msra.mxu0 0.0
    %6522 = vmatprep.subr.mxu0 0.0
    %6523 = vmatpush1.msra.mxu0 0.0
    %6524 = vmatprep.subr.mxu0 0.0
    %6525 = vmatpush1.msra.mxu0 0.0
    %6526 = vmatprep.subr.mxu0 0.0
    %6527 = vmatpush1.msra.mxu0 0.0
    %6528 = vmatprep.subr.mxu0 0.0
    %6529 = vmatpush1.msra.mxu0 0.0
    %6530 = vmatprep.subr.mxu0 0.0
    %6531 = vmatpush1.msra.mxu0 0.0
    %6532 = vmatprep.subr.mxu0 0.0
    %6533 = vmatpush1.msra.mxu0 0.0
    %6534 = vmatprep.subr.mxu0 0.0
    %6535 = vmatpush1.msra.mxu0 0.0
    %6536 = vmatprep.subr.mxu0 0.0
    %6537 = vmatpush1.msra.mxu0 0.0
    %6538 = vmatprep.subr.mxu0 0.0
    %6539 = vmatpush1.msra.mxu0 0.0
    %6540 = vmatprep.subr.mxu0 0.0
    %6541 = vmatpush1.msra.mxu0 0.0
    %6542 = vmatprep.subr.mxu0 0.0
    %6543 = vmatpush1.msra.mxu0 0.0
    %6544 = vmatprep.subr.mxu0 0.0
    %6545 = vmatpush1.msra.mxu0 0.0
    %6546 = vmatprep.subr.mxu0 0.0
    %6547 = vmatpush1.msra.mxu0 0.0
    %6548 = vmatprep.subr.mxu0 0.0
    %6549 = vmatpush1.msra.mxu0 0.0
    %6550 = vmatprep.subr.mxu0 0.0
    %6551 = vmatpush1.msra.mxu0 0.0
    %6552 = vmatprep.subr.mxu0 0.0
    %6553 = vmatpush1.msra.mxu0 0.0
    %6554 = vmatprep.subr.mxu0 0.0
    %6555 = vmatpush1.msra.mxu0 0.0
    %6556 = vmatprep.subr.mxu0 0.0
    %6557 = vmatpush1.msra.mxu0 0.0
    %6558 = vmatprep.subr.mxu0 0.0
    %6559 = vmatpush1.msra.mxu0 0.0
    %6560 = vmatprep.subr.mxu0 0.0
    %6561 = vmatpush1.msra.mxu0 0.0
    %6562 = vmatprep.subr.mxu0 0.0
    %6563 = vmatpush1.msra.mxu0 0.0
    %6564 = vmatprep.subr.mxu0 0.0
    %6565 = vmatpush1.msra.mxu0 0.0
    %6566 = vmatprep.subr.mxu0 0.0
    %6567 = vmatpush1.msra.mxu0 0.0
    %6568 = vmatprep.subr.mxu0 0.0
    %6569 = vmatpush1.msra.mxu0 0.0
    %6570 = vmatprep.subr.mxu0 0.0
    %6571 = vmatpush1.msra.mxu0 0.0
    %6572 = vmatprep.mubr.f32.mxu0 0.0
    %6573 = vmatmul.mubr.f32.gmra.mrb[0].mxu0 %v6506
    %v6574 = vpop.f32.mrb[0].mxu0
    %v6575 = vadd.f32 0.0, %v6574
    %v6576 = vpop.f32.mrb[0].mxu0
    %6577 = vdwg.mxu0
    %v6578 = vadd.f32 %v6425, %v6575
    %v6579 = vrot.slane %v6346, 1
    %v6580 = vsel %vm183, %v6579, 0
    %6582 = vmatprep.subr.mxu0 0.0
    %6583 = vmatpush1.msra.mxu0 %v6501
    %6584 = vmatprep.subr.mxu0 0.0
    %6585 = vmatpush1.msra.mxu0 %v6502
    %6586 = vmatprep.subr.mxu0 0.0
    %6587 = vmatpush1.msra.mxu0 %v6503
    %6588 = vmatprep.subr.mxu0 0.0
    %6589 = vmatpush1.msra.mxu0 %v6504
    %6590 = vmatprep.subr.mxu0 0.0
    %6591 = vmatpush1.msra.mxu0 0.0
    %6592 = vmatprep.subr.mxu0 0.0
    %6593 = vmatpush1.msra.mxu0 0.0
    %6594 = vmatprep.subr.mxu0 0.0
    %6595 = vmatpush1.msra.mxu0 0.0
    %6596 = vmatprep.subr.mxu0 0.0
    %6597 = vmatpush1.msra.mxu0 0.0
    %6598 = vmatprep.subr.mxu0 0.0
    %6599 = vmatpush1.msra.mxu0 0.0
    %6600 = vmatprep.subr.mxu0 0.0
    %6601 = vmatpush1.msra.mxu0 0.0
    %6602 = vmatprep.subr.mxu0 0.0
    %6603 = vmatpush1.msra.mxu0 0.0
    %6604 = vmatprep.subr.mxu0 0.0
    %6605 = vmatpush1.msra.mxu0 0.0
    %6606 = vmatprep.subr.mxu0 0.0
    %6607 = vmatpush1.msra.mxu0 0.0
    %6608 = vmatprep.subr.mxu0 0.0
    %6609 = vmatpush1.msra.mxu0 0.0
    %6610 = vmatprep.subr.mxu0 0.0
    %6611 = vmatpush1.msra.mxu0 0.0
    %6612 = vmatprep.subr.mxu0 0.0
    %6613 = vmatpush1.msra.mxu0 0.0
    %6614 = vmatprep.subr.mxu0 0.0
    %6615 = vmatpush1.msra.mxu0 0.0
    %6616 = vmatprep.subr.mxu0 0.0
    %6617 = vmatpush1.msra.mxu0 0.0
    %6618 = vmatprep.subr.mxu0 0.0
    %6619 = vmatpush1.msra.mxu0 0.0
    %6620 = vmatprep.subr.mxu0 0.0
    %6621 = vmatpush1.msra.mxu0 0.0
    %6622 = vmatprep.subr.mxu0 0.0
    %6623 = vmatpush1.msra.mxu0 0.0
    %6624 = vmatprep.subr.mxu0 0.0
    %6625 = vmatpush1.msra.mxu0 0.0
    %6626 = vmatprep.subr.mxu0 0.0
    %6627 = vmatpush1.msra.mxu0 0.0
    %6628 = vmatprep.subr.mxu0 0.0
    %6629 = vmatpush1.msra.mxu0 0.0
    %6630 = vmatprep.subr.mxu0 0.0
    %6631 = vmatpush1.msra.mxu0 0.0
    %6632 = vmatprep.subr.mxu0 0.0
    %6633 = vmatpush1.msra.mxu0 0.0
    %6634 = vmatprep.subr.mxu0 0.0
    %6635 = vmatpush1.msra.mxu0 0.0
    %6636 = vmatprep.subr.mxu0 0.0
    %6637 = vmatpush1.msra.mxu0 0.0
    %6638 = vmatprep.subr.mxu0 0.0
    %6639 = vmatpush1.msra.mxu0 0.0
    %6640 = vmatprep.subr.mxu0 0.0
    %6641 = vmatpush1.msra.mxu0 0.0
    %6642 = vmatprep.subr.mxu0 0.0
    %6643 = vmatpush1.msra.mxu0 0.0
    %6644 = vmatprep.subr.mxu0 0.0
    %6645 = vmatpush1.msra.mxu0 0.0
    %6646 = vmatprep.mubr.f32.mxu0 0.0
    %6647 = vmatmul.mubr.f32.gmra.mrb[0].mxu0 %v6580
    %v6648 = vpop.f32.mrb[0].mxu0
    %v6649 = vadd.f32 0.0, %v6648
    %v6650 = vpop.f32.mrb[0].mxu0
    %6651 = vdwg.mxu0
    %v6652 = vadd.f32 %v6499, %v6649
    %s6653 = scalar_lea.vmem %s59, 64
    %v6654 = vld [vmem:[%s6653] sm:$0xff]
    %v6655 = vld [vmem:[%s6653 + $0x8] sm:$0xff]
    %v6656 = vld [vmem:[%s6653 + $0x10] sm:$0xff]
    %v6657 = vld [vmem:[%s6653 + $0x18] sm:$0xff]
    %v6658 = vrot.slane %v6345, 2
    %v6659 = vsel %vm183, %v6658, 0
    %6661 = vmatprep.subr.mxu0 0.0
    %6662 = vmatpush1.msra.mxu0 %v6654
    %6663 = vmatprep.subr.mxu0 0.0
    %6664 = vmatpush1.msra.mxu0 %v6655
    %6665 = vmatprep.subr.mxu0 0.0
    %6666 = vmatpush1.msra.mxu0 %v6656
    %6667 = vmatprep.subr.mxu0 0.0
    %6668 = vmatpush1.msra.mxu0 %v6657
    %6669 = vmatprep.subr.mxu0 0.0
    %6670 = vmatpush1.msra.mxu0 0.0
    %6671 = vmatprep.subr.mxu0 0.0
    %6672 = vmatpush1.msra.mxu0 0.0
    %6673 = vmatprep.subr.mxu0 0.0
    %6674 = vmatpush1.msra.mxu0 0.0
    %6675 = vmatprep.subr.mxu0 0.0
    %6676 = vmatpush1.msra.mxu0 0.0
    %6677 = vmatprep.subr.mxu0 0.0
    %6678 = vmatpush1.msra.mxu0 0.0
    %6679 = vmatprep.subr.mxu0 0.0
    %6680 = vmatpush1.msra.mxu0 0.0
    %6681 = vmatprep.subr.mxu0 0.0
    %6682 = vmatpush1.msra.mxu0 0.0
    %6683 = vmatprep.subr.mxu0 0.0
    %6684 = vmatpush1.msra.mxu0 0.0
    %6685 = vmatprep.subr.mxu0 0.0
    %6686 = vmatpush1.msra.mxu0 0.0
    %6687 = vmatprep.subr.mxu0 0.0
    %6688 = vmatpush1.msra.mxu0 0.0
    %6689 = vmatprep.subr.mxu0 0.0
    %6690 = vmatpush1.msra.mxu0 0.0
    %6691 = vmatprep.subr.mxu0 0.0
    %6692 = vmatpush1.msra.mxu0 0.0
    %6693 = vmatprep.subr.mxu0 0.0
    %6694 = vmatpush1.msra.mxu0 0.0
    %6695 = vmatprep.subr.mxu0 0.0
    %6696 = vmatpush1.msra.mxu0 0.0
    %6697 = vmatprep.subr.mxu0 0.0
    %6698 = vmatpush1.msra.mxu0 0.0
    %6699 = vmatprep.subr.mxu0 0.0
    %6700 = vmatpush1.msra.mxu0 0.0
    %6701 = vmatprep.subr.mxu0 0.0
    %6702 = vmatpush1.msra.mxu0 0.0
    %6703 = vmatprep.subr.mxu0 0.0
    %6704 = vmatpush1.msra.mxu0 0.0
    %6705 = vmatprep.subr.mxu0 0.0
    %6706 = vmatpush1.msra.mxu0 0.0
    %6707 = vmatprep.subr.mxu0 0.0
    %6708 = vmatpush1.msra.mxu0 0.0
    %6709 = vmatprep.subr.mxu0 0.0
    %6710 = vmatpush1.msra.mxu0 0.0
    %6711 = vmatprep.subr.mxu0 0.0
    %6712 = vmatpush1.msra.mxu0 0.0
    %6713 = vmatprep.subr.mxu0 0.0
    %6714 = vmatpush1.msra.mxu0 0.0
    %6715 = vmatprep.subr.mxu0 0.0
    %6716 = vmatpush1.msra.mxu0 0.0
    %6717 = vmatprep.subr.mxu0 0.0
    %6718 = vmatpush1.msra.mxu0 0.0
    %6719 = vmatprep.subr.mxu0 0.0
    %6720 = vmatpush1.msra.mxu0 0.0
    %6721 = vmatprep.subr.mxu0 0.0
    %6722 = vmatpush1.msra.mxu0 0.0
    %6723 = vmatprep.subr.mxu0 0.0
    %6724 = vmatpush1.msra.mxu0 0.0
    %6725 = vmatprep.mubr.f32.mxu0 0.0
    %6726 = vmatmul.mubr.f32.gmra.mrb[0].mxu0 %v6659
    %v6727 = vpop.f32.mrb[0].mxu0
    %v6728 = vadd.f32 0.0, %v6727
    %v6729 = vpop.f32.mrb[0].mxu0
    %6730 = vdwg.mxu0
    %v6731 = vadd.f32 %v6578, %v6728
    %v6732 = vrot.slane %v6346, 2
    %v6733 = vsel %vm183, %v6732, 0
    %6735 = vmatprep.subr.mxu0 0.0
    %6736 = vmatpush1.msra.mxu0 %v6654
    %6737 = vmatprep.subr.mxu0 0.0
    %6738 = vmatpush1.msra.mxu0 %v6655
    %6739 = vmatprep.subr.mxu0 0.0
    %6740 = vmatpush1.msra.mxu0 %v6656
    %6741 = vmatprep.subr.mxu0 0.0
    %6742 = vmatpush1.msra.mxu0 %v6657
    %6743 = vmatprep.subr.mxu0 0.0
    %6744 = vmatpush1.msra.mxu0 0.0
    %6745 = vmatprep.subr.mxu0 0.0
    %6746 = vmatpush1.msra.mxu0 0.0
    %6747 = vmatprep.subr.mxu0 0.0
    %6748 = vmatpush1.msra.mxu0 0.0
    %6749 = vmatprep.subr.mxu0 0.0
    %6750 = vmatpush1.msra.mxu0 0.0
    %6751 = vmatprep.subr.mxu0 0.0
    %6752 = vmatpush1.msra.mxu0 0.0
    %6753 = vmatprep.subr.mxu0 0.0
    %6754 = vmatpush1.msra.mxu0 0.0
    %6755 = vmatprep.subr.mxu0 0.0
    %6756 = vmatpush1.msra.mxu0 0.0
    %6757 = vmatprep.subr.mxu0 0.0
    %6758 = vmatpush1.msra.mxu0 0.0
    %6759 = vmatprep.subr.mxu0 0.0
    %6760 = vmatpush1.msra.mxu0 0.0
    %6761 = vmatprep.subr.mxu0 0.0
    %6762 = vmatpush1.msra.mxu0 0.0
    %6763 = vmatprep.subr.mxu0 0.0
    %6764 = vmatpush1.msra.mxu0 0.0
    %6765 = vmatprep.subr.mxu0 0.0
    %6766 = vmatpush1.msra.mxu0 0.0
    %6767 = vmatprep.subr.mxu0 0.0
    %6768 = vmatpush1.msra.mxu0 0.0
    %6769 = vmatprep.subr.mxu0 0.0
    %6770 = vmatpush1.msra.mxu0 0.0
    %6771 = vmatprep.subr.mxu0 0.0
    %6772 = vmatpush1.msra.mxu0 0.0
    %6773 = vmatprep.subr.mxu0 0.0
    %6774 = vmatpush1.msra.mxu0 0.0
    %6775 = vmatprep.subr.mxu0 0.0
    %6776 = vmatpush1.msra.mxu0 0.0
    %6777 = vmatprep.subr.mxu0 0.0
    %6778 = vmatpush1.msra.mxu0 0.0
    %6779 = vmatprep.subr.mxu0 0.0
    %6780 = vmatpush1.msra.mxu0 0.0
    %6781 = vmatprep.subr.mxu0 0.0
    %6782 = vmatpush1.msra.mxu0 0.0
    %6783 = vmatprep.subr.mxu0 0.0
    %6784 = vmatpush1.msra.mxu0 0.0
    %6785 = vmatprep.subr.mxu0 0.0
    %6786 = vmatpush1.msra.mxu0 0.0
    %6787 = vmatprep.subr.mxu0 0.0
    %6788 = vmatpush1.msra.mxu0 0.0
    %6789 = vmatprep.subr.mxu0 0.0
    %6790 = vmatpush1.msra.mxu0 0.0
    %6791 = vmatprep.subr.mxu0 0.0
    %6792 = vmatpush1.msra.mxu0 0.0
    %6793 = vmatprep.subr.mxu0 0.0
    %6794 = vmatpush1.msra.mxu0 0.0
    %6795 = vmatprep.subr.mxu0 0.0
    %6796 = vmatpush1.msra.mxu0 0.0
    %6797 = vmatprep.subr.mxu0 0.0
    %6798 = vmatpush1.msra.mxu0 0.0
    %6799 = vmatprep.mubr.f32.mxu0 0.0
    %6800 = vmatmul.mubr.f32.gmra.mrb[0].mxu0 %v6733
    %v6801 = vpop.f32.mrb[0].mxu0
    %v6802 = vadd.f32 0.0, %v6801
    %v6803 = vpop.f32.mrb[0].mxu0
    %6804 = vdwg.mxu0
    %v6805 = vadd.f32 %v6652, %v6802
    %s6806 = scalar_lea.vmem %s59, 96
    %v6807 = vld [vmem:[%s6806] sm:$0xff]
    %v6808 = vld [vmem:[%s6806 + $0x8] sm:$0xff]
    %v6809 = vld [vmem:[%s6806 + $0x10] sm:$0xff]
    %v6810 = vld [vmem:[%s6806 + $0x18] sm:$0xff]
    %v6811 = vrot.slane %v6345, 3
    %v6812 = vsel %vm183, %v6811, 0
    %6814 = vmatprep.subr.mxu0 0.0
    %6815 = vmatpush1.msra.mxu0 %v6807
    %6816 = vmatprep.subr.mxu0 0.0
    %6817 = vmatpush1.msra.mxu0 %v6808
    %6818 = vmatprep.subr.mxu0 0.0
    %6819 = vmatpush1.msra.mxu0 %v6809
    %6820 = vmatprep.subr.mxu0 0.0
    %6821 = vmatpush1.msra.mxu0 %v6810
    %6822 = vmatprep.subr.mxu0 0.0
    %6823 = vmatpush1.msra.mxu0 0.0
    %6824 = vmatprep.subr.mxu0 0.0
    %6825 = vmatpush1.msra.mxu0 0.0
    %6826 = vmatprep.subr.mxu0 0.0
    %6827 = vmatpush1.msra.mxu0 0.0
    %6828 = vmatprep.subr.mxu0 0.0
    %6829 = vmatpush1.msra.mxu0 0.0
    %6830 = vmatprep.subr.mxu0 0.0
    %6831 = vmatpush1.msra.mxu0 0.0
    %6832 = vmatprep.subr.mxu0 0.0
    %6833 = vmatpush1.msra.mxu0 0.0
    %6834 = vmatprep.subr.mxu0 0.0
    %6835 = vmatpush1.msra.mxu0 0.0
    %6836 = vmatprep.subr.mxu0 0.0
    %6837 = vmatpush1.msra.mxu0 0.0
    %6838 = vmatprep.subr.mxu0 0.0
    %6839 = vmatpush1.msra.mxu0 0.0
    %6840 = vmatprep.subr.mxu0 0.0
    %6841 = vmatpush1.msra.mxu0 0.0
    %6842 = vmatprep.subr.mxu0 0.0
    %6843 = vmatpush1.msra.mxu0 0.0
    %6844 = vmatprep.subr.mxu0 0.0
    %6845 = vmatpush1.msra.mxu0 0.0
    %6846 = vmatprep.subr.mxu0 0.0
    %6847 = vmatpush1.msra.mxu0 0.0
    %6848 = vmatprep.subr.mxu0 0.0
    %6849 = vmatpush1.msra.mxu0 0.0
    %6850 = vmatprep.subr.mxu0 0.0
    %6851 = vmatpush1.msra.mxu0 0.0
    %6852 = vmatprep.subr.mxu0 0.0
    %6853 = vmatpush1.msra.mxu0 0.0
    %6854 = vmatprep.subr.mxu0 0.0
    %6855 = vmatpush1.msra.mxu0 0.0
    %6856 = vmatprep.subr.mxu0 0.0
    %6857 = vmatpush1.msra.mxu0 0.0
    %6858 = vmatprep.subr.mxu0 0.0
    %6859 = vmatpush1.msra.mxu0 0.0
    %6860 = vmatprep.subr.mxu0 0.0
    %6861 = vmatpush1.msra.mxu0 0.0
    %6862 = vmatprep.subr.mxu0 0.0
    %6863 = vmatpush1.msra.mxu0 0.0
    %6864 = vmatprep.subr.mxu0 0.0
    %6865 = vmatpush1.msra.mxu0 0.0
    %6866 = vmatprep.subr.mxu0 0.0
    %6867 = vmatpush1.msra.mxu0 0.0
    %6868 = vmatprep.subr.mxu0 0.0
    %6869 = vmatpush1.msra.mxu0 0.0
    %6870 = vmatprep.subr.mxu0 0.0
    %6871 = vmatpush1.msra.mxu0 0.0
    %6872 = vmatprep.subr.mxu0 0.0
    %6873 = vmatpush1.msra.mxu0 0.0
    %6874 = vmatprep.subr.mxu0 0.0
    %6875 = vmatpush1.msra.mxu0 0.0
    %6876 = vmatprep.subr.mxu0 0.0
    %6877 = vmatpush1.msra.mxu0 0.0
    %6878 = vmatprep.mubr.f32.mxu0 0.0
    %6879 = vmatmul.mubr.f32.gmra.mrb[0].mxu0 %v6812
    %v6880 = vpop.f32.mrb[0].mxu0
    %v6881 = vadd.f32 0.0, %v6880
    %v6882 = vpop.f32.mrb[0].mxu0
    %6883 = vdwg.mxu0
    %v6884 = vadd.f32 %v6731, %v6881
    %v6885 = vrot.slane %v6346, 3
    %v6886 = vsel %vm183, %v6885, 0
    %6888 = vmatprep.subr.mxu0 0.0
    %6889 = vmatpush1.msra.mxu0 %v6807
    %6890 = vmatprep.subr.mxu0 0.0
    %6891 = vmatpush1.msra.mxu0 %v6808
    %6892 = vmatprep.subr.mxu0 0.0
    %6893 = vmatpush1.msra.mxu0 %v6809
    %6894 = vmatprep.subr.mxu0 0.0
    %6895 = vmatpush1.msra.mxu0 %v6810
    %6896 = vmatprep.subr.mxu0 0.0
    %6897 = vmatpush1.msra.mxu0 0.0
    %6898 = vmatprep.subr.mxu0 0.0
    %6899 = vmatpush1.msra.mxu0 0.0
    %6900 = vmatprep.subr.mxu0 0.0
    %6901 = vmatpush1.msra.mxu0 0.0
    %6902 = vmatprep.subr.mxu0 0.0
    %6903 = vmatpush1.msra.mxu0 0.0
    %6904 = vmatprep.subr.mxu0 0.0
    %6905 = vmatpush1.msra.mxu0 0.0
    %6906 = vmatprep.subr.mxu0 0.0
    %6907 = vmatpush1.msra.mxu0 0.0
    %6908 = vmatprep.subr.mxu0 0.0
    %6909 = vmatpush1.msra.mxu0 0.0
    %6910 = vmatprep.subr.mxu0 0.0
    %6911 = vmatpush1.msra.mxu0 0.0
    %6912 = vmatprep.subr.mxu0 0.0
    %6913 = vmatpush1.msra.mxu0 0.0
    %6914 = vmatprep.subr.mxu0 0.0
    %6915 = vmatpush1.msra.mxu0 0.0
    %6916 = vmatprep.subr.mxu0 0.0
    %6917 = vmatpush1.msra.mxu0 0.0
    %6918 = vmatprep.subr.mxu0 0.0
    %6919 = vmatpush1.msra.mxu0 0.0
    %6920 = vmatprep.subr.mxu0 0.0
    %6921 = vmatpush1.msra.mxu0 0.0
    %6922 = vmatprep.subr.mxu0 0.0
    %6923 = vmatpush1.msra.mxu0 0.0
    %6924 = vmatprep.subr.mxu0 0.0
    %6925 = vmatpush1.msra.mxu0 0.0
    %6926 = vmatprep.subr.mxu0 0.0
    %6927 = vmatpush1.msra.mxu0 0.0
    %6928 = vmatprep.subr.mxu0 0.0
    %6929 = vmatpush1.msra.mxu0 0.0
    %6930 = vmatprep.subr.mxu0 0.0
    %6931 = vmatpush1.msra.mxu0 0.0
    %6932 = vmatprep.subr.mxu0 0.0
    %6933 = vmatpush1.msra.mxu0 0.0
    %6934 = vmatprep.subr.mxu0 0.0
    %6935 = vmatpush1.msra.mxu0 0.0
    %6936 = vmatprep.subr.mxu0 0.0
    %6937 = vmatpush1.msra.mxu0 0.0
    %6938 = vmatprep.subr.mxu0 0.0
    %6939 = vmatpush1.msra.mxu0 0.0
    %6940 = vmatprep.subr.mxu0 0.0
    %6941 = vmatpush1.msra.mxu0 0.0
    %6942 = vmatprep.subr.mxu0 0.0
    %6943 = vmatpush1.msra.mxu0 0.0
    %6944 = vmatprep.subr.mxu0 0.0
    %6945 = vmatpush1.msra.mxu0 0.0
    %6946 = vmatprep.subr.mxu0 0.0
    %6947 = vmatpush1.msra.mxu0 0.0
    %6948 = vmatprep.subr.mxu0 0.0
    %6949 = vmatpush1.msra.mxu0 0.0
    %6950 = vmatprep.subr.mxu0 0.0
    %6951 = vmatpush1.msra.mxu0 0.0
    %6952 = vmatprep.mubr.f32.mxu0 0.0
    %6953 = vmatmul.mubr.f32.gmra.mrb[0].mxu0 %v6886
    %v6954 = vpop.f32.mrb[0].mxu0
    %v6955 = vadd.f32 0.0, %v6954
    %v6956 = vpop.f32.mrb[0].mxu0
    %6957 = vdwg.mxu0
    %v6958 = vadd.f32 %v6805, %v6955
    %s6959 = scalar_lea.vmem %s59, 128
    %v6960 = vld [vmem:[%s6959] sm:$0xff]
    %v6961 = vld [vmem:[%s6959 + $0x8] sm:$0xff]
    %v6962 = vld [vmem:[%s6959 + $0x10] sm:$0xff]
    %v6963 = vld [vmem:[%s6959 + $0x18] sm:$0xff]
    %v6964 = vrot.slane %v6345, 4
    %v6965 = vsel %vm183, %v6964, 0
    %6967 = vmatprep.subr.mxu0 0.0
    %6968 = vmatpush1.msra.mxu0 %v6960
    %6969 = vmatprep.subr.mxu0 0.0
    %6970 = vmatpush1.msra.mxu0 %v6961
    %6971 = vmatprep.subr.mxu0 0.0
    %6972 = vmatpush1.msra.mxu0 %v6962
    %6973 = vmatprep.subr.mxu0 0.0
    %6974 = vmatpush1.msra.mxu0 %v6963
    %6975 = vmatprep.subr.mxu0 0.0
    %6976 = vmatpush1.msra.mxu0 0.0
    %6977 = vmatprep.subr.mxu0 0.0
    %6978 = vmatpush1.msra.mxu0 0.0
    %6979 = vmatprep.subr.mxu0 0.0
    %6980 = vmatpush1.msra.mxu0 0.0
    %6981 = vmatprep.subr.mxu0 0.0
    %6982 = vmatpush1.msra.mxu0 0.0
    %6983 = vmatprep.subr.mxu0 0.0
    %6984 = vmatpush1.msra.mxu0 0.0
    %6985 = vmatprep.subr.mxu0 0.0
    %6986 = vmatpush1.msra.mxu0 0.0
    %6987 = vmatprep.subr.mxu0 0.0
    %6988 = vmatpush1.msra.mxu0 0.0
    %6989 = vmatprep.subr.mxu0 0.0
    %6990 = vmatpush1.msra.mxu0 0.0
    %6991 = vmatprep.subr.mxu0 0.0
    %6992 = vmatpush1.msra.mxu0 0.0
    %6993 = vmatprep.subr.mxu0 0.0
    %6994 = vmatpush1.msra.mxu0 0.0
    %6995 = vmatprep.subr.mxu0 0.0
    %6996 = vmatpush1.msra.mxu0 0.0
    %6997 = vmatprep.subr.mxu0 0.0
    %6998 = vmatpush1.msra.mxu0 0.0
    %6999 = vmatprep.subr.mxu0 0.0
    %7000 = vmatpush1.msra.mxu0 0.0
    %7001 = vmatprep.subr.mxu0 0.0
    %7002 = vmatpush1.msra.mxu0 0.0
    %7003 = vmatprep.subr.mxu0 0.0
    %7004 = vmatpush1.msra.mxu0 0.0
    %7005 = vmatprep.subr.mxu0 0.0
    %7006 = vmatpush1.msra.mxu0 0.0
    %7007 = vmatprep.subr.mxu0 0.0
    %7008 = vmatpush1.msra.mxu0 0.0
    %7009 = vmatprep.subr.mxu0 0.0
    %7010 = vmatpush1.msra.mxu0 0.0
    %7011 = vmatprep.subr.mxu0 0.0
    %7012 = vmatpush1.msra.mxu0 0.0
    %7013 = vmatprep.subr.mxu0 0.0
    %7014 = vmatpush1.msra.mxu0 0.0
    %7015 = vmatprep.subr.mxu0 0.0
    %7016 = vmatpush1.msra.mxu0 0.0
    %7017 = vmatprep.subr.mxu0 0.0
    %7018 = vmatpush1.msra.mxu0 0.0
    %7019 = vmatprep.subr.mxu0 0.0
    %7020 = vmatpush1.msra.mxu0 0.0
    %7021 = vmatprep.subr.mxu0 0.0
    %7022 = vmatpush1.msra.mxu0 0.0
    %7023 = vmatprep.subr.mxu0 0.0
    %7024 = vmatpush1.msra.mxu0 0.0
    %7025 = vmatprep.subr.mxu0 0.0
    %7026 = vmatpush1.msra.mxu0 0.0
    %7027 = vmatprep.subr.mxu0 0.0
    %7028 = vmatpush1.msra.mxu0 0.0
    %7029 = vmatprep.subr.mxu0 0.0
    %7030 = vmatpush1.msra.mxu0 0.0
    %7031 = vmatprep.mubr.f32.mxu0 0.0
    %7032 = vmatmul.mubr.f32.gmra.mrb[0].mxu0 %v6965
    %v7033 = vpop.f32.mrb[0].mxu0
    %v7034 = vadd.f32 0.0, %v7033
    %v7035 = vpop.f32.mrb[0].mxu0
    %7036 = vdwg.mxu0
    %v7037 = vadd.f32 %v6884, %v7034
    %v7038 = vrot.slane %v6346, 4
    %v7039 = vsel %vm183, %v7038, 0
    %7041 = vmatprep.subr.mxu0 0.0
    %7042 = vmatpush1.msra.mxu0 %v6960
    %7043 = vmatprep.subr.mxu0 0.0
    %7044 = vmatpush1.msra.mxu0 %v6961
    %7045 = vmatprep.subr.mxu0 0.0
    %7046 = vmatpush1.msra.mxu0 %v6962
    %7047 = vmatprep.subr.mxu0 0.0
    %7048 = vmatpush1.msra.mxu0 %v6963
    %7049 = vmatprep.subr.mxu0 0.0
    %7050 = vmatpush1.msra.mxu0 0.0
    %7051 = vmatprep.subr.mxu0 0.0
    %7052 = vmatpush1.msra.mxu0 0.0
    %7053 = vmatprep.subr.mxu0 0.0
    %7054 = vmatpush1.msra.mxu0 0.0
    %7055 = vmatprep.subr.mxu0 0.0
    %7056 = vmatpush1.msra.mxu0 0.0
    %7057 = vmatprep.subr.mxu0 0.0
    %7058 = vmatpush1.msra.mxu0 0.0
    %7059 = vmatprep.subr.mxu0 0.0
    %7060 = vmatpush1.msra.mxu0 0.0
    %7061 = vmatprep.subr.mxu0 0.0
    %7062 = vmatpush1.msra.mxu0 0.0
    %7063 = vmatprep.subr.mxu0 0.0
    %7064 = vmatpush1.msra.mxu0 0.0
    %7065 = vmatprep.subr.mxu0 0.0
    %7066 = vmatpush1.msra.mxu0 0.0
    %7067 = vmatprep.subr.mxu0 0.0
    %7068 = vmatpush1.msra.mxu0 0.0
    %7069 = vmatprep.subr.mxu0 0.0
    %7070 = vmatpush1.msra.mxu0 0.0
    %7071 = vmatprep.subr.mxu0 0.0
    %7072 = vmatpush1.msra.mxu0 0.0
    %7073 = vmatprep.subr.mxu0 0.0
    %7074 = vmatpush1.msra.mxu0 0.0
    %7075 = vmatprep.subr.mxu0 0.0
    %7076 = vmatpush1.msra.mxu0 0.0
    %7077 = vmatprep.subr.mxu0 0.0
    %7078 = vmatpush1.msra.mxu0 0.0
    %7079 = vmatprep.subr.mxu0 0.0
    %7080 = vmatpush1.msra.mxu0 0.0
    %7081 = vmatprep.subr.mxu0 0.0
    %7082 = vmatpush1.msra.mxu0 0.0
    %7083 = vmatprep.subr.mxu0 0.0
    %7084 = vmatpush1.msra.mxu0 0.0
    %7085 = vmatprep.subr.mxu0 0.0
    %7086 = vmatpush1.msra.mxu0 0.0
    %7087 = vmatprep.subr.mxu0 0.0
    %7088 = vmatpush1.msra.mxu0 0.0
    %7089 = vmatprep.subr.mxu0 0.0
    %7090 = vmatpush1.msra.mxu0 0.0
    %7091 = vmatprep.subr.mxu0 0.0
    %7092 = vmatpush1.msra.mxu0 0.0
    %7093 = vmatprep.subr.mxu0 0.0
    %7094 = vmatpush1.msra.mxu0 0.0
    %7095 = vmatprep.subr.mxu0 0.0
    %7096 = vmatpush1.msra.mxu0 0.0
    %7097 = vmatprep.subr.mxu0 0.0
    %7098 = vmatpush1.msra.mxu0 0.0
    %7099 = vmatprep.subr.mxu0 0.0
    %7100 = vmatpush1.msra.mxu0 0.0
    %7101 = vmatprep.subr.mxu0 0.0
    %7102 = vmatpush1.msra.mxu0 0.0
    %7103 = vmatprep.subr.mxu0 0.0
    %7104 = vmatpush1.msra.mxu0 0.0
    %7105 = vmatprep.mubr.f32.mxu0 0.0
    %7106 = vmatmul.mubr.f32.gmra.mrb[0].mxu0 %v7039
    %v7107 = vpop.f32.mrb[0].mxu0
    %v7108 = vadd.f32 0.0, %v7107
    %v7109 = vpop.f32.mrb[0].mxu0
    %7110 = vdwg.mxu0
    %v7111 = vadd.f32 %v6958, %v7108
    %s7112 = scalar_lea.vmem %s59, 160
    %v7113 = vld [vmem:[%s7112] sm:$0xff]
    %v7114 = vld [vmem:[%s7112 + $0x8] sm:$0xff]
    %v7115 = vld [vmem:[%s7112 + $0x10] sm:$0xff]
    %v7116 = vld [vmem:[%s7112 + $0x18] sm:$0xff]
    %v7117 = vrot.slane %v6345, 5
    %v7118 = vsel %vm183, %v7117, 0
    %7120 = vmatprep.subr.mxu0 0.0
    %7121 = vmatpush1.msra.mxu0 %v7113
    %7122 = vmatprep.subr.mxu0 0.0
    %7123 = vmatpush1.msra.mxu0 %v7114
    %7124 = vmatprep.subr.mxu0 0.0
    %7125 = vmatpush1.msra.mxu0 %v7115
    %7126 = vmatprep.subr.mxu0 0.0
    %7127 = vmatpush1.msra.mxu0 %v7116
    %7128 = vmatprep.subr.mxu0 0.0
    %7129 = vmatpush1.msra.mxu0 0.0
    %7130 = vmatprep.subr.mxu0 0.0
    %7131 = vmatpush1.msra.mxu0 0.0
    %7132 = vmatprep.subr.mxu0 0.0
    %7133 = vmatpush1.msra.mxu0 0.0
    %7134 = vmatprep.subr.mxu0 0.0
    %7135 = vmatpush1.msra.mxu0 0.0
    %7136 = vmatprep.subr.mxu0 0.0
    %7137 = vmatpush1.msra.mxu0 0.0
    %7138 = vmatprep.subr.mxu0 0.0
    %7139 = vmatpush1.msra.mxu0 0.0
    %7140 = vmatprep.subr.mxu0 0.0
    %7141 = vmatpush1.msra.mxu0 0.0
    %7142 = vmatprep.subr.mxu0 0.0
    %7143 = vmatpush1.msra.mxu0 0.0
    %7144 = vmatprep.subr.mxu0 0.0
    %7145 = vmatpush1.msra.mxu0 0.0
    %7146 = vmatprep.subr.mxu0 0.0
    %7147 = vmatpush1.msra.mxu0 0.0
    %7148 = vmatprep.subr.mxu0 0.0
    %7149 = vmatpush1.msra.mxu0 0.0
    %7150 = vmatprep.subr.mxu0 0.0
    %7151 = vmatpush1.msra.mxu0 0.0
    %7152 = vmatprep.subr.mxu0 0.0
    %7153 = vmatpush1.msra.mxu0 0.0
    %7154 = vmatprep.subr.mxu0 0.0
    %7155 = vmatpush1.msra.mxu0 0.0
    %7156 = vmatprep.subr.mxu0 0.0
    %7157 = vmatpush1.msra.mxu0 0.0
    %7158 = vmatprep.subr.mxu0 0.0
    %7159 = vmatpush1.msra.mxu0 0.0
    %7160 = vmatprep.subr.mxu0 0.0
    %7161 = vmatpush1.msra.mxu0 0.0
    %7162 = vmatprep.subr.mxu0 0.0
    %7163 = vmatpush1.msra.mxu0 0.0
    %7164 = vmatprep.subr.mxu0 0.0
    %7165 = vmatpush1.msra.mxu0 0.0
    %7166 = vmatprep.subr.mxu0 0.0
    %7167 = vmatpush1.msra.mxu0 0.0
    %7168 = vmatprep.subr.mxu0 0.0
    %7169 = vmatpush1.msra.mxu0 0.0
    %7170 = vmatprep.subr.mxu0 0.0
    %7171 = vmatpush1.msra.mxu0 0.0
    %7172 = vmatprep.subr.mxu0 0.0
    %7173 = vmatpush1.msra.mxu0 0.0
    %7174 = vmatprep.subr.mxu0 0.0
    %7175 = vmatpush1.msra.mxu0 0.0
    %7176 = vmatprep.subr.mxu0 0.0
    %7177 = vmatpush1.msra.mxu0 0.0
    %7178 = vmatprep.subr.mxu0 0.0
    %7179 = vmatpush1.msra.mxu0 0.0
    %7180 = vmatprep.subr.mxu0 0.0
    %7181 = vmatpush1.msra.mxu0 0.0
    %7182 = vmatprep.subr.mxu0 0.0
    %7183 = vmatpush1.msra.mxu0 0.0
    %7184 = vmatprep.mubr.f32.mxu0 0.0
    %7185 = vmatmul.mubr.f32.gmra.mrb[0].mxu0 %v7118
    %v7186 = vpop.f32.mrb[0].mxu0
    %v7187 = vadd.f32 0.0, %v7186
    %v7188 = vpop.f32.mrb[0].mxu0
    %7189 = vdwg.mxu0
    %v7190 = vadd.f32 %v7037, %v7187
    %v7191 = vrot.slane %v6346, 5
    %v7192 = vsel %vm183, %v7191, 0
    %7194 = vmatprep.subr.mxu0 0.0
    %7195 = vmatpush1.msra.mxu0 %v7113
    %7196 = vmatprep.subr.mxu0 0.0
    %7197 = vmatpush1.msra.mxu0 %v7114
    %7198 = vmatprep.subr.mxu0 0.0
    %7199 = vmatpush1.msra.mxu0 %v7115
    %7200 = vmatprep.subr.mxu0 0.0
    %7201 = vmatpush1.msra.mxu0 %v7116
    %7202 = vmatprep.subr.mxu0 0.0
    %7203 = vmatpush1.msra.mxu0 0.0
    %7204 = vmatprep.subr.mxu0 0.0
    %7205 = vmatpush1.msra.mxu0 0.0
    %7206 = vmatprep.subr.mxu0 0.0
    %7207 = vmatpush1.msra.mxu0 0.0
    %7208 = vmatprep.subr.mxu0 0.0
    %7209 = vmatpush1.msra.mxu0 0.0
    %7210 = vmatprep.subr.mxu0 0.0
    %7211 = vmatpush1.msra.mxu0 0.0
    %7212 = vmatprep.subr.mxu0 0.0
    %7213 = vmatpush1.msra.mxu0 0.0
    %7214 = vmatprep.subr.mxu0 0.0
    %7215 = vmatpush1.msra.mxu0 0.0
    %7216 = vmatprep.subr.mxu0 0.0
    %7217 = vmatpush1.msra.mxu0 0.0
    %7218 = vmatprep.subr.mxu0 0.0
    %7219 = vmatpush1.msra.mxu0 0.0
    %7220 = vmatprep.subr.mxu0 0.0
    %7221 = vmatpush1.msra.mxu0 0.0
    %7222 = vmatprep.subr.mxu0 0.0
    %7223 = vmatpush1.msra.mxu0 0.0
    %7224 = vmatprep.subr.mxu0 0.0
    %7225 = vmatpush1.msra.mxu0 0.0
    %7226 = vmatprep.subr.mxu0 0.0
    %7227 = vmatpush1.msra.mxu0 0.0
    %7228 = vmatprep.subr.mxu0 0.0
    %7229 = vmatpush1.msra.mxu0 0.0
    %7230 = vmatprep.subr.mxu0 0.0
    %7231 = vmatpush1.msra.mxu0 0.0
    %7232 = vmatprep.subr.mxu0 0.0
    %7233 = vmatpush1.msra.mxu0 0.0
    %7234 = vmatprep.subr.mxu0 0.0
    %7235 = vmatpush1.msra.mxu0 0.0
    %7236 = vmatprep.subr.mxu0 0.0
    %7237 = vmatpush1.msra.mxu0 0.0
    %7238 = vmatprep.subr.mxu0 0.0
    %7239 = vmatpush1.msra.mxu0 0.0
    %7240 = vmatprep.subr.mxu0 0.0
    %7241 = vmatpush1.msra.mxu0 0.0
    %7242 = vmatprep.subr.mxu0 0.0
    %7243 = vmatpush1.msra.mxu0 0.0
    %7244 = vmatprep.subr.mxu0 0.0
    %7245 = vmatpush1.msra.mxu0 0.0
    %7246 = vmatprep.subr.mxu0 0.0
    %7247 = vmatpush1.msra.mxu0 0.0
    %7248 = vmatprep.subr.mxu0 0.0
    %7249 = vmatpush1.msra.mxu0 0.0
    %7250 = vmatprep.subr.mxu0 0.0
    %7251 = vmatpush1.msra.mxu0 0.0
    %7252 = vmatprep.subr.mxu0 0.0
    %7253 = vmatpush1.msra.mxu0 0.0
    %7254 = vmatprep.subr.mxu0 0.0
    %7255 = vmatpush1.msra.mxu0 0.0
    %7256 = vmatprep.subr.mxu0 0.0
    %7257 = vmatpush1.msra.mxu0 0.0
    %7258 = vmatprep.mubr.f32.mxu0 0.0
    %7259 = vmatmul.mubr.f32.gmra.mrb[0].mxu0 %v7192
    %v7260 = vpop.f32.mrb[0].mxu0
    %v7261 = vadd.f32 0.0, %v7260
    %v7262 = vpop.f32.mrb[0].mxu0
    %7263 = vdwg.mxu0
    %v7264 = vadd.f32 %v7111, %v7261
    %s7265 = scalar_lea.vmem %s59, 192
    %v7266 = vld [vmem:[%s7265] sm:$0xff]
    %v7267 = vld [vmem:[%s7265 + $0x8] sm:$0xff]
    %v7268 = vld [vmem:[%s7265 + $0x10] sm:$0xff]
    %v7269 = vld [vmem:[%s7265 + $0x18] sm:$0xff]
    %v7270 = vrot.slane %v6345, 6
    %v7271 = vsel %vm183, %v7270, 0
    %7273 = vmatprep.subr.mxu0 0.0
    %7274 = vmatpush1.msra.mxu0 %v7266
    %7275 = vmatprep.subr.mxu0 0.0
    %7276 = vmatpush1.msra.mxu0 %v7267
    %7277 = vmatprep.subr.mxu0 0.0
    %7278 = vmatpush1.msra.mxu0 %v7268
    %7279 = vmatprep.subr.mxu0 0.0
    %7280 = vmatpush1.msra.mxu0 %v7269
    %7281 = vmatprep.subr.mxu0 0.0
    %7282 = vmatpush1.msra.mxu0 0.0
    %7283 = vmatprep.subr.mxu0 0.0
    %7284 = vmatpush1.msra.mxu0 0.0
    %7285 = vmatprep.subr.mxu0 0.0
    %7286 = vmatpush1.msra.mxu0 0.0
    %7287 = vmatprep.subr.mxu0 0.0
    %7288 = vmatpush1.msra.mxu0 0.0
    %7289 = vmatprep.subr.mxu0 0.0
    %7290 = vmatpush1.msra.mxu0 0.0
    %7291 = vmatprep.subr.mxu0 0.0
    %7292 = vmatpush1.msra.mxu0 0.0
    %7293 = vmatprep.subr.mxu0 0.0
    %7294 = vmatpush1.msra.mxu0 0.0
    %7295 = vmatprep.subr.mxu0 0.0
    %7296 = vmatpush1.msra.mxu0 0.0
    %7297 = vmatprep.subr.mxu0 0.0
    %7298 = vmatpush1.msra.mxu0 0.0
    %7299 = vmatprep.subr.mxu0 0.0
    %7300 = vmatpush1.msra.mxu0 0.0
    %7301 = vmatprep.subr.mxu0 0.0
    %7302 = vmatpush1.msra.mxu0 0.0
    %7303 = vmatprep.subr.mxu0 0.0
    %7304 = vmatpush1.msra.mxu0 0.0
    %7305 = vmatprep.subr.mxu0 0.0
    %7306 = vmatpush1.msra.mxu0 0.0
    %7307 = vmatprep.subr.mxu0 0.0
    %7308 = vmatpush1.msra.mxu0 0.0
    %7309 = vmatprep.subr.mxu0 0.0
    %7310 = vmatpush1.msra.mxu0 0.0
    %7311 = vmatprep.subr.mxu0 0.0
    %7312 = vmatpush1.msra.mxu0 0.0
    %7313 = vmatprep.subr.mxu0 0.0
    %7314 = vmatpush1.msra.mxu0 0.0
    %7315 = vmatprep.subr.mxu0 0.0
    %7316 = vmatpush1.msra.mxu0 0.0
    %7317 = vmatprep.subr.mxu0 0.0
    %7318 = vmatpush1.msra.mxu0 0.0
    %7319 = vmatprep.subr.mxu0 0.0
    %7320 = vmatpush1.msra.mxu0 0.0
    %7321 = vmatprep.subr.mxu0 0.0
    %7322 = vmatpush1.msra.mxu0 0.0
    %7323 = vmatprep.subr.mxu0 0.0
    %7324 = vmatpush1.msra.mxu0 0.0
    %7325 = vmatprep.subr.mxu0 0.0
    %7326 = vmatpush1.msra.mxu0 0.0
    %7327 = vmatprep.subr.mxu0 0.0
    %7328 = vmatpush1.msra.mxu0 0.0
    %7329 = vmatprep.subr.mxu0 0.0
    %7330 = vmatpush1.msra.mxu0 0.0
    %7331 = vmatprep.subr.mxu0 0.0
    %7332 = vmatpush1.msra.mxu0 0.0
    %7333 = vmatprep.subr.mxu0 0.0
    %7334 = vmatpush1.msra.mxu0 0.0
    %7335 = vmatprep.subr.mxu0 0.0
    %7336 = vmatpush1.msra.mxu0 0.0
    %7337 = vmatprep.mubr.f32.mxu0 0.0
    %7338 = vmatmul.mubr.f32.gmra.mrb[0].mxu0 %v7271
    %v7339 = vpop.f32.mrb[0].mxu0
    %v7340 = vadd.f32 0.0, %v7339
    %v7341 = vpop.f32.mrb[0].mxu0
    %7342 = vdwg.mxu0
    %v7343 = vadd.f32 %v7190, %v7340
    %v7344 = vrot.slane %v6346, 6
    %v7345 = vsel %vm183, %v7344, 0
    %7347 = vmatprep.subr.mxu0 0.0
    %7348 = vmatpush1.msra.mxu0 %v7266
    %7349 = vmatprep.subr.mxu0 0.0
    %7350 = vmatpush1.msra.mxu0 %v7267
    %7351 = vmatprep.subr.mxu0 0.0
    %7352 = vmatpush1.msra.mxu0 %v7268
    %7353 = vmatprep.subr.mxu0 0.0
    %7354 = vmatpush1.msra.mxu0 %v7269
    %7355 = vmatprep.subr.mxu0 0.0
    %7356 = vmatpush1.msra.mxu0 0.0
    %7357 = vmatprep.subr.mxu0 0.0
    %7358 = vmatpush1.msra.mxu0 0.0
    %7359 = vmatprep.subr.mxu0 0.0
    %7360 = vmatpush1.msra.mxu0 0.0
    %7361 = vmatprep.subr.mxu0 0.0
    %7362 = vmatpush1.msra.mxu0 0.0
    %7363 = vmatprep.subr.mxu0 0.0
    %7364 = vmatpush1.msra.mxu0 0.0
    %7365 = vmatprep.subr.mxu0 0.0
    %7366 = vmatpush1.msra.mxu0 0.0
    %7367 = vmatprep.subr.mxu0 0.0
    %7368 = vmatpush1.msra.mxu0 0.0
    %7369 = vmatprep.subr.mxu0 0.0
    %7370 = vmatpush1.msra.mxu0 0.0
    %7371 = vmatprep.subr.mxu0 0.0
    %7372 = vmatpush1.msra.mxu0 0.0
    %7373 = vmatprep.subr.mxu0 0.0
    %7374 = vmatpush1.msra.mxu0 0.0
    %7375 = vmatprep.subr.mxu0 0.0
    %7376 = vmatpush1.msra.mxu0 0.0
    %7377 = vmatprep.subr.mxu0 0.0
    %7378 = vmatpush1.msra.mxu0 0.0
    %7379 = vmatprep.subr.mxu0 0.0
    %7380 = vmatpush1.msra.mxu0 0.0
    %7381 = vmatprep.subr.mxu0 0.0
    %7382 = vmatpush1.msra.mxu0 0.0
    %7383 = vmatprep.subr.mxu0 0.0
    %7384 = vmatpush1.msra.mxu0 0.0
    %7385 = vmatprep.subr.mxu0 0.0
    %7386 = vmatpush1.msra.mxu0 0.0
    %7387 = vmatprep.subr.mxu0 0.0
    %7388 = vmatpush1.msra.mxu0 0.0
    %7389 = vmatprep.subr.mxu0 0.0
    %7390 = vmatpush1.msra.mxu0 0.0
    %7391 = vmatprep.subr.mxu0 0.0
    %7392 = vmatpush1.msra.mxu0 0.0
    %7393 = vmatprep.subr.mxu0 0.0
    %7394 = vmatpush1.msra.mxu0 0.0
    %7395 = vmatprep.subr.mxu0 0.0
    %7396 = vmatpush1.msra.mxu0 0.0
    %7397 = vmatprep.subr.mxu0 0.0
    %7398 = vmatpush1.msra.mxu0 0.0
    %7399 = vmatprep.subr.mxu0 0.0
    %7400 = vmatpush1.msra.mxu0 0.0
    %7401 = vmatprep.subr.mxu0 0.0
    %7402 = vmatpush1.msra.mxu0 0.0
    %7403 = vmatprep.subr.mxu0 0.0
    %7404 = vmatpush1.msra.mxu0 0.0
    %7405 = vmatprep.subr.mxu0 0.0
    %7406 = vmatpush1.msra.mxu0 0.0
    %7407 = vmatprep.subr.mxu0 0.0
    %7408 = vmatpush1.msra.mxu0 0.0
    %7409 = vmatprep.subr.mxu0 0.0
    %7410 = vmatpush1.msra.mxu0 0.0
    %7411 = vmatprep.mubr.f32.mxu0 0.0
    %7412 = vmatmul.mubr.f32.gmra.mrb[0].mxu0 %v7345
    %v7413 = vpop.f32.mrb[0].mxu0
    %v7414 = vadd.f32 0.0, %v7413
    %v7415 = vpop.f32.mrb[0].mxu0
    %7416 = vdwg.mxu0
    %v7417 = vadd.f32 %v7264, %v7414
    %s7418 = scalar_lea.vmem %s59, 224
    %v7419 = vld [vmem:[%s7418] sm:$0xff]
    %v7420 = vld [vmem:[%s7418 + $0x8] sm:$0xff]
    %v7421 = vld [vmem:[%s7418 + $0x10] sm:$0xff]
    %v7422 = vld [vmem:[%s7418 + $0x18] sm:$0xff]
    %v7423 = vrot.slane %v6345, 7
    %v7424 = vsel %vm183, %v7423, 0
    %7426 = vmatprep.subr.mxu0 0.0
    %7427 = vmatpush1.msra.mxu0 %v7419
    %7428 = vmatprep.subr.mxu0 0.0
    %7429 = vmatpush1.msra.mxu0 %v7420
    %7430 = vmatprep.subr.mxu0 0.0
    %7431 = vmatpush1.msra.mxu0 %v7421
    %7432 = vmatprep.subr.mxu0 0.0
    %7433 = vmatpush1.msra.mxu0 %v7422
    %7434 = vmatprep.subr.mxu0 0.0
    %7435 = vmatpush1.msra.mxu0 0.0
    %7436 = vmatprep.subr.mxu0 0.0
    %7437 = vmatpush1.msra.mxu0 0.0
    %7438 = vmatprep.subr.mxu0 0.0
    %7439 = vmatpush1.msra.mxu0 0.0
    %7440 = vmatprep.subr.mxu0 0.0
    %7441 = vmatpush1.msra.mxu0 0.0
    %7442 = vmatprep.subr.mxu0 0.0
    %7443 = vmatpush1.msra.mxu0 0.0
    %7444 = vmatprep.subr.mxu0 0.0
    %7445 = vmatpush1.msra.mxu0 0.0
    %7446 = vmatprep.subr.mxu0 0.0
    %7447 = vmatpush1.msra.mxu0 0.0
    %7448 = vmatprep.subr.mxu0 0.0
    %7449 = vmatpush1.msra.mxu0 0.0
    %7450 = vmatprep.subr.mxu0 0.0
    %7451 = vmatpush1.msra.mxu0 0.0
    %7452 = vmatprep.subr.mxu0 0.0
    %7453 = vmatpush1.msra.mxu0 0.0
    %7454 = vmatprep.subr.mxu0 0.0
    %7455 = vmatpush1.msra.mxu0 0.0
    %7456 = vmatprep.subr.mxu0 0.0
    %7457 = vmatpush1.msra.mxu0 0.0
    %7458 = vmatprep.subr.mxu0 0.0
    %7459 = vmatpush1.msra.mxu0 0.0
    %7460 = vmatprep.subr.mxu0 0.0
    %7461 = vmatpush1.msra.mxu0 0.0
    %7462 = vmatprep.subr.mxu0 0.0
    %7463 = vmatpush1.msra.mxu0 0.0
    %7464 = vmatprep.subr.mxu0 0.0
    %7465 = vmatpush1.msra.mxu0 0.0
    %7466 = vmatprep.subr.mxu0 0.0
    %7467 = vmatpush1.msra.mxu0 0.0
    %7468 = vmatprep.subr.mxu0 0.0
    %7469 = vmatpush1.msra.mxu0 0.0
    %7470 = vmatprep.subr.mxu0 0.0
    %7471 = vmatpush1.msra.mxu0 0.0
    %7472 = vmatprep.subr.mxu0 0.0
    %7473 = vmatpush1.msra.mxu0 0.0
    %7474 = vmatprep.subr.mxu0 0.0
    %7475 = vmatpush1.msra.mxu0 0.0
    %7476 = vmatprep.subr.mxu0 0.0
    %7477 = vmatpush1.msra.mxu0 0.0
    %7478 = vmatprep.subr.mxu0 0.0
    %7479 = vmatpush1.msra.mxu0 0.0
    %7480 = vmatprep.subr.mxu0 0.0
    %7481 = vmatpush1.msra.mxu0 0.0
    %7482 = vmatprep.subr.mxu0 0.0
    %7483 = vmatpush1.msra.mxu0 0.0
    %7484 = vmatprep.subr.mxu0 0.0
    %7485 = vmatpush1.msra.mxu0 0.0
    %7486 = vmatprep.subr.mxu0 0.0
    %7487 = vmatpush1.msra.mxu0 0.0
    %7488 = vmatprep.subr.mxu0 0.0
    %7489 = vmatpush1.msra.mxu0 0.0
    %7490 = vmatprep.mubr.f32.mxu0 0.0
    %7491 = vmatmul.mubr.f32.gmra.mrb[0].mxu0 %v7424
    %v7492 = vpop.f32.mrb[0].mxu0
    %v7493 = vadd.f32 0.0, %v7492
    %v7494 = vpop.f32.mrb[0].mxu0
    %7495 = vdwg.mxu0
    %v7496 = vadd.f32 %v7343, %v7493
    %v7497 = vrot.slane %v6346, 7
    %v7498 = vsel %vm183, %v7497, 0
    %7500 = vmatprep.subr.mxu0 0.0
    %7501 = vmatpush1.msra.mxu0 %v7419
    %7502 = vmatprep.subr.mxu0 0.0
    %7503 = vmatpush1.msra.mxu0 %v7420
    %7504 = vmatprep.subr.mxu0 0.0
    %7505 = vmatpush1.msra.mxu0 %v7421
    %7506 = vmatprep.subr.mxu0 0.0
    %7507 = vmatpush1.msra.mxu0 %v7422
    %7508 = vmatprep.subr.mxu0 0.0
    %7509 = vmatpush1.msra.mxu0 0.0
    %7510 = vmatprep.subr.mxu0 0.0
    %7511 = vmatpush1.msra.mxu0 0.0
    %7512 = vmatprep.subr.mxu0 0.0
    %7513 = vmatpush1.msra.mxu0 0.0
    %7514 = vmatprep.subr.mxu0 0.0
    %7515 = vmatpush1.msra.mxu0 0.0
    %7516 = vmatprep.subr.mxu0 0.0
    %7517 = vmatpush1.msra.mxu0 0.0
    %7518 = vmatprep.subr.mxu0 0.0
    %7519 = vmatpush1.msra.mxu0 0.0
    %7520 = vmatprep.subr.mxu0 0.0
    %7521 = vmatpush1.msra.mxu0 0.0
    %7522 = vmatprep.subr.mxu0 0.0
    %7523 = vmatpush1.msra.mxu0 0.0
    %7524 = vmatprep.subr.mxu0 0.0
    %7525 = vmatpush1.msra.mxu0 0.0
    %7526 = vmatprep.subr.mxu0 0.0
    %7527 = vmatpush1.msra.mxu0 0.0
    %7528 = vmatprep.subr.mxu0 0.0
    %7529 = vmatpush1.msra.mxu0 0.0
    %7530 = vmatprep.subr.mxu0 0.0
    %7531 = vmatpush1.msra.mxu0 0.0
    %7532 = vmatprep.subr.mxu0 0.0
    %7533 = vmatpush1.msra.mxu0 0.0
    %7534 = vmatprep.subr.mxu0 0.0
    %7535 = vmatpush1.msra.mxu0 0.0
    %7536 = vmatprep.subr.mxu0 0.0
    %7537 = vmatpush1.msra.mxu0 0.0
    %7538 = vmatprep.subr.mxu0 0.0
    %7539 = vmatpush1.msra.mxu0 0.0
    %7540 = vmatprep.subr.mxu0 0.0
    %7541 = vmatpush1.msra.mxu0 0.0
    %7542 = vmatprep.subr.mxu0 0.0
    %7543 = vmatpush1.msra.mxu0 0.0
    %7544 = vmatprep.subr.mxu0 0.0
    %7545 = vmatpush1.msra.mxu0 0.0
    %7546 = vmatprep.subr.mxu0 0.0
    %7547 = vmatpush1.msra.mxu0 0.0
    %7548 = vmatprep.subr.mxu0 0.0
    %7549 = vmatpush1.msra.mxu0 0.0
    %7550 = vmatprep.subr.mxu0 0.0
    %7551 = vmatpush1.msra.mxu0 0.0
    %7552 = vmatprep.subr.mxu0 0.0
    %7553 = vmatpush1.msra.mxu0 0.0
    %7554 = vmatprep.subr.mxu0 0.0
    %7555 = vmatpush1.msra.mxu0 0.0
    %7556 = vmatprep.subr.mxu0 0.0
    %7557 = vmatpush1.msra.mxu0 0.0
    %7558 = vmatprep.subr.mxu0 0.0
    %7559 = vmatpush1.msra.mxu0 0.0
    %7560 = vmatprep.subr.mxu0 0.0
    %7561 = vmatpush1.msra.mxu0 0.0
    %7562 = vmatprep.subr.mxu0 0.0
    %7563 = vmatpush1.msra.mxu0 0.0
    %7564 = vmatprep.mubr.f32.mxu0 0.0
    %7565 = vmatmul.mubr.f32.gmra.mrb[0].mxu0 %v7498
    %v7566 = vpop.f32.mrb[0].mxu0
    %v7567 = vadd.f32 0.0, %v7566
    %v7568 = vpop.f32.mrb[0].mxu0
    %7569 = vdwg.mxu0
    %v7570 = vadd.f32 %v7417, %v7567
    %v7572 = vlaneseq
    %v7573 = vshrl.u32 %v7572, 7
    %v7574 = vsub.s32 0, %v7573
    %v7575 = vrot.slane %v7570, %v7574
    %vm7577 = vcmask 1040384
    %v7578 = vsel %vm7577, %v7496, %v7575
    %vm7579 = vcmask 1041408
    %v7580 = vsel %vm7579, %v7578, -inf
    %7581 = vmax.xlane.f32.xlu0 %v7580
    %v7582 = vpop.xlane.xlu0 %7581
    %v7583 = vsub.f32 %v7578, %v7582
    %v7584 = vmul.f32 %v7583, 1.442695
    %v7585 = vpow.pop %v7584
    %v7586 = vsel %vm7579, %v7585, 0.0
    %7587 = vadd.xlane.f32.xlu0 %v7586
    %v7588 = vpop.xlane.xlu0 %7587
    %v7589 = vrcp.pop %v7588
    %v7590 = vmul.f32 %v7585, %v7589
    %7591 = vst [vmem:[#allocation7] sm:$0x3] %v7590
    // Predicated region
    $region134: #{model_forward.1} parent=1 // pred_check
      _
    $region135: #{model_forward.1} parent=1 // pred_check_branch
      %7593 = sbr.rel (0) target = $region137
    $region136: #{model_forward.1} parent=1 // pred_region
      %s7595 = ssub.s32 32, 32
      %7596 = vsyncadd [#allocation4], %s7595
      %s7598 = sshll.u32 [#allocation7], 4
      %s7599 = int_to_ptr.vmem [resolvable:$true] %s7598
      %7601 = dma.vmem_to_hbm [thread:$0]  %s7599, 32, %s63, [#allocation4]
    $region137: #{model_forward.1} parent=1 // pred_fallthru
      _
    // Predicated region
    $region138: #{model_forward.1} parent=1 // pred_check
      _
    $region139: #{model_forward.1} parent=1 // pred_check_branch
      %7603 = sbr.rel (0) target = $region141
    $region140: #{model_forward.1} parent=1 // pred_region
      %7604 = dma.done [#allocation4], 32
    $region141: #{model_forward.1} parent=1 // pred_fallthru
      _
    %7605 = vsyncpa [#allocation3], 1
    %7606 = vsyncpa [#allocation6], 1
    %7607 = vsyncpa [#allocation4], 1

</llo_original>
